<compile_context>
chip_gen: v6e
topology: v6e:2x2x1
jax: 0.10.0
libtpu: 0.0.40
codegen_flags: <defaults>
</compile_context>

<pallas_src>
import jax
import jax.numpy as jnp
from jax.experimental import pallas as pl
from jax.experimental.pallas import tpu as pltpu

NUM_CLASSES = 26
LANES = 128


# ----------------------------------------------------------------------------
# small helpers
# ----------------------------------------------------------------------------
def _round_up(x, m):
    return ((x + m - 1) // m) * m


def _row_tile(rows, cap):
    """Row-tile size: multiple of 8 sublanes, capped so large batches get a grid."""
    if rows >= cap:
        return cap
    return max(8, _round_up(rows, 8))


def _pad_rows(x, rpad):
    if x.shape[0] == rpad:
        return x
    return jnp.pad(x, ((0, rpad - x.shape[0]), (0, 0)))


# ----------------------------------------------------------------------------
# Pallas kernels
# ----------------------------------------------------------------------------
def _conv_pool_kernel(p00_ref, p01_ref, p10_ref, p11_ref, w_ref, b_ref, o_ref):
    """Fused conv-as-matmul + bias + 2x2 maxpool epilogue.

    Each p*_ref holds the im2col patches of one position of the 2x2 pooling
    window; the max over the 4 matmul results equals maxpool(conv(x))."""
    w = w_ref[...]
    y00 = jnp.dot(p00_ref[...], w, preferred_element_type=jnp.float32)
    y01 = jnp.dot(p01_ref[...], w, preferred_element_type=jnp.float32)
    y10 = jnp.dot(p10_ref[...], w, preferred_element_type=jnp.float32)
    y11 = jnp.dot(p11_ref[...], w, preferred_element_type=jnp.float32)
    y = jnp.maximum(jnp.maximum(y00, y01), jnp.maximum(y10, y11)) + b_ref[...]
    o_ref[...] = y.astype(o_ref.dtype)


def conv_pool(groups, w, b, *, row_cap=256):
    """groups: 4 x (R, K) bf16; w: (K, 128) bf16; b: (1, 128) f32 -> (R, 128) bf16."""
    R, K = groups[0].shape
    N = w.shape[1]
    tm = _row_tile(R, row_cap)
    rpad = _round_up(R, tm)
    groups = [_pad_rows(g, rpad) for g in groups]
    patch_spec = pl.BlockSpec((tm, K), lambda i: (i, 0))
    out = pl.pallas_call(
        _conv_pool_kernel,
        out_shape=jax.ShapeDtypeStruct((rpad, N), jnp.bfloat16),
        grid_spec=pltpu.PrefetchScalarGridSpec(
            num_scalar_prefetch=0,
            grid=(rpad // tm,),
            in_specs=[patch_spec] * 4 + [
                pl.BlockSpec((K, N), lambda i: (0, 0)),   # weights (replicated)
                pl.BlockSpec((1, N), lambda i: (0, 0)),   # bias
            ],
            out_specs=pl.BlockSpec((tm, N), lambda i: (i, 0)),
        ),
        compiler_params=pltpu.CompilerParams(dimension_semantics=("parallel",)),
    )(*groups, w, b)
    return out[:R]


def _mlp_softmax_kernel(x_ref, w1_ref, b1_ref, w2_ref, b2_ref, o_ref):
    # fc1 + relu (f32 accumulation / epilogue)
    h = jnp.dot(x_ref[...], w1_ref[...],
                preferred_element_type=jnp.float32) + b1_ref[...]
    h = jnp.maximum(h, 0.0)
    # TODO(synk): dropout(p=0.5, training=True) omitted — eval/inference identity.
    logits = jnp.dot(h.astype(jnp.bfloat16), w2_ref[...],
                     preferred_element_type=jnp.float32) + b2_ref[...]
    # padded class columns carry a -1e30 bias -> exp() == 0, so they do not
    # perturb the softmax normalization.
    m = jnp.max(logits, axis=-1, keepdims=True)
    e = jnp.exp(logits - m)
    o_ref[...] = e * pl.reciprocal(jnp.sum(e, axis=-1, keepdims=True), approx=True)


def mlp_softmax(x, w1, b1, w2, b2, *, row_cap=128):
    """x: (B,1024) bf16; w1: (1024,1024) bf16; b1: (1,1024) f32;
    w2: (1024,128) bf16; b2: (1,128) f32 -> (B,128) f32."""
    B, D = x.shape
    H = w1.shape[1]
    N = w2.shape[1]
    tm = _row_tile(B, row_cap)
    bpad = _round_up(B, tm)
    xp = _pad_rows(x, bpad)
    out = pl.pallas_call(
        _mlp_softmax_kernel,
        out_shape=jax.ShapeDtypeStruct((bpad, N), jnp.float32),
        grid_spec=pltpu.PrefetchScalarGridSpec(
            num_scalar_prefetch=0,
            grid=(bpad // tm,),
            in_specs=[
                pl.BlockSpec((tm, D), lambda i: (i, 0)),   # activations (tiled)
                pl.BlockSpec((D, H), lambda i: (0, 0)),    # fc1 weight (replicated)
                pl.BlockSpec((1, H), lambda i: (0, 0)),    # fc1 bias
                pl.BlockSpec((H, N), lambda i: (0, 0)),    # fc2 weight (padded to 128)
                pl.BlockSpec((1, N), lambda i: (0, 0)),    # fc2 bias (-1e30 pad)
            ],
            out_specs=pl.BlockSpec((tm, N), lambda i: (i, 0)),
        ),
        compiler_params=pltpu.CompilerParams(dimension_semantics=("parallel",)),
    )(xp, w1, b1, w2, b2)
    return out[:B]


# ----------------------------------------------------------------------------
# JAX glue: im2col grouped by pool-window position, weight prep, forward
# ----------------------------------------------------------------------------
def _im2col_pool_groups(x_nhwc, ksize):
    """Extract im2col patches grouped by 2x2 pool-window position.

    Returns 4 matrices of shape (B*OH/2*OW/2, C*ksize*ksize) for (di,dj) in
    {(0,0),(0,1),(1,0),(1,1)}. Feature order c*KK + kh*K + kw matches
    torch weight.reshape(OC, IC*KH*KW)."""
    B, H, W, C = x_nhwc.shape
    OH, OW = H - ksize + 1, W - ksize + 1
    OH2, OW2 = OH // 2, OW // 2
    slabs = []
    for kh in range(ksize):
        for kw in range(ksize):
            slabs.append(x_nhwc[:, kh:kh + OH, kw:kw + OW, :])     # (B, OH, OW, C)
    p = jnp.stack(slabs, axis=3)                                   # (B, OH, OW, KK, C)
    p = jnp.transpose(p, (0, 1, 2, 4, 3))                          # (B, OH, OW, C, KK)
    p = p.reshape(B, OH, OW, C * ksize * ksize)
    groups = [
        p[:, di::2, dj::2, :].reshape(B * OH2 * OW2, C * ksize * ksize)
        for di in (0, 1) for dj in (0, 1)
    ]
    return groups, (B, OH2, OW2)


def _prep_conv(w, b):
    """(OC,IC,K,K) torch conv weight -> (IC*K*K, 128) bf16, bias -> (1,128) f32."""
    oc = w.shape[0]
    k2 = w.shape[1] * w.shape[2] * w.shape[3]
    wm = jnp.pad(w.reshape(oc, k2).T, ((0, 0), (0, LANES - oc))).astype(jnp.bfloat16)
    bm = jnp.pad(b.reshape(1, oc), ((0, 0), (0, LANES - oc))).astype(jnp.float32)
    return wm, bm


def alphabet_with_scallop_forward(x_nchw, params):
    """x_nchw: (B, 1, 28, 28) float32 -> (B, 26) probabilities."""
    B = x_nchw.shape[0]
    x = jnp.transpose(x_nchw, (0, 2, 3, 1)).astype(jnp.bfloat16)    # NHWC (B,28,28,1)

    # ---- conv1(1->32, k=5) + maxpool2, fused in one Pallas kernel ----
    w1c, b1c = _prep_conv(params["conv1_w"], params["conv1_b"])     # (25,128),(1,128)
    # TODO(synk): im2col patch extraction stays in XLA glue; in-kernel
    # shift-and-accumulate would avoid the patch materialization but is
    # layout-fragile at these tiny spatial shapes.
    groups, (b_, oh2, ow2) = _im2col_pool_groups(x, 5)              # 4 x (B*144, 25)
    y = conv_pool(groups, w1c, b1c)                                 # (B*144, 128) bf16
    y = y[:, :32].reshape(b_, oh2, ow2, 32)                         # (B,12,12,32)

    # ---- conv2(32->64, k=5) + maxpool2, fused ----
    w2c, b2c = _prep_conv(params["conv2_w"], params["conv2_b"])     # (800,128),(1,128)
    groups, (b_, oh2, ow2) = _im2col_pool_groups(y, 5)              # 4 x (B*16, 800)
    y = conv_pool(groups, w2c, b2c)                                 # (B*16, 128) bf16
    y = y[:, :64].reshape(b_, oh2, ow2, 64)                         # (B,4,4,64)

    # ---- flatten exactly like torch: (B,64,4,4).view(-1,1024) (NCHW order) ----
    feat = jnp.transpose(y, (0, 3, 1, 2)).reshape(B, 1024)          # bf16

    # ---- fused fc1 + relu + fc2 + softmax ----
    w1 = params["fc1_w"].T.astype(jnp.bfloat16)                     # (1024,1024)
    b1 = params["fc1_b"].reshape(1, 1024).astype(jnp.float32)
    w2 = jnp.pad(params["fc2_w"].T,
                 ((0, 0), (0, LANES - NUM_CLASSES))).astype(jnp.bfloat16)  # (1024,128)
    b2 = jnp.pad(params["fc2_b"].reshape(1, NUM_CLASSES),
                 ((0, 0), (0, LANES - NUM_CLASSES)),
                 constant_values=-1e30).astype(jnp.float32)         # (1,128)
    probs = mlp_softmax(feat, w1, b1, w2, b2)                       # (B,128) f32

    # Scallop `result(x) = letter(x)` under difftopkproofs == identity on probs.
    return probs[:, :NUM_CLASSES]


# ----------------------------------------------------------------------------
# Deterministic parameter init (PyTorch-like uniform fan-in bounds)
# ----------------------------------------------------------------------------
def init_params(key):
    ks = jax.random.split(key, 8)

    def u(k, shape, fan_in):
        bound = 1.0 / jnp.sqrt(fan_in)
        return jax.random.uniform(k, shape, jnp.float32, -bound, bound)

    return {
        "conv1_w": u(ks[0], (32, 1, 5, 5), 1 * 5 * 5),
        "conv1_b": u(ks[1], (32,), 1 * 5 * 5),
        "conv2_w": u(ks[2], (64, 32, 5, 5), 32 * 5 * 5),
        "conv2_b": u(ks[3], (64,), 32 * 5 * 5),
        "fc1_w": u(ks[4], (1024, 1024), 1024),
        "fc1_b": u(ks[5], (1024,), 1024),
        "fc2_w": u(ks[6], (NUM_CLASSES, 1024), 1024),
        "fc2_b": u(ks[7], (NUM_CLASSES,), 1024),
    }


if __name__ == "__main__":
    key = jax.random.PRNGKey(0)
    pkey, xkey = jax.random.split(key)
    params = init_params(pkey)

    # batch=2, single channel, 28x28 (required so flatten yields 1024 features)
    x = jax.random.normal(xkey, (2, 1, 28, 28), dtype=jnp.float32)

    out = jax.jit(alphabet_with_scallop_forward)(x, params)
    out = jax.block_until_ready(out)

    assert out.shape == (2, NUM_CLASSES)
    assert bool(jnp.all(jnp.isfinite(out)))
    assert bool(jnp.all(out >= 0.0))
    # probabilities sum to 1 (approx-reciprocal softmax + bf16 operands -> loose tol)
    assert bool(jnp.allclose(jnp.sum(out, axis=1), 1.0, atol=1e-2))
    print("KERNEL_OK")
</pallas_src>

<mosaic_0001>
module attributes {stable_mosaic.version = 11 : i64} {
  func.func @_conv_pool_kernel(%arg0: i32, %arg1: memref<256x25xbf16, #tpu.memory_space<vmem>>, %arg2: memref<256x25xbf16, #tpu.memory_space<vmem>>, %arg3: memref<256x25xbf16, #tpu.memory_space<vmem>>, %arg4: memref<256x25xbf16, #tpu.memory_space<vmem>>, %arg5: memref<25x128xbf16, #tpu.memory_space<vmem>>, %arg6: memref<1x128xf32, #tpu.memory_space<vmem>>, %arg7: memref<256x128xbf16, #tpu.memory_space<vmem>>) attributes {dimension_semantics = [#tpu.dimension_semantics<parallel>], iteration_bounds = array<i64: 2>, scalar_prefetch = 0 : i64, scratch_operands = 0 : i64, tpu.core_type = #tpu.core_type<tc>, window_params = [{transform_indices = @transform_0, window_bounds = array<i64: 256, 25>}, {transform_indices = @transform_1, window_bounds = array<i64: 256, 25>}, {transform_indices = @transform_2, window_bounds = array<i64: 256, 25>}, {transform_indices = @transform_3, window_bounds = array<i64: 256, 25>}, {pipeline_mode = #tpu.pipeline_mode<synchronous>, transform_indices = @transform_4, window_bounds = array<i64: 25, 128>}, {pipeline_mode = #tpu.pipeline_mode<synchronous>, transform_indices = @transform_5, window_bounds = array<i64: 1, 128>}, {transform_indices = @transform_6, window_bounds = array<i64: 256, 128>}]} {
    %c0 = arith.constant 0 : index
    %c0_0 = arith.constant 0 : index
    %0 = vector.load %arg5[%c0, %c0_0] : memref<25x128xbf16, #tpu.memory_space<vmem>>, vector<25x128xbf16>
    %c0_1 = arith.constant 0 : index
    %c0_2 = arith.constant 0 : index
    %1 = vector.load %arg1[%c0_1, %c0_2] : memref<256x25xbf16, #tpu.memory_space<vmem>>, vector<256x25xbf16>
    %cst = arith.constant dense<0.000000e+00> : vector<256x128xf32>
    %2 = tpu.matmul %1, %0, %cst {dimension_numbers = #tpu.dot_dimension_numbers<[1], [0], [0], [1], [0, 0, 1, 1], [], []>} : vector<256x25xbf16>, vector<25x128xbf16>, vector<256x128xf32> -> vector<256x128xf32>
    %c0_3 = arith.constant 0 : index
    %c0_4 = arith.constant 0 : index
    %3 = vector.load %arg2[%c0_3, %c0_4] : memref<256x25xbf16, #tpu.memory_space<vmem>>, vector<256x25xbf16>
    %cst_5 = arith.constant dense<0.000000e+00> : vector<256x128xf32>
    %4 = tpu.matmul %3, %0, %cst_5 {dimension_numbers = #tpu.dot_dimension_numbers<[1], [0], [0], [1], [0, 0, 1, 1], [], []>} : vector<256x25xbf16>, vector<25x128xbf16>, vector<256x128xf32> -> vector<256x128xf32>
    %c0_6 = arith.constant 0 : index
    %c0_7 = arith.constant 0 : index
    %5 = vector.load %arg3[%c0_6, %c0_7] : memref<256x25xbf16, #tpu.memory_space<vmem>>, vector<256x25xbf16>
    %cst_8 = arith.constant dense<0.000000e+00> : vector<256x128xf32>
    %6 = tpu.matmul %5, %0, %cst_8 {dimension_numbers = #tpu.dot_dimension_numbers<[1], [0], [0], [1], [0, 0, 1, 1], [], []>} : vector<256x25xbf16>, vector<25x128xbf16>, vector<256x128xf32> -> vector<256x128xf32>
    %c0_9 = arith.constant 0 : index
    %c0_10 = arith.constant 0 : index
    %7 = vector.load %arg4[%c0_9, %c0_10] : memref<256x25xbf16, #tpu.memory_space<vmem>>, vector<256x25xbf16>
    %cst_11 = arith.constant dense<0.000000e+00> : vector<256x128xf32>
    %8 = tpu.matmul %7, %0, %cst_11 {dimension_numbers = #tpu.dot_dimension_numbers<[1], [0], [0], [1], [0, 0, 1, 1], [], []>} : vector<256x25xbf16>, vector<25x128xbf16>, vector<256x128xf32> -> vector<256x128xf32>
    %9 = arith.maximumf %2, %4 : vector<256x128xf32>
    %10 = arith.maximumf %6, %8 : vector<256x128xf32>
    %11 = arith.maximumf %9, %10 : vector<256x128xf32>
    %c0_12 = arith.constant 0 : index
    %c0_13 = arith.constant 0 : index
    %12 = vector.load %arg6[%c0_12, %c0_13] : memref<1x128xf32, #tpu.memory_space<vmem>>, vector<1x128xf32>
    %13 = vector.broadcast %12 : vector<1x128xf32> to vector<256x128xf32>
    %14 = arith.addf %11, %13 : vector<256x128xf32>
    %15 = arith.truncf %14 : vector<256x128xf32> to vector<256x128xbf16>
    %c0_14 = arith.constant 0 : index
    %c0_15 = arith.constant 0 : index
    %16 = vector.load %arg7[%c0_14, %c0_15] : memref<256x128xbf16, #tpu.memory_space<vmem>>, vector<256x128xbf16>
    tpu.vector_store %arg7[%c0_14, %c0_15], %15 {strides = array<i32>} : memref<256x128xbf16, #tpu.memory_space<vmem>>, vector<256x128xbf16>,
    return
  }
  func.func @transform_0(%arg0: i32) -> (i32, i32) {
    %c0_i32 = arith.constant 0 : i32
    %c0_i32_0 = arith.constant 0 : i32
    return %arg0, %c0_i32 : i32, i32
  }
  func.func @transform_1(%arg0: i32) -> (i32, i32) {
    %c0_i32 = arith.constant 0 : i32
    %c0_i32_0 = arith.constant 0 : i32
    return %arg0, %c0_i32 : i32, i32
  }
  func.func @transform_2(%arg0: i32) -> (i32, i32) {
    %c0_i32 = arith.constant 0 : i32
    %c0_i32_0 = arith.constant 0 : i32
    return %arg0, %c0_i32 : i32, i32
  }
  func.func @transform_3(%arg0: i32) -> (i32, i32) {
    %c0_i32 = arith.constant 0 : i32
    %c0_i32_0 = arith.constant 0 : i32
    return %arg0, %c0_i32 : i32, i32
  }
  func.func @transform_4(%arg0: i32) -> (i32, i32) {
    %c0_i32 = arith.constant 0 : i32
    %c0_i32_0 = arith.constant 0 : i32
    %c0_i32_1 = arith.constant 0 : i32
    return %c0_i32, %c0_i32_0 : i32, i32
  }
  func.func @transform_5(%arg0: i32) -> (i32, i32) {
    %c0_i32 = arith.constant 0 : i32
    %c0_i32_0 = arith.constant 0 : i32
    %c0_i32_1 = arith.constant 0 : i32
    return %c0_i32, %c0_i32_0 : i32, i32
  }
  func.func @transform_6(%arg0: i32) -> (i32, i32) {
    %c0_i32 = arith.constant 0 : i32
    %c0_i32_0 = arith.constant 0 : i32
    return %arg0, %c0_i32 : i32, i32
  }
}

module attributes {stable_mosaic.version = 11 : i64} {
  func.func @_conv_pool_kernel(%arg0: i32, %arg1: memref<32x800xbf16, #tpu.memory_space<vmem>>, %arg2: memref<32x800xbf16, #tpu.memory_space<vmem>>, %arg3: memref<32x800xbf16, #tpu.memory_space<vmem>>, %arg4: memref<32x800xbf16, #tpu.memory_space<vmem>>, %arg5: memref<800x128xbf16, #tpu.memory_space<vmem>>, %arg6: memref<1x128xf32, #tpu.memory_space<vmem>>, %arg7: memref<32x128xbf16, #tpu.memory_space<vmem>>) attributes {dimension_semantics = [#tpu.dimension_semantics<parallel>], iteration_bounds = array<i64: 1>, scalar_prefetch = 0 : i64, scratch_operands = 0 : i64, tpu.core_type = #tpu.core_type<tc>, window_params = [{transform_indices = @transform_0, window_bounds = array<i64: 32, 800>}, {transform_indices = @transform_1, window_bounds = array<i64: 32, 800>}, {transform_indices = @transform_2, window_bounds = array<i64: 32, 800>}, {transform_indices = @transform_3, window_bounds = array<i64: 32, 800>}, {pipeline_mode = #tpu.pipeline_mode<synchronous>, transform_indices = @transform_4, window_bounds = array<i64: 800, 128>}, {pipeline_mode = #tpu.pipeline_mode<synchronous>, transform_indices = @transform_5, window_bounds = array<i64: 1, 128>}, {transform_indices = @transform_6, window_bounds = array<i64: 32, 128>}]} {
    %c0 = arith.constant 0 : index
    %c0_0 = arith.constant 0 : index
    %0 = vector.load %arg5[%c0, %c0_0] : memref<800x128xbf16, #tpu.memory_space<vmem>>, vector<800x128xbf16>
    %c0_1 = arith.constant 0 : index
    %c0_2 = arith.constant 0 : index
    %1 = vector.load %arg1[%c0_1, %c0_2] : memref<32x800xbf16, #tpu.memory_space<vmem>>, vector<32x800xbf16>
    %cst = arith.constant dense<0.000000e+00> : vector<32x128xf32>
    %2 = tpu.matmul %1, %0, %cst {dimension_numbers = #tpu.dot_dimension_numbers<[1], [0], [0], [1], [0, 0, 1, 1], [], []>} : vector<32x800xbf16>, vector<800x128xbf16>, vector<32x128xf32> -> vector<32x128xf32>
    %c0_3 = arith.constant 0 : index
    %c0_4 = arith.constant 0 : index
    %3 = vector.load %arg2[%c0_3, %c0_4] : memref<32x800xbf16, #tpu.memory_space<vmem>>, vector<32x800xbf16>
    %cst_5 = arith.constant dense<0.000000e+00> : vector<32x128xf32>
    %4 = tpu.matmul %3, %0, %cst_5 {dimension_numbers = #tpu.dot_dimension_numbers<[1], [0], [0], [1], [0, 0, 1, 1], [], []>} : vector<32x800xbf16>, vector<800x128xbf16>, vector<32x128xf32> -> vector<32x128xf32>
    %c0_6 = arith.constant 0 : index
    %c0_7 = arith.constant 0 : index
    %5 = vector.load %arg3[%c0_6, %c0_7] : memref<32x800xbf16, #tpu.memory_space<vmem>>, vector<32x800xbf16>
    %cst_8 = arith.constant dense<0.000000e+00> : vector<32x128xf32>
    %6 = tpu.matmul %5, %0, %cst_8 {dimension_numbers = #tpu.dot_dimension_numbers<[1], [0], [0], [1], [0, 0, 1, 1], [], []>} : vector<32x800xbf16>, vector<800x128xbf16>, vector<32x128xf32> -> vector<32x128xf32>
    %c0_9 = arith.constant 0 : index
    %c0_10 = arith.constant 0 : index
    %7 = vector.load %arg4[%c0_9, %c0_10] : memref<32x800xbf16, #tpu.memory_space<vmem>>, vector<32x800xbf16>
    %cst_11 = arith.constant dense<0.000000e+00> : vector<32x128xf32>
    %8 = tpu.matmul %7, %0, %cst_11 {dimension_numbers = #tpu.dot_dimension_numbers<[1], [0], [0], [1], [0, 0, 1, 1], [], []>} : vector<32x800xbf16>, vector<800x128xbf16>, vector<32x128xf32> -> vector<32x128xf32>
    %9 = arith.maximumf %2, %4 : vector<32x128xf32>
    %10 = arith.maximumf %6, %8 : vector<32x128xf32>
    %11 = arith.maximumf %9, %10 : vector<32x128xf32>
    %c0_12 = arith.constant 0 : index
    %c0_13 = arith.constant 0 : index
    %12 = vector.load %arg6[%c0_12, %c0_13] : memref<1x128xf32, #tpu.memory_space<vmem>>, vector<1x128xf32>
    %13 = vector.broadcast %12 : vector<1x128xf32> to vector<32x128xf32>
    %14 = arith.addf %11, %13 : vector<32x128xf32>
    %15 = arith.truncf %14 : vector<32x128xf32> to vector<32x128xbf16>
    %c0_14 = arith.constant 0 : index
    %c0_15 = arith.constant 0 : index
    %16 = vector.load %arg7[%c0_14, %c0_15] : memref<32x128xbf16, #tpu.memory_space<vmem>>, vector<32x128xbf16>
    tpu.vector_store %arg7[%c0_14, %c0_15], %15 {strides = array<i32>} : memref<32x128xbf16, #tpu.memory_space<vmem>>, vector<32x128xbf16>,
    return
  }
  func.func @transform_0(%arg0: i32) -> (i32, i32) {
    %c0_i32 = arith.constant 0 : i32
    %c0_i32_0 = arith.constant 0 : i32
    return %arg0, %c0_i32 : i32, i32
  }
  func.func @transform_1(%arg0: i32) -> (i32, i32) {
    %c0_i32 = arith.constant 0 : i32
    %c0_i32_0 = arith.constant 0 : i32
    return %arg0, %c0_i32 : i32, i32
  }
  func.func @transform_2(%arg0: i32) -> (i32, i32) {
    %c0_i32 = arith.constant 0 : i32
    %c0_i32_0 = arith.constant 0 : i32
    return %arg0, %c0_i32 : i32, i32
  }
  func.func @transform_3(%arg0: i32) -> (i32, i32) {
    %c0_i32 = arith.constant 0 : i32
    %c0_i32_0 = arith.constant 0 : i32
    return %arg0, %c0_i32 : i32, i32
  }
  func.func @transform_4(%arg0: i32) -> (i32, i32) {
    %c0_i32 = arith.constant 0 : i32
    %c0_i32_0 = arith.constant 0 : i32
    %c0_i32_1 = arith.constant 0 : i32
    return %c0_i32, %c0_i32_0 : i32, i32
  }
  func.func @transform_5(%arg0: i32) -> (i32, i32) {
    %c0_i32 = arith.constant 0 : i32
    %c0_i32_0 = arith.constant 0 : i32
    %c0_i32_1 = arith.constant 0 : i32
    return %c0_i32, %c0_i32_0 : i32, i32
  }
  func.func @transform_6(%arg0: i32) -> (i32, i32) {
    %c0_i32 = arith.constant 0 : i32
    %c0_i32_0 = arith.constant 0 : i32
    return %arg0, %c0_i32 : i32, i32
  }
}

module attributes {stable_mosaic.version = 11 : i64} {
  func.func @_mlp_softmax_kernel(%arg0: i32, %arg1: memref<8x1024xbf16, #tpu.memory_space<vmem>>, %arg2: memref<1024x1024xbf16, #tpu.memory_space<vmem>>, %arg3: memref<1x1024xf32, #tpu.memory_space<vmem>>, %arg4: memref<1024x128xbf16, #tpu.memory_space<vmem>>, %arg5: memref<1x128xf32, #tpu.memory_space<vmem>>, %arg6: memref<8x128xf32, #tpu.memory_space<vmem>>) attributes {dimension_semantics = [#tpu.dimension_semantics<parallel>], iteration_bounds = array<i64: 1>, scalar_prefetch = 0 : i64, scratch_operands = 0 : i64, tpu.core_type = #tpu.core_type<tc>, window_params = [{transform_indices = @transform_0, window_bounds = array<i64: 8, 1024>}, {pipeline_mode = #tpu.pipeline_mode<synchronous>, transform_indices = @transform_1, window_bounds = array<i64: 1024, 1024>}, {pipeline_mode = #tpu.pipeline_mode<synchronous>, transform_indices = @transform_2, window_bounds = array<i64: 1, 1024>}, {pipeline_mode = #tpu.pipeline_mode<synchronous>, transform_indices = @transform_3, window_bounds = array<i64: 1024, 128>}, {pipeline_mode = #tpu.pipeline_mode<synchronous>, transform_indices = @transform_4, window_bounds = array<i64: 1, 128>}, {transform_indices = @transform_5, window_bounds = array<i64: 8, 128>}]} {
    %c0 = arith.constant 0 : index
    %c0_0 = arith.constant 0 : index
    %0 = vector.load %arg1[%c0, %c0_0] : memref<8x1024xbf16, #tpu.memory_space<vmem>>, vector<8x1024xbf16>
    %c0_1 = arith.constant 0 : index
    %c0_2 = arith.constant 0 : index
    %1 = vector.load %arg2[%c0_1, %c0_2] : memref<1024x1024xbf16, #tpu.memory_space<vmem>>, vector<1024x1024xbf16>
    %cst = arith.constant dense<0.000000e+00> : vector<8x1024xf32>
    %2 = tpu.matmul %0, %1, %cst {dimension_numbers = #tpu.dot_dimension_numbers<[1], [0], [0], [1], [0, 0, 1, 1], [], []>} : vector<8x1024xbf16>, vector<1024x1024xbf16>, vector<8x1024xf32> -> vector<8x1024xf32>
    %c0_3 = arith.constant 0 : index
    %c0_4 = arith.constant 0 : index
    %3 = vector.load %arg3[%c0_3, %c0_4] : memref<1x1024xf32, #tpu.memory_space<vmem>>, vector<1x1024xf32>
    %4 = vector.broadcast %3 : vector<1x1024xf32> to vector<8x1024xf32>
    %5 = arith.addf %2, %4 : vector<8x1024xf32>
    %cst_5 = arith.constant 0.000000e+00 : f32
    %6 = vector.broadcast %cst_5 : f32 to vector<8x1024xf32>
    %7 = arith.maximumf %5, %6 : vector<8x1024xf32>
    %8 = arith.truncf %7 : vector<8x1024xf32> to vector<8x1024xbf16>
    %c0_6 = arith.constant 0 : index
    %c0_7 = arith.constant 0 : index
    %9 = vector.load %arg4[%c0_6, %c0_7] : memref<1024x128xbf16, #tpu.memory_space<vmem>>, vector<1024x128xbf16>
    %cst_8 = arith.constant dense<0.000000e+00> : vector<8x128xf32>
    %10 = tpu.matmul %8, %9, %cst_8 {dimension_numbers = #tpu.dot_dimension_numbers<[1], [0], [0], [1], [0, 0, 1, 1], [], []>} : vector<8x1024xbf16>, vector<1024x128xbf16>, vector<8x128xf32> -> vector<8x128xf32>
    %c0_9 = arith.constant 0 : index
    %c0_10 = arith.constant 0 : index
    %11 = vector.load %arg5[%c0_9, %c0_10] : memref<1x128xf32, #tpu.memory_space<vmem>>, vector<1x128xf32>
    %12 = vector.broadcast %11 : vector<1x128xf32> to vector<8x128xf32>
    %13 = arith.addf %10, %12 : vector<8x128xf32>
    %cst_11 = arith.constant dense<0xFF800000> : vector<8xf32>
    %14 = vector.multi_reduction <maximumf>, %13, %cst_11 [1] : vector<8x128xf32> to vector<8xf32>
    %15 = vector.shape_cast %14 : vector<8xf32> to vector<8x1xf32>
    %16 = vector.broadcast %15 : vector<8x1xf32> to vector<8x128xf32>
    %17 = arith.subf %13, %16 : vector<8x128xf32>
    %18 = math.exp %17 : vector<8x128xf32>
    %cst_12 = arith.constant dense<0.000000e+00> : vector<8xf32>
    %19 = vector.multi_reduction <add>, %18, %cst_12 [1] : vector<8x128xf32> to vector<8xf32>
    %20 = vector.shape_cast %19 : vector<8xf32> to vector<8x1xf32>
    %21 = tpu.reciprocal %20 {approx = true} : vector<8x1xf32> -> vector<8x1xf32>
    %22 = vector.broadcast %21 : vector<8x1xf32> to vector<8x128xf32>
    %23 = arith.mulf %18, %22 : vector<8x128xf32>
    %c0_13 = arith.constant 0 : index
    %c0_14 = arith.constant 0 : index
    %24 = vector.load %arg6[%c0_13, %c0_14] : memref<8x128xf32, #tpu.memory_space<vmem>>, vector<8x128xf32>
    tpu.vector_store %arg6[%c0_13, %c0_14], %23 {strides = array<i32>} : memref<8x128xf32, #tpu.memory_space<vmem>>, vector<8x128xf32>,
    return
  }
  func.func @transform_0(%arg0: i32) -> (i32, i32) {
    %c0_i32 = arith.constant 0 : i32
    %c0_i32_0 = arith.constant 0 : i32
    return %arg0, %c0_i32 : i32, i32
  }
  func.func @transform_1(%arg0: i32) -> (i32, i32) {
    %c0_i32 = arith.constant 0 : i32
    %c0_i32_0 = arith.constant 0 : i32
    %c0_i32_1 = arith.constant 0 : i32
    return %c0_i32, %c0_i32_0 : i32, i32
  }
  func.func @transform_2(%arg0: i32) -> (i32, i32) {
    %c0_i32 = arith.constant 0 : i32
    %c0_i32_0 = arith.constant 0 : i32
    %c0_i32_1 = arith.constant 0 : i32
    return %c0_i32, %c0_i32_0 : i32, i32
  }
  func.func @transform_3(%arg0: i32) -> (i32, i32) {
    %c0_i32 = arith.constant 0 : i32
    %c0_i32_0 = arith.constant 0 : i32
    %c0_i32_1 = arith.constant 0 : i32
    return %c0_i32, %c0_i32_0 : i32, i32
  }
  func.func @transform_4(%arg0: i32) -> (i32, i32) {
    %c0_i32 = arith.constant 0 : i32
    %c0_i32_0 = arith.constant 0 : i32
    %c0_i32_1 = arith.constant 0 : i32
    return %c0_i32, %c0_i32_0 : i32, i32
  }
  func.func @transform_5(%arg0: i32) -> (i32, i32) {
    %c0_i32 = arith.constant 0 : i32
    %c0_i32_0 = arith.constant 0 : i32
    return %arg0, %c0_i32 : i32, i32
  }
}

</mosaic_0001>

<llo_original>
// kernel: alphabet_with_scallop_forward.3
$region0: #{alphabet_with_scallop_forward.3}
  #allocation0 [shape = 'u32[]', space=smem, size = 0x4, offset = 0x4, fixed_abs, tag = 'smem constant byte address 0x4 - core index']
  #allocation1 [shape = 'u32[144,128]{1,0:T(1,128)}', space=vmem, size = 0x12000, scoped, tag = 'internal scratch']
  %s0 = inlined_call_operand.vmem [shape: bf16[512,25], index: 0, kind: input, shape index: {}]
  %s1 = inlined_call_operand.vmem [shape: bf16[512,25], index: 1, kind: input, shape index: {}]
  %s2 = inlined_call_operand.vmem [shape: bf16[512,25], index: 2, kind: input, shape index: {}]
  %s3 = inlined_call_operand.vmem [shape: bf16[512,25], index: 3, kind: input, shape index: {}]
  %s4 = inlined_call_operand.vmem [shape: bf16[25,128], index: 4, kind: input, shape index: {}]
  %s5 = inlined_call_operand.vmem [shape: f32[1,128], index: 5, kind: input, shape index: {}]
  %s6 = inlined_call_operand.vmem [shape: bf16[512,128], index: 6, kind: output, shape index: {}]
  %s7 = sld [smem:[#allocation0]]
  $region57: #{alphabet_with_scallop_forward.3} parent=0
    _
  %s9 = ssub.s32 1, %s7
  %s10 = scalar_select 0, %s9, %s7
  loop: start=0, step=1, limit=4
  $region2: #{alphabet_with_scallop_forward.3} parent=0 // loop_pre_header
    _
  $region3: #{alphabet_with_scallop_forward.3} parent=0 // loop_header
    %s12 = sphi 0, %s16
    %p13 = scmp.ge.s32.totalorder %s12, 4
    %s22 = sphi 0, %s24
    %s25 = sphi 0, %s22
    %s26 = sphi 0, %s25
    %s42 = sphi 0, %s26
    %s48 = sphi 0, %s50
    %s51 = sphi 0, %s48
    %s52 = sphi 0, %s51
    %s68 = sphi 0, %s52
    %s74 = sphi 0, %s76
    %s77 = sphi 0, %s74
    %s78 = sphi 0, %s77
    %s94 = sphi 0, %s78
    %s100 = sphi 0, %s102
    %s103 = sphi 0, %s100
    %s104 = sphi 0, %s103
    %s120 = sphi 0, %s104
    %s124 = sphi 0, %s124
    %s126 = sphi 0, %s124
    %s127 = sphi 0, %s126
    %s141 = sphi 0, %s127
    %s145 = sphi 0, %s145
    %s147 = sphi 0, %s145
    %s148 = sphi 0, %s147
    %s162 = sphi 0, %s148
    %s168 = sphi 0, %s170
    %s171 = sphi 0, %s168
    %s172 = sphi 0, %s171
    %s188 = sphi 0, %s172
  $region4: #{alphabet_with_scallop_forward.3} parent=0 // loop_header_branch
    %15 = sbr.rel (%p13) target = $region8
  $region5: #{alphabet_with_scallop_forward.3} parent=0 // loop_body
    %s17 = ssub.s32 %s12, 1
    %s18 = ssub.s32 %s12, 2
    %s19 = sadd.s32 %s12, 1
    %s20 = ssub.s32 %s12, %s19
    %p21 = scmp.eq.s32.totalorder %s20, 0
    %s23 = sadd.s32 %s22, 1
    %s24 = scalar_select %p21, %s22, %s23
    %p27 = pneg %p21
    %p28 = scmp.eq.s32.totalorder %s12, 1
    %p29 = por %p27, %p28
    %p30 = scmp.ne.s32.totalorder %s22, %s25
    %p31 = scmp.eq.s32.totalorder %s12, 0
    %p32 = por %p30, %p31
    %p33 = scmp.ne.s32.totalorder %s22, %s25
    %p34 = scmp.eq.s32.totalorder %s17, 1
    %p35 = por %p33, %p34
    %p36 = scmp.ne.s32.totalorder %s25, %s26
    %p37 = scmp.eq.s32.totalorder %s17, 0
    %p38 = por %p36, %p37
    %p39 = scmp.ne.s32.totalorder %s25, %s26
    %p40 = scmp.eq.s32.totalorder %s18, 1
    %p41 = por %p39, %p40
    %p43 = scmp.ne.s32.totalorder %s26, %s42
    %p44 = scmp.eq.s32.totalorder %s18, 0
    %p45 = por %p43, %p44
    %s46 = ssub.s32 %s12, %s19
    %p47 = scmp.eq.s32.totalorder %s46, 0
    %s49 = sadd.s32 %s48, 1
    %s50 = scalar_select %p47, %s48, %s49
    %p53 = pneg %p47
    %p54 = scmp.eq.s32.totalorder %s12, 1
    %p55 = por %p53, %p54
    %p56 = scmp.ne.s32.totalorder %s48, %s51
    %p57 = scmp.eq.s32.totalorder %s12, 0
    %p58 = por %p56, %p57
    %p59 = scmp.ne.s32.totalorder %s48, %s51
    %p60 = scmp.eq.s32.totalorder %s17, 1
    %p61 = por %p59, %p60
    %p62 = scmp.ne.s32.totalorder %s51, %s52
    %p63 = scmp.eq.s32.totalorder %s17, 0
    %p64 = por %p62, %p63
    %p65 = scmp.ne.s32.totalorder %s51, %s52
    %p66 = scmp.eq.s32.totalorder %s18, 1
    %p67 = por %p65, %p66
    %p69 = scmp.ne.s32.totalorder %s52, %s68
    %p70 = scmp.eq.s32.totalorder %s18, 0
    %p71 = por %p69, %p70
    %s72 = ssub.s32 %s12, %s19
    %p73 = scmp.eq.s32.totalorder %s72, 0
    %s75 = sadd.s32 %s74, 1
    %s76 = scalar_select %p73, %s74, %s75
    %p79 = pneg %p73
    %p80 = scmp.eq.s32.totalorder %s12, 1
    %p81 = por %p79, %p80
    %p82 = scmp.ne.s32.totalorder %s74, %s77
    %p83 = scmp.eq.s32.totalorder %s12, 0
    %p84 = por %p82, %p83
    %p85 = scmp.ne.s32.totalorder %s74, %s77
    %p86 = scmp.eq.s32.totalorder %s17, 1
    %p87 = por %p85, %p86
    %p88 = scmp.ne.s32.totalorder %s77, %s78
    %p89 = scmp.eq.s32.totalorder %s17, 0
    %p90 = por %p88, %p89
    %p91 = scmp.ne.s32.totalorder %s77, %s78
    %p92 = scmp.eq.s32.totalorder %s18, 1
    %p93 = por %p91, %p92
    %p95 = scmp.ne.s32.totalorder %s78, %s94
    %p96 = scmp.eq.s32.totalorder %s18, 0
    %p97 = por %p95, %p96
    %s98 = ssub.s32 %s12, %s19
    %p99 = scmp.eq.s32.totalorder %s98, 0
    %s101 = sadd.s32 %s100, 1
    %s102 = scalar_select %p99, %s100, %s101
    %p105 = pneg %p99
    %p106 = scmp.eq.s32.totalorder %s12, 1
    %p107 = por %p105, %p106
    %p108 = scmp.ne.s32.totalorder %s100, %s103
    %p109 = scmp.eq.s32.totalorder %s12, 0
    %p110 = por %p108, %p109
    %p111 = scmp.ne.s32.totalorder %s100, %s103
    %p112 = scmp.eq.s32.totalorder %s17, 1
    %p113 = por %p111, %p112
    %p114 = scmp.ne.s32.totalorder %s103, %s104
    %p115 = scmp.eq.s32.totalorder %s17, 0
    %p116 = por %p114, %p115
    %p117 = scmp.ne.s32.totalorder %s103, %s104
    %p118 = scmp.eq.s32.totalorder %s18, 1
    %p119 = por %p117, %p118
    %p121 = scmp.ne.s32.totalorder %s104, %s120
    %p122 = scmp.eq.s32.totalorder %s18, 0
    %p123 = por %p121, %p122
    %s125 = sadd.s32 %s124, 1
    %p128 = scmp.eq.s32.totalorder %s12, 1
    %p129 = scmp.ne.s32.totalorder %s124, %s126
    %p130 = scmp.eq.s32.totalorder %s12, 0
    %p131 = por %p129, %p130
    %p132 = scmp.ne.s32.totalorder %s124, %s126
    %p133 = scmp.eq.s32.totalorder %s17, 1
    %p134 = por %p132, %p133
    %p135 = scmp.ne.s32.totalorder %s126, %s127
    %p136 = scmp.eq.s32.totalorder %s17, 0
    %p137 = por %p135, %p136
    %p138 = scmp.ne.s32.totalorder %s126, %s127
    %p139 = scmp.eq.s32.totalorder %s18, 1
    %p140 = por %p138, %p139
    %p142 = scmp.ne.s32.totalorder %s127, %s141
    %p143 = scmp.eq.s32.totalorder %s18, 0
    %p144 = por %p142, %p143
    %s146 = sadd.s32 %s145, 1
    %p149 = scmp.eq.s32.totalorder %s12, 1
    %p150 = scmp.ne.s32.totalorder %s145, %s147
    %p151 = scmp.eq.s32.totalorder %s12, 0
    %p152 = por %p150, %p151
    %p153 = scmp.ne.s32.totalorder %s145, %s147
    %p154 = scmp.eq.s32.totalorder %s17, 1
    %p155 = por %p153, %p154
    %p156 = scmp.ne.s32.totalorder %s147, %s148
    %p157 = scmp.eq.s32.totalorder %s17, 0
    %p158 = por %p156, %p157
    %p159 = scmp.ne.s32.totalorder %s147, %s148
    %p160 = scmp.eq.s32.totalorder %s18, 1
    %p161 = por %p159, %p160
    %p163 = scmp.ne.s32.totalorder %s148, %s162
    %p164 = scmp.eq.s32.totalorder %s18, 0
    %p165 = por %p163, %p164
    %s166 = ssub.s32 %s12, %s19
    %p167 = scmp.eq.s32.totalorder %s166, 0
    %s169 = sadd.s32 %s168, 1
    %s170 = scalar_select %p167, %s168, %s169
    %p173 = pneg %p167
    %p174 = scmp.eq.s32.totalorder %s12, 1
    %p175 = por %p173, %p174
    %p176 = scmp.ne.s32.totalorder %s168, %s171
    %p177 = scmp.eq.s32.totalorder %s12, 0
    %p178 = por %p176, %p177
    %p179 = scmp.ne.s32.totalorder %s168, %s171
    %p180 = scmp.eq.s32.totalorder %s17, 1
    %p181 = por %p179, %p180
    %p182 = scmp.ne.s32.totalorder %s171, %s172
    %p183 = scmp.eq.s32.totalorder %s17, 0
    %p184 = por %p182, %p183
    %p185 = scmp.ne.s32.totalorder %s171, %s172
    %p186 = scmp.eq.s32.totalorder %s18, 1
    %p187 = por %p185, %p186
    %p189 = scmp.ne.s32.totalorder %s172, %s188
    %p190 = scmp.eq.s32.totalorder %s18, 0
    %p191 = por %p189, %p190
    %p192 = scmp.le.s32.totalorder 1, %s12
    %p193 = scmp.lt.s32.totalorder %s12, 3
    %p194 = pnand %p192, %p193
    %p195 = pneg %p194
    // Predicated region
    $region9: #{alphabet_with_scallop_forward.3} parent=5 // pred_check
      _
    $region10: #{alphabet_with_scallop_forward.3} parent=5 // pred_check_branch
      %197 = sbr.rel (%p194) target = $region12
    $region11: #{alphabet_with_scallop_forward.3} parent=5 // pred_region
      %s198 = ssub.s32 %s12, 1
      // Predicated region
      $region13: #{alphabet_with_scallop_forward.3} parent=11 // pred_check
        %p199 = pneg %p137
      $region14: #{alphabet_with_scallop_forward.3} parent=11 // pred_check_branch
        %201 = sbr.rel (%p199) target = $region16
      $region15: #{alphabet_with_scallop_forward.3} parent=11 // pred_region
        _
      $region16: #{alphabet_with_scallop_forward.3} parent=11 // pred_fallthru
        _
      // Predicated region
      $region17: #{alphabet_with_scallop_forward.3} parent=11 // pred_check
        %p202 = pneg %p158
      $region18: #{alphabet_with_scallop_forward.3} parent=11 // pred_check_branch
        %204 = sbr.rel (%p202) target = $region20
      $region19: #{alphabet_with_scallop_forward.3} parent=11 // pred_region
        _
      $region20: #{alphabet_with_scallop_forward.3} parent=11 // pred_fallthru
        _
    $region12: #{alphabet_with_scallop_forward.3} parent=5 // pred_fallthru
      _
    %p205 = scmp.lt.s32.totalorder %s12, 2
    // Predicated region
    $region21: #{alphabet_with_scallop_forward.3} parent=5 // pred_check
      %p206 = pneg %p205
    $region22: #{alphabet_with_scallop_forward.3} parent=5 // pred_check_branch
      %208 = sbr.rel (%p206) target = $region24
    $region23: #{alphabet_with_scallop_forward.3} parent=5 // pred_region
      // Predicated region
      $region25: #{alphabet_with_scallop_forward.3} parent=23 // pred_check
        %p209 = pneg %p32
      $region26: #{alphabet_with_scallop_forward.3} parent=23 // pred_check_branch
        %211 = sbr.rel (%p209) target = $region28
      $region27: #{alphabet_with_scallop_forward.3} parent=23 // pred_region
        %s212 = smul.u32 32, %s12
        %p213 = scmp.lt.s32.totalorder %s212, 63
        %s214 = scalar_select %p213, %s212, 63
        %s215 = smul.addr %s214, 4
        %s216 = scalar_lea.vmem %s0, %s215
        %s217 = smul.u32 32, %s12
      $region28: #{alphabet_with_scallop_forward.3} parent=23 // pred_fallthru
        _
      // Predicated region
      $region29: #{alphabet_with_scallop_forward.3} parent=23 // pred_check
        %p218 = pneg %p58
      $region30: #{alphabet_with_scallop_forward.3} parent=23 // pred_check_branch
        %220 = sbr.rel (%p218) target = $region32
      $region31: #{alphabet_with_scallop_forward.3} parent=23 // pred_region
        %s221 = smul.u32 32, %s12
        %p222 = scmp.lt.s32.totalorder %s221, 63
        %s223 = scalar_select %p222, %s221, 63
        %s224 = smul.addr %s223, 4
        %s225 = scalar_lea.vmem %s1, %s224
        %s226 = smul.u32 32, %s12
      $region32: #{alphabet_with_scallop_forward.3} parent=23 // pred_fallthru
        _
      // Predicated region
      $region33: #{alphabet_with_scallop_forward.3} parent=23 // pred_check
        %p227 = pneg %p84
      $region34: #{alphabet_with_scallop_forward.3} parent=23 // pred_check_branch
        %229 = sbr.rel (%p227) target = $region36
      $region35: #{alphabet_with_scallop_forward.3} parent=23 // pred_region
        %s230 = smul.u32 32, %s12
        %p231 = scmp.lt.s32.totalorder %s230, 63
        %s232 = scalar_select %p231, %s230, 63
        %s233 = smul.addr %s232, 4
        %s234 = scalar_lea.vmem %s2, %s233
        %s235 = smul.u32 32, %s12
      $region36: #{alphabet_with_scallop_forward.3} parent=23 // pred_fallthru
        _
      // Predicated region
      $region37: #{alphabet_with_scallop_forward.3} parent=23 // pred_check
        %p236 = pneg %p110
      $region38: #{alphabet_with_scallop_forward.3} parent=23 // pred_check_branch
        %238 = sbr.rel (%p236) target = $region40
      $region39: #{alphabet_with_scallop_forward.3} parent=23 // pred_region
        %s239 = smul.u32 32, %s12
        %p240 = scmp.lt.s32.totalorder %s239, 63
        %s241 = scalar_select %p240, %s239, 63
        %s242 = smul.addr %s241, 4
        %s243 = scalar_lea.vmem %s3, %s242
        %s244 = smul.u32 32, %s12
      $region40: #{alphabet_with_scallop_forward.3} parent=23 // pred_fallthru
        _
    $region24: #{alphabet_with_scallop_forward.3} parent=5 // pred_fallthru
      _
    %p245 = scmp.le.s32.totalorder 1, %s12
    %p246 = scmp.lt.s32.totalorder %s12, 3
    %p247 = pnand %p245, %p246
    %p248 = pneg %p247
    // Predicated region
    $region41: #{alphabet_with_scallop_forward.3} parent=5 // pred_check
      _
    $region42: #{alphabet_with_scallop_forward.3} parent=5 // pred_check_branch
      %250 = sbr.rel (%p247) target = $region44
    $region43: #{alphabet_with_scallop_forward.3} parent=5 // pred_region
      %s251 = ssub.s32 %s12, 1
      %s252 = smul.u32 32, %s17
      %p253 = scmp.lt.s32.totalorder %s252, 63
      %s254 = scalar_select %p253, %s252, 63
      %s255 = smul.addr %s254, 4
      %s256 = scalar_lea.vmem %s0, %s255
      %p257 = pneg %p38
      %p258 = pneg %p35
      %s259 = smul.u32 32, %s17
      %p260 = scmp.lt.s32.totalorder %s259, 63
      %s261 = scalar_select %p260, %s259, 63
      %s262 = smul.addr %s261, 4
      %s263 = scalar_lea.vmem %s1, %s262
      %p264 = pneg %p64
      %p265 = pneg %p61
      %s266 = smul.u32 32, %s17
      %p267 = scmp.lt.s32.totalorder %s266, 63
      %s268 = scalar_select %p267, %s266, 63
      %s269 = smul.addr %s268, 4
      %s270 = scalar_lea.vmem %s2, %s269
      %p271 = pneg %p90
      %p272 = pneg %p87
      %s273 = smul.u32 32, %s17
      %p274 = scmp.lt.s32.totalorder %s273, 63
      %s275 = scalar_select %p274, %s273, 63
      %s276 = smul.addr %s275, 4
      %s277 = scalar_lea.vmem %s3, %s276
      %p278 = pneg %p116
      %p279 = pneg %p113
      %p280 = pneg %p137
      %p281 = pneg %p134
      %p282 = pneg %p158
      %p283 = pneg %p155
      %p284 = pneg %p184
      %p285 = pneg %p181
      %s286 = smul.u32 32, %s17
      %p287 = scmp.lt.s32.totalorder %s286, 63
      %s288 = scalar_select %p287, %s286, 63
      %s289 = smul.addr %s288, 4
      %s290 = scalar_lea.vmem %s6, %s289
      %s291 = smul.u32 32, %s17
      %p292 = scmp.lt.s32.totalorder %s291, 63
      %s293 = scalar_select %p292, %s291, 63
      %s294 = smul.addr %s293, 4
      %s295 = scalar_lea.vmem %s0, %s294
      %s296 = smul.u32 32, %s17
      %s297 = smul.u32 32, %s17
      %p298 = scmp.lt.s32.totalorder %s297, 63
      %s299 = scalar_select %p298, %s297, 63
      %s300 = smul.addr %s299, 4
      %s301 = scalar_lea.vmem %s1, %s300
      %s302 = smul.u32 32, %s17
      %s303 = smul.u32 32, %s17
      %p304 = scmp.lt.s32.totalorder %s303, 63
      %s305 = scalar_select %p304, %s303, 63
      %s306 = smul.addr %s305, 4
      %s307 = scalar_lea.vmem %s2, %s306
      %s308 = smul.u32 32, %s17
      %s309 = smul.u32 32, %s17
      %p310 = scmp.lt.s32.totalorder %s309, 63
      %s311 = scalar_select %p310, %s309, 63
      %s312 = smul.addr %s311, 4
      %s313 = scalar_lea.vmem %s3, %s312
      %s314 = smul.u32 32, %s17
      %s315 = smul.u32 32, %s17
      %p316 = scmp.lt.s32.totalorder %s315, 63
      %s317 = scalar_select %p316, %s315, 63
      %s318 = smul.addr %s317, 4
      %s319 = scalar_lea.vmem %s6, %s318
      %s320 = smul.u32 32, %s17
      %v322 = vld [vmem:[%s4] sm:$0xf]
      %v323 = vld [vmem:[%s4 + $0x4] sm:$0xf]
      %v324 = vld [vmem:[%s4 + $0x8] sm:$0xf]
      %v325 = vld [vmem:[%s4 + $0xc] sm:$0x1]
      %v326 = vld [vmem:[%s295] sm:$0xf]
      %v327 = vld [vmem:[%s295 + $0x4] sm:$0xf]
      %v328 = vld [vmem:[%s295 + $0x8] sm:$0xf]
      %v329 = vld [vmem:[%s295 + $0xc] sm:$0xf]
      %v330 = vld [vmem:[%s295 + $0x10] sm:$0xf]
      %v331 = vld [vmem:[%s295 + $0x14] sm:$0xf]
      %v332 = vld [vmem:[%s295 + $0x18] sm:$0xf]
      %v333 = vld [vmem:[%s295 + $0x1c] sm:$0xf]
      %v334 = vld [vmem:[%s295 + $0x20] sm:$0xf]
      %v335 = vld [vmem:[%s295 + $0x24] sm:$0xf]
      %v336 = vld [vmem:[%s295 + $0x28] sm:$0xf]
      %v337 = vld [vmem:[%s295 + $0x2c] sm:$0xf]
      %v338 = vld [vmem:[%s295 + $0x30] sm:$0xf]
      %v339 = vld [vmem:[%s295 + $0x34] sm:$0xf]
      %v340 = vld [vmem:[%s295 + $0x38] sm:$0xf]
      %v341 = vld [vmem:[%s295 + $0x3c] sm:$0xf]
      %v342 = vld [vmem:[%s295 + $0x40] sm:$0xf]
      %v343 = vld [vmem:[%s295 + $0x44] sm:$0xf]
      %v344 = vld [vmem:[%s295 + $0x48] sm:$0xf]
      %v345 = vld [vmem:[%s295 + $0x4c] sm:$0xf]
      %v346 = vld [vmem:[%s295 + $0x50] sm:$0xf]
      %v347 = vld [vmem:[%s295 + $0x54] sm:$0xf]
      %v348 = vld [vmem:[%s295 + $0x58] sm:$0xf]
      %v349 = vld [vmem:[%s295 + $0x5c] sm:$0xf]
      %v350 = vld [vmem:[%s295 + $0x60] sm:$0xf]
      %v351 = vld [vmem:[%s295 + $0x64] sm:$0xf]
      %v352 = vld [vmem:[%s295 + $0x68] sm:$0xf]
      %v353 = vld [vmem:[%s295 + $0x6c] sm:$0xf]
      %v354 = vld [vmem:[%s295 + $0x70] sm:$0xf]
      %v355 = vld [vmem:[%s295 + $0x74] sm:$0xf]
      %v356 = vld [vmem:[%s295 + $0x78] sm:$0xf]
      %v357 = vld [vmem:[%s295 + $0x7c] sm:$0xf]
      %v390 = vunpack.c.l.b16 %v326
      %v391 = vunpack.c.l.b16 %v327
      %v392 = vunpack.c.l.b16 %v328
      %v393 = vunpack.c.l.b16 %v329
      %v394 = vunpack.c.l.b16 %v330
      %v395 = vunpack.c.l.b16 %v331
      %v396 = vunpack.c.l.b16 %v332
      %v397 = vunpack.c.l.b16 %v333
      %v398 = vunpack.c.l.b16 %v334
      %v399 = vunpack.c.l.b16 %v335
      %v400 = vunpack.c.l.b16 %v336
      %v401 = vunpack.c.l.b16 %v337
      %v402 = vunpack.c.l.b16 %v338
      %v403 = vunpack.c.l.b16 %v339
      %v404 = vunpack.c.l.b16 %v340
      %v405 = vunpack.c.l.b16 %v341
      %v406 = vunpack.c.l.b16 %v342
      %v407 = vunpack.c.l.b16 %v343
      %v408 = vunpack.c.l.b16 %v344
      %v409 = vunpack.c.l.b16 %v345
      %v410 = vunpack.c.l.b16 %v346
      %v411 = vunpack.c.l.b16 %v347
      %v412 = vunpack.c.l.b16 %v348
      %v413 = vunpack.c.l.b16 %v349
      %v414 = vunpack.c.l.b16 %v350
      %v415 = vunpack.c.l.b16 %v351
      %v416 = vunpack.c.l.b16 %v352
      %v417 = vunpack.c.l.b16 %v353
      %v418 = vunpack.c.l.b16 %v354
      %v419 = vunpack.c.l.b16 %v355
      %v420 = vunpack.c.l.b16 %v356
      %v421 = vunpack.c.l.b16 %v357
      %v422 = vpack.c.b16 %v391, %v390
      %v423 = vpack.c.b16 %v393, %v392
      %v424 = vpack.c.b16 %v395, %v394
      %v425 = vpack.c.b16 %v397, %v396
      %v426 = vpack.c.b16 %v399, %v398
      %v427 = vpack.c.b16 %v401, %v400
      %v428 = vpack.c.b16 %v403, %v402
      %v429 = vpack.c.b16 %v405, %v404
      %v430 = vpack.c.b16 %v407, %v406
      %v431 = vpack.c.b16 %v409, %v408
      %v432 = vpack.c.b16 %v411, %v410
      %v433 = vpack.c.b16 %v413, %v412
      %v434 = vpack.c.b16 %v415, %v414
      %v435 = vpack.c.b16 %v417, %v416
      %v436 = vpack.c.b16 %v419, %v418
      %v437 = vpack.c.b16 %v421, %v420
      %v442 = vunpack.c.l.b16 %v322
      %v443 = vunpack.c.l.b16 %v323
      %v444 = vunpack.c.l.b16 %v324
      %v445 = vunpack.c.l.b16 %v325
      %v446 = vpack.c.b16 %v443, %v442
      %v447 = vpack.c.b16 %v445, %v444
      %vm449 = vcmask 203776
      %v451 = vsel %vm449, %v422, 0
      %v454 = vsel %vm449, %v423, 0
      %v457 = vsel %vm449, %v424, 0
      %v460 = vsel %vm449, %v425, 0
      %v463 = vsel %vm449, %v426, 0
      %v466 = vsel %vm449, %v427, 0
      %v469 = vsel %vm449, %v428, 0
      %v472 = vsel %vm449, %v429, 0
      %v475 = vsel %vm449, %v430, 0
      %v478 = vsel %vm449, %v431, 0
      %v481 = vsel %vm449, %v432, 0
      %v484 = vsel %vm449, %v433, 0
      %v487 = vsel %vm449, %v434, 0
      %v490 = vsel %vm449, %v435, 0
      %v493 = vsel %vm449, %v436, 0
      %v496 = vsel %vm449, %v437, 0
      %vm498 = vcmask 1043456
      %vm499 = vcmask 1044480
      %v500 = vsel %vm498, 4294967295, 65535
      %v501 = vsel %vm499, %v500, 0
      %v503 = vand.u32 %v447, %v501
      %505 = vmatprep.subr.bf16.mxu0 0
      %506 = vmatpush1.bf16.msra.mxu0 0
      %507 = vmatprep.subr.bf16.mxu0 0
      %508 = vmatpush1.bf16.msra.mxu0 0
      %509 = vmatprep.subr.bf16.mxu0 0
      %510 = vmatpush1.bf16.msra.mxu0 0
      %511 = vmatprep.subr.bf16.mxu0 0
      %512 = vmatpush1.bf16.msra.mxu0 0
      %513 = vmatprep.subr.bf16.mxu0 0
      %514 = vmatpush1.bf16.msra.mxu0 0
      %515 = vmatprep.subr.bf16.mxu0 0
      %516 = vmatpush1.bf16.msra.mxu0 0
      %517 = vmatprep.subr.bf16.mxu0 0
      %518 = vmatpush1.bf16.msra.mxu0 %v503
      %519 = vmatprep.subr.bf16.mxu0 0
      %520 = vmatpush1.bf16.msra.mxu0 %v446
      %521 = vmatprep.subr.bf16.mxu0 0
      %522 = vmatpush2.bf16.msra.mxu0 0
      %523 = vmatprep.subr.bf16.mxu0 0
      %524 = vmatpush2.bf16.msra.mxu0 0
      %525 = vmatprep.subr.bf16.mxu0 0
      %526 = vmatpush2.bf16.msra.mxu0 0
      %527 = vmatprep.subr.bf16.mxu0 0
      %528 = vmatpush2.bf16.msra.mxu0 0
      %529 = vmatprep.subr.bf16.mxu0 0
      %530 = vmatpush2.bf16.msra.mxu0 0
      %531 = vmatprep.subr.bf16.mxu0 0
      %532 = vmatpush2.bf16.msra.mxu0 0
      %533 = vmatprep.subr.bf16.mxu0 0
      %534 = vmatpush2.bf16.msra.mxu0 0
      %535 = vmatprep.subr.bf16.mxu0 0
      %536 = vmatpush2.bf16.msra.mxu0 0
      %537 = vmatprep.mubr.bf16.mxu0 0
      %538 = vmatmul.mubr.bf16.gmra.mxu0 %v451
      %v539 = vpop.f32.mrf.mxu0
      %v540 = vadd.f32 0.0, %v539
      %v541 = vpop.f32.mrf.mxu0
      %v542 = vpop.f32.mrf.mxu0
      %v543 = vadd.f32 0.0, %v542
      %v544 = vpop.f32.mrf.mxu0
      %545 = vmatprep.mubr.bf16.mxu0 0
      %546 = vmatmul.mubr.bf16.gmra.mxu0 %v454
      %v547 = vpop.f32.mrf.mxu0
      %v548 = vadd.f32 0.0, %v547
      %v549 = vpop.f32.mrf.mxu0
      %v550 = vpop.f32.mrf.mxu0
      %v551 = vadd.f32 0.0, %v550
      %v552 = vpop.f32.mrf.mxu0
      %553 = vmatprep.mubr.bf16.mxu0 0
      %554 = vmatmul.mubr.bf16.gmra.mxu0 %v457
      %v555 = vpop.f32.mrf.mxu0
      %v556 = vadd.f32 0.0, %v555
      %v557 = vpop.f32.mrf.mxu0
      %v558 = vpop.f32.mrf.mxu0
      %v559 = vadd.f32 0.0, %v558
      %v560 = vpop.f32.mrf.mxu0
      %561 = vmatprep.mubr.bf16.mxu0 0
      %562 = vmatmul.mubr.bf16.gmra.mxu0 %v460
      %v563 = vpop.f32.mrf.mxu0
      %v564 = vadd.f32 0.0, %v563
      %v565 = vpop.f32.mrf.mxu0
      %v566 = vpop.f32.mrf.mxu0
      %v567 = vadd.f32 0.0, %v566
      %v568 = vpop.f32.mrf.mxu0
      %569 = vmatprep.mubr.bf16.mxu0 0
      %570 = vmatmul.mubr.bf16.gmra.mxu0 %v463
      %v571 = vpop.f32.mrf.mxu0
      %v572 = vadd.f32 0.0, %v571
      %v573 = vpop.f32.mrf.mxu0
      %v574 = vpop.f32.mrf.mxu0
      %v575 = vadd.f32 0.0, %v574
      %v576 = vpop.f32.mrf.mxu0
      %577 = vmatprep.mubr.bf16.mxu0 0
      %578 = vmatmul.mubr.bf16.gmra.mxu0 %v466
      %v579 = vpop.f32.mrf.mxu0
      %v580 = vadd.f32 0.0, %v579
      %v581 = vpop.f32.mrf.mxu0
      %v582 = vpop.f32.mrf.mxu0
      %v583 = vadd.f32 0.0, %v582
      %v584 = vpop.f32.mrf.mxu0
      %585 = vmatprep.mubr.bf16.mxu0 0
      %586 = vmatmul.mubr.bf16.gmra.mxu0 %v469
      %v587 = vpop.f32.mrf.mxu0
      %v588 = vadd.f32 0.0, %v587
      %v589 = vpop.f32.mrf.mxu0
      %v590 = vpop.f32.mrf.mxu0
      %v591 = vadd.f32 0.0, %v590
      %v592 = vpop.f32.mrf.mxu0
      %593 = vmatprep.mubr.bf16.mxu0 0
      %594 = vmatmul.mubr.bf16.gmra.mxu0 %v472
      %v595 = vpop.f32.mrf.mxu0
      %v596 = vadd.f32 0.0, %v595
      %v597 = vpop.f32.mrf.mxu0
      %v598 = vpop.f32.mrf.mxu0
      %v599 = vadd.f32 0.0, %v598
      %v600 = vpop.f32.mrf.mxu0
      %601 = vmatprep.mubr.bf16.mxu0 0
      %602 = vmatmul.mubr.bf16.gmra.mxu0 %v475
      %v603 = vpop.f32.mrf.mxu0
      %v604 = vadd.f32 0.0, %v603
      %v605 = vpop.f32.mrf.mxu0
      %v606 = vpop.f32.mrf.mxu0
      %v607 = vadd.f32 0.0, %v606
      %v608 = vpop.f32.mrf.mxu0
      %609 = vmatprep.mubr.bf16.mxu0 0
      %610 = vmatmul.mubr.bf16.gmra.mxu0 %v478
      %v611 = vpop.f32.mrf.mxu0
      %v612 = vadd.f32 0.0, %v611
      %v613 = vpop.f32.mrf.mxu0
      %v614 = vpop.f32.mrf.mxu0
      %v615 = vadd.f32 0.0, %v614
      %v616 = vpop.f32.mrf.mxu0
      %617 = vmatprep.mubr.bf16.mxu0 0
      %618 = vmatmul.mubr.bf16.gmra.mxu0 %v481
      %v619 = vpop.f32.mrf.mxu0
      %v620 = vadd.f32 0.0, %v619
      %v621 = vpop.f32.mrf.mxu0
      %v622 = vpop.f32.mrf.mxu0
      %v623 = vadd.f32 0.0, %v622
      %v624 = vpop.f32.mrf.mxu0
      %625 = vmatprep.mubr.bf16.mxu0 0
      %626 = vmatmul.mubr.bf16.gmra.mxu0 %v484
      %v627 = vpop.f32.mrf.mxu0
      %v628 = vadd.f32 0.0, %v627
      %v629 = vpop.f32.mrf.mxu0
      %v630 = vpop.f32.mrf.mxu0
      %v631 = vadd.f32 0.0, %v630
      %v632 = vpop.f32.mrf.mxu0
      %633 = vmatprep.mubr.bf16.mxu0 0
      %634 = vmatmul.mubr.bf16.gmra.mxu0 %v487
      %v635 = vpop.f32.mrf.mxu0
      %v636 = vadd.f32 0.0, %v635
      %v637 = vpop.f32.mrf.mxu0
      %v638 = vpop.f32.mrf.mxu0
      %v639 = vadd.f32 0.0, %v638
      %v640 = vpop.f32.mrf.mxu0
      %641 = vmatprep.mubr.bf16.mxu0 0
      %642 = vmatmul.mubr.bf16.gmra.mxu0 %v490
      %v643 = vpop.f32.mrf.mxu0
      %v644 = vadd.f32 0.0, %v643
      %v645 = vpop.f32.mrf.mxu0
      %v646 = vpop.f32.mrf.mxu0
      %v647 = vadd.f32 0.0, %v646
      %v648 = vpop.f32.mrf.mxu0
      %649 = vmatprep.mubr.bf16.mxu0 0
      %650 = vmatmul.mubr.bf16.gmra.mxu0 %v493
      %v651 = vpop.f32.mrf.mxu0
      %v652 = vadd.f32 0.0, %v651
      %v653 = vpop.f32.mrf.mxu0
      %v654 = vpop.f32.mrf.mxu0
      %v655 = vadd.f32 0.0, %v654
      %v656 = vpop.f32.mrf.mxu0
      %657 = vmatprep.mubr.bf16.mxu0 0
      %658 = vmatmul.mubr.bf16.gmra.mxu0 %v496
      %v659 = vpop.f32.mrf.mxu0
      %v660 = vadd.f32 0.0, %v659
      %v661 = vpop.f32.mrf.mxu0
      %v662 = vpop.f32.mrf.mxu0
      %v663 = vadd.f32 0.0, %v662
      %v664 = vpop.f32.mrf.mxu0
      %665 = vdwg.mxu0
      %v666 = vld [vmem:[%s301] sm:$0xf]
      %v667 = vld [vmem:[%s301 + $0x4] sm:$0xf]
      %v668 = vld [vmem:[%s301 + $0x8] sm:$0xf]
      %v669 = vld [vmem:[%s301 + $0xc] sm:$0xf]
      %v670 = vld [vmem:[%s301 + $0x10] sm:$0xf]
      %v671 = vld [vmem:[%s301 + $0x14] sm:$0xf]
      %v672 = vld [vmem:[%s301 + $0x18] sm:$0xf]
      %v673 = vld [vmem:[%s301 + $0x1c] sm:$0xf]
      %v674 = vld [vmem:[%s301 + $0x20] sm:$0xf]
      %v675 = vld [vmem:[%s301 + $0x24] sm:$0xf]
      %v676 = vld [vmem:[%s301 + $0x28] sm:$0xf]
      %v677 = vld [vmem:[%s301 + $0x2c] sm:$0xf]
      %v678 = vld [vmem:[%s301 + $0x30] sm:$0xf]
      %v679 = vld [vmem:[%s301 + $0x34] sm:$0xf]
      %v680 = vld [vmem:[%s301 + $0x38] sm:$0xf]
      %v681 = vld [vmem:[%s301 + $0x3c] sm:$0xf]
      %v682 = vld [vmem:[%s301 + $0x40] sm:$0xf]
      %v683 = vld [vmem:[%s301 + $0x44] sm:$0xf]
      %v684 = vld [vmem:[%s301 + $0x48] sm:$0xf]
      %v685 = vld [vmem:[%s301 + $0x4c] sm:$0xf]
      %v686 = vld [vmem:[%s301 + $0x50] sm:$0xf]
      %v687 = vld [vmem:[%s301 + $0x54] sm:$0xf]
      %v688 = vld [vmem:[%s301 + $0x58] sm:$0xf]
      %v689 = vld [vmem:[%s301 + $0x5c] sm:$0xf]
      %v690 = vld [vmem:[%s301 + $0x60] sm:$0xf]
      %v691 = vld [vmem:[%s301 + $0x64] sm:$0xf]
      %v692 = vld [vmem:[%s301 + $0x68] sm:$0xf]
      %v693 = vld [vmem:[%s301 + $0x6c] sm:$0xf]
      %v694 = vld [vmem:[%s301 + $0x70] sm:$0xf]
      %v695 = vld [vmem:[%s301 + $0x74] sm:$0xf]
      %v696 = vld [vmem:[%s301 + $0x78] sm:$0xf]
      %v697 = vld [vmem:[%s301 + $0x7c] sm:$0xf]
      %v730 = vunpack.c.l.b16 %v666
      %v731 = vunpack.c.l.b16 %v667
      %v732 = vunpack.c.l.b16 %v668
      %v733 = vunpack.c.l.b16 %v669
      %v734 = vunpack.c.l.b16 %v670
      %v735 = vunpack.c.l.b16 %v671
      %v736 = vunpack.c.l.b16 %v672
      %v737 = vunpack.c.l.b16 %v673
      %v738 = vunpack.c.l.b16 %v674
      %v739 = vunpack.c.l.b16 %v675
      %v740 = vunpack.c.l.b16 %v676
      %v741 = vunpack.c.l.b16 %v677
      %v742 = vunpack.c.l.b16 %v678
      %v743 = vunpack.c.l.b16 %v679
      %v744 = vunpack.c.l.b16 %v680
      %v745 = vunpack.c.l.b16 %v681
      %v746 = vunpack.c.l.b16 %v682
      %v747 = vunpack.c.l.b16 %v683
      %v748 = vunpack.c.l.b16 %v684
      %v749 = vunpack.c.l.b16 %v685
      %v750 = vunpack.c.l.b16 %v686
      %v751 = vunpack.c.l.b16 %v687
      %v752 = vunpack.c.l.b16 %v688
      %v753 = vunpack.c.l.b16 %v689
      %v754 = vunpack.c.l.b16 %v690
      %v755 = vunpack.c.l.b16 %v691
      %v756 = vunpack.c.l.b16 %v692
      %v757 = vunpack.c.l.b16 %v693
      %v758 = vunpack.c.l.b16 %v694
      %v759 = vunpack.c.l.b16 %v695
      %v760 = vunpack.c.l.b16 %v696
      %v761 = vunpack.c.l.b16 %v697
      %v762 = vpack.c.b16 %v731, %v730
      %v763 = vpack.c.b16 %v733, %v732
      %v764 = vpack.c.b16 %v735, %v734
      %v765 = vpack.c.b16 %v737, %v736
      %v766 = vpack.c.b16 %v739, %v738
      %v767 = vpack.c.b16 %v741, %v740
      %v768 = vpack.c.b16 %v743, %v742
      %v769 = vpack.c.b16 %v745, %v744
      %v770 = vpack.c.b16 %v747, %v746
      %v771 = vpack.c.b16 %v749, %v748
      %v772 = vpack.c.b16 %v751, %v750
      %v773 = vpack.c.b16 %v753, %v752
      %v774 = vpack.c.b16 %v755, %v754
      %v775 = vpack.c.b16 %v757, %v756
      %v776 = vpack.c.b16 %v759, %v758
      %v777 = vpack.c.b16 %v761, %v760
      %v779 = vsel %vm449, %v762, 0
      %v782 = vsel %vm449, %v763, 0
      %v785 = vsel %vm449, %v764, 0
      %v788 = vsel %vm449, %v765, 0
      %v791 = vsel %vm449, %v766, 0
      %v794 = vsel %vm449, %v767, 0
      %v797 = vsel %vm449, %v768, 0
      %v800 = vsel %vm449, %v769, 0
      %v803 = vsel %vm449, %v770, 0
      %v806 = vsel %vm449, %v771, 0
      %v809 = vsel %vm449, %v772, 0
      %v812 = vsel %vm449, %v773, 0
      %v815 = vsel %vm449, %v774, 0
      %v818 = vsel %vm449, %v775, 0
      %v821 = vsel %vm449, %v776, 0
      %v824 = vsel %vm449, %v777, 0
      %826 = vmatprep.subr.bf16.mxu0 0
      %827 = vmatpush1.bf16.msra.mxu0 0
      %828 = vmatprep.subr.bf16.mxu0 0
      %829 = vmatpush1.bf16.msra.mxu0 0
      %830 = vmatprep.subr.bf16.mxu0 0
      %831 = vmatpush1.bf16.msra.mxu0 0
      %832 = vmatprep.subr.bf16.mxu0 0
      %833 = vmatpush1.bf16.msra.mxu0 0
      %834 = vmatprep.subr.bf16.mxu0 0
      %835 = vmatpush1.bf16.msra.mxu0 0
      %836 = vmatprep.subr.bf16.mxu0 0
      %837 = vmatpush1.bf16.msra.mxu0 0
      %838 = vmatprep.subr.bf16.mxu0 0
      %839 = vmatpush1.bf16.msra.mxu0 %v503
      %840 = vmatprep.subr.bf16.mxu0 0
      %841 = vmatpush1.bf16.msra.mxu0 %v446
      %842 = vmatprep.subr.bf16.mxu0 0
      %843 = vmatpush2.bf16.msra.mxu0 0
      %844 = vmatprep.subr.bf16.mxu0 0
      %845 = vmatpush2.bf16.msra.mxu0 0
      %846 = vmatprep.subr.bf16.mxu0 0
      %847 = vmatpush2.bf16.msra.mxu0 0
      %848 = vmatprep.subr.bf16.mxu0 0
      %849 = vmatpush2.bf16.msra.mxu0 0
      %850 = vmatprep.subr.bf16.mxu0 0
      %851 = vmatpush2.bf16.msra.mxu0 0
      %852 = vmatprep.subr.bf16.mxu0 0
      %853 = vmatpush2.bf16.msra.mxu0 0
      %854 = vmatprep.subr.bf16.mxu0 0
      %855 = vmatpush2.bf16.msra.mxu0 0
      %856 = vmatprep.subr.bf16.mxu0 0
      %857 = vmatpush2.bf16.msra.mxu0 0
      %858 = vmatprep.mubr.bf16.mxu0 0
      %859 = vmatmul.mubr.bf16.gmra.mxu0 %v779
      %v860 = vpop.f32.mrf.mxu0
      %v861 = vadd.f32 0.0, %v860
      %v862 = vpop.f32.mrf.mxu0
      %v863 = vpop.f32.mrf.mxu0
      %v864 = vadd.f32 0.0, %v863
      %v865 = vpop.f32.mrf.mxu0
      %866 = vmatprep.mubr.bf16.mxu0 0
      %867 = vmatmul.mubr.bf16.gmra.mxu0 %v782
      %v868 = vpop.f32.mrf.mxu0
      %v869 = vadd.f32 0.0, %v868
      %v870 = vpop.f32.mrf.mxu0
      %v871 = vpop.f32.mrf.mxu0
      %v872 = vadd.f32 0.0, %v871
      %v873 = vpop.f32.mrf.mxu0
      %874 = vmatprep.mubr.bf16.mxu0 0
      %875 = vmatmul.mubr.bf16.gmra.mxu0 %v785
      %v876 = vpop.f32.mrf.mxu0
      %v877 = vadd.f32 0.0, %v876
      %v878 = vpop.f32.mrf.mxu0
      %v879 = vpop.f32.mrf.mxu0
      %v880 = vadd.f32 0.0, %v879
      %v881 = vpop.f32.mrf.mxu0
      %882 = vmatprep.mubr.bf16.mxu0 0
      %883 = vmatmul.mubr.bf16.gmra.mxu0 %v788
      %v884 = vpop.f32.mrf.mxu0
      %v885 = vadd.f32 0.0, %v884
      %v886 = vpop.f32.mrf.mxu0
      %v887 = vpop.f32.mrf.mxu0
      %v888 = vadd.f32 0.0, %v887
      %v889 = vpop.f32.mrf.mxu0
      %890 = vmatprep.mubr.bf16.mxu0 0
      %891 = vmatmul.mubr.bf16.gmra.mxu0 %v791
      %v892 = vpop.f32.mrf.mxu0
      %v893 = vadd.f32 0.0, %v892
      %v894 = vpop.f32.mrf.mxu0
      %v895 = vpop.f32.mrf.mxu0
      %v896 = vadd.f32 0.0, %v895
      %v897 = vpop.f32.mrf.mxu0
      %898 = vmatprep.mubr.bf16.mxu0 0
      %899 = vmatmul.mubr.bf16.gmra.mxu0 %v794
      %v900 = vpop.f32.mrf.mxu0
      %v901 = vadd.f32 0.0, %v900
      %v902 = vpop.f32.mrf.mxu0
      %v903 = vpop.f32.mrf.mxu0
      %v904 = vadd.f32 0.0, %v903
      %v905 = vpop.f32.mrf.mxu0
      %906 = vmatprep.mubr.bf16.mxu0 0
      %907 = vmatmul.mubr.bf16.gmra.mxu0 %v797
      %v908 = vpop.f32.mrf.mxu0
      %v909 = vadd.f32 0.0, %v908
      %v910 = vpop.f32.mrf.mxu0
      %v911 = vpop.f32.mrf.mxu0
      %v912 = vadd.f32 0.0, %v911
      %v913 = vpop.f32.mrf.mxu0
      %914 = vmatprep.mubr.bf16.mxu0 0
      %915 = vmatmul.mubr.bf16.gmra.mxu0 %v800
      %v916 = vpop.f32.mrf.mxu0
      %v917 = vadd.f32 0.0, %v916
      %v918 = vpop.f32.mrf.mxu0
      %v919 = vpop.f32.mrf.mxu0
      %v920 = vadd.f32 0.0, %v919
      %v921 = vpop.f32.mrf.mxu0
      %922 = vmatprep.mubr.bf16.mxu0 0
      %923 = vmatmul.mubr.bf16.gmra.mxu0 %v803
      %v924 = vpop.f32.mrf.mxu0
      %v925 = vadd.f32 0.0, %v924
      %v926 = vpop.f32.mrf.mxu0
      %v927 = vpop.f32.mrf.mxu0
      %v928 = vadd.f32 0.0, %v927
      %v929 = vpop.f32.mrf.mxu0
      %930 = vmatprep.mubr.bf16.mxu0 0
      %931 = vmatmul.mubr.bf16.gmra.mxu0 %v806
      %v932 = vpop.f32.mrf.mxu0
      %v933 = vadd.f32 0.0, %v932
      %v934 = vpop.f32.mrf.mxu0
      %v935 = vpop.f32.mrf.mxu0
      %v936 = vadd.f32 0.0, %v935
      %v937 = vpop.f32.mrf.mxu0
      %938 = vmatprep.mubr.bf16.mxu0 0
      %939 = vmatmul.mubr.bf16.gmra.mxu0 %v809
      %v940 = vpop.f32.mrf.mxu0
      %v941 = vadd.f32 0.0, %v940
      %v942 = vpop.f32.mrf.mxu0
      %v943 = vpop.f32.mrf.mxu0
      %v944 = vadd.f32 0.0, %v943
      %v945 = vpop.f32.mrf.mxu0
      %946 = vmatprep.mubr.bf16.mxu0 0
      %947 = vmatmul.mubr.bf16.gmra.mxu0 %v812
      %v948 = vpop.f32.mrf.mxu0
      %v949 = vadd.f32 0.0, %v948
      %v950 = vpop.f32.mrf.mxu0
      %v951 = vpop.f32.mrf.mxu0
      %v952 = vadd.f32 0.0, %v951
      %v953 = vpop.f32.mrf.mxu0
      %954 = vmatprep.mubr.bf16.mxu0 0
      %955 = vmatmul.mubr.bf16.gmra.mxu0 %v815
      %v956 = vpop.f32.mrf.mxu0
      %v957 = vadd.f32 0.0, %v956
      %v958 = vpop.f32.mrf.mxu0
      %v959 = vpop.f32.mrf.mxu0
      %v960 = vadd.f32 0.0, %v959
      %v961 = vpop.f32.mrf.mxu0
      %962 = vmatprep.mubr.bf16.mxu0 0
      %963 = vmatmul.mubr.bf16.gmra.mxu0 %v818
      %v964 = vpop.f32.mrf.mxu0
      %v965 = vadd.f32 0.0, %v964
      %v966 = vpop.f32.mrf.mxu0
      %v967 = vpop.f32.mrf.mxu0
      %v968 = vadd.f32 0.0, %v967
      %v969 = vpop.f32.mrf.mxu0
      %970 = vmatprep.mubr.bf16.mxu0 0
      %971 = vmatmul.mubr.bf16.gmra.mxu0 %v821
      %v972 = vpop.f32.mrf.mxu0
      %v973 = vadd.f32 0.0, %v972
      %v974 = vpop.f32.mrf.mxu0
      %v975 = vpop.f32.mrf.mxu0
      %v976 = vadd.f32 0.0, %v975
      %v977 = vpop.f32.mrf.mxu0
      %978 = vmatprep.mubr.bf16.mxu0 0
      %979 = vmatmul.mubr.bf16.gmra.mxu0 %v824
      %v980 = vpop.f32.mrf.mxu0
      %v981 = vadd.f32 0.0, %v980
      %v982 = vpop.f32.mrf.mxu0
      %v983 = vpop.f32.mrf.mxu0
      %v984 = vadd.f32 0.0, %v983
      %v985 = vpop.f32.mrf.mxu0
      %986 = vdwg.mxu0
      %v987 = vld [vmem:[%s307] sm:$0xf]
      %v988 = vld [vmem:[%s307 + $0x4] sm:$0xf]
      %v989 = vld [vmem:[%s307 + $0x8] sm:$0xf]
      %v990 = vld [vmem:[%s307 + $0xc] sm:$0xf]
      %v991 = vld [vmem:[%s307 + $0x10] sm:$0xf]
      %v992 = vld [vmem:[%s307 + $0x14] sm:$0xf]
      %v993 = vld [vmem:[%s307 + $0x18] sm:$0xf]
      %v994 = vld [vmem:[%s307 + $0x1c] sm:$0xf]
      %v995 = vld [vmem:[%s307 + $0x20] sm:$0xf]
      %v996 = vld [vmem:[%s307 + $0x24] sm:$0xf]
      %v997 = vld [vmem:[%s307 + $0x28] sm:$0xf]
      %v998 = vld [vmem:[%s307 + $0x2c] sm:$0xf]
      %v999 = vld [vmem:[%s307 + $0x30] sm:$0xf]
      %v1000 = vld [vmem:[%s307 + $0x34] sm:$0xf]
      %v1001 = vld [vmem:[%s307 + $0x38] sm:$0xf]
      %v1002 = vld [vmem:[%s307 + $0x3c] sm:$0xf]
      %v1003 = vld [vmem:[%s307 + $0x40] sm:$0xf]
      %v1004 = vld [vmem:[%s307 + $0x44] sm:$0xf]
      %v1005 = vld [vmem:[%s307 + $0x48] sm:$0xf]
      %v1006 = vld [vmem:[%s307 + $0x4c] sm:$0xf]
      %v1007 = vld [vmem:[%s307 + $0x50] sm:$0xf]
      %v1008 = vld [vmem:[%s307 + $0x54] sm:$0xf]
      %v1009 = vld [vmem:[%s307 + $0x58] sm:$0xf]
      %v1010 = vld [vmem:[%s307 + $0x5c] sm:$0xf]
      %v1011 = vld [vmem:[%s307 + $0x60] sm:$0xf]
      %v1012 = vld [vmem:[%s307 + $0x64] sm:$0xf]
      %v1013 = vld [vmem:[%s307 + $0x68] sm:$0xf]
      %v1014 = vld [vmem:[%s307 + $0x6c] sm:$0xf]
      %v1015 = vld [vmem:[%s307 + $0x70] sm:$0xf]
      %v1016 = vld [vmem:[%s307 + $0x74] sm:$0xf]
      %v1017 = vld [vmem:[%s307 + $0x78] sm:$0xf]
      %v1018 = vld [vmem:[%s307 + $0x7c] sm:$0xf]
      %v1051 = vunpack.c.l.b16 %v987
      %v1052 = vunpack.c.l.b16 %v988
      %v1053 = vunpack.c.l.b16 %v989
      %v1054 = vunpack.c.l.b16 %v990
      %v1055 = vunpack.c.l.b16 %v991
      %v1056 = vunpack.c.l.b16 %v992
      %v1057 = vunpack.c.l.b16 %v993
      %v1058 = vunpack.c.l.b16 %v994
      %v1059 = vunpack.c.l.b16 %v995
      %v1060 = vunpack.c.l.b16 %v996
      %v1061 = vunpack.c.l.b16 %v997
      %v1062 = vunpack.c.l.b16 %v998
      %v1063 = vunpack.c.l.b16 %v999
      %v1064 = vunpack.c.l.b16 %v1000
      %v1065 = vunpack.c.l.b16 %v1001
      %v1066 = vunpack.c.l.b16 %v1002
      %v1067 = vunpack.c.l.b16 %v1003
      %v1068 = vunpack.c.l.b16 %v1004
      %v1069 = vunpack.c.l.b16 %v1005
      %v1070 = vunpack.c.l.b16 %v1006
      %v1071 = vunpack.c.l.b16 %v1007
      %v1072 = vunpack.c.l.b16 %v1008
      %v1073 = vunpack.c.l.b16 %v1009
      %v1074 = vunpack.c.l.b16 %v1010
      %v1075 = vunpack.c.l.b16 %v1011
      %v1076 = vunpack.c.l.b16 %v1012
      %v1077 = vunpack.c.l.b16 %v1013
      %v1078 = vunpack.c.l.b16 %v1014
      %v1079 = vunpack.c.l.b16 %v1015
      %v1080 = vunpack.c.l.b16 %v1016
      %v1081 = vunpack.c.l.b16 %v1017
      %v1082 = vunpack.c.l.b16 %v1018
      %v1083 = vpack.c.b16 %v1052, %v1051
      %v1084 = vpack.c.b16 %v1054, %v1053
      %v1085 = vpack.c.b16 %v1056, %v1055
      %v1086 = vpack.c.b16 %v1058, %v1057
      %v1087 = vpack.c.b16 %v1060, %v1059
      %v1088 = vpack.c.b16 %v1062, %v1061
      %v1089 = vpack.c.b16 %v1064, %v1063
      %v1090 = vpack.c.b16 %v1066, %v1065
      %v1091 = vpack.c.b16 %v1068, %v1067
      %v1092 = vpack.c.b16 %v1070, %v1069
      %v1093 = vpack.c.b16 %v1072, %v1071
      %v1094 = vpack.c.b16 %v1074, %v1073
      %v1095 = vpack.c.b16 %v1076, %v1075
      %v1096 = vpack.c.b16 %v1078, %v1077
      %v1097 = vpack.c.b16 %v1080, %v1079
      %v1098 = vpack.c.b16 %v1082, %v1081
      %v1100 = vsel %vm449, %v1083, 0
      %v1103 = vsel %vm449, %v1084, 0
      %v1106 = vsel %vm449, %v1085, 0
      %v1109 = vsel %vm449, %v1086, 0
      %v1112 = vsel %vm449, %v1087, 0
      %v1115 = vsel %vm449, %v1088, 0
      %v1118 = vsel %vm449, %v1089, 0
      %v1121 = vsel %vm449, %v1090, 0
      %v1124 = vsel %vm449, %v1091, 0
      %v1127 = vsel %vm449, %v1092, 0
      %v1130 = vsel %vm449, %v1093, 0
      %v1133 = vsel %vm449, %v1094, 0
      %v1136 = vsel %vm449, %v1095, 0
      %v1139 = vsel %vm449, %v1096, 0
      %v1142 = vsel %vm449, %v1097, 0
      %v1145 = vsel %vm449, %v1098, 0
      %1147 = vmatprep.subr.bf16.mxu0 0
      %1148 = vmatpush1.bf16.msra.mxu0 0
      %1149 = vmatprep.subr.bf16.mxu0 0
      %1150 = vmatpush1.bf16.msra.mxu0 0
      %1151 = vmatprep.subr.bf16.mxu0 0
      %1152 = vmatpush1.bf16.msra.mxu0 0
      %1153 = vmatprep.subr.bf16.mxu0 0
      %1154 = vmatpush1.bf16.msra.mxu0 0
      %1155 = vmatprep.subr.bf16.mxu0 0
      %1156 = vmatpush1.bf16.msra.mxu0 0
      %1157 = vmatprep.subr.bf16.mxu0 0
      %1158 = vmatpush1.bf16.msra.mxu0 0
      %1159 = vmatprep.subr.bf16.mxu0 0
      %1160 = vmatpush1.bf16.msra.mxu0 %v503
      %1161 = vmatprep.subr.bf16.mxu0 0
      %1162 = vmatpush1.bf16.msra.mxu0 %v446
      %1163 = vmatprep.subr.bf16.mxu0 0
      %1164 = vmatpush2.bf16.msra.mxu0 0
      %1165 = vmatprep.subr.bf16.mxu0 0
      %1166 = vmatpush2.bf16.msra.mxu0 0
      %1167 = vmatprep.subr.bf16.mxu0 0
      %1168 = vmatpush2.bf16.msra.mxu0 0
      %1169 = vmatprep.subr.bf16.mxu0 0
      %1170 = vmatpush2.bf16.msra.mxu0 0
      %1171 = vmatprep.subr.bf16.mxu0 0
      %1172 = vmatpush2.bf16.msra.mxu0 0
      %1173 = vmatprep.subr.bf16.mxu0 0
      %1174 = vmatpush2.bf16.msra.mxu0 0
      %1175 = vmatprep.subr.bf16.mxu0 0
      %1176 = vmatpush2.bf16.msra.mxu0 0
      %1177 = vmatprep.subr.bf16.mxu0 0
      %1178 = vmatpush2.bf16.msra.mxu0 0
      %1179 = vmatprep.mubr.bf16.mxu0 0
      %1180 = vmatmul.mubr.bf16.gmra.mxu0 %v1100
      %v1181 = vpop.f32.mrf.mxu0
      %v1182 = vadd.f32 0.0, %v1181
      %v1183 = vpop.f32.mrf.mxu0
      %v1184 = vpop.f32.mrf.mxu0
      %v1185 = vadd.f32 0.0, %v1184
      %v1186 = vpop.f32.mrf.mxu0
      %1187 = vmatprep.mubr.bf16.mxu0 0
      %1188 = vmatmul.mubr.bf16.gmra.mxu0 %v1103
      %v1189 = vpop.f32.mrf.mxu0
      %v1190 = vadd.f32 0.0, %v1189
      %v1191 = vpop.f32.mrf.mxu0
      %v1192 = vpop.f32.mrf.mxu0
      %v1193 = vadd.f32 0.0, %v1192
      %v1194 = vpop.f32.mrf.mxu0
      %1195 = vmatprep.mubr.bf16.mxu0 0
      %1196 = vmatmul.mubr.bf16.gmra.mxu0 %v1106
      %v1197 = vpop.f32.mrf.mxu0
      %v1198 = vadd.f32 0.0, %v1197
      %v1199 = vpop.f32.mrf.mxu0
      %v1200 = vpop.f32.mrf.mxu0
      %v1201 = vadd.f32 0.0, %v1200
      %v1202 = vpop.f32.mrf.mxu0
      %1203 = vmatprep.mubr.bf16.mxu0 0
      %1204 = vmatmul.mubr.bf16.gmra.mxu0 %v1109
      %v1205 = vpop.f32.mrf.mxu0
      %v1206 = vadd.f32 0.0, %v1205
      %v1207 = vpop.f32.mrf.mxu0
      %v1208 = vpop.f32.mrf.mxu0
      %v1209 = vadd.f32 0.0, %v1208
      %v1210 = vpop.f32.mrf.mxu0
      %1211 = vmatprep.mubr.bf16.mxu0 0
      %1212 = vmatmul.mubr.bf16.gmra.mxu0 %v1112
      %v1213 = vpop.f32.mrf.mxu0
      %v1214 = vadd.f32 0.0, %v1213
      %v1215 = vpop.f32.mrf.mxu0
      %v1216 = vpop.f32.mrf.mxu0
      %v1217 = vadd.f32 0.0, %v1216
      %v1218 = vpop.f32.mrf.mxu0
      %1219 = vmatprep.mubr.bf16.mxu0 0
      %1220 = vmatmul.mubr.bf16.gmra.mxu0 %v1115
      %v1221 = vpop.f32.mrf.mxu0
      %v1222 = vadd.f32 0.0, %v1221
      %v1223 = vpop.f32.mrf.mxu0
      %v1224 = vpop.f32.mrf.mxu0
      %v1225 = vadd.f32 0.0, %v1224
      %v1226 = vpop.f32.mrf.mxu0
      %1227 = vmatprep.mubr.bf16.mxu0 0
      %1228 = vmatmul.mubr.bf16.gmra.mxu0 %v1118
      %v1229 = vpop.f32.mrf.mxu0
      %v1230 = vadd.f32 0.0, %v1229
      %v1231 = vpop.f32.mrf.mxu0
      %v1232 = vpop.f32.mrf.mxu0
      %v1233 = vadd.f32 0.0, %v1232
      %v1234 = vpop.f32.mrf.mxu0
      %1235 = vmatprep.mubr.bf16.mxu0 0
      %1236 = vmatmul.mubr.bf16.gmra.mxu0 %v1121
      %v1237 = vpop.f32.mrf.mxu0
      %v1238 = vadd.f32 0.0, %v1237
      %v1239 = vpop.f32.mrf.mxu0
      %v1240 = vpop.f32.mrf.mxu0
      %v1241 = vadd.f32 0.0, %v1240
      %v1242 = vpop.f32.mrf.mxu0
      %1243 = vmatprep.mubr.bf16.mxu0 0
      %1244 = vmatmul.mubr.bf16.gmra.mxu0 %v1124
      %v1245 = vpop.f32.mrf.mxu0
      %v1246 = vadd.f32 0.0, %v1245
      %v1247 = vpop.f32.mrf.mxu0
      %v1248 = vpop.f32.mrf.mxu0
      %v1249 = vadd.f32 0.0, %v1248
      %v1250 = vpop.f32.mrf.mxu0
      %1251 = vmatprep.mubr.bf16.mxu0 0
      %1252 = vmatmul.mubr.bf16.gmra.mxu0 %v1127
      %v1253 = vpop.f32.mrf.mxu0
      %v1254 = vadd.f32 0.0, %v1253
      %v1255 = vpop.f32.mrf.mxu0
      %v1256 = vpop.f32.mrf.mxu0
      %v1257 = vadd.f32 0.0, %v1256
      %v1258 = vpop.f32.mrf.mxu0
      %1259 = vmatprep.mubr.bf16.mxu0 0
      %1260 = vmatmul.mubr.bf16.gmra.mxu0 %v1130
      %v1261 = vpop.f32.mrf.mxu0
      %v1262 = vadd.f32 0.0, %v1261
      %v1263 = vpop.f32.mrf.mxu0
      %v1264 = vpop.f32.mrf.mxu0
      %v1265 = vadd.f32 0.0, %v1264
      %v1266 = vpop.f32.mrf.mxu0
      %1267 = vmatprep.mubr.bf16.mxu0 0
      %1268 = vmatmul.mubr.bf16.gmra.mxu0 %v1133
      %v1269 = vpop.f32.mrf.mxu0
      %v1270 = vadd.f32 0.0, %v1269
      %v1271 = vpop.f32.mrf.mxu0
      %v1272 = vpop.f32.mrf.mxu0
      %v1273 = vadd.f32 0.0, %v1272
      %v1274 = vpop.f32.mrf.mxu0
      %1275 = vmatprep.mubr.bf16.mxu0 0
      %1276 = vmatmul.mubr.bf16.gmra.mxu0 %v1136
      %v1277 = vpop.f32.mrf.mxu0
      %v1278 = vadd.f32 0.0, %v1277
      %v1279 = vpop.f32.mrf.mxu0
      %v1280 = vpop.f32.mrf.mxu0
      %v1281 = vadd.f32 0.0, %v1280
      %v1282 = vpop.f32.mrf.mxu0
      %1283 = vmatprep.mubr.bf16.mxu0 0
      %1284 = vmatmul.mubr.bf16.gmra.mxu0 %v1139
      %v1285 = vpop.f32.mrf.mxu0
      %v1286 = vadd.f32 0.0, %v1285
      %v1287 = vpop.f32.mrf.mxu0
      %v1288 = vpop.f32.mrf.mxu0
      %v1289 = vadd.f32 0.0, %v1288
      %v1290 = vpop.f32.mrf.mxu0
      %1291 = vmatprep.mubr.bf16.mxu0 0
      %1292 = vmatmul.mubr.bf16.gmra.mxu0 %v1142
      %v1293 = vpop.f32.mrf.mxu0
      %v1294 = vadd.f32 0.0, %v1293
      %v1295 = vpop.f32.mrf.mxu0
      %v1296 = vpop.f32.mrf.mxu0
      %v1297 = vadd.f32 0.0, %v1296
      %v1298 = vpop.f32.mrf.mxu0
      %1299 = vmatprep.mubr.bf16.mxu0 0
      %1300 = vmatmul.mubr.bf16.gmra.mxu0 %v1145
      %v1301 = vpop.f32.mrf.mxu0
      %v1302 = vadd.f32 0.0, %v1301
      %v1303 = vpop.f32.mrf.mxu0
      %v1304 = vpop.f32.mrf.mxu0
      %v1305 = vadd.f32 0.0, %v1304
      %v1306 = vpop.f32.mrf.mxu0
      %1307 = vdwg.mxu0
      %v1308 = vld [vmem:[%s313] sm:$0xf]
      %v1309 = vld [vmem:[%s313 + $0x4] sm:$0xf]
      %v1310 = vld [vmem:[%s313 + $0x8] sm:$0xf]
      %v1311 = vld [vmem:[%s313 + $0xc] sm:$0xf]
      %v1312 = vld [vmem:[%s313 + $0x10] sm:$0xf]
      %v1313 = vld [vmem:[%s313 + $0x14] sm:$0xf]
      %v1314 = vld [vmem:[%s313 + $0x18] sm:$0xf]
      %v1315 = vld [vmem:[%s313 + $0x1c] sm:$0xf]
      %v1316 = vld [vmem:[%s313 + $0x20] sm:$0xf]
      %v1317 = vld [vmem:[%s313 + $0x24] sm:$0xf]
      %v1318 = vld [vmem:[%s313 + $0x28] sm:$0xf]
      %v1319 = vld [vmem:[%s313 + $0x2c] sm:$0xf]
      %v1320 = vld [vmem:[%s313 + $0x30] sm:$0xf]
      %v1321 = vld [vmem:[%s313 + $0x34] sm:$0xf]
      %v1322 = vld [vmem:[%s313 + $0x38] sm:$0xf]
      %v1323 = vld [vmem:[%s313 + $0x3c] sm:$0xf]
      %v1324 = vld [vmem:[%s313 + $0x40] sm:$0xf]
      %v1325 = vld [vmem:[%s313 + $0x44] sm:$0xf]
      %v1326 = vld [vmem:[%s313 + $0x48] sm:$0xf]
      %v1327 = vld [vmem:[%s313 + $0x4c] sm:$0xf]
      %v1328 = vld [vmem:[%s313 + $0x50] sm:$0xf]
      %v1329 = vld [vmem:[%s313 + $0x54] sm:$0xf]
      %v1330 = vld [vmem:[%s313 + $0x58] sm:$0xf]
      %v1331 = vld [vmem:[%s313 + $0x5c] sm:$0xf]
      %v1332 = vld [vmem:[%s313 + $0x60] sm:$0xf]
      %v1333 = vld [vmem:[%s313 + $0x64] sm:$0xf]
      %v1334 = vld [vmem:[%s313 + $0x68] sm:$0xf]
      %v1335 = vld [vmem:[%s313 + $0x6c] sm:$0xf]
      %v1336 = vld [vmem:[%s313 + $0x70] sm:$0xf]
      %v1337 = vld [vmem:[%s313 + $0x74] sm:$0xf]
      %v1338 = vld [vmem:[%s313 + $0x78] sm:$0xf]
      %v1339 = vld [vmem:[%s313 + $0x7c] sm:$0xf]
      %v1372 = vunpack.c.l.b16 %v1308
      %v1373 = vunpack.c.l.b16 %v1309
      %v1374 = vunpack.c.l.b16 %v1310
      %v1375 = vunpack.c.l.b16 %v1311
      %v1376 = vunpack.c.l.b16 %v1312
      %v1377 = vunpack.c.l.b16 %v1313
      %v1378 = vunpack.c.l.b16 %v1314
      %v1379 = vunpack.c.l.b16 %v1315
      %v1380 = vunpack.c.l.b16 %v1316
      %v1381 = vunpack.c.l.b16 %v1317
      %v1382 = vunpack.c.l.b16 %v1318
      %v1383 = vunpack.c.l.b16 %v1319
      %v1384 = vunpack.c.l.b16 %v1320
      %v1385 = vunpack.c.l.b16 %v1321
      %v1386 = vunpack.c.l.b16 %v1322
      %v1387 = vunpack.c.l.b16 %v1323
      %v1388 = vunpack.c.l.b16 %v1324
      %v1389 = vunpack.c.l.b16 %v1325
      %v1390 = vunpack.c.l.b16 %v1326
      %v1391 = vunpack.c.l.b16 %v1327
      %v1392 = vunpack.c.l.b16 %v1328
      %v1393 = vunpack.c.l.b16 %v1329
      %v1394 = vunpack.c.l.b16 %v1330
      %v1395 = vunpack.c.l.b16 %v1331
      %v1396 = vunpack.c.l.b16 %v1332
      %v1397 = vunpack.c.l.b16 %v1333
      %v1398 = vunpack.c.l.b16 %v1334
      %v1399 = vunpack.c.l.b16 %v1335
      %v1400 = vunpack.c.l.b16 %v1336
      %v1401 = vunpack.c.l.b16 %v1337
      %v1402 = vunpack.c.l.b16 %v1338
      %v1403 = vunpack.c.l.b16 %v1339
      %v1404 = vpack.c.b16 %v1373, %v1372
      %v1405 = vpack.c.b16 %v1375, %v1374
      %v1406 = vpack.c.b16 %v1377, %v1376
      %v1407 = vpack.c.b16 %v1379, %v1378
      %v1408 = vpack.c.b16 %v1381, %v1380
      %v1409 = vpack.c.b16 %v1383, %v1382
      %v1410 = vpack.c.b16 %v1385, %v1384
      %v1411 = vpack.c.b16 %v1387, %v1386
      %v1412 = vpack.c.b16 %v1389, %v1388
      %v1413 = vpack.c.b16 %v1391, %v1390
      %v1414 = vpack.c.b16 %v1393, %v1392
      %v1415 = vpack.c.b16 %v1395, %v1394
      %v1416 = vpack.c.b16 %v1397, %v1396
      %v1417 = vpack.c.b16 %v1399, %v1398
      %v1418 = vpack.c.b16 %v1401, %v1400
      %v1419 = vpack.c.b16 %v1403, %v1402
      %v1421 = vsel %vm449, %v1404, 0
      %v1424 = vsel %vm449, %v1405, 0
      %v1427 = vsel %vm449, %v1406, 0
      %v1430 = vsel %vm449, %v1407, 0
      %v1433 = vsel %vm449, %v1408, 0
      %v1436 = vsel %vm449, %v1409, 0
      %v1439 = vsel %vm449, %v1410, 0
      %v1442 = vsel %vm449, %v1411, 0
      %v1445 = vsel %vm449, %v1412, 0
      %v1448 = vsel %vm449, %v1413, 0
      %v1451 = vsel %vm449, %v1414, 0
      %v1454 = vsel %vm449, %v1415, 0
      %v1457 = vsel %vm449, %v1416, 0
      %v1460 = vsel %vm449, %v1417, 0
      %v1463 = vsel %vm449, %v1418, 0
      %v1466 = vsel %vm449, %v1419, 0
      %1468 = vmatprep.subr.bf16.mxu0 0
      %1469 = vmatpush1.bf16.msra.mxu0 0
      %1470 = vmatprep.subr.bf16.mxu0 0
      %1471 = vmatpush1.bf16.msra.mxu0 0
      %1472 = vmatprep.subr.bf16.mxu0 0
      %1473 = vmatpush1.bf16.msra.mxu0 0
      %1474 = vmatprep.subr.bf16.mxu0 0
      %1475 = vmatpush1.bf16.msra.mxu0 0
      %1476 = vmatprep.subr.bf16.mxu0 0
      %1477 = vmatpush1.bf16.msra.mxu0 0
      %1478 = vmatprep.subr.bf16.mxu0 0
      %1479 = vmatpush1.bf16.msra.mxu0 0
      %1480 = vmatprep.subr.bf16.mxu0 0
      %1481 = vmatpush1.bf16.msra.mxu0 %v503
      %1482 = vmatprep.subr.bf16.mxu0 0
      %1483 = vmatpush1.bf16.msra.mxu0 %v446
      %1484 = vmatprep.subr.bf16.mxu0 0
      %1485 = vmatpush2.bf16.msra.mxu0 0
      %1486 = vmatprep.subr.bf16.mxu0 0
      %1487 = vmatpush2.bf16.msra.mxu0 0
      %1488 = vmatprep.subr.bf16.mxu0 0
      %1489 = vmatpush2.bf16.msra.mxu0 0
      %1490 = vmatprep.subr.bf16.mxu0 0
      %1491 = vmatpush2.bf16.msra.mxu0 0
      %1492 = vmatprep.subr.bf16.mxu0 0
      %1493 = vmatpush2.bf16.msra.mxu0 0
      %1494 = vmatprep.subr.bf16.mxu0 0
      %1495 = vmatpush2.bf16.msra.mxu0 0
      %1496 = vmatprep.subr.bf16.mxu0 0
      %1497 = vmatpush2.bf16.msra.mxu0 0
      %1498 = vmatprep.subr.bf16.mxu0 0
      %1499 = vmatpush2.bf16.msra.mxu0 0
      %1500 = vmatprep.mubr.bf16.mxu0 0
      %1501 = vmatmul.mubr.bf16.gmra.mxu0 %v1421
      %v1502 = vpop.f32.mrf.mxu0
      %v1503 = vadd.f32 0.0, %v1502
      %v1504 = vpop.f32.mrf.mxu0
      %v1505 = vpop.f32.mrf.mxu0
      %v1506 = vadd.f32 0.0, %v1505
      %v1507 = vpop.f32.mrf.mxu0
      %1508 = vmatprep.mubr.bf16.mxu0 0
      %1509 = vmatmul.mubr.bf16.gmra.mxu0 %v1424
      %v1510 = vpop.f32.mrf.mxu0
      %v1511 = vadd.f32 0.0, %v1510
      %v1512 = vpop.f32.mrf.mxu0
      %v1513 = vpop.f32.mrf.mxu0
      %v1514 = vadd.f32 0.0, %v1513
      %v1515 = vpop.f32.mrf.mxu0
      %1516 = vmatprep.mubr.bf16.mxu0 0
      %1517 = vmatmul.mubr.bf16.gmra.mxu0 %v1427
      %v1518 = vpop.f32.mrf.mxu0
      %v1519 = vadd.f32 0.0, %v1518
      %v1520 = vpop.f32.mrf.mxu0
      %v1521 = vpop.f32.mrf.mxu0
      %v1522 = vadd.f32 0.0, %v1521
      %v1523 = vpop.f32.mrf.mxu0
      %1524 = vmatprep.mubr.bf16.mxu0 0
      %1525 = vmatmul.mubr.bf16.gmra.mxu0 %v1430
      %v1526 = vpop.f32.mrf.mxu0
      %v1527 = vadd.f32 0.0, %v1526
      %v1528 = vpop.f32.mrf.mxu0
      %v1529 = vpop.f32.mrf.mxu0
      %v1530 = vadd.f32 0.0, %v1529
      %v1531 = vpop.f32.mrf.mxu0
      %1532 = vmatprep.mubr.bf16.mxu0 0
      %1533 = vmatmul.mubr.bf16.gmra.mxu0 %v1433
      %v1534 = vpop.f32.mrf.mxu0
      %v1535 = vadd.f32 0.0, %v1534
      %v1536 = vpop.f32.mrf.mxu0
      %v1537 = vpop.f32.mrf.mxu0
      %v1538 = vadd.f32 0.0, %v1537
      %v1539 = vpop.f32.mrf.mxu0
      %1540 = vmatprep.mubr.bf16.mxu0 0
      %1541 = vmatmul.mubr.bf16.gmra.mxu0 %v1436
      %v1542 = vpop.f32.mrf.mxu0
      %v1543 = vadd.f32 0.0, %v1542
      %v1544 = vpop.f32.mrf.mxu0
      %v1545 = vpop.f32.mrf.mxu0
      %v1546 = vadd.f32 0.0, %v1545
      %v1547 = vpop.f32.mrf.mxu0
      %1548 = vmatprep.mubr.bf16.mxu0 0
      %1549 = vmatmul.mubr.bf16.gmra.mxu0 %v1439
      %v1550 = vpop.f32.mrf.mxu0
      %v1551 = vadd.f32 0.0, %v1550
      %v1552 = vpop.f32.mrf.mxu0
      %v1553 = vpop.f32.mrf.mxu0
      %v1554 = vadd.f32 0.0, %v1553
      %v1555 = vpop.f32.mrf.mxu0
      %1556 = vmatprep.mubr.bf16.mxu0 0
      %1557 = vmatmul.mubr.bf16.gmra.mxu0 %v1442
      %v1558 = vpop.f32.mrf.mxu0
      %v1559 = vadd.f32 0.0, %v1558
      %v1560 = vpop.f32.mrf.mxu0
      %v1561 = vpop.f32.mrf.mxu0
      %v1562 = vadd.f32 0.0, %v1561
      %v1563 = vpop.f32.mrf.mxu0
      %1564 = vmatprep.mubr.bf16.mxu0 0
      %1565 = vmatmul.mubr.bf16.gmra.mxu0 %v1445
      %v1566 = vpop.f32.mrf.mxu0
      %v1567 = vadd.f32 0.0, %v1566
      %v1568 = vpop.f32.mrf.mxu0
      %v1569 = vpop.f32.mrf.mxu0
      %v1570 = vadd.f32 0.0, %v1569
      %v1571 = vpop.f32.mrf.mxu0
      %1572 = vmatprep.mubr.bf16.mxu0 0
      %1573 = vmatmul.mubr.bf16.gmra.mxu0 %v1448
      %v1574 = vpop.f32.mrf.mxu0
      %v1575 = vadd.f32 0.0, %v1574
      %v1576 = vpop.f32.mrf.mxu0
      %v1577 = vpop.f32.mrf.mxu0
      %v1578 = vadd.f32 0.0, %v1577
      %v1579 = vpop.f32.mrf.mxu0
      %1580 = vmatprep.mubr.bf16.mxu0 0
      %1581 = vmatmul.mubr.bf16.gmra.mxu0 %v1451
      %v1582 = vpop.f32.mrf.mxu0
      %v1583 = vadd.f32 0.0, %v1582
      %v1584 = vpop.f32.mrf.mxu0
      %v1585 = vpop.f32.mrf.mxu0
      %v1586 = vadd.f32 0.0, %v1585
      %v1587 = vpop.f32.mrf.mxu0
      %1588 = vmatprep.mubr.bf16.mxu0 0
      %1589 = vmatmul.mubr.bf16.gmra.mxu0 %v1454
      %v1590 = vpop.f32.mrf.mxu0
      %v1591 = vadd.f32 0.0, %v1590
      %v1592 = vpop.f32.mrf.mxu0
      %v1593 = vpop.f32.mrf.mxu0
      %v1594 = vadd.f32 0.0, %v1593
      %v1595 = vpop.f32.mrf.mxu0
      %1596 = vmatprep.mubr.bf16.mxu0 0
      %1597 = vmatmul.mubr.bf16.gmra.mxu0 %v1457
      %v1598 = vpop.f32.mrf.mxu0
      %v1599 = vadd.f32 0.0, %v1598
      %v1600 = vpop.f32.mrf.mxu0
      %v1601 = vpop.f32.mrf.mxu0
      %v1602 = vadd.f32 0.0, %v1601
      %v1603 = vpop.f32.mrf.mxu0
      %1604 = vmatprep.mubr.bf16.mxu0 0
      %1605 = vmatmul.mubr.bf16.gmra.mxu0 %v1460
      %v1606 = vpop.f32.mrf.mxu0
      %v1607 = vadd.f32 0.0, %v1606
      %v1608 = vpop.f32.mrf.mxu0
      %v1609 = vpop.f32.mrf.mxu0
      %v1610 = vadd.f32 0.0, %v1609
      %v1611 = vpop.f32.mrf.mxu0
      %1612 = vmatprep.mubr.bf16.mxu0 0
      %1613 = vmatmul.mubr.bf16.gmra.mxu0 %v1463
      %v1614 = vpop.f32.mrf.mxu0
      %v1615 = vadd.f32 0.0, %v1614
      %v1616 = vpop.f32.mrf.mxu0
      %v1617 = vpop.f32.mrf.mxu0
      %v1618 = vadd.f32 0.0, %v1617
      %v1619 = vpop.f32.mrf.mxu0
      %1620 = vmatprep.mubr.bf16.mxu0 0
      %1621 = vmatmul.mubr.bf16.gmra.mxu0 %v1466
      %v1622 = vpop.f32.mrf.mxu0
      %v1623 = vadd.f32 0.0, %v1622
      %v1624 = vpop.f32.mrf.mxu0
      %v1625 = vpop.f32.mrf.mxu0
      %v1626 = vadd.f32 0.0, %v1625
      %v1627 = vpop.f32.mrf.mxu0
      %1628 = vdwg.mxu0
      %v1629 = vmax.f32 %v540, %v861
      %v1630 = vmax.f32 %v543, %v864
      %v1631 = vmax.f32 %v548, %v869
      %v1632 = vmax.f32 %v551, %v872
      %v1633 = vmax.f32 %v556, %v877
      %v1634 = vmax.f32 %v559, %v880
      %v1635 = vmax.f32 %v564, %v885
      %v1636 = vmax.f32 %v567, %v888
      %v1637 = vmax.f32 %v572, %v893
      %v1638 = vmax.f32 %v575, %v896
      %v1639 = vmax.f32 %v580, %v901
      %v1640 = vmax.f32 %v583, %v904
      %v1641 = vmax.f32 %v588, %v909
      %v1642 = vmax.f32 %v591, %v912
      %v1643 = vmax.f32 %v596, %v917
      %v1644 = vmax.f32 %v599, %v920
      %v1645 = vmax.f32 %v604, %v925
      %v1646 = vmax.f32 %v607, %v928
      %v1647 = vmax.f32 %v612, %v933
      %v1648 = vmax.f32 %v615, %v936
      %v1649 = vmax.f32 %v620, %v941
      %v1650 = vmax.f32 %v623, %v944
      %v1651 = vmax.f32 %v628, %v949
      %v1652 = vmax.f32 %v631, %v952
      %v1653 = vmax.f32 %v636, %v957
      %v1654 = vmax.f32 %v639, %v960
      %v1655 = vmax.f32 %v644, %v965
      %v1656 = vmax.f32 %v647, %v968
      %v1657 = vmax.f32 %v652, %v973
      %v1658 = vmax.f32 %v655, %v976
      %v1659 = vmax.f32 %v660, %v981
      %v1660 = vmax.f32 %v663, %v984
      %v1661 = vmax.f32 %v1182, %v1503
      %v1662 = vmax.f32 %v1185, %v1506
      %v1663 = vmax.f32 %v1190, %v1511
      %v1664 = vmax.f32 %v1193, %v1514
      %v1665 = vmax.f32 %v1198, %v1519
      %v1666 = vmax.f32 %v1201, %v1522
      %v1667 = vmax.f32 %v1206, %v1527
      %v1668 = vmax.f32 %v1209, %v1530
      %v1669 = vmax.f32 %v1214, %v1535
      %v1670 = vmax.f32 %v1217, %v1538
      %v1671 = vmax.f32 %v1222, %v1543
      %v1672 = vmax.f32 %v1225, %v1546
      %v1673 = vmax.f32 %v1230, %v1551
      %v1674 = vmax.f32 %v1233, %v1554
      %v1675 = vmax.f32 %v1238, %v1559
      %v1676 = vmax.f32 %v1241, %v1562
      %v1677 = vmax.f32 %v1246, %v1567
      %v1678 = vmax.f32 %v1249, %v1570
      %v1679 = vmax.f32 %v1254, %v1575
      %v1680 = vmax.f32 %v1257, %v1578
      %v1681 = vmax.f32 %v1262, %v1583
      %v1682 = vmax.f32 %v1265, %v1586
      %v1683 = vmax.f32 %v1270, %v1591
      %v1684 = vmax.f32 %v1273, %v1594
      %v1685 = vmax.f32 %v1278, %v1599
      %v1686 = vmax.f32 %v1281, %v1602
      %v1687 = vmax.f32 %v1286, %v1607
      %v1688 = vmax.f32 %v1289, %v1610
      %v1689 = vmax.f32 %v1294, %v1615
      %v1690 = vmax.f32 %v1297, %v1618
      %v1691 = vmax.f32 %v1302, %v1623
      %v1692 = vmax.f32 %v1305, %v1626
      %v1693 = vmax.f32 %v1629, %v1661
      %v1694 = vmax.f32 %v1630, %v1662
      %v1695 = vmax.f32 %v1631, %v1663
      %v1696 = vmax.f32 %v1632, %v1664
      %v1697 = vmax.f32 %v1633, %v1665
      %v1698 = vmax.f32 %v1634, %v1666
      %v1699 = vmax.f32 %v1635, %v1667
      %v1700 = vmax.f32 %v1636, %v1668
      %v1701 = vmax.f32 %v1637, %v1669
      %v1702 = vmax.f32 %v1638, %v1670
      %v1703 = vmax.f32 %v1639, %v1671
      %v1704 = vmax.f32 %v1640, %v1672
      %v1705 = vmax.f32 %v1641, %v1673
      %v1706 = vmax.f32 %v1642, %v1674
      %v1707 = vmax.f32 %v1643, %v1675
      %v1708 = vmax.f32 %v1644, %v1676
      %v1709 = vmax.f32 %v1645, %v1677
      %v1710 = vmax.f32 %v1646, %v1678
      %v1711 = vmax.f32 %v1647, %v1679
      %v1712 = vmax.f32 %v1648, %v1680
      %v1713 = vmax.f32 %v1649, %v1681
      %v1714 = vmax.f32 %v1650, %v1682
      %v1715 = vmax.f32 %v1651, %v1683
      %v1716 = vmax.f32 %v1652, %v1684
      %v1717 = vmax.f32 %v1653, %v1685
      %v1718 = vmax.f32 %v1654, %v1686
      %v1719 = vmax.f32 %v1655, %v1687
      %v1720 = vmax.f32 %v1656, %v1688
      %v1721 = vmax.f32 %v1657, %v1689
      %v1722 = vmax.f32 %v1658, %v1690
      %v1723 = vmax.f32 %v1659, %v1691
      %v1724 = vmax.f32 %v1660, %v1692
      %v1725 = vld [vmem:[%s5] sm:$0x1]
      %v1727 = vlaneseq
      %v1728 = vshrl.u32 %v1727, 7
      %v1729 = vsub.s32 0, %v1728
      %v1730 = vrot.slane %v1725, %v1729
      %v1732 = vadd.f32 %v1693, %v1730
      %v1733 = vadd.f32 %v1694, %v1730
      %v1734 = vadd.f32 %v1695, %v1730
      %v1735 = vadd.f32 %v1696, %v1730
      %v1736 = vadd.f32 %v1697, %v1730
      %v1737 = vadd.f32 %v1698, %v1730
      %v1738 = vadd.f32 %v1699, %v1730
      %v1739 = vadd.f32 %v1700, %v1730
      %v1740 = vadd.f32 %v1701, %v1730
      %v1741 = vadd.f32 %v1702, %v1730
      %v1742 = vadd.f32 %v1703, %v1730
      %v1743 = vadd.f32 %v1704, %v1730
      %v1744 = vadd.f32 %v1705, %v1730
      %v1745 = vadd.f32 %v1706, %v1730
      %v1746 = vadd.f32 %v1707, %v1730
      %v1747 = vadd.f32 %v1708, %v1730
      %v1748 = vadd.f32 %v1709, %v1730
      %v1749 = vadd.f32 %v1710, %v1730
      %v1750 = vadd.f32 %v1711, %v1730
      %v1751 = vadd.f32 %v1712, %v1730
      %v1752 = vadd.f32 %v1713, %v1730
      %v1753 = vadd.f32 %v1714, %v1730
      %v1754 = vadd.f32 %v1715, %v1730
      %v1755 = vadd.f32 %v1716, %v1730
      %v1756 = vadd.f32 %v1717, %v1730
      %v1757 = vadd.f32 %v1718, %v1730
      %v1758 = vadd.f32 %v1719, %v1730
      %v1759 = vadd.f32 %v1720, %v1730
      %v1760 = vadd.f32 %v1721, %v1730
      %v1761 = vadd.f32 %v1722, %v1730
      %v1762 = vadd.f32 %v1723, %v1730
      %v1763 = vadd.f32 %v1724, %v1730
      %v1764 = vpack.c.bf16 %v1733, %v1732
      %v1765 = vpack.c.bf16 %v1735, %v1734
      %v1766 = vpack.c.bf16 %v1737, %v1736
      %v1767 = vpack.c.bf16 %v1739, %v1738
      %v1768 = vpack.c.bf16 %v1741, %v1740
      %v1769 = vpack.c.bf16 %v1743, %v1742
      %v1770 = vpack.c.bf16 %v1745, %v1744
      %v1771 = vpack.c.bf16 %v1747, %v1746
      %v1772 = vpack.c.bf16 %v1749, %v1748
      %v1773 = vpack.c.bf16 %v1751, %v1750
      %v1774 = vpack.c.bf16 %v1753, %v1752
      %v1775 = vpack.c.bf16 %v1755, %v1754
      %v1776 = vpack.c.bf16 %v1757, %v1756
      %v1777 = vpack.c.bf16 %v1759, %v1758
      %v1778 = vpack.c.bf16 %v1761, %v1760
      %v1779 = vpack.c.bf16 %v1763, %v1762
      %v1796 = vunpack.c.l.b16 %v1764
      %v1797 = vunpack.c.h.b16 %v1764
      %v1798 = vunpack.c.l.b16 %v1765
      %v1799 = vunpack.c.h.b16 %v1765
      %v1800 = vunpack.c.l.b16 %v1766
      %v1801 = vunpack.c.h.b16 %v1766
      %v1802 = vunpack.c.l.b16 %v1767
      %v1803 = vunpack.c.h.b16 %v1767
      %v1804 = vunpack.c.l.b16 %v1768
      %v1805 = vunpack.c.h.b16 %v1768
      %v1806 = vunpack.c.l.b16 %v1769
      %v1807 = vunpack.c.h.b16 %v1769
      %v1808 = vunpack.c.l.b16 %v1770
      %v1809 = vunpack.c.h.b16 %v1770
      %v1810 = vunpack.c.l.b16 %v1771
      %v1811 = vunpack.c.h.b16 %v1771
      %v1812 = vunpack.c.l.b16 %v1772
      %v1813 = vunpack.c.h.b16 %v1772
      %v1814 = vunpack.c.l.b16 %v1773
      %v1815 = vunpack.c.h.b16 %v1773
      %v1816 = vunpack.c.l.b16 %v1774
      %v1817 = vunpack.c.h.b16 %v1774
      %v1818 = vunpack.c.l.b16 %v1775
      %v1819 = vunpack.c.h.b16 %v1775
      %v1820 = vunpack.c.l.b16 %v1776
      %v1821 = vunpack.c.h.b16 %v1776
      %v1822 = vunpack.c.l.b16 %v1777
      %v1823 = vunpack.c.h.b16 %v1777
      %v1824 = vunpack.c.l.b16 %v1778
      %v1825 = vunpack.c.h.b16 %v1778
      %v1826 = vunpack.c.l.b16 %v1779
      %v1827 = vunpack.c.h.b16 %v1779
      %v1828 = vpack.c.b16 %v1796, %v1796
      %v1829 = vpack.c.b16 %v1797, %v1797
      %v1830 = vpack.c.b16 %v1798, %v1798
      %v1831 = vpack.c.b16 %v1799, %v1799
      %v1832 = vpack.c.b16 %v1800, %v1800
      %v1833 = vpack.c.b16 %v1801, %v1801
      %v1834 = vpack.c.b16 %v1802, %v1802
      %v1835 = vpack.c.b16 %v1803, %v1803
      %v1836 = vpack.c.b16 %v1804, %v1804
      %v1837 = vpack.c.b16 %v1805, %v1805
      %v1838 = vpack.c.b16 %v1806, %v1806
      %v1839 = vpack.c.b16 %v1807, %v1807
      %v1840 = vpack.c.b16 %v1808, %v1808
      %v1841 = vpack.c.b16 %v1809, %v1809
      %v1842 = vpack.c.b16 %v1810, %v1810
      %v1843 = vpack.c.b16 %v1811, %v1811
      %v1844 = vpack.c.b16 %v1812, %v1812
      %v1845 = vpack.c.b16 %v1813, %v1813
      %v1846 = vpack.c.b16 %v1814, %v1814
      %v1847 = vpack.c.b16 %v1815, %v1815
      %v1848 = vpack.c.b16 %v1816, %v1816
      %v1849 = vpack.c.b16 %v1817, %v1817
      %v1850 = vpack.c.b16 %v1818, %v1818
      %v1851 = vpack.c.b16 %v1819, %v1819
      %v1852 = vpack.c.b16 %v1820, %v1820
      %v1853 = vpack.c.b16 %v1821, %v1821
      %v1854 = vpack.c.b16 %v1822, %v1822
      %v1855 = vpack.c.b16 %v1823, %v1823
      %v1856 = vpack.c.b16 %v1824, %v1824
      %v1857 = vpack.c.b16 %v1825, %v1825
      %v1858 = vpack.c.b16 %v1826, %v1826
      %v1859 = vpack.c.b16 %v1827, %v1827
      %1892 = vst [vmem:[%s319] sm:$0xf] %v1828
      %1893 = vst [vmem:[%s319 + $0x4] sm:$0xf] %v1829
      %1894 = vst [vmem:[%s319 + $0x8] sm:$0xf] %v1830
      %1895 = vst [vmem:[%s319 + $0xc] sm:$0xf] %v1831
      %1896 = vst [vmem:[%s319 + $0x10] sm:$0xf] %v1832
      %1897 = vst [vmem:[%s319 + $0x14] sm:$0xf] %v1833
      %1898 = vst [vmem:[%s319 + $0x18] sm:$0xf] %v1834
      %1899 = vst [vmem:[%s319 + $0x1c] sm:$0xf] %v1835
      %1900 = vst [vmem:[%s319 + $0x20] sm:$0xf] %v1836
      %1901 = vst [vmem:[%s319 + $0x24] sm:$0xf] %v1837
      %1902 = vst [vmem:[%s319 + $0x28] sm:$0xf] %v1838
      %1903 = vst [vmem:[%s319 + $0x2c] sm:$0xf] %v1839
      %1904 = vst [vmem:[%s319 + $0x30] sm:$0xf] %v1840
      %1905 = vst [vmem:[%s319 + $0x34] sm:$0xf] %v1841
      %1906 = vst [vmem:[%s319 + $0x38] sm:$0xf] %v1842
      %1907 = vst [vmem:[%s319 + $0x3c] sm:$0xf] %v1843
      %1908 = vst [vmem:[%s319 + $0x40] sm:$0xf] %v1844
      %1909 = vst [vmem:[%s319 + $0x44] sm:$0xf] %v1845
      %1910 = vst [vmem:[%s319 + $0x48] sm:$0xf] %v1846
      %1911 = vst [vmem:[%s319 + $0x4c] sm:$0xf] %v1847
      %1912 = vst [vmem:[%s319 + $0x50] sm:$0xf] %v1848
      %1913 = vst [vmem:[%s319 + $0x54] sm:$0xf] %v1849
      %1914 = vst [vmem:[%s319 + $0x58] sm:$0xf] %v1850
      %1915 = vst [vmem:[%s319 + $0x5c] sm:$0xf] %v1851
      %1916 = vst [vmem:[%s319 + $0x60] sm:$0xf] %v1852
      %1917 = vst [vmem:[%s319 + $0x64] sm:$0xf] %v1853
      %1918 = vst [vmem:[%s319 + $0x68] sm:$0xf] %v1854
      %1919 = vst [vmem:[%s319 + $0x6c] sm:$0xf] %v1855
      %1920 = vst [vmem:[%s319 + $0x70] sm:$0xf] %v1856
      %1921 = vst [vmem:[%s319 + $0x74] sm:$0xf] %v1857
      %1922 = vst [vmem:[%s319 + $0x78] sm:$0xf] %v1858
      %1923 = vst [vmem:[%s319 + $0x7c] sm:$0xf] %v1859
      %s1924 = smul.u32 32, %s17
      %p1925 = scmp.lt.s32.totalorder %s1924, 63
      %s1926 = scalar_select %p1925, %s1924, 63
      %s1927 = smul.addr %s1926, 4
      %s1928 = scalar_lea.vmem %s6, %s1927
      // Predicated region
      $region45: #{alphabet_with_scallop_forward.3} parent=43 // pred_check
        %p1929 = pneg %p181
      $region46: #{alphabet_with_scallop_forward.3} parent=43 // pred_check_branch
        %1931 = sbr.rel (%p1929) target = $region48
      $region47: #{alphabet_with_scallop_forward.3} parent=43 // pred_region
        %s1932 = smul.u32 32, %s17
      $region48: #{alphabet_with_scallop_forward.3} parent=43 // pred_fallthru
        _
    $region44: #{alphabet_with_scallop_forward.3} parent=5 // pred_fallthru
      _
    %p1933 = scmp.le.s32.totalorder 2, %s12
    // Predicated region
    $region49: #{alphabet_with_scallop_forward.3} parent=5 // pred_check
      %p1934 = pneg %p1933
    $region50: #{alphabet_with_scallop_forward.3} parent=5 // pred_check_branch
      %1936 = sbr.rel (%p1934) target = $region52
    $region51: #{alphabet_with_scallop_forward.3} parent=5 // pred_region
      %s1937 = ssub.s32 %s12, 2
      // Predicated region
      $region53: #{alphabet_with_scallop_forward.3} parent=51 // pred_check
        %p1938 = pneg %p187
      $region54: #{alphabet_with_scallop_forward.3} parent=51 // pred_check_branch
        %1940 = sbr.rel (%p1938) target = $region56
      $region55: #{alphabet_with_scallop_forward.3} parent=51 // pred_region
        %s1941 = smul.u32 32, %s18
        %p1942 = scmp.lt.s32.totalorder %s1941, 63
        %s1943 = scalar_select %p1942, %s1941, 63
        %s1944 = smul.addr %s1943, 4
        %s1945 = scalar_lea.vmem %s6, %s1944
      $region56: #{alphabet_with_scallop_forward.3} parent=51 // pred_fallthru
        _
    $region52: #{alphabet_with_scallop_forward.3} parent=5 // pred_fallthru
      _
  $region6: #{alphabet_with_scallop_forward.3} parent=0 // loop_footer
    %s16 = sadd.s32 1, %s12
  $region7: #{alphabet_with_scallop_forward.3} parent=0 // loop_footer_branch
    %11 = sbr.rel target = $region3
  $region8: #{alphabet_with_scallop_forward.3} parent=0 // loop_exit
    _

// kernel: alphabet_with_scallop_forward.4
$region0: #{alphabet_with_scallop_forward.4}
  #allocation0 [shape = 'u32[]', space=smem, size = 0x4, offset = 0x4, fixed_abs, tag = 'smem constant byte address 0x4 - core index']
  #allocation1 [shape = 'u32[144,128]{1,0:T(1,128)}', space=vmem, size = 0x12000, scoped, tag = 'internal scratch']
  %s0 = inlined_call_operand.vmem [shape: bf16[32,800], index: 0, kind: input, shape index: {}]
  %s1 = inlined_call_operand.vmem [shape: bf16[32,800], index: 1, kind: input, shape index: {}]
  %s2 = inlined_call_operand.vmem [shape: bf16[32,800], index: 2, kind: input, shape index: {}]
  %s3 = inlined_call_operand.vmem [shape: bf16[32,800], index: 3, kind: input, shape index: {}]
  %s4 = inlined_call_operand.vmem [shape: bf16[800,128], index: 4, kind: input, shape index: {}]
  %s5 = inlined_call_operand.vmem [shape: f32[1,128], index: 5, kind: input, shape index: {}]
  %s6 = inlined_call_operand.vmem [shape: bf16[32,128], index: 6, kind: output, shape index: {}]
  %s7 = sld [smem:[#allocation0]]
  $region34: #{alphabet_with_scallop_forward.4} parent=0
    _
  %s9 = ssub.s32 1, %s7
  %s10 = scalar_select 0, %s9, %s7
  // Predicated region
  $region2: #{alphabet_with_scallop_forward.4} parent=0 // pred_check
    _
  $region3: #{alphabet_with_scallop_forward.4} parent=0 // pred_check_branch
    %12 = sbr.rel (0) target = $region5
  $region4: #{alphabet_with_scallop_forward.4} parent=0 // pred_region
    _
  $region5: #{alphabet_with_scallop_forward.4} parent=0 // pred_fallthru
    _
  // Predicated region
  $region6: #{alphabet_with_scallop_forward.4} parent=0 // pred_check
    _
  $region7: #{alphabet_with_scallop_forward.4} parent=0 // pred_check_branch
    %14 = sbr.rel (0) target = $region9
  $region8: #{alphabet_with_scallop_forward.4} parent=0 // pred_region
    _
  $region9: #{alphabet_with_scallop_forward.4} parent=0 // pred_fallthru
    _
  // Predicated region
  $region10: #{alphabet_with_scallop_forward.4} parent=0 // pred_check
    _
  $region11: #{alphabet_with_scallop_forward.4} parent=0 // pred_check_branch
    %16 = sbr.rel (0) target = $region13
  $region12: #{alphabet_with_scallop_forward.4} parent=0 // pred_region
    _
  $region13: #{alphabet_with_scallop_forward.4} parent=0 // pred_fallthru
    _
  // Predicated region
  $region14: #{alphabet_with_scallop_forward.4} parent=0 // pred_check
    _
  $region15: #{alphabet_with_scallop_forward.4} parent=0 // pred_check_branch
    %18 = sbr.rel (0) target = $region17
  $region16: #{alphabet_with_scallop_forward.4} parent=0 // pred_region
    _
  $region17: #{alphabet_with_scallop_forward.4} parent=0 // pred_fallthru
    _
  // Predicated region
  $region18: #{alphabet_with_scallop_forward.4} parent=0 // pred_check
    _
  $region19: #{alphabet_with_scallop_forward.4} parent=0 // pred_check_branch
    %20 = sbr.rel (0) target = $region21
  $region20: #{alphabet_with_scallop_forward.4} parent=0 // pred_region
    _
  $region21: #{alphabet_with_scallop_forward.4} parent=0 // pred_fallthru
    _
  // Predicated region
  $region22: #{alphabet_with_scallop_forward.4} parent=0 // pred_check
    _
  $region23: #{alphabet_with_scallop_forward.4} parent=0 // pred_check_branch
    %22 = sbr.rel (0) target = $region25
  $region24: #{alphabet_with_scallop_forward.4} parent=0 // pred_region
    _
  $region25: #{alphabet_with_scallop_forward.4} parent=0 // pred_fallthru
    _
  %v24 = vld [vmem:[%s4] sm:$0xf]
  %v25 = vld [vmem:[%s4 + $0x4] sm:$0xf]
  %v26 = vld [vmem:[%s4 + $0x8] sm:$0xf]
  %v27 = vld [vmem:[%s4 + $0xc] sm:$0xf]
  %v28 = vld [vmem:[%s4 + $0x10] sm:$0xf]
  %v29 = vld [vmem:[%s4 + $0x14] sm:$0xf]
  %v30 = vld [vmem:[%s4 + $0x18] sm:$0xf]
  %v31 = vld [vmem:[%s4 + $0x1c] sm:$0xf]
  %v32 = vld [vmem:[%s4 + $0x20] sm:$0xf]
  %v33 = vld [vmem:[%s4 + $0x24] sm:$0xf]
  %v34 = vld [vmem:[%s4 + $0x28] sm:$0xf]
  %v35 = vld [vmem:[%s4 + $0x2c] sm:$0xf]
  %v36 = vld [vmem:[%s4 + $0x30] sm:$0xf]
  %v37 = vld [vmem:[%s4 + $0x34] sm:$0xf]
  %v38 = vld [vmem:[%s4 + $0x38] sm:$0xf]
  %v39 = vld [vmem:[%s4 + $0x3c] sm:$0xf]
  %v40 = vld [vmem:[%s4 + $0x40] sm:$0xf]
  %v41 = vld [vmem:[%s4 + $0x44] sm:$0xf]
  %v42 = vld [vmem:[%s4 + $0x48] sm:$0xf]
  %v43 = vld [vmem:[%s4 + $0x4c] sm:$0xf]
  %v44 = vld [vmem:[%s4 + $0x50] sm:$0xf]
  %v45 = vld [vmem:[%s4 + $0x54] sm:$0xf]
  %v46 = vld [vmem:[%s4 + $0x58] sm:$0xf]
  %v47 = vld [vmem:[%s4 + $0x5c] sm:$0xf]
  %v48 = vld [vmem:[%s4 + $0x60] sm:$0xf]
  %v49 = vld [vmem:[%s4 + $0x64] sm:$0xf]
  %v50 = vld [vmem:[%s4 + $0x68] sm:$0xf]
  %v51 = vld [vmem:[%s4 + $0x6c] sm:$0xf]
  %v52 = vld [vmem:[%s4 + $0x70] sm:$0xf]
  %v53 = vld [vmem:[%s4 + $0x74] sm:$0xf]
  %v54 = vld [vmem:[%s4 + $0x78] sm:$0xf]
  %v55 = vld [vmem:[%s4 + $0x7c] sm:$0xf]
  %v56 = vld [vmem:[%s4 + $0x80] sm:$0xf]
  %v57 = vld [vmem:[%s4 + $0x84] sm:$0xf]
  %v58 = vld [vmem:[%s4 + $0x88] sm:$0xf]
  %v59 = vld [vmem:[%s4 + $0x8c] sm:$0xf]
  %v60 = vld [vmem:[%s4 + $0x90] sm:$0xf]
  %v61 = vld [vmem:[%s4 + $0x94] sm:$0xf]
  %v62 = vld [vmem:[%s4 + $0x98] sm:$0xf]
  %v63 = vld [vmem:[%s4 + $0x9c] sm:$0xf]
  %v64 = vld [vmem:[%s4 + $0xa0] sm:$0xf]
  %v65 = vld [vmem:[%s4 + $0xa4] sm:$0xf]
  %v66 = vld [vmem:[%s4 + $0xa8] sm:$0xf]
  %v67 = vld [vmem:[%s4 + $0xac] sm:$0xf]
  %v68 = vld [vmem:[%s4 + $0xb0] sm:$0xf]
  %v69 = vld [vmem:[%s4 + $0xb4] sm:$0xf]
  %v70 = vld [vmem:[%s4 + $0xb8] sm:$0xf]
  %v71 = vld [vmem:[%s4 + $0xbc] sm:$0xf]
  %v72 = vld [vmem:[%s4 + $0xc0] sm:$0xf]
  %v73 = vld [vmem:[%s4 + $0xc4] sm:$0xf]
  %v74 = vld [vmem:[%s4 + $0xc8] sm:$0xf]
  %v75 = vld [vmem:[%s4 + $0xcc] sm:$0xf]
  %v76 = vld [vmem:[%s4 + $0xd0] sm:$0xf]
  %v77 = vld [vmem:[%s4 + $0xd4] sm:$0xf]
  %v78 = vld [vmem:[%s4 + $0xd8] sm:$0xf]
  %v79 = vld [vmem:[%s4 + $0xdc] sm:$0xf]
  %v80 = vld [vmem:[%s4 + $0xe0] sm:$0xf]
  %v81 = vld [vmem:[%s4 + $0xe4] sm:$0xf]
  %v82 = vld [vmem:[%s4 + $0xe8] sm:$0xf]
  %v83 = vld [vmem:[%s4 + $0xec] sm:$0xf]
  %v84 = vld [vmem:[%s4 + $0xf0] sm:$0xf]
  %v85 = vld [vmem:[%s4 + $0xf4] sm:$0xf]
  %v86 = vld [vmem:[%s4 + $0xf8] sm:$0xf]
  %v87 = vld [vmem:[%s4 + $0xfc] sm:$0xf]
  %v88 = vld [vmem:[%s4 + $0x100] sm:$0xf]
  %v89 = vld [vmem:[%s4 + $0x104] sm:$0xf]
  %v90 = vld [vmem:[%s4 + $0x108] sm:$0xf]
  %v91 = vld [vmem:[%s4 + $0x10c] sm:$0xf]
  %v92 = vld [vmem:[%s4 + $0x110] sm:$0xf]
  %v93 = vld [vmem:[%s4 + $0x114] sm:$0xf]
  %v94 = vld [vmem:[%s4 + $0x118] sm:$0xf]
  %v95 = vld [vmem:[%s4 + $0x11c] sm:$0xf]
  %v96 = vld [vmem:[%s4 + $0x120] sm:$0xf]
  %v97 = vld [vmem:[%s4 + $0x124] sm:$0xf]
  %v98 = vld [vmem:[%s4 + $0x128] sm:$0xf]
  %v99 = vld [vmem:[%s4 + $0x12c] sm:$0xf]
  %v100 = vld [vmem:[%s4 + $0x130] sm:$0xf]
  %v101 = vld [vmem:[%s4 + $0x134] sm:$0xf]
  %v102 = vld [vmem:[%s4 + $0x138] sm:$0xf]
  %v103 = vld [vmem:[%s4 + $0x13c] sm:$0xf]
  %v104 = vld [vmem:[%s4 + $0x140] sm:$0xf]
  %v105 = vld [vmem:[%s4 + $0x144] sm:$0xf]
  %v106 = vld [vmem:[%s4 + $0x148] sm:$0xf]
  %v107 = vld [vmem:[%s4 + $0x14c] sm:$0xf]
  %v108 = vld [vmem:[%s4 + $0x150] sm:$0xf]
  %v109 = vld [vmem:[%s4 + $0x154] sm:$0xf]
  %v110 = vld [vmem:[%s4 + $0x158] sm:$0xf]
  %v111 = vld [vmem:[%s4 + $0x15c] sm:$0xf]
  %v112 = vld [vmem:[%s4 + $0x160] sm:$0xf]
  %v113 = vld [vmem:[%s4 + $0x164] sm:$0xf]
  %v114 = vld [vmem:[%s4 + $0x168] sm:$0xf]
  %v115 = vld [vmem:[%s4 + $0x16c] sm:$0xf]
  %v116 = vld [vmem:[%s4 + $0x170] sm:$0xf]
  %v117 = vld [vmem:[%s4 + $0x174] sm:$0xf]
  %v118 = vld [vmem:[%s4 + $0x178] sm:$0xf]
  %v119 = vld [vmem:[%s4 + $0x17c] sm:$0xf]
  %v120 = vld [vmem:[%s4 + $0x180] sm:$0xf]
  %v121 = vld [vmem:[%s4 + $0x184] sm:$0xf]
  %v122 = vld [vmem:[%s4 + $0x188] sm:$0xf]
  %v123 = vld [vmem:[%s4 + $0x18c] sm:$0xf]
  %v124 = vld [vmem:[%s0] sm:$0xff]
  %v125 = vld [vmem:[%s0 + $0x8] sm:$0xff]
  %v126 = vld [vmem:[%s0 + $0x10] sm:$0xff]
  %v127 = vld [vmem:[%s0 + $0x18] sm:$0xf]
  %v128 = vld [vmem:[%s0 + $0x1c] sm:$0xff]
  %v129 = vld [vmem:[%s0 + $0x24] sm:$0xff]
  %v130 = vld [vmem:[%s0 + $0x2c] sm:$0xff]
  %v131 = vld [vmem:[%s0 + $0x34] sm:$0xf]
  %v132 = vld [vmem:[%s0 + $0x38] sm:$0xff]
  %v133 = vld [vmem:[%s0 + $0x40] sm:$0xff]
  %v134 = vld [vmem:[%s0 + $0x48] sm:$0xff]
  %v135 = vld [vmem:[%s0 + $0x50] sm:$0xf]
  %v136 = vld [vmem:[%s0 + $0x54] sm:$0xff]
  %v137 = vld [vmem:[%s0 + $0x5c] sm:$0xff]
  %v138 = vld [vmem:[%s0 + $0x64] sm:$0xff]
  %v139 = vld [vmem:[%s0 + $0x6c] sm:$0xf]
  %v156 = vunpack.c.l.b16 %v124
  %v157 = vunpack.c.h.b16 %v124
  %v158 = vunpack.c.l.b16 %v125
  %v159 = vunpack.c.h.b16 %v125
  %v160 = vunpack.c.l.b16 %v126
  %v161 = vunpack.c.h.b16 %v126
  %v162 = vunpack.c.l.b16 %v127
  %v163 = vunpack.c.l.b16 %v128
  %v164 = vunpack.c.h.b16 %v128
  %v165 = vunpack.c.l.b16 %v129
  %v166 = vunpack.c.h.b16 %v129
  %v167 = vunpack.c.l.b16 %v130
  %v168 = vunpack.c.h.b16 %v130
  %v169 = vunpack.c.l.b16 %v131
  %v170 = vunpack.c.l.b16 %v132
  %v171 = vunpack.c.h.b16 %v132
  %v172 = vunpack.c.l.b16 %v133
  %v173 = vunpack.c.h.b16 %v133
  %v174 = vunpack.c.l.b16 %v134
  %v175 = vunpack.c.h.b16 %v134
  %v176 = vunpack.c.l.b16 %v135
  %v177 = vunpack.c.l.b16 %v136
  %v178 = vunpack.c.h.b16 %v136
  %v179 = vunpack.c.l.b16 %v137
  %v180 = vunpack.c.h.b16 %v137
  %v181 = vunpack.c.l.b16 %v138
  %v182 = vunpack.c.h.b16 %v138
  %v183 = vunpack.c.l.b16 %v139
  %v184 = vpack.c.b16 %v163, %v156
  %v185 = vpack.c.b16 %v164, %v157
  %v186 = vpack.c.b16 %v165, %v158
  %v187 = vpack.c.b16 %v166, %v159
  %v188 = vpack.c.b16 %v167, %v160
  %v189 = vpack.c.b16 %v168, %v161
  %v190 = vpack.c.b16 %v169, %v162
  %v191 = vpack.c.b16 %v177, %v170
  %v192 = vpack.c.b16 %v178, %v171
  %v193 = vpack.c.b16 %v179, %v172
  %v194 = vpack.c.b16 %v180, %v173
  %v195 = vpack.c.b16 %v181, %v174
  %v196 = vpack.c.b16 %v182, %v175
  %v197 = vpack.c.b16 %v183, %v176
  %v310 = vunpack.c.l.b16 %v24
  %v311 = vunpack.c.l.b16 %v25
  %v312 = vunpack.c.l.b16 %v26
  %v313 = vunpack.c.l.b16 %v27
  %v314 = vunpack.c.l.b16 %v28
  %v315 = vunpack.c.l.b16 %v29
  %v316 = vunpack.c.l.b16 %v30
  %v317 = vunpack.c.l.b16 %v31
  %v318 = vunpack.c.l.b16 %v32
  %v319 = vunpack.c.l.b16 %v33
  %v320 = vunpack.c.l.b16 %v34
  %v321 = vunpack.c.l.b16 %v35
  %v322 = vunpack.c.l.b16 %v36
  %v323 = vunpack.c.l.b16 %v37
  %v324 = vunpack.c.l.b16 %v38
  %v325 = vunpack.c.l.b16 %v39
  %v326 = vunpack.c.l.b16 %v40
  %v327 = vunpack.c.l.b16 %v41
  %v328 = vunpack.c.l.b16 %v42
  %v329 = vunpack.c.l.b16 %v43
  %v330 = vunpack.c.l.b16 %v44
  %v331 = vunpack.c.l.b16 %v45
  %v332 = vunpack.c.l.b16 %v46
  %v333 = vunpack.c.l.b16 %v47
  %v334 = vunpack.c.l.b16 %v48
  %v335 = vunpack.c.l.b16 %v49
  %v336 = vunpack.c.l.b16 %v50
  %v337 = vunpack.c.l.b16 %v51
  %v338 = vunpack.c.l.b16 %v52
  %v339 = vunpack.c.l.b16 %v53
  %v340 = vunpack.c.l.b16 %v54
  %v341 = vunpack.c.l.b16 %v55
  %v342 = vunpack.c.l.b16 %v56
  %v343 = vunpack.c.l.b16 %v57
  %v344 = vunpack.c.l.b16 %v58
  %v345 = vunpack.c.l.b16 %v59
  %v346 = vunpack.c.l.b16 %v60
  %v347 = vunpack.c.l.b16 %v61
  %v348 = vunpack.c.l.b16 %v62
  %v349 = vunpack.c.l.b16 %v63
  %v350 = vunpack.c.l.b16 %v64
  %v351 = vunpack.c.l.b16 %v65
  %v352 = vunpack.c.l.b16 %v66
  %v353 = vunpack.c.l.b16 %v67
  %v354 = vunpack.c.l.b16 %v68
  %v355 = vunpack.c.l.b16 %v69
  %v356 = vunpack.c.l.b16 %v70
  %v357 = vunpack.c.l.b16 %v71
  %v358 = vunpack.c.l.b16 %v72
  %v359 = vunpack.c.l.b16 %v73
  %v360 = vunpack.c.l.b16 %v74
  %v361 = vunpack.c.l.b16 %v75
  %v362 = vunpack.c.l.b16 %v76
  %v363 = vunpack.c.l.b16 %v77
  %v364 = vunpack.c.l.b16 %v78
  %v365 = vunpack.c.l.b16 %v79
  %v366 = vunpack.c.l.b16 %v80
  %v367 = vunpack.c.l.b16 %v81
  %v368 = vunpack.c.l.b16 %v82
  %v369 = vunpack.c.l.b16 %v83
  %v370 = vunpack.c.l.b16 %v84
  %v371 = vunpack.c.l.b16 %v85
  %v372 = vunpack.c.l.b16 %v86
  %v373 = vunpack.c.l.b16 %v87
  %v374 = vunpack.c.l.b16 %v88
  %v375 = vunpack.c.l.b16 %v89
  %v376 = vunpack.c.l.b16 %v90
  %v377 = vunpack.c.l.b16 %v91
  %v378 = vunpack.c.l.b16 %v92
  %v379 = vunpack.c.l.b16 %v93
  %v380 = vunpack.c.l.b16 %v94
  %v381 = vunpack.c.l.b16 %v95
  %v382 = vunpack.c.l.b16 %v96
  %v383 = vunpack.c.l.b16 %v97
  %v384 = vunpack.c.l.b16 %v98
  %v385 = vunpack.c.l.b16 %v99
  %v386 = vunpack.c.l.b16 %v100
  %v387 = vunpack.c.l.b16 %v101
  %v388 = vunpack.c.l.b16 %v102
  %v389 = vunpack.c.l.b16 %v103
  %v390 = vunpack.c.l.b16 %v104
  %v391 = vunpack.c.l.b16 %v105
  %v392 = vunpack.c.l.b16 %v106
  %v393 = vunpack.c.l.b16 %v107
  %v394 = vunpack.c.l.b16 %v108
  %v395 = vunpack.c.l.b16 %v109
  %v396 = vunpack.c.l.b16 %v110
  %v397 = vunpack.c.l.b16 %v111
  %v398 = vunpack.c.l.b16 %v112
  %v399 = vunpack.c.l.b16 %v113
  %v400 = vunpack.c.l.b16 %v114
  %v401 = vunpack.c.l.b16 %v115
  %v402 = vunpack.c.l.b16 %v116
  %v403 = vunpack.c.l.b16 %v117
  %v404 = vunpack.c.l.b16 %v118
  %v405 = vunpack.c.l.b16 %v119
  %v406 = vunpack.c.l.b16 %v120
  %v407 = vunpack.c.l.b16 %v121
  %v408 = vunpack.c.l.b16 %v122
  %v409 = vunpack.c.l.b16 %v123
  %v410 = vpack.c.b16 %v311, %v310
  %v411 = vpack.c.b16 %v313, %v312
  %v412 = vpack.c.b16 %v315, %v314
  %v413 = vpack.c.b16 %v317, %v316
  %v414 = vpack.c.b16 %v319, %v318
  %v415 = vpack.c.b16 %v321, %v320
  %v416 = vpack.c.b16 %v323, %v322
  %v417 = vpack.c.b16 %v325, %v324
  %v418 = vpack.c.b16 %v327, %v326
  %v419 = vpack.c.b16 %v329, %v328
  %v420 = vpack.c.b16 %v331, %v330
  %v421 = vpack.c.b16 %v333, %v332
  %v422 = vpack.c.b16 %v335, %v334
  %v423 = vpack.c.b16 %v337, %v336
  %v424 = vpack.c.b16 %v339, %v338
  %v425 = vpack.c.b16 %v341, %v340
  %v426 = vpack.c.b16 %v343, %v342
  %v427 = vpack.c.b16 %v345, %v344
  %v428 = vpack.c.b16 %v347, %v346
  %v429 = vpack.c.b16 %v349, %v348
  %v430 = vpack.c.b16 %v351, %v350
  %v431 = vpack.c.b16 %v353, %v352
  %v432 = vpack.c.b16 %v355, %v354
  %v433 = vpack.c.b16 %v357, %v356
  %v434 = vpack.c.b16 %v359, %v358
  %v435 = vpack.c.b16 %v361, %v360
  %v436 = vpack.c.b16 %v363, %v362
  %v437 = vpack.c.b16 %v365, %v364
  %v438 = vpack.c.b16 %v367, %v366
  %v439 = vpack.c.b16 %v369, %v368
  %v440 = vpack.c.b16 %v371, %v370
  %v441 = vpack.c.b16 %v373, %v372
  %v442 = vpack.c.b16 %v375, %v374
  %v443 = vpack.c.b16 %v377, %v376
  %v444 = vpack.c.b16 %v379, %v378
  %v445 = vpack.c.b16 %v381, %v380
  %v446 = vpack.c.b16 %v383, %v382
  %v447 = vpack.c.b16 %v385, %v384
  %v448 = vpack.c.b16 %v387, %v386
  %v449 = vpack.c.b16 %v389, %v388
  %v450 = vpack.c.b16 %v391, %v390
  %v451 = vpack.c.b16 %v393, %v392
  %v452 = vpack.c.b16 %v395, %v394
  %v453 = vpack.c.b16 %v397, %v396
  %v454 = vpack.c.b16 %v399, %v398
  %v455 = vpack.c.b16 %v401, %v400
  %v456 = vpack.c.b16 %v403, %v402
  %v457 = vpack.c.b16 %v405, %v404
  %v458 = vpack.c.b16 %v407, %v406
  %v459 = vpack.c.b16 %v409, %v408
  %vm510 = vcmask 261120
  %v512 = vsel %vm510, %v190, 0
  %v515 = vsel %vm510, %v197, 0
  %517 = vmatprep.subr.bf16.mxu0 0
  %518 = vmatpush1.bf16.msra.mxu0 %v417
  %519 = vmatprep.subr.bf16.mxu0 0
  %520 = vmatpush1.bf16.msra.mxu0 %v416
  %521 = vmatprep.subr.bf16.mxu0 0
  %522 = vmatpush1.bf16.msra.mxu0 %v415
  %523 = vmatprep.subr.bf16.mxu0 0
  %524 = vmatpush1.bf16.msra.mxu0 %v414
  %525 = vmatprep.subr.bf16.mxu0 0
  %526 = vmatpush1.bf16.msra.mxu0 %v413
  %527 = vmatprep.subr.bf16.mxu0 0
  %528 = vmatpush1.bf16.msra.mxu0 %v412
  %529 = vmatprep.subr.bf16.mxu0 0
  %530 = vmatpush1.bf16.msra.mxu0 %v411
  %531 = vmatprep.subr.bf16.mxu0 0
  %532 = vmatpush1.bf16.msra.mxu0 %v410
  %533 = vmatprep.subr.bf16.mxu0 0
  %534 = vmatpush2.bf16.msra.mxu0 %v425
  %535 = vmatprep.subr.bf16.mxu0 0
  %536 = vmatpush2.bf16.msra.mxu0 %v424
  %537 = vmatprep.subr.bf16.mxu0 0
  %538 = vmatpush2.bf16.msra.mxu0 %v423
  %539 = vmatprep.subr.bf16.mxu0 0
  %540 = vmatpush2.bf16.msra.mxu0 %v422
  %541 = vmatprep.subr.bf16.mxu0 0
  %542 = vmatpush2.bf16.msra.mxu0 %v421
  %543 = vmatprep.subr.bf16.mxu0 0
  %544 = vmatpush2.bf16.msra.mxu0 %v420
  %545 = vmatprep.subr.bf16.mxu0 0
  %546 = vmatpush2.bf16.msra.mxu0 %v419
  %547 = vmatprep.subr.bf16.mxu0 0
  %548 = vmatpush2.bf16.msra.mxu0 %v418
  %549 = vmatprep.mubr.bf16.mxu0 %v185
  %550 = vmatmul.mubr.bf16.gmra.mxu0 %v184
  %v551 = vpop.f32.mrf.mxu0
  %v552 = vadd.f32 0.0, %v551
  %v553 = vpop.f32.mrf.mxu0
  %v554 = vpop.f32.mrf.mxu0
  %v555 = vadd.f32 0.0, %v554
  %v556 = vpop.f32.mrf.mxu0
  %557 = vmatprep.mubr.bf16.mxu0 %v192
  %558 = vmatmul.mubr.bf16.gmra.mxu0 %v191
  %v559 = vpop.f32.mrf.mxu0
  %v560 = vadd.f32 0.0, %v559
  %v561 = vpop.f32.mrf.mxu0
  %v562 = vpop.f32.mrf.mxu0
  %v563 = vadd.f32 0.0, %v562
  %v564 = vpop.f32.mrf.mxu0
  %565 = vdwg.mxu0
  %566 = vmatprep.subr.bf16.mxu0 0
  %567 = vmatpush1.bf16.msra.mxu0 %v433
  %568 = vmatprep.subr.bf16.mxu0 0
  %569 = vmatpush1.bf16.msra.mxu0 %v432
  %570 = vmatprep.subr.bf16.mxu0 0
  %571 = vmatpush1.bf16.msra.mxu0 %v431
  %572 = vmatprep.subr.bf16.mxu0 0
  %573 = vmatpush1.bf16.msra.mxu0 %v430
  %574 = vmatprep.subr.bf16.mxu0 0
  %575 = vmatpush1.bf16.msra.mxu0 %v429
  %576 = vmatprep.subr.bf16.mxu0 0
  %577 = vmatpush1.bf16.msra.mxu0 %v428
  %578 = vmatprep.subr.bf16.mxu0 0
  %579 = vmatpush1.bf16.msra.mxu0 %v427
  %580 = vmatprep.subr.bf16.mxu0 0
  %581 = vmatpush1.bf16.msra.mxu0 %v426
  %582 = vmatprep.subr.bf16.mxu0 0
  %583 = vmatpush2.bf16.msra.mxu0 %v441
  %584 = vmatprep.subr.bf16.mxu0 0
  %585 = vmatpush2.bf16.msra.mxu0 %v440
  %586 = vmatprep.subr.bf16.mxu0 0
  %587 = vmatpush2.bf16.msra.mxu0 %v439
  %588 = vmatprep.subr.bf16.mxu0 0
  %589 = vmatpush2.bf16.msra.mxu0 %v438
  %590 = vmatprep.subr.bf16.mxu0 0
  %591 = vmatpush2.bf16.msra.mxu0 %v437
  %592 = vmatprep.subr.bf16.mxu0 0
  %593 = vmatpush2.bf16.msra.mxu0 %v436
  %594 = vmatprep.subr.bf16.mxu0 0
  %595 = vmatpush2.bf16.msra.mxu0 %v435
  %596 = vmatprep.subr.bf16.mxu0 0
  %597 = vmatpush2.bf16.msra.mxu0 %v434
  %598 = vmatprep.mubr.bf16.mxu0 %v187
  %599 = vmatmul.mubr.bf16.gmra.mxu0 %v186
  %v600 = vpop.f32.mrf.mxu0
  %v601 = vadd.f32 %v552, %v600
  %v602 = vpop.f32.mrf.mxu0
  %v603 = vpop.f32.mrf.mxu0
  %v604 = vadd.f32 %v555, %v603
  %v605 = vpop.f32.mrf.mxu0
  %606 = vmatprep.mubr.bf16.mxu0 %v194
  %607 = vmatmul.mubr.bf16.gmra.mxu0 %v193
  %v608 = vpop.f32.mrf.mxu0
  %v609 = vadd.f32 %v560, %v608
  %v610 = vpop.f32.mrf.mxu0
  %v611 = vpop.f32.mrf.mxu0
  %v612 = vadd.f32 %v563, %v611
  %v613 = vpop.f32.mrf.mxu0
  %614 = vdwg.mxu0
  %615 = vmatprep.subr.bf16.mxu0 0
  %616 = vmatpush1.bf16.msra.mxu0 %v449
  %617 = vmatprep.subr.bf16.mxu0 0
  %618 = vmatpush1.bf16.msra.mxu0 %v448
  %619 = vmatprep.subr.bf16.mxu0 0
  %620 = vmatpush1.bf16.msra.mxu0 %v447
  %621 = vmatprep.subr.bf16.mxu0 0
  %622 = vmatpush1.bf16.msra.mxu0 %v446
  %623 = vmatprep.subr.bf16.mxu0 0
  %624 = vmatpush1.bf16.msra.mxu0 %v445
  %625 = vmatprep.subr.bf16.mxu0 0
  %626 = vmatpush1.bf16.msra.mxu0 %v444
  %627 = vmatprep.subr.bf16.mxu0 0
  %628 = vmatpush1.bf16.msra.mxu0 %v443
  %629 = vmatprep.subr.bf16.mxu0 0
  %630 = vmatpush1.bf16.msra.mxu0 %v442
  %631 = vmatprep.subr.bf16.mxu0 0
  %632 = vmatpush2.bf16.msra.mxu0 %v457
  %633 = vmatprep.subr.bf16.mxu0 0
  %634 = vmatpush2.bf16.msra.mxu0 %v456
  %635 = vmatprep.subr.bf16.mxu0 0
  %636 = vmatpush2.bf16.msra.mxu0 %v455
  %637 = vmatprep.subr.bf16.mxu0 0
  %638 = vmatpush2.bf16.msra.mxu0 %v454
  %639 = vmatprep.subr.bf16.mxu0 0
  %640 = vmatpush2.bf16.msra.mxu0 %v453
  %641 = vmatprep.subr.bf16.mxu0 0
  %642 = vmatpush2.bf16.msra.mxu0 %v452
  %643 = vmatprep.subr.bf16.mxu0 0
  %644 = vmatpush2.bf16.msra.mxu0 %v451
  %645 = vmatprep.subr.bf16.mxu0 0
  %646 = vmatpush2.bf16.msra.mxu0 %v450
  %647 = vmatprep.mubr.bf16.mxu0 %v189
  %648 = vmatmul.mubr.bf16.gmra.mxu0 %v188
  %v649 = vpop.f32.mrf.mxu0
  %v650 = vadd.f32 %v601, %v649
  %v651 = vpop.f32.mrf.mxu0
  %v652 = vpop.f32.mrf.mxu0
  %v653 = vadd.f32 %v604, %v652
  %v654 = vpop.f32.mrf.mxu0
  %655 = vmatprep.mubr.bf16.mxu0 %v196
  %656 = vmatmul.mubr.bf16.gmra.mxu0 %v195
  %v657 = vpop.f32.mrf.mxu0
  %v658 = vadd.f32 %v609, %v657
  %v659 = vpop.f32.mrf.mxu0
  %v660 = vpop.f32.mrf.mxu0
  %v661 = vadd.f32 %v612, %v660
  %v662 = vpop.f32.mrf.mxu0
  %663 = vdwg.mxu0
  %664 = vmatprep.subr.bf16.mxu0 0
  %665 = vmatpush1.bf16.msra.mxu0 0
  %666 = vmatprep.subr.bf16.mxu0 0
  %667 = vmatpush1.bf16.msra.mxu0 0
  %668 = vmatprep.subr.bf16.mxu0 0
  %669 = vmatpush1.bf16.msra.mxu0 0
  %670 = vmatprep.subr.bf16.mxu0 0
  %671 = vmatpush1.bf16.msra.mxu0 0
  %672 = vmatprep.subr.bf16.mxu0 0
  %673 = vmatpush1.bf16.msra.mxu0 0
  %674 = vmatprep.subr.bf16.mxu0 0
  %675 = vmatpush1.bf16.msra.mxu0 0
  %676 = vmatprep.subr.bf16.mxu0 0
  %677 = vmatpush1.bf16.msra.mxu0 %v459
  %678 = vmatprep.subr.bf16.mxu0 0
  %679 = vmatpush1.bf16.msra.mxu0 %v458
  %680 = vmatprep.subr.bf16.mxu0 0
  %681 = vmatpush2.bf16.msra.mxu0 0
  %682 = vmatprep.subr.bf16.mxu0 0
  %683 = vmatpush2.bf16.msra.mxu0 0
  %684 = vmatprep.subr.bf16.mxu0 0
  %685 = vmatpush2.bf16.msra.mxu0 0
  %686 = vmatprep.subr.bf16.mxu0 0
  %687 = vmatpush2.bf16.msra.mxu0 0
  %688 = vmatprep.subr.bf16.mxu0 0
  %689 = vmatpush2.bf16.msra.mxu0 0
  %690 = vmatprep.subr.bf16.mxu0 0
  %691 = vmatpush2.bf16.msra.mxu0 0
  %692 = vmatprep.subr.bf16.mxu0 0
  %693 = vmatpush2.bf16.msra.mxu0 0
  %694 = vmatprep.subr.bf16.mxu0 0
  %695 = vmatpush2.bf16.msra.mxu0 0
  %696 = vmatprep.mubr.bf16.mxu0 0
  %697 = vmatmul.mubr.bf16.gmra.mxu0 %v512
  %v698 = vpop.f32.mrf.mxu0
  %v699 = vadd.f32 %v650, %v698
  %v700 = vpop.f32.mrf.mxu0
  %v701 = vpop.f32.mrf.mxu0
  %v702 = vadd.f32 %v653, %v701
  %v703 = vpop.f32.mrf.mxu0
  %704 = vmatprep.mubr.bf16.mxu0 0
  %705 = vmatmul.mubr.bf16.gmra.mxu0 %v515
  %v706 = vpop.f32.mrf.mxu0
  %v707 = vadd.f32 %v658, %v706
  %v708 = vpop.f32.mrf.mxu0
  %v709 = vpop.f32.mrf.mxu0
  %v710 = vadd.f32 %v661, %v709
  %v711 = vpop.f32.mrf.mxu0
  %712 = vdwg.mxu0
  %v713 = vld [vmem:[%s1] sm:$0xff]
  %v714 = vld [vmem:[%s1 + $0x8] sm:$0xff]
  %v715 = vld [vmem:[%s1 + $0x10] sm:$0xff]
  %v716 = vld [vmem:[%s1 + $0x18] sm:$0xf]
  %v717 = vld [vmem:[%s1 + $0x1c] sm:$0xff]
  %v718 = vld [vmem:[%s1 + $0x24] sm:$0xff]
  %v719 = vld [vmem:[%s1 + $0x2c] sm:$0xff]
  %v720 = vld [vmem:[%s1 + $0x34] sm:$0xf]
  %v721 = vld [vmem:[%s1 + $0x38] sm:$0xff]
  %v722 = vld [vmem:[%s1 + $0x40] sm:$0xff]
  %v723 = vld [vmem:[%s1 + $0x48] sm:$0xff]
  %v724 = vld [vmem:[%s1 + $0x50] sm:$0xf]
  %v725 = vld [vmem:[%s1 + $0x54] sm:$0xff]
  %v726 = vld [vmem:[%s1 + $0x5c] sm:$0xff]
  %v727 = vld [vmem:[%s1 + $0x64] sm:$0xff]
  %v728 = vld [vmem:[%s1 + $0x6c] sm:$0xf]
  %v745 = vunpack.c.l.b16 %v713
  %v746 = vunpack.c.h.b16 %v713
  %v747 = vunpack.c.l.b16 %v714
  %v748 = vunpack.c.h.b16 %v714
  %v749 = vunpack.c.l.b16 %v715
  %v750 = vunpack.c.h.b16 %v715
  %v751 = vunpack.c.l.b16 %v716
  %v752 = vunpack.c.l.b16 %v717
  %v753 = vunpack.c.h.b16 %v717
  %v754 = vunpack.c.l.b16 %v718
  %v755 = vunpack.c.h.b16 %v718
  %v756 = vunpack.c.l.b16 %v719
  %v757 = vunpack.c.h.b16 %v719
  %v758 = vunpack.c.l.b16 %v720
  %v759 = vunpack.c.l.b16 %v721
  %v760 = vunpack.c.h.b16 %v721
  %v761 = vunpack.c.l.b16 %v722
  %v762 = vunpack.c.h.b16 %v722
  %v763 = vunpack.c.l.b16 %v723
  %v764 = vunpack.c.h.b16 %v723
  %v765 = vunpack.c.l.b16 %v724
  %v766 = vunpack.c.l.b16 %v725
  %v767 = vunpack.c.h.b16 %v725
  %v768 = vunpack.c.l.b16 %v726
  %v769 = vunpack.c.h.b16 %v726
  %v770 = vunpack.c.l.b16 %v727
  %v771 = vunpack.c.h.b16 %v727
  %v772 = vunpack.c.l.b16 %v728
  %v773 = vpack.c.b16 %v752, %v745
  %v774 = vpack.c.b16 %v753, %v746
  %v775 = vpack.c.b16 %v754, %v747
  %v776 = vpack.c.b16 %v755, %v748
  %v777 = vpack.c.b16 %v756, %v749
  %v778 = vpack.c.b16 %v757, %v750
  %v779 = vpack.c.b16 %v758, %v751
  %v780 = vpack.c.b16 %v766, %v759
  %v781 = vpack.c.b16 %v767, %v760
  %v782 = vpack.c.b16 %v768, %v761
  %v783 = vpack.c.b16 %v769, %v762
  %v784 = vpack.c.b16 %v770, %v763
  %v785 = vpack.c.b16 %v771, %v764
  %v786 = vpack.c.b16 %v772, %v765
  %v800 = vsel %vm510, %v779, 0
  %v803 = vsel %vm510, %v786, 0
  %805 = vmatprep.subr.bf16.mxu0 0
  %806 = vmatpush1.bf16.msra.mxu0 %v417
  %807 = vmatprep.subr.bf16.mxu0 0
  %808 = vmatpush1.bf16.msra.mxu0 %v416
  %809 = vmatprep.subr.bf16.mxu0 0
  %810 = vmatpush1.bf16.msra.mxu0 %v415
  %811 = vmatprep.subr.bf16.mxu0 0
  %812 = vmatpush1.bf16.msra.mxu0 %v414
  %813 = vmatprep.subr.bf16.mxu0 0
  %814 = vmatpush1.bf16.msra.mxu0 %v413
  %815 = vmatprep.subr.bf16.mxu0 0
  %816 = vmatpush1.bf16.msra.mxu0 %v412
  %817 = vmatprep.subr.bf16.mxu0 0
  %818 = vmatpush1.bf16.msra.mxu0 %v411
  %819 = vmatprep.subr.bf16.mxu0 0
  %820 = vmatpush1.bf16.msra.mxu0 %v410
  %821 = vmatprep.subr.bf16.mxu0 0
  %822 = vmatpush2.bf16.msra.mxu0 %v425
  %823 = vmatprep.subr.bf16.mxu0 0
  %824 = vmatpush2.bf16.msra.mxu0 %v424
  %825 = vmatprep.subr.bf16.mxu0 0
  %826 = vmatpush2.bf16.msra.mxu0 %v423
  %827 = vmatprep.subr.bf16.mxu0 0
  %828 = vmatpush2.bf16.msra.mxu0 %v422
  %829 = vmatprep.subr.bf16.mxu0 0
  %830 = vmatpush2.bf16.msra.mxu0 %v421
  %831 = vmatprep.subr.bf16.mxu0 0
  %832 = vmatpush2.bf16.msra.mxu0 %v420
  %833 = vmatprep.subr.bf16.mxu0 0
  %834 = vmatpush2.bf16.msra.mxu0 %v419
  %835 = vmatprep.subr.bf16.mxu0 0
  %836 = vmatpush2.bf16.msra.mxu0 %v418
  %837 = vmatprep.mubr.bf16.mxu0 %v774
  %838 = vmatmul.mubr.bf16.gmra.mxu0 %v773
  %v839 = vpop.f32.mrf.mxu0
  %v840 = vadd.f32 0.0, %v839
  %v841 = vpop.f32.mrf.mxu0
  %v842 = vpop.f32.mrf.mxu0
  %v843 = vadd.f32 0.0, %v842
  %v844 = vpop.f32.mrf.mxu0
  %845 = vmatprep.mubr.bf16.mxu0 %v781
  %846 = vmatmul.mubr.bf16.gmra.mxu0 %v780
  %v847 = vpop.f32.mrf.mxu0
  %v848 = vadd.f32 0.0, %v847
  %v849 = vpop.f32.mrf.mxu0
  %v850 = vpop.f32.mrf.mxu0
  %v851 = vadd.f32 0.0, %v850
  %v852 = vpop.f32.mrf.mxu0
  %853 = vdwg.mxu0
  %854 = vmatprep.subr.bf16.mxu0 0
  %855 = vmatpush1.bf16.msra.mxu0 %v433
  %856 = vmatprep.subr.bf16.mxu0 0
  %857 = vmatpush1.bf16.msra.mxu0 %v432
  %858 = vmatprep.subr.bf16.mxu0 0
  %859 = vmatpush1.bf16.msra.mxu0 %v431
  %860 = vmatprep.subr.bf16.mxu0 0
  %861 = vmatpush1.bf16.msra.mxu0 %v430
  %862 = vmatprep.subr.bf16.mxu0 0
  %863 = vmatpush1.bf16.msra.mxu0 %v429
  %864 = vmatprep.subr.bf16.mxu0 0
  %865 = vmatpush1.bf16.msra.mxu0 %v428
  %866 = vmatprep.subr.bf16.mxu0 0
  %867 = vmatpush1.bf16.msra.mxu0 %v427
  %868 = vmatprep.subr.bf16.mxu0 0
  %869 = vmatpush1.bf16.msra.mxu0 %v426
  %870 = vmatprep.subr.bf16.mxu0 0
  %871 = vmatpush2.bf16.msra.mxu0 %v441
  %872 = vmatprep.subr.bf16.mxu0 0
  %873 = vmatpush2.bf16.msra.mxu0 %v440
  %874 = vmatprep.subr.bf16.mxu0 0
  %875 = vmatpush2.bf16.msra.mxu0 %v439
  %876 = vmatprep.subr.bf16.mxu0 0
  %877 = vmatpush2.bf16.msra.mxu0 %v438
  %878 = vmatprep.subr.bf16.mxu0 0
  %879 = vmatpush2.bf16.msra.mxu0 %v437
  %880 = vmatprep.subr.bf16.mxu0 0
  %881 = vmatpush2.bf16.msra.mxu0 %v436
  %882 = vmatprep.subr.bf16.mxu0 0
  %883 = vmatpush2.bf16.msra.mxu0 %v435
  %884 = vmatprep.subr.bf16.mxu0 0
  %885 = vmatpush2.bf16.msra.mxu0 %v434
  %886 = vmatprep.mubr.bf16.mxu0 %v776
  %887 = vmatmul.mubr.bf16.gmra.mxu0 %v775
  %v888 = vpop.f32.mrf.mxu0
  %v889 = vadd.f32 %v840, %v888
  %v890 = vpop.f32.mrf.mxu0
  %v891 = vpop.f32.mrf.mxu0
  %v892 = vadd.f32 %v843, %v891
  %v893 = vpop.f32.mrf.mxu0
  %894 = vmatprep.mubr.bf16.mxu0 %v783
  %895 = vmatmul.mubr.bf16.gmra.mxu0 %v782
  %v896 = vpop.f32.mrf.mxu0
  %v897 = vadd.f32 %v848, %v896
  %v898 = vpop.f32.mrf.mxu0
  %v899 = vpop.f32.mrf.mxu0
  %v900 = vadd.f32 %v851, %v899
  %v901 = vpop.f32.mrf.mxu0
  %902 = vdwg.mxu0
  %903 = vmatprep.subr.bf16.mxu0 0
  %904 = vmatpush1.bf16.msra.mxu0 %v449
  %905 = vmatprep.subr.bf16.mxu0 0
  %906 = vmatpush1.bf16.msra.mxu0 %v448
  %907 = vmatprep.subr.bf16.mxu0 0
  %908 = vmatpush1.bf16.msra.mxu0 %v447
  %909 = vmatprep.subr.bf16.mxu0 0
  %910 = vmatpush1.bf16.msra.mxu0 %v446
  %911 = vmatprep.subr.bf16.mxu0 0
  %912 = vmatpush1.bf16.msra.mxu0 %v445
  %913 = vmatprep.subr.bf16.mxu0 0
  %914 = vmatpush1.bf16.msra.mxu0 %v444
  %915 = vmatprep.subr.bf16.mxu0 0
  %916 = vmatpush1.bf16.msra.mxu0 %v443
  %917 = vmatprep.subr.bf16.mxu0 0
  %918 = vmatpush1.bf16.msra.mxu0 %v442
  %919 = vmatprep.subr.bf16.mxu0 0
  %920 = vmatpush2.bf16.msra.mxu0 %v457
  %921 = vmatprep.subr.bf16.mxu0 0
  %922 = vmatpush2.bf16.msra.mxu0 %v456
  %923 = vmatprep.subr.bf16.mxu0 0
  %924 = vmatpush2.bf16.msra.mxu0 %v455
  %925 = vmatprep.subr.bf16.mxu0 0
  %926 = vmatpush2.bf16.msra.mxu0 %v454
  %927 = vmatprep.subr.bf16.mxu0 0
  %928 = vmatpush2.bf16.msra.mxu0 %v453
  %929 = vmatprep.subr.bf16.mxu0 0
  %930 = vmatpush2.bf16.msra.mxu0 %v452
  %931 = vmatprep.subr.bf16.mxu0 0
  %932 = vmatpush2.bf16.msra.mxu0 %v451
  %933 = vmatprep.subr.bf16.mxu0 0
  %934 = vmatpush2.bf16.msra.mxu0 %v450
  %935 = vmatprep.mubr.bf16.mxu0 %v778
  %936 = vmatmul.mubr.bf16.gmra.mxu0 %v777
  %v937 = vpop.f32.mrf.mxu0
  %v938 = vadd.f32 %v889, %v937
  %v939 = vpop.f32.mrf.mxu0
  %v940 = vpop.f32.mrf.mxu0
  %v941 = vadd.f32 %v892, %v940
  %v942 = vpop.f32.mrf.mxu0
  %943 = vmatprep.mubr.bf16.mxu0 %v785
  %944 = vmatmul.mubr.bf16.gmra.mxu0 %v784
  %v945 = vpop.f32.mrf.mxu0
  %v946 = vadd.f32 %v897, %v945
  %v947 = vpop.f32.mrf.mxu0
  %v948 = vpop.f32.mrf.mxu0
  %v949 = vadd.f32 %v900, %v948
  %v950 = vpop.f32.mrf.mxu0
  %951 = vdwg.mxu0
  %952 = vmatprep.subr.bf16.mxu0 0
  %953 = vmatpush1.bf16.msra.mxu0 0
  %954 = vmatprep.subr.bf16.mxu0 0
  %955 = vmatpush1.bf16.msra.mxu0 0
  %956 = vmatprep.subr.bf16.mxu0 0
  %957 = vmatpush1.bf16.msra.mxu0 0
  %958 = vmatprep.subr.bf16.mxu0 0
  %959 = vmatpush1.bf16.msra.mxu0 0
  %960 = vmatprep.subr.bf16.mxu0 0
  %961 = vmatpush1.bf16.msra.mxu0 0
  %962 = vmatprep.subr.bf16.mxu0 0
  %963 = vmatpush1.bf16.msra.mxu0 0
  %964 = vmatprep.subr.bf16.mxu0 0
  %965 = vmatpush1.bf16.msra.mxu0 %v459
  %966 = vmatprep.subr.bf16.mxu0 0
  %967 = vmatpush1.bf16.msra.mxu0 %v458
  %968 = vmatprep.subr.bf16.mxu0 0
  %969 = vmatpush2.bf16.msra.mxu0 0
  %970 = vmatprep.subr.bf16.mxu0 0
  %971 = vmatpush2.bf16.msra.mxu0 0
  %972 = vmatprep.subr.bf16.mxu0 0
  %973 = vmatpush2.bf16.msra.mxu0 0
  %974 = vmatprep.subr.bf16.mxu0 0
  %975 = vmatpush2.bf16.msra.mxu0 0
  %976 = vmatprep.subr.bf16.mxu0 0
  %977 = vmatpush2.bf16.msra.mxu0 0
  %978 = vmatprep.subr.bf16.mxu0 0
  %979 = vmatpush2.bf16.msra.mxu0 0
  %980 = vmatprep.subr.bf16.mxu0 0
  %981 = vmatpush2.bf16.msra.mxu0 0
  %982 = vmatprep.subr.bf16.mxu0 0
  %983 = vmatpush2.bf16.msra.mxu0 0
  %984 = vmatprep.mubr.bf16.mxu0 0
  %985 = vmatmul.mubr.bf16.gmra.mxu0 %v800
  %v986 = vpop.f32.mrf.mxu0
  %v987 = vadd.f32 %v938, %v986
  %v988 = vpop.f32.mrf.mxu0
  %v989 = vpop.f32.mrf.mxu0
  %v990 = vadd.f32 %v941, %v989
  %v991 = vpop.f32.mrf.mxu0
  %992 = vmatprep.mubr.bf16.mxu0 0
  %993 = vmatmul.mubr.bf16.gmra.mxu0 %v803
  %v994 = vpop.f32.mrf.mxu0
  %v995 = vadd.f32 %v946, %v994
  %v996 = vpop.f32.mrf.mxu0
  %v997 = vpop.f32.mrf.mxu0
  %v998 = vadd.f32 %v949, %v997
  %v999 = vpop.f32.mrf.mxu0
  %1000 = vdwg.mxu0
  %v1001 = vld [vmem:[%s2] sm:$0xff]
  %v1002 = vld [vmem:[%s2 + $0x8] sm:$0xff]
  %v1003 = vld [vmem:[%s2 + $0x10] sm:$0xff]
  %v1004 = vld [vmem:[%s2 + $0x18] sm:$0xf]
  %v1005 = vld [vmem:[%s2 + $0x1c] sm:$0xff]
  %v1006 = vld [vmem:[%s2 + $0x24] sm:$0xff]
  %v1007 = vld [vmem:[%s2 + $0x2c] sm:$0xff]
  %v1008 = vld [vmem:[%s2 + $0x34] sm:$0xf]
  %v1009 = vld [vmem:[%s2 + $0x38] sm:$0xff]
  %v1010 = vld [vmem:[%s2 + $0x40] sm:$0xff]
  %v1011 = vld [vmem:[%s2 + $0x48] sm:$0xff]
  %v1012 = vld [vmem:[%s2 + $0x50] sm:$0xf]
  %v1013 = vld [vmem:[%s2 + $0x54] sm:$0xff]
  %v1014 = vld [vmem:[%s2 + $0x5c] sm:$0xff]
  %v1015 = vld [vmem:[%s2 + $0x64] sm:$0xff]
  %v1016 = vld [vmem:[%s2 + $0x6c] sm:$0xf]
  %v1033 = vunpack.c.l.b16 %v1001
  %v1034 = vunpack.c.h.b16 %v1001
  %v1035 = vunpack.c.l.b16 %v1002
  %v1036 = vunpack.c.h.b16 %v1002
  %v1037 = vunpack.c.l.b16 %v1003
  %v1038 = vunpack.c.h.b16 %v1003
  %v1039 = vunpack.c.l.b16 %v1004
  %v1040 = vunpack.c.l.b16 %v1005
  %v1041 = vunpack.c.h.b16 %v1005
  %v1042 = vunpack.c.l.b16 %v1006
  %v1043 = vunpack.c.h.b16 %v1006
  %v1044 = vunpack.c.l.b16 %v1007
  %v1045 = vunpack.c.h.b16 %v1007
  %v1046 = vunpack.c.l.b16 %v1008
  %v1047 = vunpack.c.l.b16 %v1009
  %v1048 = vunpack.c.h.b16 %v1009
  %v1049 = vunpack.c.l.b16 %v1010
  %v1050 = vunpack.c.h.b16 %v1010
  %v1051 = vunpack.c.l.b16 %v1011
  %v1052 = vunpack.c.h.b16 %v1011
  %v1053 = vunpack.c.l.b16 %v1012
  %v1054 = vunpack.c.l.b16 %v1013
  %v1055 = vunpack.c.h.b16 %v1013
  %v1056 = vunpack.c.l.b16 %v1014
  %v1057 = vunpack.c.h.b16 %v1014
  %v1058 = vunpack.c.l.b16 %v1015
  %v1059 = vunpack.c.h.b16 %v1015
  %v1060 = vunpack.c.l.b16 %v1016
  %v1061 = vpack.c.b16 %v1040, %v1033
  %v1062 = vpack.c.b16 %v1041, %v1034
  %v1063 = vpack.c.b16 %v1042, %v1035
  %v1064 = vpack.c.b16 %v1043, %v1036
  %v1065 = vpack.c.b16 %v1044, %v1037
  %v1066 = vpack.c.b16 %v1045, %v1038
  %v1067 = vpack.c.b16 %v1046, %v1039
  %v1068 = vpack.c.b16 %v1054, %v1047
  %v1069 = vpack.c.b16 %v1055, %v1048
  %v1070 = vpack.c.b16 %v1056, %v1049
  %v1071 = vpack.c.b16 %v1057, %v1050
  %v1072 = vpack.c.b16 %v1058, %v1051
  %v1073 = vpack.c.b16 %v1059, %v1052
  %v1074 = vpack.c.b16 %v1060, %v1053
  %v1088 = vsel %vm510, %v1067, 0
  %v1091 = vsel %vm510, %v1074, 0
  %1093 = vmatprep.subr.bf16.mxu0 0
  %1094 = vmatpush1.bf16.msra.mxu0 %v417
  %1095 = vmatprep.subr.bf16.mxu0 0
  %1096 = vmatpush1.bf16.msra.mxu0 %v416
  %1097 = vmatprep.subr.bf16.mxu0 0
  %1098 = vmatpush1.bf16.msra.mxu0 %v415
  %1099 = vmatprep.subr.bf16.mxu0 0
  %1100 = vmatpush1.bf16.msra.mxu0 %v414
  %1101 = vmatprep.subr.bf16.mxu0 0
  %1102 = vmatpush1.bf16.msra.mxu0 %v413
  %1103 = vmatprep.subr.bf16.mxu0 0
  %1104 = vmatpush1.bf16.msra.mxu0 %v412
  %1105 = vmatprep.subr.bf16.mxu0 0
  %1106 = vmatpush1.bf16.msra.mxu0 %v411
  %1107 = vmatprep.subr.bf16.mxu0 0
  %1108 = vmatpush1.bf16.msra.mxu0 %v410
  %1109 = vmatprep.subr.bf16.mxu0 0
  %1110 = vmatpush2.bf16.msra.mxu0 %v425
  %1111 = vmatprep.subr.bf16.mxu0 0
  %1112 = vmatpush2.bf16.msra.mxu0 %v424
  %1113 = vmatprep.subr.bf16.mxu0 0
  %1114 = vmatpush2.bf16.msra.mxu0 %v423
  %1115 = vmatprep.subr.bf16.mxu0 0
  %1116 = vmatpush2.bf16.msra.mxu0 %v422
  %1117 = vmatprep.subr.bf16.mxu0 0
  %1118 = vmatpush2.bf16.msra.mxu0 %v421
  %1119 = vmatprep.subr.bf16.mxu0 0
  %1120 = vmatpush2.bf16.msra.mxu0 %v420
  %1121 = vmatprep.subr.bf16.mxu0 0
  %1122 = vmatpush2.bf16.msra.mxu0 %v419
  %1123 = vmatprep.subr.bf16.mxu0 0
  %1124 = vmatpush2.bf16.msra.mxu0 %v418
  %1125 = vmatprep.mubr.bf16.mxu0 %v1062
  %1126 = vmatmul.mubr.bf16.gmra.mxu0 %v1061
  %v1127 = vpop.f32.mrf.mxu0
  %v1128 = vadd.f32 0.0, %v1127
  %v1129 = vpop.f32.mrf.mxu0
  %v1130 = vpop.f32.mrf.mxu0
  %v1131 = vadd.f32 0.0, %v1130
  %v1132 = vpop.f32.mrf.mxu0
  %1133 = vmatprep.mubr.bf16.mxu0 %v1069
  %1134 = vmatmul.mubr.bf16.gmra.mxu0 %v1068
  %v1135 = vpop.f32.mrf.mxu0
  %v1136 = vadd.f32 0.0, %v1135
  %v1137 = vpop.f32.mrf.mxu0
  %v1138 = vpop.f32.mrf.mxu0
  %v1139 = vadd.f32 0.0, %v1138
  %v1140 = vpop.f32.mrf.mxu0
  %1141 = vdwg.mxu0
  %1142 = vmatprep.subr.bf16.mxu0 0
  %1143 = vmatpush1.bf16.msra.mxu0 %v433
  %1144 = vmatprep.subr.bf16.mxu0 0
  %1145 = vmatpush1.bf16.msra.mxu0 %v432
  %1146 = vmatprep.subr.bf16.mxu0 0
  %1147 = vmatpush1.bf16.msra.mxu0 %v431
  %1148 = vmatprep.subr.bf16.mxu0 0
  %1149 = vmatpush1.bf16.msra.mxu0 %v430
  %1150 = vmatprep.subr.bf16.mxu0 0
  %1151 = vmatpush1.bf16.msra.mxu0 %v429
  %1152 = vmatprep.subr.bf16.mxu0 0
  %1153 = vmatpush1.bf16.msra.mxu0 %v428
  %1154 = vmatprep.subr.bf16.mxu0 0
  %1155 = vmatpush1.bf16.msra.mxu0 %v427
  %1156 = vmatprep.subr.bf16.mxu0 0
  %1157 = vmatpush1.bf16.msra.mxu0 %v426
  %1158 = vmatprep.subr.bf16.mxu0 0
  %1159 = vmatpush2.bf16.msra.mxu0 %v441
  %1160 = vmatprep.subr.bf16.mxu0 0
  %1161 = vmatpush2.bf16.msra.mxu0 %v440
  %1162 = vmatprep.subr.bf16.mxu0 0
  %1163 = vmatpush2.bf16.msra.mxu0 %v439
  %1164 = vmatprep.subr.bf16.mxu0 0
  %1165 = vmatpush2.bf16.msra.mxu0 %v438
  %1166 = vmatprep.subr.bf16.mxu0 0
  %1167 = vmatpush2.bf16.msra.mxu0 %v437
  %1168 = vmatprep.subr.bf16.mxu0 0
  %1169 = vmatpush2.bf16.msra.mxu0 %v436
  %1170 = vmatprep.subr.bf16.mxu0 0
  %1171 = vmatpush2.bf16.msra.mxu0 %v435
  %1172 = vmatprep.subr.bf16.mxu0 0
  %1173 = vmatpush2.bf16.msra.mxu0 %v434
  %1174 = vmatprep.mubr.bf16.mxu0 %v1064
  %1175 = vmatmul.mubr.bf16.gmra.mxu0 %v1063
  %v1176 = vpop.f32.mrf.mxu0
  %v1177 = vadd.f32 %v1128, %v1176
  %v1178 = vpop.f32.mrf.mxu0
  %v1179 = vpop.f32.mrf.mxu0
  %v1180 = vadd.f32 %v1131, %v1179
  %v1181 = vpop.f32.mrf.mxu0
  %1182 = vmatprep.mubr.bf16.mxu0 %v1071
  %1183 = vmatmul.mubr.bf16.gmra.mxu0 %v1070
  %v1184 = vpop.f32.mrf.mxu0
  %v1185 = vadd.f32 %v1136, %v1184
  %v1186 = vpop.f32.mrf.mxu0
  %v1187 = vpop.f32.mrf.mxu0
  %v1188 = vadd.f32 %v1139, %v1187
  %v1189 = vpop.f32.mrf.mxu0
  %1190 = vdwg.mxu0
  %1191 = vmatprep.subr.bf16.mxu0 0
  %1192 = vmatpush1.bf16.msra.mxu0 %v449
  %1193 = vmatprep.subr.bf16.mxu0 0
  %1194 = vmatpush1.bf16.msra.mxu0 %v448
  %1195 = vmatprep.subr.bf16.mxu0 0
  %1196 = vmatpush1.bf16.msra.mxu0 %v447
  %1197 = vmatprep.subr.bf16.mxu0 0
  %1198 = vmatpush1.bf16.msra.mxu0 %v446
  %1199 = vmatprep.subr.bf16.mxu0 0
  %1200 = vmatpush1.bf16.msra.mxu0 %v445
  %1201 = vmatprep.subr.bf16.mxu0 0
  %1202 = vmatpush1.bf16.msra.mxu0 %v444
  %1203 = vmatprep.subr.bf16.mxu0 0
  %1204 = vmatpush1.bf16.msra.mxu0 %v443
  %1205 = vmatprep.subr.bf16.mxu0 0
  %1206 = vmatpush1.bf16.msra.mxu0 %v442
  %1207 = vmatprep.subr.bf16.mxu0 0
  %1208 = vmatpush2.bf16.msra.mxu0 %v457
  %1209 = vmatprep.subr.bf16.mxu0 0
  %1210 = vmatpush2.bf16.msra.mxu0 %v456
  %1211 = vmatprep.subr.bf16.mxu0 0
  %1212 = vmatpush2.bf16.msra.mxu0 %v455
  %1213 = vmatprep.subr.bf16.mxu0 0
  %1214 = vmatpush2.bf16.msra.mxu0 %v454
  %1215 = vmatprep.subr.bf16.mxu0 0
  %1216 = vmatpush2.bf16.msra.mxu0 %v453
  %1217 = vmatprep.subr.bf16.mxu0 0
  %1218 = vmatpush2.bf16.msra.mxu0 %v452
  %1219 = vmatprep.subr.bf16.mxu0 0
  %1220 = vmatpush2.bf16.msra.mxu0 %v451
  %1221 = vmatprep.subr.bf16.mxu0 0
  %1222 = vmatpush2.bf16.msra.mxu0 %v450
  %1223 = vmatprep.mubr.bf16.mxu0 %v1066
  %1224 = vmatmul.mubr.bf16.gmra.mxu0 %v1065
  %v1225 = vpop.f32.mrf.mxu0
  %v1226 = vadd.f32 %v1177, %v1225
  %v1227 = vpop.f32.mrf.mxu0
  %v1228 = vpop.f32.mrf.mxu0
  %v1229 = vadd.f32 %v1180, %v1228
  %v1230 = vpop.f32.mrf.mxu0
  %1231 = vmatprep.mubr.bf16.mxu0 %v1073
  %1232 = vmatmul.mubr.bf16.gmra.mxu0 %v1072
  %v1233 = vpop.f32.mrf.mxu0
  %v1234 = vadd.f32 %v1185, %v1233
  %v1235 = vpop.f32.mrf.mxu0
  %v1236 = vpop.f32.mrf.mxu0
  %v1237 = vadd.f32 %v1188, %v1236
  %v1238 = vpop.f32.mrf.mxu0
  %1239 = vdwg.mxu0
  %1240 = vmatprep.subr.bf16.mxu0 0
  %1241 = vmatpush1.bf16.msra.mxu0 0
  %1242 = vmatprep.subr.bf16.mxu0 0
  %1243 = vmatpush1.bf16.msra.mxu0 0
  %1244 = vmatprep.subr.bf16.mxu0 0
  %1245 = vmatpush1.bf16.msra.mxu0 0
  %1246 = vmatprep.subr.bf16.mxu0 0
  %1247 = vmatpush1.bf16.msra.mxu0 0
  %1248 = vmatprep.subr.bf16.mxu0 0
  %1249 = vmatpush1.bf16.msra.mxu0 0
  %1250 = vmatprep.subr.bf16.mxu0 0
  %1251 = vmatpush1.bf16.msra.mxu0 0
  %1252 = vmatprep.subr.bf16.mxu0 0
  %1253 = vmatpush1.bf16.msra.mxu0 %v459
  %1254 = vmatprep.subr.bf16.mxu0 0
  %1255 = vmatpush1.bf16.msra.mxu0 %v458
  %1256 = vmatprep.subr.bf16.mxu0 0
  %1257 = vmatpush2.bf16.msra.mxu0 0
  %1258 = vmatprep.subr.bf16.mxu0 0
  %1259 = vmatpush2.bf16.msra.mxu0 0
  %1260 = vmatprep.subr.bf16.mxu0 0
  %1261 = vmatpush2.bf16.msra.mxu0 0
  %1262 = vmatprep.subr.bf16.mxu0 0
  %1263 = vmatpush2.bf16.msra.mxu0 0
  %1264 = vmatprep.subr.bf16.mxu0 0
  %1265 = vmatpush2.bf16.msra.mxu0 0
  %1266 = vmatprep.subr.bf16.mxu0 0
  %1267 = vmatpush2.bf16.msra.mxu0 0
  %1268 = vmatprep.subr.bf16.mxu0 0
  %1269 = vmatpush2.bf16.msra.mxu0 0
  %1270 = vmatprep.subr.bf16.mxu0 0
  %1271 = vmatpush2.bf16.msra.mxu0 0
  %1272 = vmatprep.mubr.bf16.mxu0 0
  %1273 = vmatmul.mubr.bf16.gmra.mxu0 %v1088
  %v1274 = vpop.f32.mrf.mxu0
  %v1275 = vadd.f32 %v1226, %v1274
  %v1276 = vpop.f32.mrf.mxu0
  %v1277 = vpop.f32.mrf.mxu0
  %v1278 = vadd.f32 %v1229, %v1277
  %v1279 = vpop.f32.mrf.mxu0
  %1280 = vmatprep.mubr.bf16.mxu0 0
  %1281 = vmatmul.mubr.bf16.gmra.mxu0 %v1091
  %v1282 = vpop.f32.mrf.mxu0
  %v1283 = vadd.f32 %v1234, %v1282
  %v1284 = vpop.f32.mrf.mxu0
  %v1285 = vpop.f32.mrf.mxu0
  %v1286 = vadd.f32 %v1237, %v1285
  %v1287 = vpop.f32.mrf.mxu0
  %1288 = vdwg.mxu0
  %v1289 = vld [vmem:[%s3] sm:$0xff]
  %v1290 = vld [vmem:[%s3 + $0x8] sm:$0xff]
  %v1291 = vld [vmem:[%s3 + $0x10] sm:$0xff]
  %v1292 = vld [vmem:[%s3 + $0x18] sm:$0xf]
  %v1293 = vld [vmem:[%s3 + $0x1c] sm:$0xff]
  %v1294 = vld [vmem:[%s3 + $0x24] sm:$0xff]
  %v1295 = vld [vmem:[%s3 + $0x2c] sm:$0xff]
  %v1296 = vld [vmem:[%s3 + $0x34] sm:$0xf]
  %v1297 = vld [vmem:[%s3 + $0x38] sm:$0xff]
  %v1298 = vld [vmem:[%s3 + $0x40] sm:$0xff]
  %v1299 = vld [vmem:[%s3 + $0x48] sm:$0xff]
  %v1300 = vld [vmem:[%s3 + $0x50] sm:$0xf]
  %v1301 = vld [vmem:[%s3 + $0x54] sm:$0xff]
  %v1302 = vld [vmem:[%s3 + $0x5c] sm:$0xff]
  %v1303 = vld [vmem:[%s3 + $0x64] sm:$0xff]
  %v1304 = vld [vmem:[%s3 + $0x6c] sm:$0xf]
  %v1321 = vunpack.c.l.b16 %v1289
  %v1322 = vunpack.c.h.b16 %v1289
  %v1323 = vunpack.c.l.b16 %v1290
  %v1324 = vunpack.c.h.b16 %v1290
  %v1325 = vunpack.c.l.b16 %v1291
  %v1326 = vunpack.c.h.b16 %v1291
  %v1327 = vunpack.c.l.b16 %v1292
  %v1328 = vunpack.c.l.b16 %v1293
  %v1329 = vunpack.c.h.b16 %v1293
  %v1330 = vunpack.c.l.b16 %v1294
  %v1331 = vunpack.c.h.b16 %v1294
  %v1332 = vunpack.c.l.b16 %v1295
  %v1333 = vunpack.c.h.b16 %v1295
  %v1334 = vunpack.c.l.b16 %v1296
  %v1335 = vunpack.c.l.b16 %v1297
  %v1336 = vunpack.c.h.b16 %v1297
  %v1337 = vunpack.c.l.b16 %v1298
  %v1338 = vunpack.c.h.b16 %v1298
  %v1339 = vunpack.c.l.b16 %v1299
  %v1340 = vunpack.c.h.b16 %v1299
  %v1341 = vunpack.c.l.b16 %v1300
  %v1342 = vunpack.c.l.b16 %v1301
  %v1343 = vunpack.c.h.b16 %v1301
  %v1344 = vunpack.c.l.b16 %v1302
  %v1345 = vunpack.c.h.b16 %v1302
  %v1346 = vunpack.c.l.b16 %v1303
  %v1347 = vunpack.c.h.b16 %v1303
  %v1348 = vunpack.c.l.b16 %v1304
  %v1349 = vpack.c.b16 %v1328, %v1321
  %v1350 = vpack.c.b16 %v1329, %v1322
  %v1351 = vpack.c.b16 %v1330, %v1323
  %v1352 = vpack.c.b16 %v1331, %v1324
  %v1353 = vpack.c.b16 %v1332, %v1325
  %v1354 = vpack.c.b16 %v1333, %v1326
  %v1355 = vpack.c.b16 %v1334, %v1327
  %v1356 = vpack.c.b16 %v1342, %v1335
  %v1357 = vpack.c.b16 %v1343, %v1336
  %v1358 = vpack.c.b16 %v1344, %v1337
  %v1359 = vpack.c.b16 %v1345, %v1338
  %v1360 = vpack.c.b16 %v1346, %v1339
  %v1361 = vpack.c.b16 %v1347, %v1340
  %v1362 = vpack.c.b16 %v1348, %v1341
  %v1376 = vsel %vm510, %v1355, 0
  %v1379 = vsel %vm510, %v1362, 0
  %1381 = vmatprep.subr.bf16.mxu0 0
  %1382 = vmatpush1.bf16.msra.mxu0 %v417
  %1383 = vmatprep.subr.bf16.mxu0 0
  %1384 = vmatpush1.bf16.msra.mxu0 %v416
  %1385 = vmatprep.subr.bf16.mxu0 0
  %1386 = vmatpush1.bf16.msra.mxu0 %v415
  %1387 = vmatprep.subr.bf16.mxu0 0
  %1388 = vmatpush1.bf16.msra.mxu0 %v414
  %1389 = vmatprep.subr.bf16.mxu0 0
  %1390 = vmatpush1.bf16.msra.mxu0 %v413
  %1391 = vmatprep.subr.bf16.mxu0 0
  %1392 = vmatpush1.bf16.msra.mxu0 %v412
  %1393 = vmatprep.subr.bf16.mxu0 0
  %1394 = vmatpush1.bf16.msra.mxu0 %v411
  %1395 = vmatprep.subr.bf16.mxu0 0
  %1396 = vmatpush1.bf16.msra.mxu0 %v410
  %1397 = vmatprep.subr.bf16.mxu0 0
  %1398 = vmatpush2.bf16.msra.mxu0 %v425
  %1399 = vmatprep.subr.bf16.mxu0 0
  %1400 = vmatpush2.bf16.msra.mxu0 %v424
  %1401 = vmatprep.subr.bf16.mxu0 0
  %1402 = vmatpush2.bf16.msra.mxu0 %v423
  %1403 = vmatprep.subr.bf16.mxu0 0
  %1404 = vmatpush2.bf16.msra.mxu0 %v422
  %1405 = vmatprep.subr.bf16.mxu0 0
  %1406 = vmatpush2.bf16.msra.mxu0 %v421
  %1407 = vmatprep.subr.bf16.mxu0 0
  %1408 = vmatpush2.bf16.msra.mxu0 %v420
  %1409 = vmatprep.subr.bf16.mxu0 0
  %1410 = vmatpush2.bf16.msra.mxu0 %v419
  %1411 = vmatprep.subr.bf16.mxu0 0
  %1412 = vmatpush2.bf16.msra.mxu0 %v418
  %1413 = vmatprep.mubr.bf16.mxu0 %v1350
  %1414 = vmatmul.mubr.bf16.gmra.mxu0 %v1349
  %v1415 = vpop.f32.mrf.mxu0
  %v1416 = vadd.f32 0.0, %v1415
  %v1417 = vpop.f32.mrf.mxu0
  %v1418 = vpop.f32.mrf.mxu0
  %v1419 = vadd.f32 0.0, %v1418
  %v1420 = vpop.f32.mrf.mxu0
  %1421 = vmatprep.mubr.bf16.mxu0 %v1357
  %1422 = vmatmul.mubr.bf16.gmra.mxu0 %v1356
  %v1423 = vpop.f32.mrf.mxu0
  %v1424 = vadd.f32 0.0, %v1423
  %v1425 = vpop.f32.mrf.mxu0
  %v1426 = vpop.f32.mrf.mxu0
  %v1427 = vadd.f32 0.0, %v1426
  %v1428 = vpop.f32.mrf.mxu0
  %1429 = vdwg.mxu0
  %1430 = vmatprep.subr.bf16.mxu0 0
  %1431 = vmatpush1.bf16.msra.mxu0 %v433
  %1432 = vmatprep.subr.bf16.mxu0 0
  %1433 = vmatpush1.bf16.msra.mxu0 %v432
  %1434 = vmatprep.subr.bf16.mxu0 0
  %1435 = vmatpush1.bf16.msra.mxu0 %v431
  %1436 = vmatprep.subr.bf16.mxu0 0
  %1437 = vmatpush1.bf16.msra.mxu0 %v430
  %1438 = vmatprep.subr.bf16.mxu0 0
  %1439 = vmatpush1.bf16.msra.mxu0 %v429
  %1440 = vmatprep.subr.bf16.mxu0 0
  %1441 = vmatpush1.bf16.msra.mxu0 %v428
  %1442 = vmatprep.subr.bf16.mxu0 0
  %1443 = vmatpush1.bf16.msra.mxu0 %v427
  %1444 = vmatprep.subr.bf16.mxu0 0
  %1445 = vmatpush1.bf16.msra.mxu0 %v426
  %1446 = vmatprep.subr.bf16.mxu0 0
  %1447 = vmatpush2.bf16.msra.mxu0 %v441
  %1448 = vmatprep.subr.bf16.mxu0 0
  %1449 = vmatpush2.bf16.msra.mxu0 %v440
  %1450 = vmatprep.subr.bf16.mxu0 0
  %1451 = vmatpush2.bf16.msra.mxu0 %v439
  %1452 = vmatprep.subr.bf16.mxu0 0
  %1453 = vmatpush2.bf16.msra.mxu0 %v438
  %1454 = vmatprep.subr.bf16.mxu0 0
  %1455 = vmatpush2.bf16.msra.mxu0 %v437
  %1456 = vmatprep.subr.bf16.mxu0 0
  %1457 = vmatpush2.bf16.msra.mxu0 %v436
  %1458 = vmatprep.subr.bf16.mxu0 0
  %1459 = vmatpush2.bf16.msra.mxu0 %v435
  %1460 = vmatprep.subr.bf16.mxu0 0
  %1461 = vmatpush2.bf16.msra.mxu0 %v434
  %1462 = vmatprep.mubr.bf16.mxu0 %v1352
  %1463 = vmatmul.mubr.bf16.gmra.mxu0 %v1351
  %v1464 = vpop.f32.mrf.mxu0
  %v1465 = vadd.f32 %v1416, %v1464
  %v1466 = vpop.f32.mrf.mxu0
  %v1467 = vpop.f32.mrf.mxu0
  %v1468 = vadd.f32 %v1419, %v1467
  %v1469 = vpop.f32.mrf.mxu0
  %1470 = vmatprep.mubr.bf16.mxu0 %v1359
  %1471 = vmatmul.mubr.bf16.gmra.mxu0 %v1358
  %v1472 = vpop.f32.mrf.mxu0
  %v1473 = vadd.f32 %v1424, %v1472
  %v1474 = vpop.f32.mrf.mxu0
  %v1475 = vpop.f32.mrf.mxu0
  %v1476 = vadd.f32 %v1427, %v1475
  %v1477 = vpop.f32.mrf.mxu0
  %1478 = vdwg.mxu0
  %1479 = vmatprep.subr.bf16.mxu0 0
  %1480 = vmatpush1.bf16.msra.mxu0 %v449
  %1481 = vmatprep.subr.bf16.mxu0 0
  %1482 = vmatpush1.bf16.msra.mxu0 %v448
  %1483 = vmatprep.subr.bf16.mxu0 0
  %1484 = vmatpush1.bf16.msra.mxu0 %v447
  %1485 = vmatprep.subr.bf16.mxu0 0
  %1486 = vmatpush1.bf16.msra.mxu0 %v446
  %1487 = vmatprep.subr.bf16.mxu0 0
  %1488 = vmatpush1.bf16.msra.mxu0 %v445
  %1489 = vmatprep.subr.bf16.mxu0 0
  %1490 = vmatpush1.bf16.msra.mxu0 %v444
  %1491 = vmatprep.subr.bf16.mxu0 0
  %1492 = vmatpush1.bf16.msra.mxu0 %v443
  %1493 = vmatprep.subr.bf16.mxu0 0
  %1494 = vmatpush1.bf16.msra.mxu0 %v442
  %1495 = vmatprep.subr.bf16.mxu0 0
  %1496 = vmatpush2.bf16.msra.mxu0 %v457
  %1497 = vmatprep.subr.bf16.mxu0 0
  %1498 = vmatpush2.bf16.msra.mxu0 %v456
  %1499 = vmatprep.subr.bf16.mxu0 0
  %1500 = vmatpush2.bf16.msra.mxu0 %v455
  %1501 = vmatprep.subr.bf16.mxu0 0
  %1502 = vmatpush2.bf16.msra.mxu0 %v454
  %1503 = vmatprep.subr.bf16.mxu0 0
  %1504 = vmatpush2.bf16.msra.mxu0 %v453
  %1505 = vmatprep.subr.bf16.mxu0 0
  %1506 = vmatpush2.bf16.msra.mxu0 %v452
  %1507 = vmatprep.subr.bf16.mxu0 0
  %1508 = vmatpush2.bf16.msra.mxu0 %v451
  %1509 = vmatprep.subr.bf16.mxu0 0
  %1510 = vmatpush2.bf16.msra.mxu0 %v450
  %1511 = vmatprep.mubr.bf16.mxu0 %v1354
  %1512 = vmatmul.mubr.bf16.gmra.mxu0 %v1353
  %v1513 = vpop.f32.mrf.mxu0
  %v1514 = vadd.f32 %v1465, %v1513
  %v1515 = vpop.f32.mrf.mxu0
  %v1516 = vpop.f32.mrf.mxu0
  %v1517 = vadd.f32 %v1468, %v1516
  %v1518 = vpop.f32.mrf.mxu0
  %1519 = vmatprep.mubr.bf16.mxu0 %v1361
  %1520 = vmatmul.mubr.bf16.gmra.mxu0 %v1360
  %v1521 = vpop.f32.mrf.mxu0
  %v1522 = vadd.f32 %v1473, %v1521
  %v1523 = vpop.f32.mrf.mxu0
  %v1524 = vpop.f32.mrf.mxu0
  %v1525 = vadd.f32 %v1476, %v1524
  %v1526 = vpop.f32.mrf.mxu0
  %1527 = vdwg.mxu0
  %1528 = vmatprep.subr.bf16.mxu0 0
  %1529 = vmatpush1.bf16.msra.mxu0 0
  %1530 = vmatprep.subr.bf16.mxu0 0
  %1531 = vmatpush1.bf16.msra.mxu0 0
  %1532 = vmatprep.subr.bf16.mxu0 0
  %1533 = vmatpush1.bf16.msra.mxu0 0
  %1534 = vmatprep.subr.bf16.mxu0 0
  %1535 = vmatpush1.bf16.msra.mxu0 0
  %1536 = vmatprep.subr.bf16.mxu0 0
  %1537 = vmatpush1.bf16.msra.mxu0 0
  %1538 = vmatprep.subr.bf16.mxu0 0
  %1539 = vmatpush1.bf16.msra.mxu0 0
  %1540 = vmatprep.subr.bf16.mxu0 0
  %1541 = vmatpush1.bf16.msra.mxu0 %v459
  %1542 = vmatprep.subr.bf16.mxu0 0
  %1543 = vmatpush1.bf16.msra.mxu0 %v458
  %1544 = vmatprep.subr.bf16.mxu0 0
  %1545 = vmatpush2.bf16.msra.mxu0 0
  %1546 = vmatprep.subr.bf16.mxu0 0
  %1547 = vmatpush2.bf16.msra.mxu0 0
  %1548 = vmatprep.subr.bf16.mxu0 0
  %1549 = vmatpush2.bf16.msra.mxu0 0
  %1550 = vmatprep.subr.bf16.mxu0 0
  %1551 = vmatpush2.bf16.msra.mxu0 0
  %1552 = vmatprep.subr.bf16.mxu0 0
  %1553 = vmatpush2.bf16.msra.mxu0 0
  %1554 = vmatprep.subr.bf16.mxu0 0
  %1555 = vmatpush2.bf16.msra.mxu0 0
  %1556 = vmatprep.subr.bf16.mxu0 0
  %1557 = vmatpush2.bf16.msra.mxu0 0
  %1558 = vmatprep.subr.bf16.mxu0 0
  %1559 = vmatpush2.bf16.msra.mxu0 0
  %1560 = vmatprep.mubr.bf16.mxu0 0
  %1561 = vmatmul.mubr.bf16.gmra.mxu0 %v1376
  %v1562 = vpop.f32.mrf.mxu0
  %v1563 = vadd.f32 %v1514, %v1562
  %v1564 = vpop.f32.mrf.mxu0
  %v1565 = vpop.f32.mrf.mxu0
  %v1566 = vadd.f32 %v1517, %v1565
  %v1567 = vpop.f32.mrf.mxu0
  %1568 = vmatprep.mubr.bf16.mxu0 0
  %1569 = vmatmul.mubr.bf16.gmra.mxu0 %v1379
  %v1570 = vpop.f32.mrf.mxu0
  %v1571 = vadd.f32 %v1522, %v1570
  %v1572 = vpop.f32.mrf.mxu0
  %v1573 = vpop.f32.mrf.mxu0
  %v1574 = vadd.f32 %v1525, %v1573
  %v1575 = vpop.f32.mrf.mxu0
  %1576 = vdwg.mxu0
  %v1577 = vmax.f32 %v699, %v987
  %v1578 = vmax.f32 %v702, %v990
  %v1579 = vmax.f32 %v707, %v995
  %v1580 = vmax.f32 %v710, %v998
  %v1581 = vmax.f32 %v1275, %v1563
  %v1582 = vmax.f32 %v1278, %v1566
  %v1583 = vmax.f32 %v1283, %v1571
  %v1584 = vmax.f32 %v1286, %v1574
  %v1585 = vmax.f32 %v1577, %v1581
  %v1586 = vmax.f32 %v1578, %v1582
  %v1587 = vmax.f32 %v1579, %v1583
  %v1588 = vmax.f32 %v1580, %v1584
  %v1589 = vld [vmem:[%s5] sm:$0x1]
  %v1591 = vlaneseq
  %v1592 = vshrl.u32 %v1591, 7
  %v1593 = vsub.s32 0, %v1592
  %v1594 = vrot.slane %v1589, %v1593
  %v1596 = vadd.f32 %v1585, %v1594
  %v1597 = vadd.f32 %v1586, %v1594
  %v1598 = vadd.f32 %v1587, %v1594
  %v1599 = vadd.f32 %v1588, %v1594
  %v1600 = vpack.c.bf16 %v1597, %v1596
  %v1601 = vpack.c.bf16 %v1599, %v1598
  %v1604 = vunpack.c.l.b16 %v1600
  %v1605 = vunpack.c.h.b16 %v1600
  %v1606 = vunpack.c.l.b16 %v1601
  %v1607 = vunpack.c.h.b16 %v1601
  %v1608 = vpack.c.b16 %v1604, %v1604
  %v1609 = vpack.c.b16 %v1605, %v1605
  %v1610 = vpack.c.b16 %v1606, %v1606
  %v1611 = vpack.c.b16 %v1607, %v1607
  %1616 = vst [vmem:[%s6] sm:$0xf] %v1608
  %1617 = vst [vmem:[%s6 + $0x4] sm:$0xf] %v1609
  %1618 = vst [vmem:[%s6 + $0x8] sm:$0xf] %v1610
  %1619 = vst [vmem:[%s6 + $0xc] sm:$0xf] %v1611
  // Predicated region
  $region26: #{alphabet_with_scallop_forward.4} parent=0 // pred_check
    _
  $region27: #{alphabet_with_scallop_forward.4} parent=0 // pred_check_branch
    %1621 = sbr.rel (0) target = $region29
  $region28: #{alphabet_with_scallop_forward.4} parent=0 // pred_region
    _
  $region29: #{alphabet_with_scallop_forward.4} parent=0 // pred_fallthru
    _
  // Predicated region
  $region30: #{alphabet_with_scallop_forward.4} parent=0 // pred_check
    _
  $region31: #{alphabet_with_scallop_forward.4} parent=0 // pred_check_branch
    %1623 = sbr.rel (0) target = $region33
  $region32: #{alphabet_with_scallop_forward.4} parent=0 // pred_region
    _
  $region33: #{alphabet_with_scallop_forward.4} parent=0 // pred_fallthru
    _

// kernel: alphabet_with_scallop_forward.5
$region0: #{alphabet_with_scallop_forward.5}
  #allocation0 [shape = 'u32[]', space=smem, size = 0x4, offset = 0x4, fixed_abs, tag = 'smem constant byte address 0x4 - core index']
  #allocation1 [shape = 'u32[144,128]{1,0:T(1,128)}', space=vmem, size = 0x12000, scoped, tag = 'internal scratch']
  %s0 = inlined_call_operand.vmem [shape: bf16[8,1024], index: 0, kind: input, shape index: {}]
  %s1 = inlined_call_operand.vmem [shape: bf16[1024,1024], index: 1, kind: input, shape index: {}]
  %s2 = inlined_call_operand.vmem [shape: f32[1,1024], index: 2, kind: input, shape index: {}]
  %s3 = inlined_call_operand.vmem [shape: bf16[1024,128], index: 3, kind: input, shape index: {}]
  %s4 = inlined_call_operand.vmem [shape: f32[1,128], index: 4, kind: input, shape index: {}]
  %s5 = inlined_call_operand.vmem [shape: f32[8,128], index: 5, kind: output, shape index: {}]
  %s6 = sld [smem:[#allocation0]]
  $region30: #{alphabet_with_scallop_forward.5} parent=0
    _
  %s8 = ssub.s32 1, %s6
  %s9 = scalar_select 0, %s8, %s6
  // Predicated region
  $region2: #{alphabet_with_scallop_forward.5} parent=0 // pred_check
    _
  $region3: #{alphabet_with_scallop_forward.5} parent=0 // pred_check_branch
    %11 = sbr.rel (0) target = $region5
  $region4: #{alphabet_with_scallop_forward.5} parent=0 // pred_region
    _
  $region5: #{alphabet_with_scallop_forward.5} parent=0 // pred_fallthru
    _
  // Predicated region
  $region6: #{alphabet_with_scallop_forward.5} parent=0 // pred_check
    _
  $region7: #{alphabet_with_scallop_forward.5} parent=0 // pred_check_branch
    %13 = sbr.rel (0) target = $region9
  $region8: #{alphabet_with_scallop_forward.5} parent=0 // pred_region
    _
  $region9: #{alphabet_with_scallop_forward.5} parent=0 // pred_fallthru
    _
  // Predicated region
  $region10: #{alphabet_with_scallop_forward.5} parent=0 // pred_check
    _
  $region11: #{alphabet_with_scallop_forward.5} parent=0 // pred_check_branch
    %15 = sbr.rel (0) target = $region13
  $region12: #{alphabet_with_scallop_forward.5} parent=0 // pred_region
    _
  $region13: #{alphabet_with_scallop_forward.5} parent=0 // pred_fallthru
    _
  // Predicated region
  $region14: #{alphabet_with_scallop_forward.5} parent=0 // pred_check
    _
  $region15: #{alphabet_with_scallop_forward.5} parent=0 // pred_check_branch
    %17 = sbr.rel (0) target = $region17
  $region16: #{alphabet_with_scallop_forward.5} parent=0 // pred_region
    _
  $region17: #{alphabet_with_scallop_forward.5} parent=0 // pred_fallthru
    _
  // Predicated region
  $region18: #{alphabet_with_scallop_forward.5} parent=0 // pred_check
    _
  $region19: #{alphabet_with_scallop_forward.5} parent=0 // pred_check_branch
    %19 = sbr.rel (0) target = $region21
  $region20: #{alphabet_with_scallop_forward.5} parent=0 // pred_region
    _
  $region21: #{alphabet_with_scallop_forward.5} parent=0 // pred_fallthru
    _
  %v21 = vld [vmem:[%s0] sm:$0xff]
  %v22 = vld [vmem:[%s0 + $0x8] sm:$0xff]
  %v23 = vld [vmem:[%s0 + $0x10] sm:$0xff]
  %v24 = vld [vmem:[%s0 + $0x18] sm:$0xff]
  %v25 = vld [vmem:[%s1] sm:$0xff]
  %v26 = vld [vmem:[%s1 + $0x8] sm:$0xff]
  %v27 = vld [vmem:[%s1 + $0x10] sm:$0xff]
  %v28 = vld [vmem:[%s1 + $0x18] sm:$0xff]
  %v29 = vld [vmem:[%s1 + $0x20] sm:$0xff]
  %v30 = vld [vmem:[%s1 + $0x28] sm:$0xff]
  %v31 = vld [vmem:[%s1 + $0x30] sm:$0xff]
  %v32 = vld [vmem:[%s1 + $0x38] sm:$0xff]
  %v33 = vld [vmem:[%s1 + $0x40] sm:$0xff]
  %v34 = vld [vmem:[%s1 + $0x48] sm:$0xff]
  %v35 = vld [vmem:[%s1 + $0x50] sm:$0xff]
  %v36 = vld [vmem:[%s1 + $0x58] sm:$0xff]
  %v37 = vld [vmem:[%s1 + $0x60] sm:$0xff]
  %v38 = vld [vmem:[%s1 + $0x68] sm:$0xff]
  %v39 = vld [vmem:[%s1 + $0x70] sm:$0xff]
  %v40 = vld [vmem:[%s1 + $0x78] sm:$0xff]
  %v41 = vld [vmem:[%s1 + $0x80] sm:$0xff]
  %v42 = vld [vmem:[%s1 + $0x88] sm:$0xff]
  %v43 = vld [vmem:[%s1 + $0x90] sm:$0xff]
  %v44 = vld [vmem:[%s1 + $0x98] sm:$0xff]
  %v45 = vld [vmem:[%s1 + $0xa0] sm:$0xff]
  %v46 = vld [vmem:[%s1 + $0xa8] sm:$0xff]
  %v47 = vld [vmem:[%s1 + $0xb0] sm:$0xff]
  %v48 = vld [vmem:[%s1 + $0xb8] sm:$0xff]
  %v49 = vld [vmem:[%s1 + $0xc0] sm:$0xff]
  %v50 = vld [vmem:[%s1 + $0xc8] sm:$0xff]
  %v51 = vld [vmem:[%s1 + $0xd0] sm:$0xff]
  %v52 = vld [vmem:[%s1 + $0xd8] sm:$0xff]
  %v53 = vld [vmem:[%s1 + $0xe0] sm:$0xff]
  %v54 = vld [vmem:[%s1 + $0xe8] sm:$0xff]
  %v55 = vld [vmem:[%s1 + $0xf0] sm:$0xff]
  %v56 = vld [vmem:[%s1 + $0xf8] sm:$0xff]
  %v57 = vld [vmem:[%s1 + $0x100] sm:$0xff]
  %v58 = vld [vmem:[%s1 + $0x108] sm:$0xff]
  %v59 = vld [vmem:[%s1 + $0x110] sm:$0xff]
  %v60 = vld [vmem:[%s1 + $0x118] sm:$0xff]
  %v61 = vld [vmem:[%s1 + $0x120] sm:$0xff]
  %v62 = vld [vmem:[%s1 + $0x128] sm:$0xff]
  %v63 = vld [vmem:[%s1 + $0x130] sm:$0xff]
  %v64 = vld [vmem:[%s1 + $0x138] sm:$0xff]
  %v65 = vld [vmem:[%s1 + $0x140] sm:$0xff]
  %v66 = vld [vmem:[%s1 + $0x148] sm:$0xff]
  %v67 = vld [vmem:[%s1 + $0x150] sm:$0xff]
  %v68 = vld [vmem:[%s1 + $0x158] sm:$0xff]
  %v69 = vld [vmem:[%s1 + $0x160] sm:$0xff]
  %v70 = vld [vmem:[%s1 + $0x168] sm:$0xff]
  %v71 = vld [vmem:[%s1 + $0x170] sm:$0xff]
  %v72 = vld [vmem:[%s1 + $0x178] sm:$0xff]
  %v73 = vld [vmem:[%s1 + $0x180] sm:$0xff]
  %v74 = vld [vmem:[%s1 + $0x188] sm:$0xff]
  %v75 = vld [vmem:[%s1 + $0x190] sm:$0xff]
  %v76 = vld [vmem:[%s1 + $0x198] sm:$0xff]
  %v77 = vld [vmem:[%s1 + $0x1a0] sm:$0xff]
  %v78 = vld [vmem:[%s1 + $0x1a8] sm:$0xff]
  %v79 = vld [vmem:[%s1 + $0x1b0] sm:$0xff]
  %v80 = vld [vmem:[%s1 + $0x1b8] sm:$0xff]
  %v81 = vld [vmem:[%s1 + $0x1c0] sm:$0xff]
  %v82 = vld [vmem:[%s1 + $0x1c8] sm:$0xff]
  %v83 = vld [vmem:[%s1 + $0x1d0] sm:$0xff]
  %v84 = vld [vmem:[%s1 + $0x1d8] sm:$0xff]
  %v85 = vld [vmem:[%s1 + $0x1e0] sm:$0xff]
  %v86 = vld [vmem:[%s1 + $0x1e8] sm:$0xff]
  %v87 = vld [vmem:[%s1 + $0x1f0] sm:$0xff]
  %v88 = vld [vmem:[%s1 + $0x1f8] sm:$0xff]
  %v89 = vld [vmem:[%s1 + $0x200] sm:$0xff]
  %v90 = vld [vmem:[%s1 + $0x208] sm:$0xff]
  %v91 = vld [vmem:[%s1 + $0x210] sm:$0xff]
  %v92 = vld [vmem:[%s1 + $0x218] sm:$0xff]
  %v93 = vld [vmem:[%s1 + $0x220] sm:$0xff]
  %v94 = vld [vmem:[%s1 + $0x228] sm:$0xff]
  %v95 = vld [vmem:[%s1 + $0x230] sm:$0xff]
  %v96 = vld [vmem:[%s1 + $0x238] sm:$0xff]
  %v97 = vld [vmem:[%s1 + $0x240] sm:$0xff]
  %v98 = vld [vmem:[%s1 + $0x248] sm:$0xff]
  %v99 = vld [vmem:[%s1 + $0x250] sm:$0xff]
  %v100 = vld [vmem:[%s1 + $0x258] sm:$0xff]
  %v101 = vld [vmem:[%s1 + $0x260] sm:$0xff]
  %v102 = vld [vmem:[%s1 + $0x268] sm:$0xff]
  %v103 = vld [vmem:[%s1 + $0x270] sm:$0xff]
  %v104 = vld [vmem:[%s1 + $0x278] sm:$0xff]
  %v105 = vld [vmem:[%s1 + $0x280] sm:$0xff]
  %v106 = vld [vmem:[%s1 + $0x288] sm:$0xff]
  %v107 = vld [vmem:[%s1 + $0x290] sm:$0xff]
  %v108 = vld [vmem:[%s1 + $0x298] sm:$0xff]
  %v109 = vld [vmem:[%s1 + $0x2a0] sm:$0xff]
  %v110 = vld [vmem:[%s1 + $0x2a8] sm:$0xff]
  %v111 = vld [vmem:[%s1 + $0x2b0] sm:$0xff]
  %v112 = vld [vmem:[%s1 + $0x2b8] sm:$0xff]
  %v113 = vld [vmem:[%s1 + $0x2c0] sm:$0xff]
  %v114 = vld [vmem:[%s1 + $0x2c8] sm:$0xff]
  %v115 = vld [vmem:[%s1 + $0x2d0] sm:$0xff]
  %v116 = vld [vmem:[%s1 + $0x2d8] sm:$0xff]
  %v117 = vld [vmem:[%s1 + $0x2e0] sm:$0xff]
  %v118 = vld [vmem:[%s1 + $0x2e8] sm:$0xff]
  %v119 = vld [vmem:[%s1 + $0x2f0] sm:$0xff]
  %v120 = vld [vmem:[%s1 + $0x2f8] sm:$0xff]
  %v121 = vld [vmem:[%s1 + $0x300] sm:$0xff]
  %v122 = vld [vmem:[%s1 + $0x308] sm:$0xff]
  %v123 = vld [vmem:[%s1 + $0x310] sm:$0xff]
  %v124 = vld [vmem:[%s1 + $0x318] sm:$0xff]
  %v125 = vld [vmem:[%s1 + $0x320] sm:$0xff]
  %v126 = vld [vmem:[%s1 + $0x328] sm:$0xff]
  %v127 = vld [vmem:[%s1 + $0x330] sm:$0xff]
  %v128 = vld [vmem:[%s1 + $0x338] sm:$0xff]
  %v129 = vld [vmem:[%s1 + $0x340] sm:$0xff]
  %v130 = vld [vmem:[%s1 + $0x348] sm:$0xff]
  %v131 = vld [vmem:[%s1 + $0x350] sm:$0xff]
  %v132 = vld [vmem:[%s1 + $0x358] sm:$0xff]
  %v133 = vld [vmem:[%s1 + $0x360] sm:$0xff]
  %v134 = vld [vmem:[%s1 + $0x368] sm:$0xff]
  %v135 = vld [vmem:[%s1 + $0x370] sm:$0xff]
  %v136 = vld [vmem:[%s1 + $0x378] sm:$0xff]
  %v137 = vld [vmem:[%s1 + $0x380] sm:$0xff]
  %v138 = vld [vmem:[%s1 + $0x388] sm:$0xff]
  %v139 = vld [vmem:[%s1 + $0x390] sm:$0xff]
  %v140 = vld [vmem:[%s1 + $0x398] sm:$0xff]
  %v141 = vld [vmem:[%s1 + $0x3a0] sm:$0xff]
  %v142 = vld [vmem:[%s1 + $0x3a8] sm:$0xff]
  %v143 = vld [vmem:[%s1 + $0x3b0] sm:$0xff]
  %v144 = vld [vmem:[%s1 + $0x3b8] sm:$0xff]
  %v145 = vld [vmem:[%s1 + $0x3c0] sm:$0xff]
  %v146 = vld [vmem:[%s1 + $0x3c8] sm:$0xff]
  %v147 = vld [vmem:[%s1 + $0x3d0] sm:$0xff]
  %v148 = vld [vmem:[%s1 + $0x3d8] sm:$0xff]
  %v149 = vld [vmem:[%s1 + $0x3e0] sm:$0xff]
  %v150 = vld [vmem:[%s1 + $0x3e8] sm:$0xff]
  %v151 = vld [vmem:[%s1 + $0x3f0] sm:$0xff]
  %v152 = vld [vmem:[%s1 + $0x3f8] sm:$0xff]
  %v153 = vld [vmem:[%s1 + $0x400] sm:$0xff]
  %v154 = vld [vmem:[%s1 + $0x408] sm:$0xff]
  %v155 = vld [vmem:[%s1 + $0x410] sm:$0xff]
  %v156 = vld [vmem:[%s1 + $0x418] sm:$0xff]
  %v157 = vld [vmem:[%s1 + $0x420] sm:$0xff]
  %v158 = vld [vmem:[%s1 + $0x428] sm:$0xff]
  %v159 = vld [vmem:[%s1 + $0x430] sm:$0xff]
  %v160 = vld [vmem:[%s1 + $0x438] sm:$0xff]
  %v161 = vld [vmem:[%s1 + $0x440] sm:$0xff]
  %v162 = vld [vmem:[%s1 + $0x448] sm:$0xff]
  %v163 = vld [vmem:[%s1 + $0x450] sm:$0xff]
  %v164 = vld [vmem:[%s1 + $0x458] sm:$0xff]
  %v165 = vld [vmem:[%s1 + $0x460] sm:$0xff]
  %v166 = vld [vmem:[%s1 + $0x468] sm:$0xff]
  %v167 = vld [vmem:[%s1 + $0x470] sm:$0xff]
  %v168 = vld [vmem:[%s1 + $0x478] sm:$0xff]
  %v169 = vld [vmem:[%s1 + $0x480] sm:$0xff]
  %v170 = vld [vmem:[%s1 + $0x488] sm:$0xff]
  %v171 = vld [vmem:[%s1 + $0x490] sm:$0xff]
  %v172 = vld [vmem:[%s1 + $0x498] sm:$0xff]
  %v173 = vld [vmem:[%s1 + $0x4a0] sm:$0xff]
  %v174 = vld [vmem:[%s1 + $0x4a8] sm:$0xff]
  %v175 = vld [vmem:[%s1 + $0x4b0] sm:$0xff]
  %v176 = vld [vmem:[%s1 + $0x4b8] sm:$0xff]
  %v177 = vld [vmem:[%s1 + $0x4c0] sm:$0xff]
  %v178 = vld [vmem:[%s1 + $0x4c8] sm:$0xff]
  %v179 = vld [vmem:[%s1 + $0x4d0] sm:$0xff]
  %v180 = vld [vmem:[%s1 + $0x4d8] sm:$0xff]
  %v181 = vld [vmem:[%s1 + $0x4e0] sm:$0xff]
  %v182 = vld [vmem:[%s1 + $0x4e8] sm:$0xff]
  %v183 = vld [vmem:[%s1 + $0x4f0] sm:$0xff]
  %v184 = vld [vmem:[%s1 + $0x4f8] sm:$0xff]
  %v185 = vld [vmem:[%s1 + $0x500] sm:$0xff]
  %v186 = vld [vmem:[%s1 + $0x508] sm:$0xff]
  %v187 = vld [vmem:[%s1 + $0x510] sm:$0xff]
  %v188 = vld [vmem:[%s1 + $0x518] sm:$0xff]
  %v189 = vld [vmem:[%s1 + $0x520] sm:$0xff]
  %v190 = vld [vmem:[%s1 + $0x528] sm:$0xff]
  %v191 = vld [vmem:[%s1 + $0x530] sm:$0xff]
  %v192 = vld [vmem:[%s1 + $0x538] sm:$0xff]
  %v193 = vld [vmem:[%s1 + $0x540] sm:$0xff]
  %v194 = vld [vmem:[%s1 + $0x548] sm:$0xff]
  %v195 = vld [vmem:[%s1 + $0x550] sm:$0xff]
  %v196 = vld [vmem:[%s1 + $0x558] sm:$0xff]
  %v197 = vld [vmem:[%s1 + $0x560] sm:$0xff]
  %v198 = vld [vmem:[%s1 + $0x568] sm:$0xff]
  %v199 = vld [vmem:[%s1 + $0x570] sm:$0xff]
  %v200 = vld [vmem:[%s1 + $0x578] sm:$0xff]
  %v201 = vld [vmem:[%s1 + $0x580] sm:$0xff]
  %v202 = vld [vmem:[%s1 + $0x588] sm:$0xff]
  %v203 = vld [vmem:[%s1 + $0x590] sm:$0xff]
  %v204 = vld [vmem:[%s1 + $0x598] sm:$0xff]
  %v205 = vld [vmem:[%s1 + $0x5a0] sm:$0xff]
  %v206 = vld [vmem:[%s1 + $0x5a8] sm:$0xff]
  %v207 = vld [vmem:[%s1 + $0x5b0] sm:$0xff]
  %v208 = vld [vmem:[%s1 + $0x5b8] sm:$0xff]
  %v209 = vld [vmem:[%s1 + $0x5c0] sm:$0xff]
  %v210 = vld [vmem:[%s1 + $0x5c8] sm:$0xff]
  %v211 = vld [vmem:[%s1 + $0x5d0] sm:$0xff]
  %v212 = vld [vmem:[%s1 + $0x5d8] sm:$0xff]
  %v213 = vld [vmem:[%s1 + $0x5e0] sm:$0xff]
  %v214 = vld [vmem:[%s1 + $0x5e8] sm:$0xff]
  %v215 = vld [vmem:[%s1 + $0x5f0] sm:$0xff]
  %v216 = vld [vmem:[%s1 + $0x5f8] sm:$0xff]
  %v217 = vld [vmem:[%s1 + $0x600] sm:$0xff]
  %v218 = vld [vmem:[%s1 + $0x608] sm:$0xff]
  %v219 = vld [vmem:[%s1 + $0x610] sm:$0xff]
  %v220 = vld [vmem:[%s1 + $0x618] sm:$0xff]
  %v221 = vld [vmem:[%s1 + $0x620] sm:$0xff]
  %v222 = vld [vmem:[%s1 + $0x628] sm:$0xff]
  %v223 = vld [vmem:[%s1 + $0x630] sm:$0xff]
  %v224 = vld [vmem:[%s1 + $0x638] sm:$0xff]
  %v225 = vld [vmem:[%s1 + $0x640] sm:$0xff]
  %v226 = vld [vmem:[%s1 + $0x648] sm:$0xff]
  %v227 = vld [vmem:[%s1 + $0x650] sm:$0xff]
  %v228 = vld [vmem:[%s1 + $0x658] sm:$0xff]
  %v229 = vld [vmem:[%s1 + $0x660] sm:$0xff]
  %v230 = vld [vmem:[%s1 + $0x668] sm:$0xff]
  %v231 = vld [vmem:[%s1 + $0x670] sm:$0xff]
  %v232 = vld [vmem:[%s1 + $0x678] sm:$0xff]
  %v233 = vld [vmem:[%s1 + $0x680] sm:$0xff]
  %v234 = vld [vmem:[%s1 + $0x688] sm:$0xff]
  %v235 = vld [vmem:[%s1 + $0x690] sm:$0xff]
  %v236 = vld [vmem:[%s1 + $0x698] sm:$0xff]
  %v237 = vld [vmem:[%s1 + $0x6a0] sm:$0xff]
  %v238 = vld [vmem:[%s1 + $0x6a8] sm:$0xff]
  %v239 = vld [vmem:[%s1 + $0x6b0] sm:$0xff]
  %v240 = vld [vmem:[%s1 + $0x6b8] sm:$0xff]
  %v241 = vld [vmem:[%s1 + $0x6c0] sm:$0xff]
  %v242 = vld [vmem:[%s1 + $0x6c8] sm:$0xff]
  %v243 = vld [vmem:[%s1 + $0x6d0] sm:$0xff]
  %v244 = vld [vmem:[%s1 + $0x6d8] sm:$0xff]
  %v245 = vld [vmem:[%s1 + $0x6e0] sm:$0xff]
  %v246 = vld [vmem:[%s1 + $0x6e8] sm:$0xff]
  %v247 = vld [vmem:[%s1 + $0x6f0] sm:$0xff]
  %v248 = vld [vmem:[%s1 + $0x6f8] sm:$0xff]
  %v249 = vld [vmem:[%s1 + $0x700] sm:$0xff]
  %v250 = vld [vmem:[%s1 + $0x708] sm:$0xff]
  %v251 = vld [vmem:[%s1 + $0x710] sm:$0xff]
  %v252 = vld [vmem:[%s1 + $0x718] sm:$0xff]
  %v253 = vld [vmem:[%s1 + $0x720] sm:$0xff]
  %v254 = vld [vmem:[%s1 + $0x728] sm:$0xff]
  %v255 = vld [vmem:[%s1 + $0x730] sm:$0xff]
  %v256 = vld [vmem:[%s1 + $0x738] sm:$0xff]
  %v257 = vld [vmem:[%s1 + $0x740] sm:$0xff]
  %v258 = vld [vmem:[%s1 + $0x748] sm:$0xff]
  %v259 = vld [vmem:[%s1 + $0x750] sm:$0xff]
  %v260 = vld [vmem:[%s1 + $0x758] sm:$0xff]
  %v261 = vld [vmem:[%s1 + $0x760] sm:$0xff]
  %v262 = vld [vmem:[%s1 + $0x768] sm:$0xff]
  %v263 = vld [vmem:[%s1 + $0x770] sm:$0xff]
  %v264 = vld [vmem:[%s1 + $0x778] sm:$0xff]
  %v265 = vld [vmem:[%s1 + $0x780] sm:$0xff]
  %v266 = vld [vmem:[%s1 + $0x788] sm:$0xff]
  %v267 = vld [vmem:[%s1 + $0x790] sm:$0xff]
  %v268 = vld [vmem:[%s1 + $0x798] sm:$0xff]
  %v269 = vld [vmem:[%s1 + $0x7a0] sm:$0xff]
  %v270 = vld [vmem:[%s1 + $0x7a8] sm:$0xff]
  %v271 = vld [vmem:[%s1 + $0x7b0] sm:$0xff]
  %v272 = vld [vmem:[%s1 + $0x7b8] sm:$0xff]
  %v273 = vld [vmem:[%s1 + $0x7c0] sm:$0xff]
  %v274 = vld [vmem:[%s1 + $0x7c8] sm:$0xff]
  %v275 = vld [vmem:[%s1 + $0x7d0] sm:$0xff]
  %v276 = vld [vmem:[%s1 + $0x7d8] sm:$0xff]
  %v277 = vld [vmem:[%s1 + $0x7e0] sm:$0xff]
  %v278 = vld [vmem:[%s1 + $0x7e8] sm:$0xff]
  %v279 = vld [vmem:[%s1 + $0x7f0] sm:$0xff]
  %v280 = vld [vmem:[%s1 + $0x7f8] sm:$0xff]
  %v281 = vld [vmem:[%s1 + $0x800] sm:$0xff]
  %v282 = vld [vmem:[%s1 + $0x808] sm:$0xff]
  %v283 = vld [vmem:[%s1 + $0x810] sm:$0xff]
  %v284 = vld [vmem:[%s1 + $0x818] sm:$0xff]
  %v285 = vld [vmem:[%s1 + $0x820] sm:$0xff]
  %v286 = vld [vmem:[%s1 + $0x828] sm:$0xff]
  %v287 = vld [vmem:[%s1 + $0x830] sm:$0xff]
  %v288 = vld [vmem:[%s1 + $0x838] sm:$0xff]
  %v289 = vld [vmem:[%s1 + $0x840] sm:$0xff]
  %v290 = vld [vmem:[%s1 + $0x848] sm:$0xff]
  %v291 = vld [vmem:[%s1 + $0x850] sm:$0xff]
  %v292 = vld [vmem:[%s1 + $0x858] sm:$0xff]
  %v293 = vld [vmem:[%s1 + $0x860] sm:$0xff]
  %v294 = vld [vmem:[%s1 + $0x868] sm:$0xff]
  %v295 = vld [vmem:[%s1 + $0x870] sm:$0xff]
  %v296 = vld [vmem:[%s1 + $0x878] sm:$0xff]
  %v297 = vld [vmem:[%s1 + $0x880] sm:$0xff]
  %v298 = vld [vmem:[%s1 + $0x888] sm:$0xff]
  %v299 = vld [vmem:[%s1 + $0x890] sm:$0xff]
  %v300 = vld [vmem:[%s1 + $0x898] sm:$0xff]
  %v301 = vld [vmem:[%s1 + $0x8a0] sm:$0xff]
  %v302 = vld [vmem:[%s1 + $0x8a8] sm:$0xff]
  %v303 = vld [vmem:[%s1 + $0x8b0] sm:$0xff]
  %v304 = vld [vmem:[%s1 + $0x8b8] sm:$0xff]
  %v305 = vld [vmem:[%s1 + $0x8c0] sm:$0xff]
  %v306 = vld [vmem:[%s1 + $0x8c8] sm:$0xff]
  %v307 = vld [vmem:[%s1 + $0x8d0] sm:$0xff]
  %v308 = vld [vmem:[%s1 + $0x8d8] sm:$0xff]
  %v309 = vld [vmem:[%s1 + $0x8e0] sm:$0xff]
  %v310 = vld [vmem:[%s1 + $0x8e8] sm:$0xff]
  %v311 = vld [vmem:[%s1 + $0x8f0] sm:$0xff]
  %v312 = vld [vmem:[%s1 + $0x8f8] sm:$0xff]
  %v313 = vld [vmem:[%s1 + $0x900] sm:$0xff]
  %v314 = vld [vmem:[%s1 + $0x908] sm:$0xff]
  %v315 = vld [vmem:[%s1 + $0x910] sm:$0xff]
  %v316 = vld [vmem:[%s1 + $0x918] sm:$0xff]
  %v317 = vld [vmem:[%s1 + $0x920] sm:$0xff]
  %v318 = vld [vmem:[%s1 + $0x928] sm:$0xff]
  %v319 = vld [vmem:[%s1 + $0x930] sm:$0xff]
  %v320 = vld [vmem:[%s1 + $0x938] sm:$0xff]
  %v321 = vld [vmem:[%s1 + $0x940] sm:$0xff]
  %v322 = vld [vmem:[%s1 + $0x948] sm:$0xff]
  %v323 = vld [vmem:[%s1 + $0x950] sm:$0xff]
  %v324 = vld [vmem:[%s1 + $0x958] sm:$0xff]
  %v325 = vld [vmem:[%s1 + $0x960] sm:$0xff]
  %v326 = vld [vmem:[%s1 + $0x968] sm:$0xff]
  %v327 = vld [vmem:[%s1 + $0x970] sm:$0xff]
  %v328 = vld [vmem:[%s1 + $0x978] sm:$0xff]
  %v329 = vld [vmem:[%s1 + $0x980] sm:$0xff]
  %v330 = vld [vmem:[%s1 + $0x988] sm:$0xff]
  %v331 = vld [vmem:[%s1 + $0x990] sm:$0xff]
  %v332 = vld [vmem:[%s1 + $0x998] sm:$0xff]
  %v333 = vld [vmem:[%s1 + $0x9a0] sm:$0xff]
  %v334 = vld [vmem:[%s1 + $0x9a8] sm:$0xff]
  %v335 = vld [vmem:[%s1 + $0x9b0] sm:$0xff]
  %v336 = vld [vmem:[%s1 + $0x9b8] sm:$0xff]
  %v337 = vld [vmem:[%s1 + $0x9c0] sm:$0xff]
  %v338 = vld [vmem:[%s1 + $0x9c8] sm:$0xff]
  %v339 = vld [vmem:[%s1 + $0x9d0] sm:$0xff]
  %v340 = vld [vmem:[%s1 + $0x9d8] sm:$0xff]
  %v341 = vld [vmem:[%s1 + $0x9e0] sm:$0xff]
  %v342 = vld [vmem:[%s1 + $0x9e8] sm:$0xff]
  %v343 = vld [vmem:[%s1 + $0x9f0] sm:$0xff]
  %v344 = vld [vmem:[%s1 + $0x9f8] sm:$0xff]
  %v345 = vld [vmem:[%s1 + $0xa00] sm:$0xff]
  %v346 = vld [vmem:[%s1 + $0xa08] sm:$0xff]
  %v347 = vld [vmem:[%s1 + $0xa10] sm:$0xff]
  %v348 = vld [vmem:[%s1 + $0xa18] sm:$0xff]
  %v349 = vld [vmem:[%s1 + $0xa20] sm:$0xff]
  %v350 = vld [vmem:[%s1 + $0xa28] sm:$0xff]
  %v351 = vld [vmem:[%s1 + $0xa30] sm:$0xff]
  %v352 = vld [vmem:[%s1 + $0xa38] sm:$0xff]
  %v353 = vld [vmem:[%s1 + $0xa40] sm:$0xff]
  %v354 = vld [vmem:[%s1 + $0xa48] sm:$0xff]
  %v355 = vld [vmem:[%s1 + $0xa50] sm:$0xff]
  %v356 = vld [vmem:[%s1 + $0xa58] sm:$0xff]
  %v357 = vld [vmem:[%s1 + $0xa60] sm:$0xff]
  %v358 = vld [vmem:[%s1 + $0xa68] sm:$0xff]
  %v359 = vld [vmem:[%s1 + $0xa70] sm:$0xff]
  %v360 = vld [vmem:[%s1 + $0xa78] sm:$0xff]
  %v361 = vld [vmem:[%s1 + $0xa80] sm:$0xff]
  %v362 = vld [vmem:[%s1 + $0xa88] sm:$0xff]
  %v363 = vld [vmem:[%s1 + $0xa90] sm:$0xff]
  %v364 = vld [vmem:[%s1 + $0xa98] sm:$0xff]
  %v365 = vld [vmem:[%s1 + $0xaa0] sm:$0xff]
  %v366 = vld [vmem:[%s1 + $0xaa8] sm:$0xff]
  %v367 = vld [vmem:[%s1 + $0xab0] sm:$0xff]
  %v368 = vld [vmem:[%s1 + $0xab8] sm:$0xff]
  %v369 = vld [vmem:[%s1 + $0xac0] sm:$0xff]
  %v370 = vld [vmem:[%s1 + $0xac8] sm:$0xff]
  %v371 = vld [vmem:[%s1 + $0xad0] sm:$0xff]
  %v372 = vld [vmem:[%s1 + $0xad8] sm:$0xff]
  %v373 = vld [vmem:[%s1 + $0xae0] sm:$0xff]
  %v374 = vld [vmem:[%s1 + $0xae8] sm:$0xff]
  %v375 = vld [vmem:[%s1 + $0xaf0] sm:$0xff]
  %v376 = vld [vmem:[%s1 + $0xaf8] sm:$0xff]
  %v377 = vld [vmem:[%s1 + $0xb00] sm:$0xff]
  %v378 = vld [vmem:[%s1 + $0xb08] sm:$0xff]
  %v379 = vld [vmem:[%s1 + $0xb10] sm:$0xff]
  %v380 = vld [vmem:[%s1 + $0xb18] sm:$0xff]
  %v381 = vld [vmem:[%s1 + $0xb20] sm:$0xff]
  %v382 = vld [vmem:[%s1 + $0xb28] sm:$0xff]
  %v383 = vld [vmem:[%s1 + $0xb30] sm:$0xff]
  %v384 = vld [vmem:[%s1 + $0xb38] sm:$0xff]
  %v385 = vld [vmem:[%s1 + $0xb40] sm:$0xff]
  %v386 = vld [vmem:[%s1 + $0xb48] sm:$0xff]
  %v387 = vld [vmem:[%s1 + $0xb50] sm:$0xff]
  %v388 = vld [vmem:[%s1 + $0xb58] sm:$0xff]
  %v389 = vld [vmem:[%s1 + $0xb60] sm:$0xff]
  %v390 = vld [vmem:[%s1 + $0xb68] sm:$0xff]
  %v391 = vld [vmem:[%s1 + $0xb70] sm:$0xff]
  %v392 = vld [vmem:[%s1 + $0xb78] sm:$0xff]
  %v393 = vld [vmem:[%s1 + $0xb80] sm:$0xff]
  %v394 = vld [vmem:[%s1 + $0xb88] sm:$0xff]
  %v395 = vld [vmem:[%s1 + $0xb90] sm:$0xff]
  %v396 = vld [vmem:[%s1 + $0xb98] sm:$0xff]
  %v397 = vld [vmem:[%s1 + $0xba0] sm:$0xff]
  %v398 = vld [vmem:[%s1 + $0xba8] sm:$0xff]
  %v399 = vld [vmem:[%s1 + $0xbb0] sm:$0xff]
  %v400 = vld [vmem:[%s1 + $0xbb8] sm:$0xff]
  %v401 = vld [vmem:[%s1 + $0xbc0] sm:$0xff]
  %v402 = vld [vmem:[%s1 + $0xbc8] sm:$0xff]
  %v403 = vld [vmem:[%s1 + $0xbd0] sm:$0xff]
  %v404 = vld [vmem:[%s1 + $0xbd8] sm:$0xff]
  %v405 = vld [vmem:[%s1 + $0xbe0] sm:$0xff]
  %v406 = vld [vmem:[%s1 + $0xbe8] sm:$0xff]
  %v407 = vld [vmem:[%s1 + $0xbf0] sm:$0xff]
  %v408 = vld [vmem:[%s1 + $0xbf8] sm:$0xff]
  %v409 = vld [vmem:[%s1 + $0xc00] sm:$0xff]
  %v410 = vld [vmem:[%s1 + $0xc08] sm:$0xff]
  %v411 = vld [vmem:[%s1 + $0xc10] sm:$0xff]
  %v412 = vld [vmem:[%s1 + $0xc18] sm:$0xff]
  %v413 = vld [vmem:[%s1 + $0xc20] sm:$0xff]
  %v414 = vld [vmem:[%s1 + $0xc28] sm:$0xff]
  %v415 = vld [vmem:[%s1 + $0xc30] sm:$0xff]
  %v416 = vld [vmem:[%s1 + $0xc38] sm:$0xff]
  %v417 = vld [vmem:[%s1 + $0xc40] sm:$0xff]
  %v418 = vld [vmem:[%s1 + $0xc48] sm:$0xff]
  %v419 = vld [vmem:[%s1 + $0xc50] sm:$0xff]
  %v420 = vld [vmem:[%s1 + $0xc58] sm:$0xff]
  %v421 = vld [vmem:[%s1 + $0xc60] sm:$0xff]
  %v422 = vld [vmem:[%s1 + $0xc68] sm:$0xff]
  %v423 = vld [vmem:[%s1 + $0xc70] sm:$0xff]
  %v424 = vld [vmem:[%s1 + $0xc78] sm:$0xff]
  %v425 = vld [vmem:[%s1 + $0xc80] sm:$0xff]
  %v426 = vld [vmem:[%s1 + $0xc88] sm:$0xff]
  %v427 = vld [vmem:[%s1 + $0xc90] sm:$0xff]
  %v428 = vld [vmem:[%s1 + $0xc98] sm:$0xff]
  %v429 = vld [vmem:[%s1 + $0xca0] sm:$0xff]
  %v430 = vld [vmem:[%s1 + $0xca8] sm:$0xff]
  %v431 = vld [vmem:[%s1 + $0xcb0] sm:$0xff]
  %v432 = vld [vmem:[%s1 + $0xcb8] sm:$0xff]
  %v433 = vld [vmem:[%s1 + $0xcc0] sm:$0xff]
  %v434 = vld [vmem:[%s1 + $0xcc8] sm:$0xff]
  %v435 = vld [vmem:[%s1 + $0xcd0] sm:$0xff]
  %v436 = vld [vmem:[%s1 + $0xcd8] sm:$0xff]
  %v437 = vld [vmem:[%s1 + $0xce0] sm:$0xff]
  %v438 = vld [vmem:[%s1 + $0xce8] sm:$0xff]
  %v439 = vld [vmem:[%s1 + $0xcf0] sm:$0xff]
  %v440 = vld [vmem:[%s1 + $0xcf8] sm:$0xff]
  %v441 = vld [vmem:[%s1 + $0xd00] sm:$0xff]
  %v442 = vld [vmem:[%s1 + $0xd08] sm:$0xff]
  %v443 = vld [vmem:[%s1 + $0xd10] sm:$0xff]
  %v444 = vld [vmem:[%s1 + $0xd18] sm:$0xff]
  %v445 = vld [vmem:[%s1 + $0xd20] sm:$0xff]
  %v446 = vld [vmem:[%s1 + $0xd28] sm:$0xff]
  %v447 = vld [vmem:[%s1 + $0xd30] sm:$0xff]
  %v448 = vld [vmem:[%s1 + $0xd38] sm:$0xff]
  %v449 = vld [vmem:[%s1 + $0xd40] sm:$0xff]
  %v450 = vld [vmem:[%s1 + $0xd48] sm:$0xff]
  %v451 = vld [vmem:[%s1 + $0xd50] sm:$0xff]
  %v452 = vld [vmem:[%s1 + $0xd58] sm:$0xff]
  %v453 = vld [vmem:[%s1 + $0xd60] sm:$0xff]
  %v454 = vld [vmem:[%s1 + $0xd68] sm:$0xff]
  %v455 = vld [vmem:[%s1 + $0xd70] sm:$0xff]
  %v456 = vld [vmem:[%s1 + $0xd78] sm:$0xff]
  %v457 = vld [vmem:[%s1 + $0xd80] sm:$0xff]
  %v458 = vld [vmem:[%s1 + $0xd88] sm:$0xff]
  %v459 = vld [vmem:[%s1 + $0xd90] sm:$0xff]
  %v460 = vld [vmem:[%s1 + $0xd98] sm:$0xff]
  %v461 = vld [vmem:[%s1 + $0xda0] sm:$0xff]
  %v462 = vld [vmem:[%s1 + $0xda8] sm:$0xff]
  %v463 = vld [vmem:[%s1 + $0xdb0] sm:$0xff]
  %v464 = vld [vmem:[%s1 + $0xdb8] sm:$0xff]
  %v465 = vld [vmem:[%s1 + $0xdc0] sm:$0xff]
  %v466 = vld [vmem:[%s1 + $0xdc8] sm:$0xff]
  %v467 = vld [vmem:[%s1 + $0xdd0] sm:$0xff]
  %v468 = vld [vmem:[%s1 + $0xdd8] sm:$0xff]
  %v469 = vld [vmem:[%s1 + $0xde0] sm:$0xff]
  %v470 = vld [vmem:[%s1 + $0xde8] sm:$0xff]
  %v471 = vld [vmem:[%s1 + $0xdf0] sm:$0xff]
  %v472 = vld [vmem:[%s1 + $0xdf8] sm:$0xff]
  %v473 = vld [vmem:[%s1 + $0xe00] sm:$0xff]
  %v474 = vld [vmem:[%s1 + $0xe08] sm:$0xff]
  %v475 = vld [vmem:[%s1 + $0xe10] sm:$0xff]
  %v476 = vld [vmem:[%s1 + $0xe18] sm:$0xff]
  %v477 = vld [vmem:[%s1 + $0xe20] sm:$0xff]
  %v478 = vld [vmem:[%s1 + $0xe28] sm:$0xff]
  %v479 = vld [vmem:[%s1 + $0xe30] sm:$0xff]
  %v480 = vld [vmem:[%s1 + $0xe38] sm:$0xff]
  %v481 = vld [vmem:[%s1 + $0xe40] sm:$0xff]
  %v482 = vld [vmem:[%s1 + $0xe48] sm:$0xff]
  %v483 = vld [vmem:[%s1 + $0xe50] sm:$0xff]
  %v484 = vld [vmem:[%s1 + $0xe58] sm:$0xff]
  %v485 = vld [vmem:[%s1 + $0xe60] sm:$0xff]
  %v486 = vld [vmem:[%s1 + $0xe68] sm:$0xff]
  %v487 = vld [vmem:[%s1 + $0xe70] sm:$0xff]
  %v488 = vld [vmem:[%s1 + $0xe78] sm:$0xff]
  %v489 = vld [vmem:[%s1 + $0xe80] sm:$0xff]
  %v490 = vld [vmem:[%s1 + $0xe88] sm:$0xff]
  %v491 = vld [vmem:[%s1 + $0xe90] sm:$0xff]
  %v492 = vld [vmem:[%s1 + $0xe98] sm:$0xff]
  %v493 = vld [vmem:[%s1 + $0xea0] sm:$0xff]
  %v494 = vld [vmem:[%s1 + $0xea8] sm:$0xff]
  %v495 = vld [vmem:[%s1 + $0xeb0] sm:$0xff]
  %v496 = vld [vmem:[%s1 + $0xeb8] sm:$0xff]
  %v497 = vld [vmem:[%s1 + $0xec0] sm:$0xff]
  %v498 = vld [vmem:[%s1 + $0xec8] sm:$0xff]
  %v499 = vld [vmem:[%s1 + $0xed0] sm:$0xff]
  %v500 = vld [vmem:[%s1 + $0xed8] sm:$0xff]
  %v501 = vld [vmem:[%s1 + $0xee0] sm:$0xff]
  %v502 = vld [vmem:[%s1 + $0xee8] sm:$0xff]
  %v503 = vld [vmem:[%s1 + $0xef0] sm:$0xff]
  %v504 = vld [vmem:[%s1 + $0xef8] sm:$0xff]
  %v505 = vld [vmem:[%s1 + $0xf00] sm:$0xff]
  %v506 = vld [vmem:[%s1 + $0xf08] sm:$0xff]
  %v507 = vld [vmem:[%s1 + $0xf10] sm:$0xff]
  %v508 = vld [vmem:[%s1 + $0xf18] sm:$0xff]
  %v509 = vld [vmem:[%s1 + $0xf20] sm:$0xff]
  %v510 = vld [vmem:[%s1 + $0xf28] sm:$0xff]
  %v511 = vld [vmem:[%s1 + $0xf30] sm:$0xff]
  %v512 = vld [vmem:[%s1 + $0xf38] sm:$0xff]
  %v513 = vld [vmem:[%s1 + $0xf40] sm:$0xff]
  %v514 = vld [vmem:[%s1 + $0xf48] sm:$0xff]
  %v515 = vld [vmem:[%s1 + $0xf50] sm:$0xff]
  %v516 = vld [vmem:[%s1 + $0xf58] sm:$0xff]
  %v517 = vld [vmem:[%s1 + $0xf60] sm:$0xff]
  %v518 = vld [vmem:[%s1 + $0xf68] sm:$0xff]
  %v519 = vld [vmem:[%s1 + $0xf70] sm:$0xff]
  %v520 = vld [vmem:[%s1 + $0xf78] sm:$0xff]
  %v521 = vld [vmem:[%s1 + $0xf80] sm:$0xff]
  %v522 = vld [vmem:[%s1 + $0xf88] sm:$0xff]
  %v523 = vld [vmem:[%s1 + $0xf90] sm:$0xff]
  %v524 = vld [vmem:[%s1 + $0xf98] sm:$0xff]
  %v525 = vld [vmem:[%s1 + $0xfa0] sm:$0xff]
  %v526 = vld [vmem:[%s1 + $0xfa8] sm:$0xff]
  %v527 = vld [vmem:[%s1 + $0xfb0] sm:$0xff]
  %v528 = vld [vmem:[%s1 + $0xfb8] sm:$0xff]
  %v529 = vld [vmem:[%s1 + $0xfc0] sm:$0xff]
  %v530 = vld [vmem:[%s1 + $0xfc8] sm:$0xff]
  %v531 = vld [vmem:[%s1 + $0xfd0] sm:$0xff]
  %v532 = vld [vmem:[%s1 + $0xfd8] sm:$0xff]
  %v533 = vld [vmem:[%s1 + $0xfe0] sm:$0xff]
  %v534 = vld [vmem:[%s1 + $0xfe8] sm:$0xff]
  %v535 = vld [vmem:[%s1 + $0xff0] sm:$0xff]
  %v536 = vld [vmem:[%s1 + $0xff8] sm:$0xff]
  %v537 = vld [vmem:[%s2] sm:$0xff]
  %v539 = vlaneseq
  %v540 = vshrl.u32 %v539, 7
  %v541 = vsub.s32 0, %v540
  %v542 = vrot.slane %v537, %v541
  %v543 = vlaneseq
  %v544 = vshrl.u32 %v543, 7
  %v545 = vsub.s32 1, %v544
  %v546 = vrot.slane %v537, %v545
  %v547 = vlaneseq
  %v548 = vshrl.u32 %v547, 7
  %v549 = vsub.s32 2, %v548
  %v550 = vrot.slane %v537, %v549
  %v551 = vlaneseq
  %v552 = vshrl.u32 %v551, 7
  %v553 = vsub.s32 3, %v552
  %v554 = vrot.slane %v537, %v553
  %v555 = vlaneseq
  %v556 = vshrl.u32 %v555, 7
  %v557 = vsub.s32 4, %v556
  %v558 = vrot.slane %v537, %v557
  %v559 = vlaneseq
  %v560 = vshrl.u32 %v559, 7
  %v561 = vsub.s32 5, %v560
  %v562 = vrot.slane %v537, %v561
  %v563 = vlaneseq
  %v564 = vshrl.u32 %v563, 7
  %v565 = vsub.s32 6, %v564
  %v566 = vrot.slane %v537, %v565
  %v567 = vlaneseq
  %v568 = vshrl.u32 %v567, 7
  %v569 = vsub.s32 7, %v568
  %v570 = vrot.slane %v537, %v569
  %v583 = vunpack.c.l.b16 %v21
  %v584 = vunpack.c.h.b16 %v21
  %v585 = vunpack.c.l.b16 %v22
  %v586 = vunpack.c.h.b16 %v22
  %v587 = vunpack.c.l.b16 %v23
  %v588 = vunpack.c.h.b16 %v23
  %v589 = vunpack.c.l.b16 %v24
  %v590 = vunpack.c.h.b16 %v24
  %v591 = vpack.c.b16 %v583, %v583
  %v592 = vpack.c.b16 %v584, %v584
  %v593 = vpack.c.b16 %v585, %v585
  %v594 = vpack.c.b16 %v586, %v586
  %v595 = vpack.c.b16 %v587, %v587
  %v596 = vpack.c.b16 %v588, %v588
  %v597 = vpack.c.b16 %v589, %v589
  %v598 = vpack.c.b16 %v590, %v590
  %v1119 = vunpack.c.l.b16 %v25
  %v1120 = vunpack.c.h.b16 %v25
  %v1121 = vunpack.c.l.b16 %v26
  %v1122 = vunpack.c.h.b16 %v26
  %v1123 = vunpack.c.l.b16 %v27
  %v1124 = vunpack.c.h.b16 %v27
  %v1125 = vunpack.c.l.b16 %v28
  %v1126 = vunpack.c.h.b16 %v28
  %v1127 = vunpack.c.l.b16 %v29
  %v1128 = vunpack.c.h.b16 %v29
  %v1129 = vunpack.c.l.b16 %v30
  %v1130 = vunpack.c.h.b16 %v30
  %v1131 = vunpack.c.l.b16 %v31
  %v1132 = vunpack.c.h.b16 %v31
  %v1133 = vunpack.c.l.b16 %v32
  %v1134 = vunpack.c.h.b16 %v32
  %v1135 = vunpack.c.l.b16 %v33
  %v1136 = vunpack.c.h.b16 %v33
  %v1137 = vunpack.c.l.b16 %v34
  %v1138 = vunpack.c.h.b16 %v34
  %v1139 = vunpack.c.l.b16 %v35
  %v1140 = vunpack.c.h.b16 %v35
  %v1141 = vunpack.c.l.b16 %v36
  %v1142 = vunpack.c.h.b16 %v36
  %v1143 = vunpack.c.l.b16 %v37
  %v1144 = vunpack.c.h.b16 %v37
  %v1145 = vunpack.c.l.b16 %v38
  %v1146 = vunpack.c.h.b16 %v38
  %v1147 = vunpack.c.l.b16 %v39
  %v1148 = vunpack.c.h.b16 %v39
  %v1149 = vunpack.c.l.b16 %v40
  %v1150 = vunpack.c.h.b16 %v40
  %v1151 = vunpack.c.l.b16 %v41
  %v1152 = vunpack.c.h.b16 %v41
  %v1153 = vunpack.c.l.b16 %v42
  %v1154 = vunpack.c.h.b16 %v42
  %v1155 = vunpack.c.l.b16 %v43
  %v1156 = vunpack.c.h.b16 %v43
  %v1157 = vunpack.c.l.b16 %v44
  %v1158 = vunpack.c.h.b16 %v44
  %v1159 = vunpack.c.l.b16 %v45
  %v1160 = vunpack.c.h.b16 %v45
  %v1161 = vunpack.c.l.b16 %v46
  %v1162 = vunpack.c.h.b16 %v46
  %v1163 = vunpack.c.l.b16 %v47
  %v1164 = vunpack.c.h.b16 %v47
  %v1165 = vunpack.c.l.b16 %v48
  %v1166 = vunpack.c.h.b16 %v48
  %v1167 = vunpack.c.l.b16 %v49
  %v1168 = vunpack.c.h.b16 %v49
  %v1169 = vunpack.c.l.b16 %v50
  %v1170 = vunpack.c.h.b16 %v50
  %v1171 = vunpack.c.l.b16 %v51
  %v1172 = vunpack.c.h.b16 %v51
  %v1173 = vunpack.c.l.b16 %v52
  %v1174 = vunpack.c.h.b16 %v52
  %v1175 = vunpack.c.l.b16 %v53
  %v1176 = vunpack.c.h.b16 %v53
  %v1177 = vunpack.c.l.b16 %v54
  %v1178 = vunpack.c.h.b16 %v54
  %v1179 = vunpack.c.l.b16 %v55
  %v1180 = vunpack.c.h.b16 %v55
  %v1181 = vunpack.c.l.b16 %v56
  %v1182 = vunpack.c.h.b16 %v56
  %v1183 = vunpack.c.l.b16 %v57
  %v1184 = vunpack.c.h.b16 %v57
  %v1185 = vunpack.c.l.b16 %v58
  %v1186 = vunpack.c.h.b16 %v58
  %v1187 = vunpack.c.l.b16 %v59
  %v1188 = vunpack.c.h.b16 %v59
  %v1189 = vunpack.c.l.b16 %v60
  %v1190 = vunpack.c.h.b16 %v60
  %v1191 = vunpack.c.l.b16 %v61
  %v1192 = vunpack.c.h.b16 %v61
  %v1193 = vunpack.c.l.b16 %v62
  %v1194 = vunpack.c.h.b16 %v62
  %v1195 = vunpack.c.l.b16 %v63
  %v1196 = vunpack.c.h.b16 %v63
  %v1197 = vunpack.c.l.b16 %v64
  %v1198 = vunpack.c.h.b16 %v64
  %v1199 = vunpack.c.l.b16 %v65
  %v1200 = vunpack.c.h.b16 %v65
  %v1201 = vunpack.c.l.b16 %v66
  %v1202 = vunpack.c.h.b16 %v66
  %v1203 = vunpack.c.l.b16 %v67
  %v1204 = vunpack.c.h.b16 %v67
  %v1205 = vunpack.c.l.b16 %v68
  %v1206 = vunpack.c.h.b16 %v68
  %v1207 = vunpack.c.l.b16 %v69
  %v1208 = vunpack.c.h.b16 %v69
  %v1209 = vunpack.c.l.b16 %v70
  %v1210 = vunpack.c.h.b16 %v70
  %v1211 = vunpack.c.l.b16 %v71
  %v1212 = vunpack.c.h.b16 %v71
  %v1213 = vunpack.c.l.b16 %v72
  %v1214 = vunpack.c.h.b16 %v72
  %v1215 = vunpack.c.l.b16 %v73
  %v1216 = vunpack.c.h.b16 %v73
  %v1217 = vunpack.c.l.b16 %v74
  %v1218 = vunpack.c.h.b16 %v74
  %v1219 = vunpack.c.l.b16 %v75
  %v1220 = vunpack.c.h.b16 %v75
  %v1221 = vunpack.c.l.b16 %v76
  %v1222 = vunpack.c.h.b16 %v76
  %v1223 = vunpack.c.l.b16 %v77
  %v1224 = vunpack.c.h.b16 %v77
  %v1225 = vunpack.c.l.b16 %v78
  %v1226 = vunpack.c.h.b16 %v78
  %v1227 = vunpack.c.l.b16 %v79
  %v1228 = vunpack.c.h.b16 %v79
  %v1229 = vunpack.c.l.b16 %v80
  %v1230 = vunpack.c.h.b16 %v80
  %v1231 = vunpack.c.l.b16 %v81
  %v1232 = vunpack.c.h.b16 %v81
  %v1233 = vunpack.c.l.b16 %v82
  %v1234 = vunpack.c.h.b16 %v82
  %v1235 = vunpack.c.l.b16 %v83
  %v1236 = vunpack.c.h.b16 %v83
  %v1237 = vunpack.c.l.b16 %v84
  %v1238 = vunpack.c.h.b16 %v84
  %v1239 = vunpack.c.l.b16 %v85
  %v1240 = vunpack.c.h.b16 %v85
  %v1241 = vunpack.c.l.b16 %v86
  %v1242 = vunpack.c.h.b16 %v86
  %v1243 = vunpack.c.l.b16 %v87
  %v1244 = vunpack.c.h.b16 %v87
  %v1245 = vunpack.c.l.b16 %v88
  %v1246 = vunpack.c.h.b16 %v88
  %v1247 = vunpack.c.l.b16 %v89
  %v1248 = vunpack.c.h.b16 %v89
  %v1249 = vunpack.c.l.b16 %v90
  %v1250 = vunpack.c.h.b16 %v90
  %v1251 = vunpack.c.l.b16 %v91
  %v1252 = vunpack.c.h.b16 %v91
  %v1253 = vunpack.c.l.b16 %v92
  %v1254 = vunpack.c.h.b16 %v92
  %v1255 = vunpack.c.l.b16 %v93
  %v1256 = vunpack.c.h.b16 %v93
  %v1257 = vunpack.c.l.b16 %v94
  %v1258 = vunpack.c.h.b16 %v94
  %v1259 = vunpack.c.l.b16 %v95
  %v1260 = vunpack.c.h.b16 %v95
  %v1261 = vunpack.c.l.b16 %v96
  %v1262 = vunpack.c.h.b16 %v96
  %v1263 = vunpack.c.l.b16 %v97
  %v1264 = vunpack.c.h.b16 %v97
  %v1265 = vunpack.c.l.b16 %v98
  %v1266 = vunpack.c.h.b16 %v98
  %v1267 = vunpack.c.l.b16 %v99
  %v1268 = vunpack.c.h.b16 %v99
  %v1269 = vunpack.c.l.b16 %v100
  %v1270 = vunpack.c.h.b16 %v100
  %v1271 = vunpack.c.l.b16 %v101
  %v1272 = vunpack.c.h.b16 %v101
  %v1273 = vunpack.c.l.b16 %v102
  %v1274 = vunpack.c.h.b16 %v102
  %v1275 = vunpack.c.l.b16 %v103
  %v1276 = vunpack.c.h.b16 %v103
  %v1277 = vunpack.c.l.b16 %v104
  %v1278 = vunpack.c.h.b16 %v104
  %v1279 = vunpack.c.l.b16 %v105
  %v1280 = vunpack.c.h.b16 %v105
  %v1281 = vunpack.c.l.b16 %v106
  %v1282 = vunpack.c.h.b16 %v106
  %v1283 = vunpack.c.l.b16 %v107
  %v1284 = vunpack.c.h.b16 %v107
  %v1285 = vunpack.c.l.b16 %v108
  %v1286 = vunpack.c.h.b16 %v108
  %v1287 = vunpack.c.l.b16 %v109
  %v1288 = vunpack.c.h.b16 %v109
  %v1289 = vunpack.c.l.b16 %v110
  %v1290 = vunpack.c.h.b16 %v110
  %v1291 = vunpack.c.l.b16 %v111
  %v1292 = vunpack.c.h.b16 %v111
  %v1293 = vunpack.c.l.b16 %v112
  %v1294 = vunpack.c.h.b16 %v112
  %v1295 = vunpack.c.l.b16 %v113
  %v1296 = vunpack.c.h.b16 %v113
  %v1297 = vunpack.c.l.b16 %v114
  %v1298 = vunpack.c.h.b16 %v114
  %v1299 = vunpack.c.l.b16 %v115
  %v1300 = vunpack.c.h.b16 %v115
  %v1301 = vunpack.c.l.b16 %v116
  %v1302 = vunpack.c.h.b16 %v116
  %v1303 = vunpack.c.l.b16 %v117
  %v1304 = vunpack.c.h.b16 %v117
  %v1305 = vunpack.c.l.b16 %v118
  %v1306 = vunpack.c.h.b16 %v118
  %v1307 = vunpack.c.l.b16 %v119
  %v1308 = vunpack.c.h.b16 %v119
  %v1309 = vunpack.c.l.b16 %v120
  %v1310 = vunpack.c.h.b16 %v120
  %v1311 = vunpack.c.l.b16 %v121
  %v1312 = vunpack.c.h.b16 %v121
  %v1313 = vunpack.c.l.b16 %v122
  %v1314 = vunpack.c.h.b16 %v122
  %v1315 = vunpack.c.l.b16 %v123
  %v1316 = vunpack.c.h.b16 %v123
  %v1317 = vunpack.c.l.b16 %v124
  %v1318 = vunpack.c.h.b16 %v124
  %v1319 = vunpack.c.l.b16 %v125
  %v1320 = vunpack.c.h.b16 %v125
  %v1321 = vunpack.c.l.b16 %v126
  %v1322 = vunpack.c.h.b16 %v126
  %v1323 = vunpack.c.l.b16 %v127
  %v1324 = vunpack.c.h.b16 %v127
  %v1325 = vunpack.c.l.b16 %v128
  %v1326 = vunpack.c.h.b16 %v128
  %v1327 = vunpack.c.l.b16 %v129
  %v1328 = vunpack.c.h.b16 %v129
  %v1329 = vunpack.c.l.b16 %v130
  %v1330 = vunpack.c.h.b16 %v130
  %v1331 = vunpack.c.l.b16 %v131
  %v1332 = vunpack.c.h.b16 %v131
  %v1333 = vunpack.c.l.b16 %v132
  %v1334 = vunpack.c.h.b16 %v132
  %v1335 = vunpack.c.l.b16 %v133
  %v1336 = vunpack.c.h.b16 %v133
  %v1337 = vunpack.c.l.b16 %v134
  %v1338 = vunpack.c.h.b16 %v134
  %v1339 = vunpack.c.l.b16 %v135
  %v1340 = vunpack.c.h.b16 %v135
  %v1341 = vunpack.c.l.b16 %v136
  %v1342 = vunpack.c.h.b16 %v136
  %v1343 = vunpack.c.l.b16 %v137
  %v1344 = vunpack.c.h.b16 %v137
  %v1345 = vunpack.c.l.b16 %v138
  %v1346 = vunpack.c.h.b16 %v138
  %v1347 = vunpack.c.l.b16 %v139
  %v1348 = vunpack.c.h.b16 %v139
  %v1349 = vunpack.c.l.b16 %v140
  %v1350 = vunpack.c.h.b16 %v140
  %v1351 = vunpack.c.l.b16 %v141
  %v1352 = vunpack.c.h.b16 %v141
  %v1353 = vunpack.c.l.b16 %v142
  %v1354 = vunpack.c.h.b16 %v142
  %v1355 = vunpack.c.l.b16 %v143
  %v1356 = vunpack.c.h.b16 %v143
  %v1357 = vunpack.c.l.b16 %v144
  %v1358 = vunpack.c.h.b16 %v144
  %v1359 = vunpack.c.l.b16 %v145
  %v1360 = vunpack.c.h.b16 %v145
  %v1361 = vunpack.c.l.b16 %v146
  %v1362 = vunpack.c.h.b16 %v146
  %v1363 = vunpack.c.l.b16 %v147
  %v1364 = vunpack.c.h.b16 %v147
  %v1365 = vunpack.c.l.b16 %v148
  %v1366 = vunpack.c.h.b16 %v148
  %v1367 = vunpack.c.l.b16 %v149
  %v1368 = vunpack.c.h.b16 %v149
  %v1369 = vunpack.c.l.b16 %v150
  %v1370 = vunpack.c.h.b16 %v150
  %v1371 = vunpack.c.l.b16 %v151
  %v1372 = vunpack.c.h.b16 %v151
  %v1373 = vunpack.c.l.b16 %v152
  %v1374 = vunpack.c.h.b16 %v152
  %v1375 = vunpack.c.l.b16 %v153
  %v1376 = vunpack.c.h.b16 %v153
  %v1377 = vunpack.c.l.b16 %v154
  %v1378 = vunpack.c.h.b16 %v154
  %v1379 = vunpack.c.l.b16 %v155
  %v1380 = vunpack.c.h.b16 %v155
  %v1381 = vunpack.c.l.b16 %v156
  %v1382 = vunpack.c.h.b16 %v156
  %v1383 = vunpack.c.l.b16 %v157
  %v1384 = vunpack.c.h.b16 %v157
  %v1385 = vunpack.c.l.b16 %v158
  %v1386 = vunpack.c.h.b16 %v158
  %v1387 = vunpack.c.l.b16 %v159
  %v1388 = vunpack.c.h.b16 %v159
  %v1389 = vunpack.c.l.b16 %v160
  %v1390 = vunpack.c.h.b16 %v160
  %v1391 = vunpack.c.l.b16 %v161
  %v1392 = vunpack.c.h.b16 %v161
  %v1393 = vunpack.c.l.b16 %v162
  %v1394 = vunpack.c.h.b16 %v162
  %v1395 = vunpack.c.l.b16 %v163
  %v1396 = vunpack.c.h.b16 %v163
  %v1397 = vunpack.c.l.b16 %v164
  %v1398 = vunpack.c.h.b16 %v164
  %v1399 = vunpack.c.l.b16 %v165
  %v1400 = vunpack.c.h.b16 %v165
  %v1401 = vunpack.c.l.b16 %v166
  %v1402 = vunpack.c.h.b16 %v166
  %v1403 = vunpack.c.l.b16 %v167
  %v1404 = vunpack.c.h.b16 %v167
  %v1405 = vunpack.c.l.b16 %v168
  %v1406 = vunpack.c.h.b16 %v168
  %v1407 = vunpack.c.l.b16 %v169
  %v1408 = vunpack.c.h.b16 %v169
  %v1409 = vunpack.c.l.b16 %v170
  %v1410 = vunpack.c.h.b16 %v170
  %v1411 = vunpack.c.l.b16 %v171
  %v1412 = vunpack.c.h.b16 %v171
  %v1413 = vunpack.c.l.b16 %v172
  %v1414 = vunpack.c.h.b16 %v172
  %v1415 = vunpack.c.l.b16 %v173
  %v1416 = vunpack.c.h.b16 %v173
  %v1417 = vunpack.c.l.b16 %v174
  %v1418 = vunpack.c.h.b16 %v174
  %v1419 = vunpack.c.l.b16 %v175
  %v1420 = vunpack.c.h.b16 %v175
  %v1421 = vunpack.c.l.b16 %v176
  %v1422 = vunpack.c.h.b16 %v176
  %v1423 = vunpack.c.l.b16 %v177
  %v1424 = vunpack.c.h.b16 %v177
  %v1425 = vunpack.c.l.b16 %v178
  %v1426 = vunpack.c.h.b16 %v178
  %v1427 = vunpack.c.l.b16 %v179
  %v1428 = vunpack.c.h.b16 %v179
  %v1429 = vunpack.c.l.b16 %v180
  %v1430 = vunpack.c.h.b16 %v180
  %v1431 = vunpack.c.l.b16 %v181
  %v1432 = vunpack.c.h.b16 %v181
  %v1433 = vunpack.c.l.b16 %v182
  %v1434 = vunpack.c.h.b16 %v182
  %v1435 = vunpack.c.l.b16 %v183
  %v1436 = vunpack.c.h.b16 %v183
  %v1437 = vunpack.c.l.b16 %v184
  %v1438 = vunpack.c.h.b16 %v184
  %v1439 = vunpack.c.l.b16 %v185
  %v1440 = vunpack.c.h.b16 %v185
  %v1441 = vunpack.c.l.b16 %v186
  %v1442 = vunpack.c.h.b16 %v186
  %v1443 = vunpack.c.l.b16 %v187
  %v1444 = vunpack.c.h.b16 %v187
  %v1445 = vunpack.c.l.b16 %v188
  %v1446 = vunpack.c.h.b16 %v188
  %v1447 = vunpack.c.l.b16 %v189
  %v1448 = vunpack.c.h.b16 %v189
  %v1449 = vunpack.c.l.b16 %v190
  %v1450 = vunpack.c.h.b16 %v190
  %v1451 = vunpack.c.l.b16 %v191
  %v1452 = vunpack.c.h.b16 %v191
  %v1453 = vunpack.c.l.b16 %v192
  %v1454 = vunpack.c.h.b16 %v192
  %v1455 = vunpack.c.l.b16 %v193
  %v1456 = vunpack.c.h.b16 %v193
  %v1457 = vunpack.c.l.b16 %v194
  %v1458 = vunpack.c.h.b16 %v194
  %v1459 = vunpack.c.l.b16 %v195
  %v1460 = vunpack.c.h.b16 %v195
  %v1461 = vunpack.c.l.b16 %v196
  %v1462 = vunpack.c.h.b16 %v196
  %v1463 = vunpack.c.l.b16 %v197
  %v1464 = vunpack.c.h.b16 %v197
  %v1465 = vunpack.c.l.b16 %v198
  %v1466 = vunpack.c.h.b16 %v198
  %v1467 = vunpack.c.l.b16 %v199
  %v1468 = vunpack.c.h.b16 %v199
  %v1469 = vunpack.c.l.b16 %v200
  %v1470 = vunpack.c.h.b16 %v200
  %v1471 = vunpack.c.l.b16 %v201
  %v1472 = vunpack.c.h.b16 %v201
  %v1473 = vunpack.c.l.b16 %v202
  %v1474 = vunpack.c.h.b16 %v202
  %v1475 = vunpack.c.l.b16 %v203
  %v1476 = vunpack.c.h.b16 %v203
  %v1477 = vunpack.c.l.b16 %v204
  %v1478 = vunpack.c.h.b16 %v204
  %v1479 = vunpack.c.l.b16 %v205
  %v1480 = vunpack.c.h.b16 %v205
  %v1481 = vunpack.c.l.b16 %v206
  %v1482 = vunpack.c.h.b16 %v206
  %v1483 = vunpack.c.l.b16 %v207
  %v1484 = vunpack.c.h.b16 %v207
  %v1485 = vunpack.c.l.b16 %v208
  %v1486 = vunpack.c.h.b16 %v208
  %v1487 = vunpack.c.l.b16 %v209
  %v1488 = vunpack.c.h.b16 %v209
  %v1489 = vunpack.c.l.b16 %v210
  %v1490 = vunpack.c.h.b16 %v210
  %v1491 = vunpack.c.l.b16 %v211
  %v1492 = vunpack.c.h.b16 %v211
  %v1493 = vunpack.c.l.b16 %v212
  %v1494 = vunpack.c.h.b16 %v212
  %v1495 = vunpack.c.l.b16 %v213
  %v1496 = vunpack.c.h.b16 %v213
  %v1497 = vunpack.c.l.b16 %v214
  %v1498 = vunpack.c.h.b16 %v214
  %v1499 = vunpack.c.l.b16 %v215
  %v1500 = vunpack.c.h.b16 %v215
  %v1501 = vunpack.c.l.b16 %v216
  %v1502 = vunpack.c.h.b16 %v216
  %v1503 = vunpack.c.l.b16 %v217
  %v1504 = vunpack.c.h.b16 %v217
  %v1505 = vunpack.c.l.b16 %v218
  %v1506 = vunpack.c.h.b16 %v218
  %v1507 = vunpack.c.l.b16 %v219
  %v1508 = vunpack.c.h.b16 %v219
  %v1509 = vunpack.c.l.b16 %v220
  %v1510 = vunpack.c.h.b16 %v220
  %v1511 = vunpack.c.l.b16 %v221
  %v1512 = vunpack.c.h.b16 %v221
  %v1513 = vunpack.c.l.b16 %v222
  %v1514 = vunpack.c.h.b16 %v222
  %v1515 = vunpack.c.l.b16 %v223
  %v1516 = vunpack.c.h.b16 %v223
  %v1517 = vunpack.c.l.b16 %v224
  %v1518 = vunpack.c.h.b16 %v224
  %v1519 = vunpack.c.l.b16 %v225
  %v1520 = vunpack.c.h.b16 %v225
  %v1521 = vunpack.c.l.b16 %v226
  %v1522 = vunpack.c.h.b16 %v226
  %v1523 = vunpack.c.l.b16 %v227
  %v1524 = vunpack.c.h.b16 %v227
  %v1525 = vunpack.c.l.b16 %v228
  %v1526 = vunpack.c.h.b16 %v228
  %v1527 = vunpack.c.l.b16 %v229
  %v1528 = vunpack.c.h.b16 %v229
  %v1529 = vunpack.c.l.b16 %v230
  %v1530 = vunpack.c.h.b16 %v230
  %v1531 = vunpack.c.l.b16 %v231
  %v1532 = vunpack.c.h.b16 %v231
  %v1533 = vunpack.c.l.b16 %v232
  %v1534 = vunpack.c.h.b16 %v232
  %v1535 = vunpack.c.l.b16 %v233
  %v1536 = vunpack.c.h.b16 %v233
  %v1537 = vunpack.c.l.b16 %v234
  %v1538 = vunpack.c.h.b16 %v234
  %v1539 = vunpack.c.l.b16 %v235
  %v1540 = vunpack.c.h.b16 %v235
  %v1541 = vunpack.c.l.b16 %v236
  %v1542 = vunpack.c.h.b16 %v236
  %v1543 = vunpack.c.l.b16 %v237
  %v1544 = vunpack.c.h.b16 %v237
  %v1545 = vunpack.c.l.b16 %v238
  %v1546 = vunpack.c.h.b16 %v238
  %v1547 = vunpack.c.l.b16 %v239
  %v1548 = vunpack.c.h.b16 %v239
  %v1549 = vunpack.c.l.b16 %v240
  %v1550 = vunpack.c.h.b16 %v240
  %v1551 = vunpack.c.l.b16 %v241
  %v1552 = vunpack.c.h.b16 %v241
  %v1553 = vunpack.c.l.b16 %v242
  %v1554 = vunpack.c.h.b16 %v242
  %v1555 = vunpack.c.l.b16 %v243
  %v1556 = vunpack.c.h.b16 %v243
  %v1557 = vunpack.c.l.b16 %v244
  %v1558 = vunpack.c.h.b16 %v244
  %v1559 = vunpack.c.l.b16 %v245
  %v1560 = vunpack.c.h.b16 %v245
  %v1561 = vunpack.c.l.b16 %v246
  %v1562 = vunpack.c.h.b16 %v246
  %v1563 = vunpack.c.l.b16 %v247
  %v1564 = vunpack.c.h.b16 %v247
  %v1565 = vunpack.c.l.b16 %v248
  %v1566 = vunpack.c.h.b16 %v248
  %v1567 = vunpack.c.l.b16 %v249
  %v1568 = vunpack.c.h.b16 %v249
  %v1569 = vunpack.c.l.b16 %v250
  %v1570 = vunpack.c.h.b16 %v250
  %v1571 = vunpack.c.l.b16 %v251
  %v1572 = vunpack.c.h.b16 %v251
  %v1573 = vunpack.c.l.b16 %v252
  %v1574 = vunpack.c.h.b16 %v252
  %v1575 = vunpack.c.l.b16 %v253
  %v1576 = vunpack.c.h.b16 %v253
  %v1577 = vunpack.c.l.b16 %v254
  %v1578 = vunpack.c.h.b16 %v254
  %v1579 = vunpack.c.l.b16 %v255
  %v1580 = vunpack.c.h.b16 %v255
  %v1581 = vunpack.c.l.b16 %v256
  %v1582 = vunpack.c.h.b16 %v256
  %v1583 = vunpack.c.l.b16 %v257
  %v1584 = vunpack.c.h.b16 %v257
  %v1585 = vunpack.c.l.b16 %v258
  %v1586 = vunpack.c.h.b16 %v258
  %v1587 = vunpack.c.l.b16 %v259
  %v1588 = vunpack.c.h.b16 %v259
  %v1589 = vunpack.c.l.b16 %v260
  %v1590 = vunpack.c.h.b16 %v260
  %v1591 = vunpack.c.l.b16 %v261
  %v1592 = vunpack.c.h.b16 %v261
  %v1593 = vunpack.c.l.b16 %v262
  %v1594 = vunpack.c.h.b16 %v262
  %v1595 = vunpack.c.l.b16 %v263
  %v1596 = vunpack.c.h.b16 %v263
  %v1597 = vunpack.c.l.b16 %v264
  %v1598 = vunpack.c.h.b16 %v264
  %v1599 = vunpack.c.l.b16 %v265
  %v1600 = vunpack.c.h.b16 %v265
  %v1601 = vunpack.c.l.b16 %v266
  %v1602 = vunpack.c.h.b16 %v266
  %v1603 = vunpack.c.l.b16 %v267
  %v1604 = vunpack.c.h.b16 %v267
  %v1605 = vunpack.c.l.b16 %v268
  %v1606 = vunpack.c.h.b16 %v268
  %v1607 = vunpack.c.l.b16 %v269
  %v1608 = vunpack.c.h.b16 %v269
  %v1609 = vunpack.c.l.b16 %v270
  %v1610 = vunpack.c.h.b16 %v270
  %v1611 = vunpack.c.l.b16 %v271
  %v1612 = vunpack.c.h.b16 %v271
  %v1613 = vunpack.c.l.b16 %v272
  %v1614 = vunpack.c.h.b16 %v272
  %v1615 = vunpack.c.l.b16 %v273
  %v1616 = vunpack.c.h.b16 %v273
  %v1617 = vunpack.c.l.b16 %v274
  %v1618 = vunpack.c.h.b16 %v274
  %v1619 = vunpack.c.l.b16 %v275
  %v1620 = vunpack.c.h.b16 %v275
  %v1621 = vunpack.c.l.b16 %v276
  %v1622 = vunpack.c.h.b16 %v276
  %v1623 = vunpack.c.l.b16 %v277
  %v1624 = vunpack.c.h.b16 %v277
  %v1625 = vunpack.c.l.b16 %v278
  %v1626 = vunpack.c.h.b16 %v278
  %v1627 = vunpack.c.l.b16 %v279
  %v1628 = vunpack.c.h.b16 %v279
  %v1629 = vunpack.c.l.b16 %v280
  %v1630 = vunpack.c.h.b16 %v280
  %v1631 = vunpack.c.l.b16 %v281
  %v1632 = vunpack.c.h.b16 %v281
  %v1633 = vunpack.c.l.b16 %v282
  %v1634 = vunpack.c.h.b16 %v282
  %v1635 = vunpack.c.l.b16 %v283
  %v1636 = vunpack.c.h.b16 %v283
  %v1637 = vunpack.c.l.b16 %v284
  %v1638 = vunpack.c.h.b16 %v284
  %v1639 = vunpack.c.l.b16 %v285
  %v1640 = vunpack.c.h.b16 %v285
  %v1641 = vunpack.c.l.b16 %v286
  %v1642 = vunpack.c.h.b16 %v286
  %v1643 = vunpack.c.l.b16 %v287
  %v1644 = vunpack.c.h.b16 %v287
  %v1645 = vunpack.c.l.b16 %v288
  %v1646 = vunpack.c.h.b16 %v288
  %v1647 = vunpack.c.l.b16 %v289
  %v1648 = vunpack.c.h.b16 %v289
  %v1649 = vunpack.c.l.b16 %v290
  %v1650 = vunpack.c.h.b16 %v290
  %v1651 = vunpack.c.l.b16 %v291
  %v1652 = vunpack.c.h.b16 %v291
  %v1653 = vunpack.c.l.b16 %v292
  %v1654 = vunpack.c.h.b16 %v292
  %v1655 = vunpack.c.l.b16 %v293
  %v1656 = vunpack.c.h.b16 %v293
  %v1657 = vunpack.c.l.b16 %v294
  %v1658 = vunpack.c.h.b16 %v294
  %v1659 = vunpack.c.l.b16 %v295
  %v1660 = vunpack.c.h.b16 %v295
  %v1661 = vunpack.c.l.b16 %v296
  %v1662 = vunpack.c.h.b16 %v296
  %v1663 = vunpack.c.l.b16 %v297
  %v1664 = vunpack.c.h.b16 %v297
  %v1665 = vunpack.c.l.b16 %v298
  %v1666 = vunpack.c.h.b16 %v298
  %v1667 = vunpack.c.l.b16 %v299
  %v1668 = vunpack.c.h.b16 %v299
  %v1669 = vunpack.c.l.b16 %v300
  %v1670 = vunpack.c.h.b16 %v300
  %v1671 = vunpack.c.l.b16 %v301
  %v1672 = vunpack.c.h.b16 %v301
  %v1673 = vunpack.c.l.b16 %v302
  %v1674 = vunpack.c.h.b16 %v302
  %v1675 = vunpack.c.l.b16 %v303
  %v1676 = vunpack.c.h.b16 %v303
  %v1677 = vunpack.c.l.b16 %v304
  %v1678 = vunpack.c.h.b16 %v304
  %v1679 = vunpack.c.l.b16 %v305
  %v1680 = vunpack.c.h.b16 %v305
  %v1681 = vunpack.c.l.b16 %v306
  %v1682 = vunpack.c.h.b16 %v306
  %v1683 = vunpack.c.l.b16 %v307
  %v1684 = vunpack.c.h.b16 %v307
  %v1685 = vunpack.c.l.b16 %v308
  %v1686 = vunpack.c.h.b16 %v308
  %v1687 = vunpack.c.l.b16 %v309
  %v1688 = vunpack.c.h.b16 %v309
  %v1689 = vunpack.c.l.b16 %v310
  %v1690 = vunpack.c.h.b16 %v310
  %v1691 = vunpack.c.l.b16 %v311
  %v1692 = vunpack.c.h.b16 %v311
  %v1693 = vunpack.c.l.b16 %v312
  %v1694 = vunpack.c.h.b16 %v312
  %v1695 = vunpack.c.l.b16 %v313
  %v1696 = vunpack.c.h.b16 %v313
  %v1697 = vunpack.c.l.b16 %v314
  %v1698 = vunpack.c.h.b16 %v314
  %v1699 = vunpack.c.l.b16 %v315
  %v1700 = vunpack.c.h.b16 %v315
  %v1701 = vunpack.c.l.b16 %v316
  %v1702 = vunpack.c.h.b16 %v316
  %v1703 = vunpack.c.l.b16 %v317
  %v1704 = vunpack.c.h.b16 %v317
  %v1705 = vunpack.c.l.b16 %v318
  %v1706 = vunpack.c.h.b16 %v318
  %v1707 = vunpack.c.l.b16 %v319
  %v1708 = vunpack.c.h.b16 %v319
  %v1709 = vunpack.c.l.b16 %v320
  %v1710 = vunpack.c.h.b16 %v320
  %v1711 = vunpack.c.l.b16 %v321
  %v1712 = vunpack.c.h.b16 %v321
  %v1713 = vunpack.c.l.b16 %v322
  %v1714 = vunpack.c.h.b16 %v322
  %v1715 = vunpack.c.l.b16 %v323
  %v1716 = vunpack.c.h.b16 %v323
  %v1717 = vunpack.c.l.b16 %v324
  %v1718 = vunpack.c.h.b16 %v324
  %v1719 = vunpack.c.l.b16 %v325
  %v1720 = vunpack.c.h.b16 %v325
  %v1721 = vunpack.c.l.b16 %v326
  %v1722 = vunpack.c.h.b16 %v326
  %v1723 = vunpack.c.l.b16 %v327
  %v1724 = vunpack.c.h.b16 %v327
  %v1725 = vunpack.c.l.b16 %v328
  %v1726 = vunpack.c.h.b16 %v328
  %v1727 = vunpack.c.l.b16 %v329
  %v1728 = vunpack.c.h.b16 %v329
  %v1729 = vunpack.c.l.b16 %v330
  %v1730 = vunpack.c.h.b16 %v330
  %v1731 = vunpack.c.l.b16 %v331
  %v1732 = vunpack.c.h.b16 %v331
  %v1733 = vunpack.c.l.b16 %v332
  %v1734 = vunpack.c.h.b16 %v332
  %v1735 = vunpack.c.l.b16 %v333
  %v1736 = vunpack.c.h.b16 %v333
  %v1737 = vunpack.c.l.b16 %v334
  %v1738 = vunpack.c.h.b16 %v334
  %v1739 = vunpack.c.l.b16 %v335
  %v1740 = vunpack.c.h.b16 %v335
  %v1741 = vunpack.c.l.b16 %v336
  %v1742 = vunpack.c.h.b16 %v336
  %v1743 = vunpack.c.l.b16 %v337
  %v1744 = vunpack.c.h.b16 %v337
  %v1745 = vunpack.c.l.b16 %v338
  %v1746 = vunpack.c.h.b16 %v338
  %v1747 = vunpack.c.l.b16 %v339
  %v1748 = vunpack.c.h.b16 %v339
  %v1749 = vunpack.c.l.b16 %v340
  %v1750 = vunpack.c.h.b16 %v340
  %v1751 = vunpack.c.l.b16 %v341
  %v1752 = vunpack.c.h.b16 %v341
  %v1753 = vunpack.c.l.b16 %v342
  %v1754 = vunpack.c.h.b16 %v342
  %v1755 = vunpack.c.l.b16 %v343
  %v1756 = vunpack.c.h.b16 %v343
  %v1757 = vunpack.c.l.b16 %v344
  %v1758 = vunpack.c.h.b16 %v344
  %v1759 = vunpack.c.l.b16 %v345
  %v1760 = vunpack.c.h.b16 %v345
  %v1761 = vunpack.c.l.b16 %v346
  %v1762 = vunpack.c.h.b16 %v346
  %v1763 = vunpack.c.l.b16 %v347
  %v1764 = vunpack.c.h.b16 %v347
  %v1765 = vunpack.c.l.b16 %v348
  %v1766 = vunpack.c.h.b16 %v348
  %v1767 = vunpack.c.l.b16 %v349
  %v1768 = vunpack.c.h.b16 %v349
  %v1769 = vunpack.c.l.b16 %v350
  %v1770 = vunpack.c.h.b16 %v350
  %v1771 = vunpack.c.l.b16 %v351
  %v1772 = vunpack.c.h.b16 %v351
  %v1773 = vunpack.c.l.b16 %v352
  %v1774 = vunpack.c.h.b16 %v352
  %v1775 = vunpack.c.l.b16 %v353
  %v1776 = vunpack.c.h.b16 %v353
  %v1777 = vunpack.c.l.b16 %v354
  %v1778 = vunpack.c.h.b16 %v354
  %v1779 = vunpack.c.l.b16 %v355
  %v1780 = vunpack.c.h.b16 %v355
  %v1781 = vunpack.c.l.b16 %v356
  %v1782 = vunpack.c.h.b16 %v356
  %v1783 = vunpack.c.l.b16 %v357
  %v1784 = vunpack.c.h.b16 %v357
  %v1785 = vunpack.c.l.b16 %v358
  %v1786 = vunpack.c.h.b16 %v358
  %v1787 = vunpack.c.l.b16 %v359
  %v1788 = vunpack.c.h.b16 %v359
  %v1789 = vunpack.c.l.b16 %v360
  %v1790 = vunpack.c.h.b16 %v360
  %v1791 = vunpack.c.l.b16 %v361
  %v1792 = vunpack.c.h.b16 %v361
  %v1793 = vunpack.c.l.b16 %v362
  %v1794 = vunpack.c.h.b16 %v362
  %v1795 = vunpack.c.l.b16 %v363
  %v1796 = vunpack.c.h.b16 %v363
  %v1797 = vunpack.c.l.b16 %v364
  %v1798 = vunpack.c.h.b16 %v364
  %v1799 = vunpack.c.l.b16 %v365
  %v1800 = vunpack.c.h.b16 %v365
  %v1801 = vunpack.c.l.b16 %v366
  %v1802 = vunpack.c.h.b16 %v366
  %v1803 = vunpack.c.l.b16 %v367
  %v1804 = vunpack.c.h.b16 %v367
  %v1805 = vunpack.c.l.b16 %v368
  %v1806 = vunpack.c.h.b16 %v368
  %v1807 = vunpack.c.l.b16 %v369
  %v1808 = vunpack.c.h.b16 %v369
  %v1809 = vunpack.c.l.b16 %v370
  %v1810 = vunpack.c.h.b16 %v370
  %v1811 = vunpack.c.l.b16 %v371
  %v1812 = vunpack.c.h.b16 %v371
  %v1813 = vunpack.c.l.b16 %v372
  %v1814 = vunpack.c.h.b16 %v372
  %v1815 = vunpack.c.l.b16 %v373
  %v1816 = vunpack.c.h.b16 %v373
  %v1817 = vunpack.c.l.b16 %v374
  %v1818 = vunpack.c.h.b16 %v374
  %v1819 = vunpack.c.l.b16 %v375
  %v1820 = vunpack.c.h.b16 %v375
  %v1821 = vunpack.c.l.b16 %v376
  %v1822 = vunpack.c.h.b16 %v376
  %v1823 = vunpack.c.l.b16 %v377
  %v1824 = vunpack.c.h.b16 %v377
  %v1825 = vunpack.c.l.b16 %v378
  %v1826 = vunpack.c.h.b16 %v378
  %v1827 = vunpack.c.l.b16 %v379
  %v1828 = vunpack.c.h.b16 %v379
  %v1829 = vunpack.c.l.b16 %v380
  %v1830 = vunpack.c.h.b16 %v380
  %v1831 = vunpack.c.l.b16 %v381
  %v1832 = vunpack.c.h.b16 %v381
  %v1833 = vunpack.c.l.b16 %v382
  %v1834 = vunpack.c.h.b16 %v382
  %v1835 = vunpack.c.l.b16 %v383
  %v1836 = vunpack.c.h.b16 %v383
  %v1837 = vunpack.c.l.b16 %v384
  %v1838 = vunpack.c.h.b16 %v384
  %v1839 = vunpack.c.l.b16 %v385
  %v1840 = vunpack.c.h.b16 %v385
  %v1841 = vunpack.c.l.b16 %v386
  %v1842 = vunpack.c.h.b16 %v386
  %v1843 = vunpack.c.l.b16 %v387
  %v1844 = vunpack.c.h.b16 %v387
  %v1845 = vunpack.c.l.b16 %v388
  %v1846 = vunpack.c.h.b16 %v388
  %v1847 = vunpack.c.l.b16 %v389
  %v1848 = vunpack.c.h.b16 %v389
  %v1849 = vunpack.c.l.b16 %v390
  %v1850 = vunpack.c.h.b16 %v390
  %v1851 = vunpack.c.l.b16 %v391
  %v1852 = vunpack.c.h.b16 %v391
  %v1853 = vunpack.c.l.b16 %v392
  %v1854 = vunpack.c.h.b16 %v392
  %v1855 = vunpack.c.l.b16 %v393
  %v1856 = vunpack.c.h.b16 %v393
  %v1857 = vunpack.c.l.b16 %v394
  %v1858 = vunpack.c.h.b16 %v394
  %v1859 = vunpack.c.l.b16 %v395
  %v1860 = vunpack.c.h.b16 %v395
  %v1861 = vunpack.c.l.b16 %v396
  %v1862 = vunpack.c.h.b16 %v396
  %v1863 = vunpack.c.l.b16 %v397
  %v1864 = vunpack.c.h.b16 %v397
  %v1865 = vunpack.c.l.b16 %v398
  %v1866 = vunpack.c.h.b16 %v398
  %v1867 = vunpack.c.l.b16 %v399
  %v1868 = vunpack.c.h.b16 %v399
  %v1869 = vunpack.c.l.b16 %v400
  %v1870 = vunpack.c.h.b16 %v400
  %v1871 = vunpack.c.l.b16 %v401
  %v1872 = vunpack.c.h.b16 %v401
  %v1873 = vunpack.c.l.b16 %v402
  %v1874 = vunpack.c.h.b16 %v402
  %v1875 = vunpack.c.l.b16 %v403
  %v1876 = vunpack.c.h.b16 %v403
  %v1877 = vunpack.c.l.b16 %v404
  %v1878 = vunpack.c.h.b16 %v404
  %v1879 = vunpack.c.l.b16 %v405
  %v1880 = vunpack.c.h.b16 %v405
  %v1881 = vunpack.c.l.b16 %v406
  %v1882 = vunpack.c.h.b16 %v406
  %v1883 = vunpack.c.l.b16 %v407
  %v1884 = vunpack.c.h.b16 %v407
  %v1885 = vunpack.c.l.b16 %v408
  %v1886 = vunpack.c.h.b16 %v408
  %v1887 = vunpack.c.l.b16 %v409
  %v1888 = vunpack.c.h.b16 %v409
  %v1889 = vunpack.c.l.b16 %v410
  %v1890 = vunpack.c.h.b16 %v410
  %v1891 = vunpack.c.l.b16 %v411
  %v1892 = vunpack.c.h.b16 %v411
  %v1893 = vunpack.c.l.b16 %v412
  %v1894 = vunpack.c.h.b16 %v412
  %v1895 = vunpack.c.l.b16 %v413
  %v1896 = vunpack.c.h.b16 %v413
  %v1897 = vunpack.c.l.b16 %v414
  %v1898 = vunpack.c.h.b16 %v414
  %v1899 = vunpack.c.l.b16 %v415
  %v1900 = vunpack.c.h.b16 %v415
  %v1901 = vunpack.c.l.b16 %v416
  %v1902 = vunpack.c.h.b16 %v416
  %v1903 = vunpack.c.l.b16 %v417
  %v1904 = vunpack.c.h.b16 %v417
  %v1905 = vunpack.c.l.b16 %v418
  %v1906 = vunpack.c.h.b16 %v418
  %v1907 = vunpack.c.l.b16 %v419
  %v1908 = vunpack.c.h.b16 %v419
  %v1909 = vunpack.c.l.b16 %v420
  %v1910 = vunpack.c.h.b16 %v420
  %v1911 = vunpack.c.l.b16 %v421
  %v1912 = vunpack.c.h.b16 %v421
  %v1913 = vunpack.c.l.b16 %v422
  %v1914 = vunpack.c.h.b16 %v422
  %v1915 = vunpack.c.l.b16 %v423
  %v1916 = vunpack.c.h.b16 %v423
  %v1917 = vunpack.c.l.b16 %v424
  %v1918 = vunpack.c.h.b16 %v424
  %v1919 = vunpack.c.l.b16 %v425
  %v1920 = vunpack.c.h.b16 %v425
  %v1921 = vunpack.c.l.b16 %v426
  %v1922 = vunpack.c.h.b16 %v426
  %v1923 = vunpack.c.l.b16 %v427
  %v1924 = vunpack.c.h.b16 %v427
  %v1925 = vunpack.c.l.b16 %v428
  %v1926 = vunpack.c.h.b16 %v428
  %v1927 = vunpack.c.l.b16 %v429
  %v1928 = vunpack.c.h.b16 %v429
  %v1929 = vunpack.c.l.b16 %v430
  %v1930 = vunpack.c.h.b16 %v430
  %v1931 = vunpack.c.l.b16 %v431
  %v1932 = vunpack.c.h.b16 %v431
  %v1933 = vunpack.c.l.b16 %v432
  %v1934 = vunpack.c.h.b16 %v432
  %v1935 = vunpack.c.l.b16 %v433
  %v1936 = vunpack.c.h.b16 %v433
  %v1937 = vunpack.c.l.b16 %v434
  %v1938 = vunpack.c.h.b16 %v434
  %v1939 = vunpack.c.l.b16 %v435
  %v1940 = vunpack.c.h.b16 %v435
  %v1941 = vunpack.c.l.b16 %v436
  %v1942 = vunpack.c.h.b16 %v436
  %v1943 = vunpack.c.l.b16 %v437
  %v1944 = vunpack.c.h.b16 %v437
  %v1945 = vunpack.c.l.b16 %v438
  %v1946 = vunpack.c.h.b16 %v438
  %v1947 = vunpack.c.l.b16 %v439
  %v1948 = vunpack.c.h.b16 %v439
  %v1949 = vunpack.c.l.b16 %v440
  %v1950 = vunpack.c.h.b16 %v440
  %v1951 = vunpack.c.l.b16 %v441
  %v1952 = vunpack.c.h.b16 %v441
  %v1953 = vunpack.c.l.b16 %v442
  %v1954 = vunpack.c.h.b16 %v442
  %v1955 = vunpack.c.l.b16 %v443
  %v1956 = vunpack.c.h.b16 %v443
  %v1957 = vunpack.c.l.b16 %v444
  %v1958 = vunpack.c.h.b16 %v444
  %v1959 = vunpack.c.l.b16 %v445
  %v1960 = vunpack.c.h.b16 %v445
  %v1961 = vunpack.c.l.b16 %v446
  %v1962 = vunpack.c.h.b16 %v446
  %v1963 = vunpack.c.l.b16 %v447
  %v1964 = vunpack.c.h.b16 %v447
  %v1965 = vunpack.c.l.b16 %v448
  %v1966 = vunpack.c.h.b16 %v448
  %v1967 = vunpack.c.l.b16 %v449
  %v1968 = vunpack.c.h.b16 %v449
  %v1969 = vunpack.c.l.b16 %v450
  %v1970 = vunpack.c.h.b16 %v450
  %v1971 = vunpack.c.l.b16 %v451
  %v1972 = vunpack.c.h.b16 %v451
  %v1973 = vunpack.c.l.b16 %v452
  %v1974 = vunpack.c.h.b16 %v452
  %v1975 = vunpack.c.l.b16 %v453
  %v1976 = vunpack.c.h.b16 %v453
  %v1977 = vunpack.c.l.b16 %v454
  %v1978 = vunpack.c.h.b16 %v454
  %v1979 = vunpack.c.l.b16 %v455
  %v1980 = vunpack.c.h.b16 %v455
  %v1981 = vunpack.c.l.b16 %v456
  %v1982 = vunpack.c.h.b16 %v456
  %v1983 = vunpack.c.l.b16 %v457
  %v1984 = vunpack.c.h.b16 %v457
  %v1985 = vunpack.c.l.b16 %v458
  %v1986 = vunpack.c.h.b16 %v458
  %v1987 = vunpack.c.l.b16 %v459
  %v1988 = vunpack.c.h.b16 %v459
  %v1989 = vunpack.c.l.b16 %v460
  %v1990 = vunpack.c.h.b16 %v460
  %v1991 = vunpack.c.l.b16 %v461
  %v1992 = vunpack.c.h.b16 %v461
  %v1993 = vunpack.c.l.b16 %v462
  %v1994 = vunpack.c.h.b16 %v462
  %v1995 = vunpack.c.l.b16 %v463
  %v1996 = vunpack.c.h.b16 %v463
  %v1997 = vunpack.c.l.b16 %v464
  %v1998 = vunpack.c.h.b16 %v464
  %v1999 = vunpack.c.l.b16 %v465
  %v2000 = vunpack.c.h.b16 %v465
  %v2001 = vunpack.c.l.b16 %v466
  %v2002 = vunpack.c.h.b16 %v466
  %v2003 = vunpack.c.l.b16 %v467
  %v2004 = vunpack.c.h.b16 %v467
  %v2005 = vunpack.c.l.b16 %v468
  %v2006 = vunpack.c.h.b16 %v468
  %v2007 = vunpack.c.l.b16 %v469
  %v2008 = vunpack.c.h.b16 %v469
  %v2009 = vunpack.c.l.b16 %v470
  %v2010 = vunpack.c.h.b16 %v470
  %v2011 = vunpack.c.l.b16 %v471
  %v2012 = vunpack.c.h.b16 %v471
  %v2013 = vunpack.c.l.b16 %v472
  %v2014 = vunpack.c.h.b16 %v472
  %v2015 = vunpack.c.l.b16 %v473
  %v2016 = vunpack.c.h.b16 %v473
  %v2017 = vunpack.c.l.b16 %v474
  %v2018 = vunpack.c.h.b16 %v474
  %v2019 = vunpack.c.l.b16 %v475
  %v2020 = vunpack.c.h.b16 %v475
  %v2021 = vunpack.c.l.b16 %v476
  %v2022 = vunpack.c.h.b16 %v476
  %v2023 = vunpack.c.l.b16 %v477
  %v2024 = vunpack.c.h.b16 %v477
  %v2025 = vunpack.c.l.b16 %v478
  %v2026 = vunpack.c.h.b16 %v478
  %v2027 = vunpack.c.l.b16 %v479
  %v2028 = vunpack.c.h.b16 %v479
  %v2029 = vunpack.c.l.b16 %v480
  %v2030 = vunpack.c.h.b16 %v480
  %v2031 = vunpack.c.l.b16 %v481
  %v2032 = vunpack.c.h.b16 %v481
  %v2033 = vunpack.c.l.b16 %v482
  %v2034 = vunpack.c.h.b16 %v482
  %v2035 = vunpack.c.l.b16 %v483
  %v2036 = vunpack.c.h.b16 %v483
  %v2037 = vunpack.c.l.b16 %v484
  %v2038 = vunpack.c.h.b16 %v484
  %v2039 = vunpack.c.l.b16 %v485
  %v2040 = vunpack.c.h.b16 %v485
  %v2041 = vunpack.c.l.b16 %v486
  %v2042 = vunpack.c.h.b16 %v486
  %v2043 = vunpack.c.l.b16 %v487
  %v2044 = vunpack.c.h.b16 %v487
  %v2045 = vunpack.c.l.b16 %v488
  %v2046 = vunpack.c.h.b16 %v488
  %v2047 = vunpack.c.l.b16 %v489
  %v2048 = vunpack.c.h.b16 %v489
  %v2049 = vunpack.c.l.b16 %v490
  %v2050 = vunpack.c.h.b16 %v490
  %v2051 = vunpack.c.l.b16 %v491
  %v2052 = vunpack.c.h.b16 %v491
  %v2053 = vunpack.c.l.b16 %v492
  %v2054 = vunpack.c.h.b16 %v492
  %v2055 = vunpack.c.l.b16 %v493
  %v2056 = vunpack.c.h.b16 %v493
  %v2057 = vunpack.c.l.b16 %v494
  %v2058 = vunpack.c.h.b16 %v494
  %v2059 = vunpack.c.l.b16 %v495
  %v2060 = vunpack.c.h.b16 %v495
  %v2061 = vunpack.c.l.b16 %v496
  %v2062 = vunpack.c.h.b16 %v496
  %v2063 = vunpack.c.l.b16 %v497
  %v2064 = vunpack.c.h.b16 %v497
  %v2065 = vunpack.c.l.b16 %v498
  %v2066 = vunpack.c.h.b16 %v498
  %v2067 = vunpack.c.l.b16 %v499
  %v2068 = vunpack.c.h.b16 %v499
  %v2069 = vunpack.c.l.b16 %v500
  %v2070 = vunpack.c.h.b16 %v500
  %v2071 = vunpack.c.l.b16 %v501
  %v2072 = vunpack.c.h.b16 %v501
  %v2073 = vunpack.c.l.b16 %v502
  %v2074 = vunpack.c.h.b16 %v502
  %v2075 = vunpack.c.l.b16 %v503
  %v2076 = vunpack.c.h.b16 %v503
  %v2077 = vunpack.c.l.b16 %v504
  %v2078 = vunpack.c.h.b16 %v504
  %v2079 = vunpack.c.l.b16 %v505
  %v2080 = vunpack.c.h.b16 %v505
  %v2081 = vunpack.c.l.b16 %v506
  %v2082 = vunpack.c.h.b16 %v506
  %v2083 = vunpack.c.l.b16 %v507
  %v2084 = vunpack.c.h.b16 %v507
  %v2085 = vunpack.c.l.b16 %v508
  %v2086 = vunpack.c.h.b16 %v508
  %v2087 = vunpack.c.l.b16 %v509
  %v2088 = vunpack.c.h.b16 %v509
  %v2089 = vunpack.c.l.b16 %v510
  %v2090 = vunpack.c.h.b16 %v510
  %v2091 = vunpack.c.l.b16 %v511
  %v2092 = vunpack.c.h.b16 %v511
  %v2093 = vunpack.c.l.b16 %v512
  %v2094 = vunpack.c.h.b16 %v512
  %v2095 = vunpack.c.l.b16 %v513
  %v2096 = vunpack.c.h.b16 %v513
  %v2097 = vunpack.c.l.b16 %v514
  %v2098 = vunpack.c.h.b16 %v514
  %v2099 = vunpack.c.l.b16 %v515
  %v2100 = vunpack.c.h.b16 %v515
  %v2101 = vunpack.c.l.b16 %v516
  %v2102 = vunpack.c.h.b16 %v516
  %v2103 = vunpack.c.l.b16 %v517
  %v2104 = vunpack.c.h.b16 %v517
  %v2105 = vunpack.c.l.b16 %v518
  %v2106 = vunpack.c.h.b16 %v518
  %v2107 = vunpack.c.l.b16 %v519
  %v2108 = vunpack.c.h.b16 %v519
  %v2109 = vunpack.c.l.b16 %v520
  %v2110 = vunpack.c.h.b16 %v520
  %v2111 = vunpack.c.l.b16 %v521
  %v2112 = vunpack.c.h.b16 %v521
  %v2113 = vunpack.c.l.b16 %v522
  %v2114 = vunpack.c.h.b16 %v522
  %v2115 = vunpack.c.l.b16 %v523
  %v2116 = vunpack.c.h.b16 %v523
  %v2117 = vunpack.c.l.b16 %v524
  %v2118 = vunpack.c.h.b16 %v524
  %v2119 = vunpack.c.l.b16 %v525
  %v2120 = vunpack.c.h.b16 %v525
  %v2121 = vunpack.c.l.b16 %v526
  %v2122 = vunpack.c.h.b16 %v526
  %v2123 = vunpack.c.l.b16 %v527
  %v2124 = vunpack.c.h.b16 %v527
  %v2125 = vunpack.c.l.b16 %v528
  %v2126 = vunpack.c.h.b16 %v528
  %v2127 = vunpack.c.l.b16 %v529
  %v2128 = vunpack.c.h.b16 %v529
  %v2129 = vunpack.c.l.b16 %v530
  %v2130 = vunpack.c.h.b16 %v530
  %v2131 = vunpack.c.l.b16 %v531
  %v2132 = vunpack.c.h.b16 %v531
  %v2133 = vunpack.c.l.b16 %v532
  %v2134 = vunpack.c.h.b16 %v532
  %v2135 = vunpack.c.l.b16 %v533
  %v2136 = vunpack.c.h.b16 %v533
  %v2137 = vunpack.c.l.b16 %v534
  %v2138 = vunpack.c.h.b16 %v534
  %v2139 = vunpack.c.l.b16 %v535
  %v2140 = vunpack.c.h.b16 %v535
  %v2141 = vunpack.c.l.b16 %v536
  %v2142 = vunpack.c.h.b16 %v536
  %v2143 = vpack.c.b16 %v1127, %v1119
  %v2144 = vpack.c.b16 %v1128, %v1120
  %v2145 = vpack.c.b16 %v1129, %v1121
  %v2146 = vpack.c.b16 %v1130, %v1122
  %v2147 = vpack.c.b16 %v1131, %v1123
  %v2148 = vpack.c.b16 %v1132, %v1124
  %v2149 = vpack.c.b16 %v1133, %v1125
  %v2150 = vpack.c.b16 %v1134, %v1126
  %v2151 = vpack.c.b16 %v1143, %v1135
  %v2152 = vpack.c.b16 %v1144, %v1136
  %v2153 = vpack.c.b16 %v1145, %v1137
  %v2154 = vpack.c.b16 %v1146, %v1138
  %v2155 = vpack.c.b16 %v1147, %v1139
  %v2156 = vpack.c.b16 %v1148, %v1140
  %v2157 = vpack.c.b16 %v1149, %v1141
  %v2158 = vpack.c.b16 %v1150, %v1142
  %v2159 = vpack.c.b16 %v1159, %v1151
  %v2160 = vpack.c.b16 %v1160, %v1152
  %v2161 = vpack.c.b16 %v1161, %v1153
  %v2162 = vpack.c.b16 %v1162, %v1154
  %v2163 = vpack.c.b16 %v1163, %v1155
  %v2164 = vpack.c.b16 %v1164, %v1156
  %v2165 = vpack.c.b16 %v1165, %v1157
  %v2166 = vpack.c.b16 %v1166, %v1158
  %v2167 = vpack.c.b16 %v1175, %v1167
  %v2168 = vpack.c.b16 %v1176, %v1168
  %v2169 = vpack.c.b16 %v1177, %v1169
  %v2170 = vpack.c.b16 %v1178, %v1170
  %v2171 = vpack.c.b16 %v1179, %v1171
  %v2172 = vpack.c.b16 %v1180, %v1172
  %v2173 = vpack.c.b16 %v1181, %v1173
  %v2174 = vpack.c.b16 %v1182, %v1174
  %v2175 = vpack.c.b16 %v1191, %v1183
  %v2176 = vpack.c.b16 %v1192, %v1184
  %v2177 = vpack.c.b16 %v1193, %v1185
  %v2178 = vpack.c.b16 %v1194, %v1186
  %v2179 = vpack.c.b16 %v1195, %v1187
  %v2180 = vpack.c.b16 %v1196, %v1188
  %v2181 = vpack.c.b16 %v1197, %v1189
  %v2182 = vpack.c.b16 %v1198, %v1190
  %v2183 = vpack.c.b16 %v1207, %v1199
  %v2184 = vpack.c.b16 %v1208, %v1200
  %v2185 = vpack.c.b16 %v1209, %v1201
  %v2186 = vpack.c.b16 %v1210, %v1202
  %v2187 = vpack.c.b16 %v1211, %v1203
  %v2188 = vpack.c.b16 %v1212, %v1204
  %v2189 = vpack.c.b16 %v1213, %v1205
  %v2190 = vpack.c.b16 %v1214, %v1206
  %v2191 = vpack.c.b16 %v1223, %v1215
  %v2192 = vpack.c.b16 %v1224, %v1216
  %v2193 = vpack.c.b16 %v1225, %v1217
  %v2194 = vpack.c.b16 %v1226, %v1218
  %v2195 = vpack.c.b16 %v1227, %v1219
  %v2196 = vpack.c.b16 %v1228, %v1220
  %v2197 = vpack.c.b16 %v1229, %v1221
  %v2198 = vpack.c.b16 %v1230, %v1222
  %v2199 = vpack.c.b16 %v1239, %v1231
  %v2200 = vpack.c.b16 %v1240, %v1232
  %v2201 = vpack.c.b16 %v1241, %v1233
  %v2202 = vpack.c.b16 %v1242, %v1234
  %v2203 = vpack.c.b16 %v1243, %v1235
  %v2204 = vpack.c.b16 %v1244, %v1236
  %v2205 = vpack.c.b16 %v1245, %v1237
  %v2206 = vpack.c.b16 %v1246, %v1238
  %v2207 = vpack.c.b16 %v1255, %v1247
  %v2208 = vpack.c.b16 %v1256, %v1248
  %v2209 = vpack.c.b16 %v1257, %v1249
  %v2210 = vpack.c.b16 %v1258, %v1250
  %v2211 = vpack.c.b16 %v1259, %v1251
  %v2212 = vpack.c.b16 %v1260, %v1252
  %v2213 = vpack.c.b16 %v1261, %v1253
  %v2214 = vpack.c.b16 %v1262, %v1254
  %v2215 = vpack.c.b16 %v1271, %v1263
  %v2216 = vpack.c.b16 %v1272, %v1264
  %v2217 = vpack.c.b16 %v1273, %v1265
  %v2218 = vpack.c.b16 %v1274, %v1266
  %v2219 = vpack.c.b16 %v1275, %v1267
  %v2220 = vpack.c.b16 %v1276, %v1268
  %v2221 = vpack.c.b16 %v1277, %v1269
  %v2222 = vpack.c.b16 %v1278, %v1270
  %v2223 = vpack.c.b16 %v1287, %v1279
  %v2224 = vpack.c.b16 %v1288, %v1280
  %v2225 = vpack.c.b16 %v1289, %v1281
  %v2226 = vpack.c.b16 %v1290, %v1282
  %v2227 = vpack.c.b16 %v1291, %v1283
  %v2228 = vpack.c.b16 %v1292, %v1284
  %v2229 = vpack.c.b16 %v1293, %v1285
  %v2230 = vpack.c.b16 %v1294, %v1286
  %v2231 = vpack.c.b16 %v1303, %v1295
  %v2232 = vpack.c.b16 %v1304, %v1296
  %v2233 = vpack.c.b16 %v1305, %v1297
  %v2234 = vpack.c.b16 %v1306, %v1298
  %v2235 = vpack.c.b16 %v1307, %v1299
  %v2236 = vpack.c.b16 %v1308, %v1300
  %v2237 = vpack.c.b16 %v1309, %v1301
  %v2238 = vpack.c.b16 %v1310, %v1302
  %v2239 = vpack.c.b16 %v1319, %v1311
  %v2240 = vpack.c.b16 %v1320, %v1312
  %v2241 = vpack.c.b16 %v1321, %v1313
  %v2242 = vpack.c.b16 %v1322, %v1314
  %v2243 = vpack.c.b16 %v1323, %v1315
  %v2244 = vpack.c.b16 %v1324, %v1316
  %v2245 = vpack.c.b16 %v1325, %v1317
  %v2246 = vpack.c.b16 %v1326, %v1318
  %v2247 = vpack.c.b16 %v1335, %v1327
  %v2248 = vpack.c.b16 %v1336, %v1328
  %v2249 = vpack.c.b16 %v1337, %v1329
  %v2250 = vpack.c.b16 %v1338, %v1330
  %v2251 = vpack.c.b16 %v1339, %v1331
  %v2252 = vpack.c.b16 %v1340, %v1332
  %v2253 = vpack.c.b16 %v1341, %v1333
  %v2254 = vpack.c.b16 %v1342, %v1334
  %v2255 = vpack.c.b16 %v1351, %v1343
  %v2256 = vpack.c.b16 %v1352, %v1344
  %v2257 = vpack.c.b16 %v1353, %v1345
  %v2258 = vpack.c.b16 %v1354, %v1346
  %v2259 = vpack.c.b16 %v1355, %v1347
  %v2260 = vpack.c.b16 %v1356, %v1348
  %v2261 = vpack.c.b16 %v1357, %v1349
  %v2262 = vpack.c.b16 %v1358, %v1350
  %v2263 = vpack.c.b16 %v1367, %v1359
  %v2264 = vpack.c.b16 %v1368, %v1360
  %v2265 = vpack.c.b16 %v1369, %v1361
  %v2266 = vpack.c.b16 %v1370, %v1362
  %v2267 = vpack.c.b16 %v1371, %v1363
  %v2268 = vpack.c.b16 %v1372, %v1364
  %v2269 = vpack.c.b16 %v1373, %v1365
  %v2270 = vpack.c.b16 %v1374, %v1366
  %v2271 = vpack.c.b16 %v1383, %v1375
  %v2272 = vpack.c.b16 %v1384, %v1376
  %v2273 = vpack.c.b16 %v1385, %v1377
  %v2274 = vpack.c.b16 %v1386, %v1378
  %v2275 = vpack.c.b16 %v1387, %v1379
  %v2276 = vpack.c.b16 %v1388, %v1380
  %v2277 = vpack.c.b16 %v1389, %v1381
  %v2278 = vpack.c.b16 %v1390, %v1382
  %v2279 = vpack.c.b16 %v1399, %v1391
  %v2280 = vpack.c.b16 %v1400, %v1392
  %v2281 = vpack.c.b16 %v1401, %v1393
  %v2282 = vpack.c.b16 %v1402, %v1394
  %v2283 = vpack.c.b16 %v1403, %v1395
  %v2284 = vpack.c.b16 %v1404, %v1396
  %v2285 = vpack.c.b16 %v1405, %v1397
  %v2286 = vpack.c.b16 %v1406, %v1398
  %v2287 = vpack.c.b16 %v1415, %v1407
  %v2288 = vpack.c.b16 %v1416, %v1408
  %v2289 = vpack.c.b16 %v1417, %v1409
  %v2290 = vpack.c.b16 %v1418, %v1410
  %v2291 = vpack.c.b16 %v1419, %v1411
  %v2292 = vpack.c.b16 %v1420, %v1412
  %v2293 = vpack.c.b16 %v1421, %v1413
  %v2294 = vpack.c.b16 %v1422, %v1414
  %v2295 = vpack.c.b16 %v1431, %v1423
  %v2296 = vpack.c.b16 %v1432, %v1424
  %v2297 = vpack.c.b16 %v1433, %v1425
  %v2298 = vpack.c.b16 %v1434, %v1426
  %v2299 = vpack.c.b16 %v1435, %v1427
  %v2300 = vpack.c.b16 %v1436, %v1428
  %v2301 = vpack.c.b16 %v1437, %v1429
  %v2302 = vpack.c.b16 %v1438, %v1430
  %v2303 = vpack.c.b16 %v1447, %v1439
  %v2304 = vpack.c.b16 %v1448, %v1440
  %v2305 = vpack.c.b16 %v1449, %v1441
  %v2306 = vpack.c.b16 %v1450, %v1442
  %v2307 = vpack.c.b16 %v1451, %v1443
  %v2308 = vpack.c.b16 %v1452, %v1444
  %v2309 = vpack.c.b16 %v1453, %v1445
  %v2310 = vpack.c.b16 %v1454, %v1446
  %v2311 = vpack.c.b16 %v1463, %v1455
  %v2312 = vpack.c.b16 %v1464, %v1456
  %v2313 = vpack.c.b16 %v1465, %v1457
  %v2314 = vpack.c.b16 %v1466, %v1458
  %v2315 = vpack.c.b16 %v1467, %v1459
  %v2316 = vpack.c.b16 %v1468, %v1460
  %v2317 = vpack.c.b16 %v1469, %v1461
  %v2318 = vpack.c.b16 %v1470, %v1462
  %v2319 = vpack.c.b16 %v1479, %v1471
  %v2320 = vpack.c.b16 %v1480, %v1472
  %v2321 = vpack.c.b16 %v1481, %v1473
  %v2322 = vpack.c.b16 %v1482, %v1474
  %v2323 = vpack.c.b16 %v1483, %v1475
  %v2324 = vpack.c.b16 %v1484, %v1476
  %v2325 = vpack.c.b16 %v1485, %v1477
  %v2326 = vpack.c.b16 %v1486, %v1478
  %v2327 = vpack.c.b16 %v1495, %v1487
  %v2328 = vpack.c.b16 %v1496, %v1488
  %v2329 = vpack.c.b16 %v1497, %v1489
  %v2330 = vpack.c.b16 %v1498, %v1490
  %v2331 = vpack.c.b16 %v1499, %v1491
  %v2332 = vpack.c.b16 %v1500, %v1492
  %v2333 = vpack.c.b16 %v1501, %v1493
  %v2334 = vpack.c.b16 %v1502, %v1494
  %v2335 = vpack.c.b16 %v1511, %v1503
  %v2336 = vpack.c.b16 %v1512, %v1504
  %v2337 = vpack.c.b16 %v1513, %v1505
  %v2338 = vpack.c.b16 %v1514, %v1506
  %v2339 = vpack.c.b16 %v1515, %v1507
  %v2340 = vpack.c.b16 %v1516, %v1508
  %v2341 = vpack.c.b16 %v1517, %v1509
  %v2342 = vpack.c.b16 %v1518, %v1510
  %v2343 = vpack.c.b16 %v1527, %v1519
  %v2344 = vpack.c.b16 %v1528, %v1520
  %v2345 = vpack.c.b16 %v1529, %v1521
  %v2346 = vpack.c.b16 %v1530, %v1522
  %v2347 = vpack.c.b16 %v1531, %v1523
  %v2348 = vpack.c.b16 %v1532, %v1524
  %v2349 = vpack.c.b16 %v1533, %v1525
  %v2350 = vpack.c.b16 %v1534, %v1526
  %v2351 = vpack.c.b16 %v1543, %v1535
  %v2352 = vpack.c.b16 %v1544, %v1536
  %v2353 = vpack.c.b16 %v1545, %v1537
  %v2354 = vpack.c.b16 %v1546, %v1538
  %v2355 = vpack.c.b16 %v1547, %v1539
  %v2356 = vpack.c.b16 %v1548, %v1540
  %v2357 = vpack.c.b16 %v1549, %v1541
  %v2358 = vpack.c.b16 %v1550, %v1542
  %v2359 = vpack.c.b16 %v1559, %v1551
  %v2360 = vpack.c.b16 %v1560, %v1552
  %v2361 = vpack.c.b16 %v1561, %v1553
  %v2362 = vpack.c.b16 %v1562, %v1554
  %v2363 = vpack.c.b16 %v1563, %v1555
  %v2364 = vpack.c.b16 %v1564, %v1556
  %v2365 = vpack.c.b16 %v1565, %v1557
  %v2366 = vpack.c.b16 %v1566, %v1558
  %v2367 = vpack.c.b16 %v1575, %v1567
  %v2368 = vpack.c.b16 %v1576, %v1568
  %v2369 = vpack.c.b16 %v1577, %v1569
  %v2370 = vpack.c.b16 %v1578, %v1570
  %v2371 = vpack.c.b16 %v1579, %v1571
  %v2372 = vpack.c.b16 %v1580, %v1572
  %v2373 = vpack.c.b16 %v1581, %v1573
  %v2374 = vpack.c.b16 %v1582, %v1574
  %v2375 = vpack.c.b16 %v1591, %v1583
  %v2376 = vpack.c.b16 %v1592, %v1584
  %v2377 = vpack.c.b16 %v1593, %v1585
  %v2378 = vpack.c.b16 %v1594, %v1586
  %v2379 = vpack.c.b16 %v1595, %v1587
  %v2380 = vpack.c.b16 %v1596, %v1588
  %v2381 = vpack.c.b16 %v1597, %v1589
  %v2382 = vpack.c.b16 %v1598, %v1590
  %v2383 = vpack.c.b16 %v1607, %v1599
  %v2384 = vpack.c.b16 %v1608, %v1600
  %v2385 = vpack.c.b16 %v1609, %v1601
  %v2386 = vpack.c.b16 %v1610, %v1602
  %v2387 = vpack.c.b16 %v1611, %v1603
  %v2388 = vpack.c.b16 %v1612, %v1604
  %v2389 = vpack.c.b16 %v1613, %v1605
  %v2390 = vpack.c.b16 %v1614, %v1606
  %v2391 = vpack.c.b16 %v1623, %v1615
  %v2392 = vpack.c.b16 %v1624, %v1616
  %v2393 = vpack.c.b16 %v1625, %v1617
  %v2394 = vpack.c.b16 %v1626, %v1618
  %v2395 = vpack.c.b16 %v1627, %v1619
  %v2396 = vpack.c.b16 %v1628, %v1620
  %v2397 = vpack.c.b16 %v1629, %v1621
  %v2398 = vpack.c.b16 %v1630, %v1622
  %v2399 = vpack.c.b16 %v1639, %v1631
  %v2400 = vpack.c.b16 %v1640, %v1632
  %v2401 = vpack.c.b16 %v1641, %v1633
  %v2402 = vpack.c.b16 %v1642, %v1634
  %v2403 = vpack.c.b16 %v1643, %v1635
  %v2404 = vpack.c.b16 %v1644, %v1636
  %v2405 = vpack.c.b16 %v1645, %v1637
  %v2406 = vpack.c.b16 %v1646, %v1638
  %v2407 = vpack.c.b16 %v1655, %v1647
  %v2408 = vpack.c.b16 %v1656, %v1648
  %v2409 = vpack.c.b16 %v1657, %v1649
  %v2410 = vpack.c.b16 %v1658, %v1650
  %v2411 = vpack.c.b16 %v1659, %v1651
  %v2412 = vpack.c.b16 %v1660, %v1652
  %v2413 = vpack.c.b16 %v1661, %v1653
  %v2414 = vpack.c.b16 %v1662, %v1654
  %v2415 = vpack.c.b16 %v1671, %v1663
  %v2416 = vpack.c.b16 %v1672, %v1664
  %v2417 = vpack.c.b16 %v1673, %v1665
  %v2418 = vpack.c.b16 %v1674, %v1666
  %v2419 = vpack.c.b16 %v1675, %v1667
  %v2420 = vpack.c.b16 %v1676, %v1668
  %v2421 = vpack.c.b16 %v1677, %v1669
  %v2422 = vpack.c.b16 %v1678, %v1670
  %v2423 = vpack.c.b16 %v1687, %v1679
  %v2424 = vpack.c.b16 %v1688, %v1680
  %v2425 = vpack.c.b16 %v1689, %v1681
  %v2426 = vpack.c.b16 %v1690, %v1682
  %v2427 = vpack.c.b16 %v1691, %v1683
  %v2428 = vpack.c.b16 %v1692, %v1684
  %v2429 = vpack.c.b16 %v1693, %v1685
  %v2430 = vpack.c.b16 %v1694, %v1686
  %v2431 = vpack.c.b16 %v1703, %v1695
  %v2432 = vpack.c.b16 %v1704, %v1696
  %v2433 = vpack.c.b16 %v1705, %v1697
  %v2434 = vpack.c.b16 %v1706, %v1698
  %v2435 = vpack.c.b16 %v1707, %v1699
  %v2436 = vpack.c.b16 %v1708, %v1700
  %v2437 = vpack.c.b16 %v1709, %v1701
  %v2438 = vpack.c.b16 %v1710, %v1702
  %v2439 = vpack.c.b16 %v1719, %v1711
  %v2440 = vpack.c.b16 %v1720, %v1712
  %v2441 = vpack.c.b16 %v1721, %v1713
  %v2442 = vpack.c.b16 %v1722, %v1714
  %v2443 = vpack.c.b16 %v1723, %v1715
  %v2444 = vpack.c.b16 %v1724, %v1716
  %v2445 = vpack.c.b16 %v1725, %v1717
  %v2446 = vpack.c.b16 %v1726, %v1718
  %v2447 = vpack.c.b16 %v1735, %v1727
  %v2448 = vpack.c.b16 %v1736, %v1728
  %v2449 = vpack.c.b16 %v1737, %v1729
  %v2450 = vpack.c.b16 %v1738, %v1730
  %v2451 = vpack.c.b16 %v1739, %v1731
  %v2452 = vpack.c.b16 %v1740, %v1732
  %v2453 = vpack.c.b16 %v1741, %v1733
  %v2454 = vpack.c.b16 %v1742, %v1734
  %v2455 = vpack.c.b16 %v1751, %v1743
  %v2456 = vpack.c.b16 %v1752, %v1744
  %v2457 = vpack.c.b16 %v1753, %v1745
  %v2458 = vpack.c.b16 %v1754, %v1746
  %v2459 = vpack.c.b16 %v1755, %v1747
  %v2460 = vpack.c.b16 %v1756, %v1748
  %v2461 = vpack.c.b16 %v1757, %v1749
  %v2462 = vpack.c.b16 %v1758, %v1750
  %v2463 = vpack.c.b16 %v1767, %v1759
  %v2464 = vpack.c.b16 %v1768, %v1760
  %v2465 = vpack.c.b16 %v1769, %v1761
  %v2466 = vpack.c.b16 %v1770, %v1762
  %v2467 = vpack.c.b16 %v1771, %v1763
  %v2468 = vpack.c.b16 %v1772, %v1764
  %v2469 = vpack.c.b16 %v1773, %v1765
  %v2470 = vpack.c.b16 %v1774, %v1766
  %v2471 = vpack.c.b16 %v1783, %v1775
  %v2472 = vpack.c.b16 %v1784, %v1776
  %v2473 = vpack.c.b16 %v1785, %v1777
  %v2474 = vpack.c.b16 %v1786, %v1778
  %v2475 = vpack.c.b16 %v1787, %v1779
  %v2476 = vpack.c.b16 %v1788, %v1780
  %v2477 = vpack.c.b16 %v1789, %v1781
  %v2478 = vpack.c.b16 %v1790, %v1782
  %v2479 = vpack.c.b16 %v1799, %v1791
  %v2480 = vpack.c.b16 %v1800, %v1792
  %v2481 = vpack.c.b16 %v1801, %v1793
  %v2482 = vpack.c.b16 %v1802, %v1794
  %v2483 = vpack.c.b16 %v1803, %v1795
  %v2484 = vpack.c.b16 %v1804, %v1796
  %v2485 = vpack.c.b16 %v1805, %v1797
  %v2486 = vpack.c.b16 %v1806, %v1798
  %v2487 = vpack.c.b16 %v1815, %v1807
  %v2488 = vpack.c.b16 %v1816, %v1808
  %v2489 = vpack.c.b16 %v1817, %v1809
  %v2490 = vpack.c.b16 %v1818, %v1810
  %v2491 = vpack.c.b16 %v1819, %v1811
  %v2492 = vpack.c.b16 %v1820, %v1812
  %v2493 = vpack.c.b16 %v1821, %v1813
  %v2494 = vpack.c.b16 %v1822, %v1814
  %v2495 = vpack.c.b16 %v1831, %v1823
  %v2496 = vpack.c.b16 %v1832, %v1824
  %v2497 = vpack.c.b16 %v1833, %v1825
  %v2498 = vpack.c.b16 %v1834, %v1826
  %v2499 = vpack.c.b16 %v1835, %v1827
  %v2500 = vpack.c.b16 %v1836, %v1828
  %v2501 = vpack.c.b16 %v1837, %v1829
  %v2502 = vpack.c.b16 %v1838, %v1830
  %v2503 = vpack.c.b16 %v1847, %v1839
  %v2504 = vpack.c.b16 %v1848, %v1840
  %v2505 = vpack.c.b16 %v1849, %v1841
  %v2506 = vpack.c.b16 %v1850, %v1842
  %v2507 = vpack.c.b16 %v1851, %v1843
  %v2508 = vpack.c.b16 %v1852, %v1844
  %v2509 = vpack.c.b16 %v1853, %v1845
  %v2510 = vpack.c.b16 %v1854, %v1846
  %v2511 = vpack.c.b16 %v1863, %v1855
  %v2512 = vpack.c.b16 %v1864, %v1856
  %v2513 = vpack.c.b16 %v1865, %v1857
  %v2514 = vpack.c.b16 %v1866, %v1858
  %v2515 = vpack.c.b16 %v1867, %v1859
  %v2516 = vpack.c.b16 %v1868, %v1860
  %v2517 = vpack.c.b16 %v1869, %v1861
  %v2518 = vpack.c.b16 %v1870, %v1862
  %v2519 = vpack.c.b16 %v1879, %v1871
  %v2520 = vpack.c.b16 %v1880, %v1872
  %v2521 = vpack.c.b16 %v1881, %v1873
  %v2522 = vpack.c.b16 %v1882, %v1874
  %v2523 = vpack.c.b16 %v1883, %v1875
  %v2524 = vpack.c.b16 %v1884, %v1876
  %v2525 = vpack.c.b16 %v1885, %v1877
  %v2526 = vpack.c.b16 %v1886, %v1878
  %v2527 = vpack.c.b16 %v1895, %v1887
  %v2528 = vpack.c.b16 %v1896, %v1888
  %v2529 = vpack.c.b16 %v1897, %v1889
  %v2530 = vpack.c.b16 %v1898, %v1890
  %v2531 = vpack.c.b16 %v1899, %v1891
  %v2532 = vpack.c.b16 %v1900, %v1892
  %v2533 = vpack.c.b16 %v1901, %v1893
  %v2534 = vpack.c.b16 %v1902, %v1894
  %v2535 = vpack.c.b16 %v1911, %v1903
  %v2536 = vpack.c.b16 %v1912, %v1904
  %v2537 = vpack.c.b16 %v1913, %v1905
  %v2538 = vpack.c.b16 %v1914, %v1906
  %v2539 = vpack.c.b16 %v1915, %v1907
  %v2540 = vpack.c.b16 %v1916, %v1908
  %v2541 = vpack.c.b16 %v1917, %v1909
  %v2542 = vpack.c.b16 %v1918, %v1910
  %v2543 = vpack.c.b16 %v1927, %v1919
  %v2544 = vpack.c.b16 %v1928, %v1920
  %v2545 = vpack.c.b16 %v1929, %v1921
  %v2546 = vpack.c.b16 %v1930, %v1922
  %v2547 = vpack.c.b16 %v1931, %v1923
  %v2548 = vpack.c.b16 %v1932, %v1924
  %v2549 = vpack.c.b16 %v1933, %v1925
  %v2550 = vpack.c.b16 %v1934, %v1926
  %v2551 = vpack.c.b16 %v1943, %v1935
  %v2552 = vpack.c.b16 %v1944, %v1936
  %v2553 = vpack.c.b16 %v1945, %v1937
  %v2554 = vpack.c.b16 %v1946, %v1938
  %v2555 = vpack.c.b16 %v1947, %v1939
  %v2556 = vpack.c.b16 %v1948, %v1940
  %v2557 = vpack.c.b16 %v1949, %v1941
  %v2558 = vpack.c.b16 %v1950, %v1942
  %v2559 = vpack.c.b16 %v1959, %v1951
  %v2560 = vpack.c.b16 %v1960, %v1952
  %v2561 = vpack.c.b16 %v1961, %v1953
  %v2562 = vpack.c.b16 %v1962, %v1954
  %v2563 = vpack.c.b16 %v1963, %v1955
  %v2564 = vpack.c.b16 %v1964, %v1956
  %v2565 = vpack.c.b16 %v1965, %v1957
  %v2566 = vpack.c.b16 %v1966, %v1958
  %v2567 = vpack.c.b16 %v1975, %v1967
  %v2568 = vpack.c.b16 %v1976, %v1968
  %v2569 = vpack.c.b16 %v1977, %v1969
  %v2570 = vpack.c.b16 %v1978, %v1970
  %v2571 = vpack.c.b16 %v1979, %v1971
  %v2572 = vpack.c.b16 %v1980, %v1972
  %v2573 = vpack.c.b16 %v1981, %v1973
  %v2574 = vpack.c.b16 %v1982, %v1974
  %v2575 = vpack.c.b16 %v1991, %v1983
  %v2576 = vpack.c.b16 %v1992, %v1984
  %v2577 = vpack.c.b16 %v1993, %v1985
  %v2578 = vpack.c.b16 %v1994, %v1986
  %v2579 = vpack.c.b16 %v1995, %v1987
  %v2580 = vpack.c.b16 %v1996, %v1988
  %v2581 = vpack.c.b16 %v1997, %v1989
  %v2582 = vpack.c.b16 %v1998, %v1990
  %v2583 = vpack.c.b16 %v2007, %v1999
  %v2584 = vpack.c.b16 %v2008, %v2000
  %v2585 = vpack.c.b16 %v2009, %v2001
  %v2586 = vpack.c.b16 %v2010, %v2002
  %v2587 = vpack.c.b16 %v2011, %v2003
  %v2588 = vpack.c.b16 %v2012, %v2004
  %v2589 = vpack.c.b16 %v2013, %v2005
  %v2590 = vpack.c.b16 %v2014, %v2006
  %v2591 = vpack.c.b16 %v2023, %v2015
  %v2592 = vpack.c.b16 %v2024, %v2016
  %v2593 = vpack.c.b16 %v2025, %v2017
  %v2594 = vpack.c.b16 %v2026, %v2018
  %v2595 = vpack.c.b16 %v2027, %v2019
  %v2596 = vpack.c.b16 %v2028, %v2020
  %v2597 = vpack.c.b16 %v2029, %v2021
  %v2598 = vpack.c.b16 %v2030, %v2022
  %v2599 = vpack.c.b16 %v2039, %v2031
  %v2600 = vpack.c.b16 %v2040, %v2032
  %v2601 = vpack.c.b16 %v2041, %v2033
  %v2602 = vpack.c.b16 %v2042, %v2034
  %v2603 = vpack.c.b16 %v2043, %v2035
  %v2604 = vpack.c.b16 %v2044, %v2036
  %v2605 = vpack.c.b16 %v2045, %v2037
  %v2606 = vpack.c.b16 %v2046, %v2038
  %v2607 = vpack.c.b16 %v2055, %v2047
  %v2608 = vpack.c.b16 %v2056, %v2048
  %v2609 = vpack.c.b16 %v2057, %v2049
  %v2610 = vpack.c.b16 %v2058, %v2050
  %v2611 = vpack.c.b16 %v2059, %v2051
  %v2612 = vpack.c.b16 %v2060, %v2052
  %v2613 = vpack.c.b16 %v2061, %v2053
  %v2614 = vpack.c.b16 %v2062, %v2054
  %v2615 = vpack.c.b16 %v2071, %v2063
  %v2616 = vpack.c.b16 %v2072, %v2064
  %v2617 = vpack.c.b16 %v2073, %v2065
  %v2618 = vpack.c.b16 %v2074, %v2066
  %v2619 = vpack.c.b16 %v2075, %v2067
  %v2620 = vpack.c.b16 %v2076, %v2068
  %v2621 = vpack.c.b16 %v2077, %v2069
  %v2622 = vpack.c.b16 %v2078, %v2070
  %v2623 = vpack.c.b16 %v2087, %v2079
  %v2624 = vpack.c.b16 %v2088, %v2080
  %v2625 = vpack.c.b16 %v2089, %v2081
  %v2626 = vpack.c.b16 %v2090, %v2082
  %v2627 = vpack.c.b16 %v2091, %v2083
  %v2628 = vpack.c.b16 %v2092, %v2084
  %v2629 = vpack.c.b16 %v2093, %v2085
  %v2630 = vpack.c.b16 %v2094, %v2086
  %v2631 = vpack.c.b16 %v2103, %v2095
  %v2632 = vpack.c.b16 %v2104, %v2096
  %v2633 = vpack.c.b16 %v2105, %v2097
  %v2634 = vpack.c.b16 %v2106, %v2098
  %v2635 = vpack.c.b16 %v2107, %v2099
  %v2636 = vpack.c.b16 %v2108, %v2100
  %v2637 = vpack.c.b16 %v2109, %v2101
  %v2638 = vpack.c.b16 %v2110, %v2102
  %v2639 = vpack.c.b16 %v2119, %v2111
  %v2640 = vpack.c.b16 %v2120, %v2112
  %v2641 = vpack.c.b16 %v2121, %v2113
  %v2642 = vpack.c.b16 %v2122, %v2114
  %v2643 = vpack.c.b16 %v2123, %v2115
  %v2644 = vpack.c.b16 %v2124, %v2116
  %v2645 = vpack.c.b16 %v2125, %v2117
  %v2646 = vpack.c.b16 %v2126, %v2118
  %v2647 = vpack.c.b16 %v2135, %v2127
  %v2648 = vpack.c.b16 %v2136, %v2128
  %v2649 = vpack.c.b16 %v2137, %v2129
  %v2650 = vpack.c.b16 %v2138, %v2130
  %v2651 = vpack.c.b16 %v2139, %v2131
  %v2652 = vpack.c.b16 %v2140, %v2132
  %v2653 = vpack.c.b16 %v2141, %v2133
  %v2654 = vpack.c.b16 %v2142, %v2134
  %3167 = vmatprep.subr.bf16.mxu0 %v2200
  %3168 = vmatpush1.bf16.msra.mxu0 %v2199
  %3169 = vmatprep.subr.bf16.mxu0 %v2192
  %3170 = vmatpush1.bf16.msra.mxu0 %v2191
  %3171 = vmatprep.subr.bf16.mxu0 %v2184
  %3172 = vmatpush1.bf16.msra.mxu0 %v2183
  %3173 = vmatprep.subr.bf16.mxu0 %v2176
  %3174 = vmatpush1.bf16.msra.mxu0 %v2175
  %3175 = vmatprep.subr.bf16.mxu0 %v2168
  %3176 = vmatpush1.bf16.msra.mxu0 %v2167
  %3177 = vmatprep.subr.bf16.mxu0 %v2160
  %3178 = vmatpush1.bf16.msra.mxu0 %v2159
  %3179 = vmatprep.subr.bf16.mxu0 %v2152
  %3180 = vmatpush1.bf16.msra.mxu0 %v2151
  %3181 = vmatprep.subr.bf16.mxu0 %v2144
  %3182 = vmatpush1.bf16.msra.mxu0 %v2143
  %3183 = vmatprep.subr.bf16.mxu0 %v2264
  %3184 = vmatpush2.bf16.msra.mxu0 %v2263
  %3185 = vmatprep.subr.bf16.mxu0 %v2256
  %3186 = vmatpush2.bf16.msra.mxu0 %v2255
  %3187 = vmatprep.subr.bf16.mxu0 %v2248
  %3188 = vmatpush2.bf16.msra.mxu0 %v2247
  %3189 = vmatprep.subr.bf16.mxu0 %v2240
  %3190 = vmatpush2.bf16.msra.mxu0 %v2239
  %3191 = vmatprep.subr.bf16.mxu0 %v2232
  %3192 = vmatpush2.bf16.msra.mxu0 %v2231
  %3193 = vmatprep.subr.bf16.mxu0 %v2224
  %3194 = vmatpush2.bf16.msra.mxu0 %v2223
  %3195 = vmatprep.subr.bf16.mxu0 %v2216
  %3196 = vmatpush2.bf16.msra.mxu0 %v2215
  %3197 = vmatprep.subr.bf16.mxu0 %v2208
  %3198 = vmatpush2.bf16.msra.mxu0 %v2207
  %3199 = vmatprep.mubr.bf16.mxu0 %v592
  %3200 = vmatmul.mubr.bf16.gmra.mxu0 %v591
  %v3201 = vpop.f32.mrf.mxu0
  %v3202 = vadd.f32 %v542, %v3201
  %v3203 = vpop.f32.mrf.mxu0
  %v3204 = vadd.f32 %v546, %v3203
  %v3205 = vpop.f32.mrf.mxu0
  %v3206 = vpop.f32.mrf.mxu0
  %3207 = vdwg.mxu0
  %3208 = vmatprep.subr.bf16.mxu0 %v2328
  %3209 = vmatpush1.bf16.msra.mxu0 %v2327
  %3210 = vmatprep.subr.bf16.mxu0 %v2320
  %3211 = vmatpush1.bf16.msra.mxu0 %v2319
  %3212 = vmatprep.subr.bf16.mxu0 %v2312
  %3213 = vmatpush1.bf16.msra.mxu0 %v2311
  %3214 = vmatprep.subr.bf16.mxu0 %v2304
  %3215 = vmatpush1.bf16.msra.mxu0 %v2303
  %3216 = vmatprep.subr.bf16.mxu0 %v2296
  %3217 = vmatpush1.bf16.msra.mxu0 %v2295
  %3218 = vmatprep.subr.bf16.mxu0 %v2288
  %3219 = vmatpush1.bf16.msra.mxu0 %v2287
  %3220 = vmatprep.subr.bf16.mxu0 %v2280
  %3221 = vmatpush1.bf16.msra.mxu0 %v2279
  %3222 = vmatprep.subr.bf16.mxu0 %v2272
  %3223 = vmatpush1.bf16.msra.mxu0 %v2271
  %3224 = vmatprep.subr.bf16.mxu0 %v2392
  %3225 = vmatpush2.bf16.msra.mxu0 %v2391
  %3226 = vmatprep.subr.bf16.mxu0 %v2384
  %3227 = vmatpush2.bf16.msra.mxu0 %v2383
  %3228 = vmatprep.subr.bf16.mxu0 %v2376
  %3229 = vmatpush2.bf16.msra.mxu0 %v2375
  %3230 = vmatprep.subr.bf16.mxu0 %v2368
  %3231 = vmatpush2.bf16.msra.mxu0 %v2367
  %3232 = vmatprep.subr.bf16.mxu0 %v2360
  %3233 = vmatpush2.bf16.msra.mxu0 %v2359
  %3234 = vmatprep.subr.bf16.mxu0 %v2352
  %3235 = vmatpush2.bf16.msra.mxu0 %v2351
  %3236 = vmatprep.subr.bf16.mxu0 %v2344
  %3237 = vmatpush2.bf16.msra.mxu0 %v2343
  %3238 = vmatprep.subr.bf16.mxu0 %v2336
  %3239 = vmatpush2.bf16.msra.mxu0 %v2335
  %3240 = vmatprep.mubr.bf16.mxu0 %v594
  %3241 = vmatmul.mubr.bf16.gmra.mxu0 %v593
  %v3242 = vpop.f32.mrf.mxu0
  %v3243 = vadd.f32 %v3202, %v3242
  %v3244 = vpop.f32.mrf.mxu0
  %v3245 = vadd.f32 %v3204, %v3244
  %v3246 = vpop.f32.mrf.mxu0
  %v3247 = vpop.f32.mrf.mxu0
  %3248 = vdwg.mxu0
  %3249 = vmatprep.subr.bf16.mxu0 %v2456
  %3250 = vmatpush1.bf16.msra.mxu0 %v2455
  %3251 = vmatprep.subr.bf16.mxu0 %v2448
  %3252 = vmatpush1.bf16.msra.mxu0 %v2447
  %3253 = vmatprep.subr.bf16.mxu0 %v2440
  %3254 = vmatpush1.bf16.msra.mxu0 %v2439
  %3255 = vmatprep.subr.bf16.mxu0 %v2432
  %3256 = vmatpush1.bf16.msra.mxu0 %v2431
  %3257 = vmatprep.subr.bf16.mxu0 %v2424
  %3258 = vmatpush1.bf16.msra.mxu0 %v2423
  %3259 = vmatprep.subr.bf16.mxu0 %v2416
  %3260 = vmatpush1.bf16.msra.mxu0 %v2415
  %3261 = vmatprep.subr.bf16.mxu0 %v2408
  %3262 = vmatpush1.bf16.msra.mxu0 %v2407
  %3263 = vmatprep.subr.bf16.mxu0 %v2400
  %3264 = vmatpush1.bf16.msra.mxu0 %v2399
  %3265 = vmatprep.subr.bf16.mxu0 %v2520
  %3266 = vmatpush2.bf16.msra.mxu0 %v2519
  %3267 = vmatprep.subr.bf16.mxu0 %v2512
  %3268 = vmatpush2.bf16.msra.mxu0 %v2511
  %3269 = vmatprep.subr.bf16.mxu0 %v2504
  %3270 = vmatpush2.bf16.msra.mxu0 %v2503
  %3271 = vmatprep.subr.bf16.mxu0 %v2496
  %3272 = vmatpush2.bf16.msra.mxu0 %v2495
  %3273 = vmatprep.subr.bf16.mxu0 %v2488
  %3274 = vmatpush2.bf16.msra.mxu0 %v2487
  %3275 = vmatprep.subr.bf16.mxu0 %v2480
  %3276 = vmatpush2.bf16.msra.mxu0 %v2479
  %3277 = vmatprep.subr.bf16.mxu0 %v2472
  %3278 = vmatpush2.bf16.msra.mxu0 %v2471
  %3279 = vmatprep.subr.bf16.mxu0 %v2464
  %3280 = vmatpush2.bf16.msra.mxu0 %v2463
  %3281 = vmatprep.mubr.bf16.mxu0 %v596
  %3282 = vmatmul.mubr.bf16.gmra.mxu0 %v595
  %v3283 = vpop.f32.mrf.mxu0
  %v3284 = vadd.f32 %v3243, %v3283
  %v3285 = vpop.f32.mrf.mxu0
  %v3286 = vadd.f32 %v3245, %v3285
  %v3287 = vpop.f32.mrf.mxu0
  %v3288 = vpop.f32.mrf.mxu0
  %3289 = vdwg.mxu0
  %3290 = vmatprep.subr.bf16.mxu0 %v2584
  %3291 = vmatpush1.bf16.msra.mxu0 %v2583
  %3292 = vmatprep.subr.bf16.mxu0 %v2576
  %3293 = vmatpush1.bf16.msra.mxu0 %v2575
  %3294 = vmatprep.subr.bf16.mxu0 %v2568
  %3295 = vmatpush1.bf16.msra.mxu0 %v2567
  %3296 = vmatprep.subr.bf16.mxu0 %v2560
  %3297 = vmatpush1.bf16.msra.mxu0 %v2559
  %3298 = vmatprep.subr.bf16.mxu0 %v2552
  %3299 = vmatpush1.bf16.msra.mxu0 %v2551
  %3300 = vmatprep.subr.bf16.mxu0 %v2544
  %3301 = vmatpush1.bf16.msra.mxu0 %v2543
  %3302 = vmatprep.subr.bf16.mxu0 %v2536
  %3303 = vmatpush1.bf16.msra.mxu0 %v2535
  %3304 = vmatprep.subr.bf16.mxu0 %v2528
  %3305 = vmatpush1.bf16.msra.mxu0 %v2527
  %3306 = vmatprep.subr.bf16.mxu0 %v2648
  %3307 = vmatpush2.bf16.msra.mxu0 %v2647
  %3308 = vmatprep.subr.bf16.mxu0 %v2640
  %3309 = vmatpush2.bf16.msra.mxu0 %v2639
  %3310 = vmatprep.subr.bf16.mxu0 %v2632
  %3311 = vmatpush2.bf16.msra.mxu0 %v2631
  %3312 = vmatprep.subr.bf16.mxu0 %v2624
  %3313 = vmatpush2.bf16.msra.mxu0 %v2623
  %3314 = vmatprep.subr.bf16.mxu0 %v2616
  %3315 = vmatpush2.bf16.msra.mxu0 %v2615
  %3316 = vmatprep.subr.bf16.mxu0 %v2608
  %3317 = vmatpush2.bf16.msra.mxu0 %v2607
  %3318 = vmatprep.subr.bf16.mxu0 %v2600
  %3319 = vmatpush2.bf16.msra.mxu0 %v2599
  %3320 = vmatprep.subr.bf16.mxu0 %v2592
  %3321 = vmatpush2.bf16.msra.mxu0 %v2591
  %3322 = vmatprep.mubr.bf16.mxu0 %v598
  %3323 = vmatmul.mubr.bf16.gmra.mxu0 %v597
  %v3324 = vpop.f32.mrf.mxu0
  %v3325 = vadd.f32 %v3284, %v3324
  %v3326 = vpop.f32.mrf.mxu0
  %v3327 = vadd.f32 %v3286, %v3326
  %v3328 = vpop.f32.mrf.mxu0
  %v3329 = vpop.f32.mrf.mxu0
  %3330 = vdwg.mxu0
  %3331 = vmatprep.subr.bf16.mxu0 %v2202
  %3332 = vmatpush1.bf16.msra.mxu0 %v2201
  %3333 = vmatprep.subr.bf16.mxu0 %v2194
  %3334 = vmatpush1.bf16.msra.mxu0 %v2193
  %3335 = vmatprep.subr.bf16.mxu0 %v2186
  %3336 = vmatpush1.bf16.msra.mxu0 %v2185
  %3337 = vmatprep.subr.bf16.mxu0 %v2178
  %3338 = vmatpush1.bf16.msra.mxu0 %v2177
  %3339 = vmatprep.subr.bf16.mxu0 %v2170
  %3340 = vmatpush1.bf16.msra.mxu0 %v2169
  %3341 = vmatprep.subr.bf16.mxu0 %v2162
  %3342 = vmatpush1.bf16.msra.mxu0 %v2161
  %3343 = vmatprep.subr.bf16.mxu0 %v2154
  %3344 = vmatpush1.bf16.msra.mxu0 %v2153
  %3345 = vmatprep.subr.bf16.mxu0 %v2146
  %3346 = vmatpush1.bf16.msra.mxu0 %v2145
  %3347 = vmatprep.subr.bf16.mxu0 %v2266
  %3348 = vmatpush2.bf16.msra.mxu0 %v2265
  %3349 = vmatprep.subr.bf16.mxu0 %v2258
  %3350 = vmatpush2.bf16.msra.mxu0 %v2257
  %3351 = vmatprep.subr.bf16.mxu0 %v2250
  %3352 = vmatpush2.bf16.msra.mxu0 %v2249
  %3353 = vmatprep.subr.bf16.mxu0 %v2242
  %3354 = vmatpush2.bf16.msra.mxu0 %v2241
  %3355 = vmatprep.subr.bf16.mxu0 %v2234
  %3356 = vmatpush2.bf16.msra.mxu0 %v2233
  %3357 = vmatprep.subr.bf16.mxu0 %v2226
  %3358 = vmatpush2.bf16.msra.mxu0 %v2225
  %3359 = vmatprep.subr.bf16.mxu0 %v2218
  %3360 = vmatpush2.bf16.msra.mxu0 %v2217
  %3361 = vmatprep.subr.bf16.mxu0 %v2210
  %3362 = vmatpush2.bf16.msra.mxu0 %v2209
  %3363 = vmatprep.mubr.bf16.mxu0 %v592
  %3364 = vmatmul.mubr.bf16.gmra.mxu0 %v591
  %v3365 = vpop.f32.mrf.mxu0
  %v3366 = vadd.f32 %v550, %v3365
  %v3367 = vpop.f32.mrf.mxu0
  %v3368 = vadd.f32 %v554, %v3367
  %v3369 = vpop.f32.mrf.mxu0
  %v3370 = vpop.f32.mrf.mxu0
  %3371 = vdwg.mxu0
  %3372 = vmatprep.subr.bf16.mxu0 %v2330
  %3373 = vmatpush1.bf16.msra.mxu0 %v2329
  %3374 = vmatprep.subr.bf16.mxu0 %v2322
  %3375 = vmatpush1.bf16.msra.mxu0 %v2321
  %3376 = vmatprep.subr.bf16.mxu0 %v2314
  %3377 = vmatpush1.bf16.msra.mxu0 %v2313
  %3378 = vmatprep.subr.bf16.mxu0 %v2306
  %3379 = vmatpush1.bf16.msra.mxu0 %v2305
  %3380 = vmatprep.subr.bf16.mxu0 %v2298
  %3381 = vmatpush1.bf16.msra.mxu0 %v2297
  %3382 = vmatprep.subr.bf16.mxu0 %v2290
  %3383 = vmatpush1.bf16.msra.mxu0 %v2289
  %3384 = vmatprep.subr.bf16.mxu0 %v2282
  %3385 = vmatpush1.bf16.msra.mxu0 %v2281
  %3386 = vmatprep.subr.bf16.mxu0 %v2274
  %3387 = vmatpush1.bf16.msra.mxu0 %v2273
  %3388 = vmatprep.subr.bf16.mxu0 %v2394
  %3389 = vmatpush2.bf16.msra.mxu0 %v2393
  %3390 = vmatprep.subr.bf16.mxu0 %v2386
  %3391 = vmatpush2.bf16.msra.mxu0 %v2385
  %3392 = vmatprep.subr.bf16.mxu0 %v2378
  %3393 = vmatpush2.bf16.msra.mxu0 %v2377
  %3394 = vmatprep.subr.bf16.mxu0 %v2370
  %3395 = vmatpush2.bf16.msra.mxu0 %v2369
  %3396 = vmatprep.subr.bf16.mxu0 %v2362
  %3397 = vmatpush2.bf16.msra.mxu0 %v2361
  %3398 = vmatprep.subr.bf16.mxu0 %v2354
  %3399 = vmatpush2.bf16.msra.mxu0 %v2353
  %3400 = vmatprep.subr.bf16.mxu0 %v2346
  %3401 = vmatpush2.bf16.msra.mxu0 %v2345
  %3402 = vmatprep.subr.bf16.mxu0 %v2338
  %3403 = vmatpush2.bf16.msra.mxu0 %v2337
  %3404 = vmatprep.mubr.bf16.mxu0 %v594
  %3405 = vmatmul.mubr.bf16.gmra.mxu0 %v593
  %v3406 = vpop.f32.mrf.mxu0
  %v3407 = vadd.f32 %v3366, %v3406
  %v3408 = vpop.f32.mrf.mxu0
  %v3409 = vadd.f32 %v3368, %v3408
  %v3410 = vpop.f32.mrf.mxu0
  %v3411 = vpop.f32.mrf.mxu0
  %3412 = vdwg.mxu0
  %3413 = vmatprep.subr.bf16.mxu0 %v2458
  %3414 = vmatpush1.bf16.msra.mxu0 %v2457
  %3415 = vmatprep.subr.bf16.mxu0 %v2450
  %3416 = vmatpush1.bf16.msra.mxu0 %v2449
  %3417 = vmatprep.subr.bf16.mxu0 %v2442
  %3418 = vmatpush1.bf16.msra.mxu0 %v2441
  %3419 = vmatprep.subr.bf16.mxu0 %v2434
  %3420 = vmatpush1.bf16.msra.mxu0 %v2433
  %3421 = vmatprep.subr.bf16.mxu0 %v2426
  %3422 = vmatpush1.bf16.msra.mxu0 %v2425
  %3423 = vmatprep.subr.bf16.mxu0 %v2418
  %3424 = vmatpush1.bf16.msra.mxu0 %v2417
  %3425 = vmatprep.subr.bf16.mxu0 %v2410
  %3426 = vmatpush1.bf16.msra.mxu0 %v2409
  %3427 = vmatprep.subr.bf16.mxu0 %v2402
  %3428 = vmatpush1.bf16.msra.mxu0 %v2401
  %3429 = vmatprep.subr.bf16.mxu0 %v2522
  %3430 = vmatpush2.bf16.msra.mxu0 %v2521
  %3431 = vmatprep.subr.bf16.mxu0 %v2514
  %3432 = vmatpush2.bf16.msra.mxu0 %v2513
  %3433 = vmatprep.subr.bf16.mxu0 %v2506
  %3434 = vmatpush2.bf16.msra.mxu0 %v2505
  %3435 = vmatprep.subr.bf16.mxu0 %v2498
  %3436 = vmatpush2.bf16.msra.mxu0 %v2497
  %3437 = vmatprep.subr.bf16.mxu0 %v2490
  %3438 = vmatpush2.bf16.msra.mxu0 %v2489
  %3439 = vmatprep.subr.bf16.mxu0 %v2482
  %3440 = vmatpush2.bf16.msra.mxu0 %v2481
  %3441 = vmatprep.subr.bf16.mxu0 %v2474
  %3442 = vmatpush2.bf16.msra.mxu0 %v2473
  %3443 = vmatprep.subr.bf16.mxu0 %v2466
  %3444 = vmatpush2.bf16.msra.mxu0 %v2465
  %3445 = vmatprep.mubr.bf16.mxu0 %v596
  %3446 = vmatmul.mubr.bf16.gmra.mxu0 %v595
  %v3447 = vpop.f32.mrf.mxu0
  %v3448 = vadd.f32 %v3407, %v3447
  %v3449 = vpop.f32.mrf.mxu0
  %v3450 = vadd.f32 %v3409, %v3449
  %v3451 = vpop.f32.mrf.mxu0
  %v3452 = vpop.f32.mrf.mxu0
  %3453 = vdwg.mxu0
  %3454 = vmatprep.subr.bf16.mxu0 %v2586
  %3455 = vmatpush1.bf16.msra.mxu0 %v2585
  %3456 = vmatprep.subr.bf16.mxu0 %v2578
  %3457 = vmatpush1.bf16.msra.mxu0 %v2577
  %3458 = vmatprep.subr.bf16.mxu0 %v2570
  %3459 = vmatpush1.bf16.msra.mxu0 %v2569
  %3460 = vmatprep.subr.bf16.mxu0 %v2562
  %3461 = vmatpush1.bf16.msra.mxu0 %v2561
  %3462 = vmatprep.subr.bf16.mxu0 %v2554
  %3463 = vmatpush1.bf16.msra.mxu0 %v2553
  %3464 = vmatprep.subr.bf16.mxu0 %v2546
  %3465 = vmatpush1.bf16.msra.mxu0 %v2545
  %3466 = vmatprep.subr.bf16.mxu0 %v2538
  %3467 = vmatpush1.bf16.msra.mxu0 %v2537
  %3468 = vmatprep.subr.bf16.mxu0 %v2530
  %3469 = vmatpush1.bf16.msra.mxu0 %v2529
  %3470 = vmatprep.subr.bf16.mxu0 %v2650
  %3471 = vmatpush2.bf16.msra.mxu0 %v2649
  %3472 = vmatprep.subr.bf16.mxu0 %v2642
  %3473 = vmatpush2.bf16.msra.mxu0 %v2641
  %3474 = vmatprep.subr.bf16.mxu0 %v2634
  %3475 = vmatpush2.bf16.msra.mxu0 %v2633
  %3476 = vmatprep.subr.bf16.mxu0 %v2626
  %3477 = vmatpush2.bf16.msra.mxu0 %v2625
  %3478 = vmatprep.subr.bf16.mxu0 %v2618
  %3479 = vmatpush2.bf16.msra.mxu0 %v2617
  %3480 = vmatprep.subr.bf16.mxu0 %v2610
  %3481 = vmatpush2.bf16.msra.mxu0 %v2609
  %3482 = vmatprep.subr.bf16.mxu0 %v2602
  %3483 = vmatpush2.bf16.msra.mxu0 %v2601
  %3484 = vmatprep.subr.bf16.mxu0 %v2594
  %3485 = vmatpush2.bf16.msra.mxu0 %v2593
  %3486 = vmatprep.mubr.bf16.mxu0 %v598
  %3487 = vmatmul.mubr.bf16.gmra.mxu0 %v597
  %v3488 = vpop.f32.mrf.mxu0
  %v3489 = vadd.f32 %v3448, %v3488
  %v3490 = vpop.f32.mrf.mxu0
  %v3491 = vadd.f32 %v3450, %v3490
  %v3492 = vpop.f32.mrf.mxu0
  %v3493 = vpop.f32.mrf.mxu0
  %3494 = vdwg.mxu0
  %3495 = vmatprep.subr.bf16.mxu0 %v2204
  %3496 = vmatpush1.bf16.msra.mxu0 %v2203
  %3497 = vmatprep.subr.bf16.mxu0 %v2196
  %3498 = vmatpush1.bf16.msra.mxu0 %v2195
  %3499 = vmatprep.subr.bf16.mxu0 %v2188
  %3500 = vmatpush1.bf16.msra.mxu0 %v2187
  %3501 = vmatprep.subr.bf16.mxu0 %v2180
  %3502 = vmatpush1.bf16.msra.mxu0 %v2179
  %3503 = vmatprep.subr.bf16.mxu0 %v2172
  %3504 = vmatpush1.bf16.msra.mxu0 %v2171
  %3505 = vmatprep.subr.bf16.mxu0 %v2164
  %3506 = vmatpush1.bf16.msra.mxu0 %v2163
  %3507 = vmatprep.subr.bf16.mxu0 %v2156
  %3508 = vmatpush1.bf16.msra.mxu0 %v2155
  %3509 = vmatprep.subr.bf16.mxu0 %v2148
  %3510 = vmatpush1.bf16.msra.mxu0 %v2147
  %3511 = vmatprep.subr.bf16.mxu0 %v2268
  %3512 = vmatpush2.bf16.msra.mxu0 %v2267
  %3513 = vmatprep.subr.bf16.mxu0 %v2260
  %3514 = vmatpush2.bf16.msra.mxu0 %v2259
  %3515 = vmatprep.subr.bf16.mxu0 %v2252
  %3516 = vmatpush2.bf16.msra.mxu0 %v2251
  %3517 = vmatprep.subr.bf16.mxu0 %v2244
  %3518 = vmatpush2.bf16.msra.mxu0 %v2243
  %3519 = vmatprep.subr.bf16.mxu0 %v2236
  %3520 = vmatpush2.bf16.msra.mxu0 %v2235
  %3521 = vmatprep.subr.bf16.mxu0 %v2228
  %3522 = vmatpush2.bf16.msra.mxu0 %v2227
  %3523 = vmatprep.subr.bf16.mxu0 %v2220
  %3524 = vmatpush2.bf16.msra.mxu0 %v2219
  %3525 = vmatprep.subr.bf16.mxu0 %v2212
  %3526 = vmatpush2.bf16.msra.mxu0 %v2211
  %3527 = vmatprep.mubr.bf16.mxu0 %v592
  %3528 = vmatmul.mubr.bf16.gmra.mxu0 %v591
  %v3529 = vpop.f32.mrf.mxu0
  %v3530 = vadd.f32 %v558, %v3529
  %v3531 = vpop.f32.mrf.mxu0
  %v3532 = vadd.f32 %v562, %v3531
  %v3533 = vpop.f32.mrf.mxu0
  %v3534 = vpop.f32.mrf.mxu0
  %3535 = vdwg.mxu0
  %3536 = vmatprep.subr.bf16.mxu0 %v2332
  %3537 = vmatpush1.bf16.msra.mxu0 %v2331
  %3538 = vmatprep.subr.bf16.mxu0 %v2324
  %3539 = vmatpush1.bf16.msra.mxu0 %v2323
  %3540 = vmatprep.subr.bf16.mxu0 %v2316
  %3541 = vmatpush1.bf16.msra.mxu0 %v2315
  %3542 = vmatprep.subr.bf16.mxu0 %v2308
  %3543 = vmatpush1.bf16.msra.mxu0 %v2307
  %3544 = vmatprep.subr.bf16.mxu0 %v2300
  %3545 = vmatpush1.bf16.msra.mxu0 %v2299
  %3546 = vmatprep.subr.bf16.mxu0 %v2292
  %3547 = vmatpush1.bf16.msra.mxu0 %v2291
  %3548 = vmatprep.subr.bf16.mxu0 %v2284
  %3549 = vmatpush1.bf16.msra.mxu0 %v2283
  %3550 = vmatprep.subr.bf16.mxu0 %v2276
  %3551 = vmatpush1.bf16.msra.mxu0 %v2275
  %3552 = vmatprep.subr.bf16.mxu0 %v2396
  %3553 = vmatpush2.bf16.msra.mxu0 %v2395
  %3554 = vmatprep.subr.bf16.mxu0 %v2388
  %3555 = vmatpush2.bf16.msra.mxu0 %v2387
  %3556 = vmatprep.subr.bf16.mxu0 %v2380
  %3557 = vmatpush2.bf16.msra.mxu0 %v2379
  %3558 = vmatprep.subr.bf16.mxu0 %v2372
  %3559 = vmatpush2.bf16.msra.mxu0 %v2371
  %3560 = vmatprep.subr.bf16.mxu0 %v2364
  %3561 = vmatpush2.bf16.msra.mxu0 %v2363
  %3562 = vmatprep.subr.bf16.mxu0 %v2356
  %3563 = vmatpush2.bf16.msra.mxu0 %v2355
  %3564 = vmatprep.subr.bf16.mxu0 %v2348
  %3565 = vmatpush2.bf16.msra.mxu0 %v2347
  %3566 = vmatprep.subr.bf16.mxu0 %v2340
  %3567 = vmatpush2.bf16.msra.mxu0 %v2339
  %3568 = vmatprep.mubr.bf16.mxu0 %v594
  %3569 = vmatmul.mubr.bf16.gmra.mxu0 %v593
  %v3570 = vpop.f32.mrf.mxu0
  %v3571 = vadd.f32 %v3530, %v3570
  %v3572 = vpop.f32.mrf.mxu0
  %v3573 = vadd.f32 %v3532, %v3572
  %v3574 = vpop.f32.mrf.mxu0
  %v3575 = vpop.f32.mrf.mxu0
  %3576 = vdwg.mxu0
  %3577 = vmatprep.subr.bf16.mxu0 %v2460
  %3578 = vmatpush1.bf16.msra.mxu0 %v2459
  %3579 = vmatprep.subr.bf16.mxu0 %v2452
  %3580 = vmatpush1.bf16.msra.mxu0 %v2451
  %3581 = vmatprep.subr.bf16.mxu0 %v2444
  %3582 = vmatpush1.bf16.msra.mxu0 %v2443
  %3583 = vmatprep.subr.bf16.mxu0 %v2436
  %3584 = vmatpush1.bf16.msra.mxu0 %v2435
  %3585 = vmatprep.subr.bf16.mxu0 %v2428
  %3586 = vmatpush1.bf16.msra.mxu0 %v2427
  %3587 = vmatprep.subr.bf16.mxu0 %v2420
  %3588 = vmatpush1.bf16.msra.mxu0 %v2419
  %3589 = vmatprep.subr.bf16.mxu0 %v2412
  %3590 = vmatpush1.bf16.msra.mxu0 %v2411
  %3591 = vmatprep.subr.bf16.mxu0 %v2404
  %3592 = vmatpush1.bf16.msra.mxu0 %v2403
  %3593 = vmatprep.subr.bf16.mxu0 %v2524
  %3594 = vmatpush2.bf16.msra.mxu0 %v2523
  %3595 = vmatprep.subr.bf16.mxu0 %v2516
  %3596 = vmatpush2.bf16.msra.mxu0 %v2515
  %3597 = vmatprep.subr.bf16.mxu0 %v2508
  %3598 = vmatpush2.bf16.msra.mxu0 %v2507
  %3599 = vmatprep.subr.bf16.mxu0 %v2500
  %3600 = vmatpush2.bf16.msra.mxu0 %v2499
  %3601 = vmatprep.subr.bf16.mxu0 %v2492
  %3602 = vmatpush2.bf16.msra.mxu0 %v2491
  %3603 = vmatprep.subr.bf16.mxu0 %v2484
  %3604 = vmatpush2.bf16.msra.mxu0 %v2483
  %3605 = vmatprep.subr.bf16.mxu0 %v2476
  %3606 = vmatpush2.bf16.msra.mxu0 %v2475
  %3607 = vmatprep.subr.bf16.mxu0 %v2468
  %3608 = vmatpush2.bf16.msra.mxu0 %v2467
  %3609 = vmatprep.mubr.bf16.mxu0 %v596
  %3610 = vmatmul.mubr.bf16.gmra.mxu0 %v595
  %v3611 = vpop.f32.mrf.mxu0
  %v3612 = vadd.f32 %v3571, %v3611
  %v3613 = vpop.f32.mrf.mxu0
  %v3614 = vadd.f32 %v3573, %v3613
  %v3615 = vpop.f32.mrf.mxu0
  %v3616 = vpop.f32.mrf.mxu0
  %3617 = vdwg.mxu0
  %3618 = vmatprep.subr.bf16.mxu0 %v2588
  %3619 = vmatpush1.bf16.msra.mxu0 %v2587
  %3620 = vmatprep.subr.bf16.mxu0 %v2580
  %3621 = vmatpush1.bf16.msra.mxu0 %v2579
  %3622 = vmatprep.subr.bf16.mxu0 %v2572
  %3623 = vmatpush1.bf16.msra.mxu0 %v2571
  %3624 = vmatprep.subr.bf16.mxu0 %v2564
  %3625 = vmatpush1.bf16.msra.mxu0 %v2563
  %3626 = vmatprep.subr.bf16.mxu0 %v2556
  %3627 = vmatpush1.bf16.msra.mxu0 %v2555
  %3628 = vmatprep.subr.bf16.mxu0 %v2548
  %3629 = vmatpush1.bf16.msra.mxu0 %v2547
  %3630 = vmatprep.subr.bf16.mxu0 %v2540
  %3631 = vmatpush1.bf16.msra.mxu0 %v2539
  %3632 = vmatprep.subr.bf16.mxu0 %v2532
  %3633 = vmatpush1.bf16.msra.mxu0 %v2531
  %3634 = vmatprep.subr.bf16.mxu0 %v2652
  %3635 = vmatpush2.bf16.msra.mxu0 %v2651
  %3636 = vmatprep.subr.bf16.mxu0 %v2644
  %3637 = vmatpush2.bf16.msra.mxu0 %v2643
  %3638 = vmatprep.subr.bf16.mxu0 %v2636
  %3639 = vmatpush2.bf16.msra.mxu0 %v2635
  %3640 = vmatprep.subr.bf16.mxu0 %v2628
  %3641 = vmatpush2.bf16.msra.mxu0 %v2627
  %3642 = vmatprep.subr.bf16.mxu0 %v2620
  %3643 = vmatpush2.bf16.msra.mxu0 %v2619
  %3644 = vmatprep.subr.bf16.mxu0 %v2612
  %3645 = vmatpush2.bf16.msra.mxu0 %v2611
  %3646 = vmatprep.subr.bf16.mxu0 %v2604
  %3647 = vmatpush2.bf16.msra.mxu0 %v2603
  %3648 = vmatprep.subr.bf16.mxu0 %v2596
  %3649 = vmatpush2.bf16.msra.mxu0 %v2595
  %3650 = vmatprep.mubr.bf16.mxu0 %v598
  %3651 = vmatmul.mubr.bf16.gmra.mxu0 %v597
  %v3652 = vpop.f32.mrf.mxu0
  %v3653 = vadd.f32 %v3612, %v3652
  %v3654 = vpop.f32.mrf.mxu0
  %v3655 = vadd.f32 %v3614, %v3654
  %v3656 = vpop.f32.mrf.mxu0
  %v3657 = vpop.f32.mrf.mxu0
  %3658 = vdwg.mxu0
  %3659 = vmatprep.subr.bf16.mxu0 %v2206
  %3660 = vmatpush1.bf16.msra.mxu0 %v2205
  %3661 = vmatprep.subr.bf16.mxu0 %v2198
  %3662 = vmatpush1.bf16.msra.mxu0 %v2197
  %3663 = vmatprep.subr.bf16.mxu0 %v2190
  %3664 = vmatpush1.bf16.msra.mxu0 %v2189
  %3665 = vmatprep.subr.bf16.mxu0 %v2182
  %3666 = vmatpush1.bf16.msra.mxu0 %v2181
  %3667 = vmatprep.subr.bf16.mxu0 %v2174
  %3668 = vmatpush1.bf16.msra.mxu0 %v2173
  %3669 = vmatprep.subr.bf16.mxu0 %v2166
  %3670 = vmatpush1.bf16.msra.mxu0 %v2165
  %3671 = vmatprep.subr.bf16.mxu0 %v2158
  %3672 = vmatpush1.bf16.msra.mxu0 %v2157
  %3673 = vmatprep.subr.bf16.mxu0 %v2150
  %3674 = vmatpush1.bf16.msra.mxu0 %v2149
  %3675 = vmatprep.subr.bf16.mxu0 %v2270
  %3676 = vmatpush2.bf16.msra.mxu0 %v2269
  %3677 = vmatprep.subr.bf16.mxu0 %v2262
  %3678 = vmatpush2.bf16.msra.mxu0 %v2261
  %3679 = vmatprep.subr.bf16.mxu0 %v2254
  %3680 = vmatpush2.bf16.msra.mxu0 %v2253
  %3681 = vmatprep.subr.bf16.mxu0 %v2246
  %3682 = vmatpush2.bf16.msra.mxu0 %v2245
  %3683 = vmatprep.subr.bf16.mxu0 %v2238
  %3684 = vmatpush2.bf16.msra.mxu0 %v2237
  %3685 = vmatprep.subr.bf16.mxu0 %v2230
  %3686 = vmatpush2.bf16.msra.mxu0 %v2229
  %3687 = vmatprep.subr.bf16.mxu0 %v2222
  %3688 = vmatpush2.bf16.msra.mxu0 %v2221
  %3689 = vmatprep.subr.bf16.mxu0 %v2214
  %3690 = vmatpush2.bf16.msra.mxu0 %v2213
  %3691 = vmatprep.mubr.bf16.mxu0 %v592
  %3692 = vmatmul.mubr.bf16.gmra.mxu0 %v591
  %v3693 = vpop.f32.mrf.mxu0
  %v3694 = vadd.f32 %v566, %v3693
  %v3695 = vpop.f32.mrf.mxu0
  %v3696 = vadd.f32 %v570, %v3695
  %v3697 = vpop.f32.mrf.mxu0
  %v3698 = vpop.f32.mrf.mxu0
  %3699 = vdwg.mxu0
  %3700 = vmatprep.subr.bf16.mxu0 %v2334
  %3701 = vmatpush1.bf16.msra.mxu0 %v2333
  %3702 = vmatprep.subr.bf16.mxu0 %v2326
  %3703 = vmatpush1.bf16.msra.mxu0 %v2325
  %3704 = vmatprep.subr.bf16.mxu0 %v2318
  %3705 = vmatpush1.bf16.msra.mxu0 %v2317
  %3706 = vmatprep.subr.bf16.mxu0 %v2310
  %3707 = vmatpush1.bf16.msra.mxu0 %v2309
  %3708 = vmatprep.subr.bf16.mxu0 %v2302
  %3709 = vmatpush1.bf16.msra.mxu0 %v2301
  %3710 = vmatprep.subr.bf16.mxu0 %v2294
  %3711 = vmatpush1.bf16.msra.mxu0 %v2293
  %3712 = vmatprep.subr.bf16.mxu0 %v2286
  %3713 = vmatpush1.bf16.msra.mxu0 %v2285
  %3714 = vmatprep.subr.bf16.mxu0 %v2278
  %3715 = vmatpush1.bf16.msra.mxu0 %v2277
  %3716 = vmatprep.subr.bf16.mxu0 %v2398
  %3717 = vmatpush2.bf16.msra.mxu0 %v2397
  %3718 = vmatprep.subr.bf16.mxu0 %v2390
  %3719 = vmatpush2.bf16.msra.mxu0 %v2389
  %3720 = vmatprep.subr.bf16.mxu0 %v2382
  %3721 = vmatpush2.bf16.msra.mxu0 %v2381
  %3722 = vmatprep.subr.bf16.mxu0 %v2374
  %3723 = vmatpush2.bf16.msra.mxu0 %v2373
  %3724 = vmatprep.subr.bf16.mxu0 %v2366
  %3725 = vmatpush2.bf16.msra.mxu0 %v2365
  %3726 = vmatprep.subr.bf16.mxu0 %v2358
  %3727 = vmatpush2.bf16.msra.mxu0 %v2357
  %3728 = vmatprep.subr.bf16.mxu0 %v2350
  %3729 = vmatpush2.bf16.msra.mxu0 %v2349
  %3730 = vmatprep.subr.bf16.mxu0 %v2342
  %3731 = vmatpush2.bf16.msra.mxu0 %v2341
  %3732 = vmatprep.mubr.bf16.mxu0 %v594
  %3733 = vmatmul.mubr.bf16.gmra.mxu0 %v593
  %v3734 = vpop.f32.mrf.mxu0
  %v3735 = vadd.f32 %v3694, %v3734
  %v3736 = vpop.f32.mrf.mxu0
  %v3737 = vadd.f32 %v3696, %v3736
  %v3738 = vpop.f32.mrf.mxu0
  %v3739 = vpop.f32.mrf.mxu0
  %3740 = vdwg.mxu0
  %3741 = vmatprep.subr.bf16.mxu0 %v2462
  %3742 = vmatpush1.bf16.msra.mxu0 %v2461
  %3743 = vmatprep.subr.bf16.mxu0 %v2454
  %3744 = vmatpush1.bf16.msra.mxu0 %v2453
  %3745 = vmatprep.subr.bf16.mxu0 %v2446
  %3746 = vmatpush1.bf16.msra.mxu0 %v2445
  %3747 = vmatprep.subr.bf16.mxu0 %v2438
  %3748 = vmatpush1.bf16.msra.mxu0 %v2437
  %3749 = vmatprep.subr.bf16.mxu0 %v2430
  %3750 = vmatpush1.bf16.msra.mxu0 %v2429
  %3751 = vmatprep.subr.bf16.mxu0 %v2422
  %3752 = vmatpush1.bf16.msra.mxu0 %v2421
  %3753 = vmatprep.subr.bf16.mxu0 %v2414
  %3754 = vmatpush1.bf16.msra.mxu0 %v2413
  %3755 = vmatprep.subr.bf16.mxu0 %v2406
  %3756 = vmatpush1.bf16.msra.mxu0 %v2405
  %3757 = vmatprep.subr.bf16.mxu0 %v2526
  %3758 = vmatpush2.bf16.msra.mxu0 %v2525
  %3759 = vmatprep.subr.bf16.mxu0 %v2518
  %3760 = vmatpush2.bf16.msra.mxu0 %v2517
  %3761 = vmatprep.subr.bf16.mxu0 %v2510
  %3762 = vmatpush2.bf16.msra.mxu0 %v2509
  %3763 = vmatprep.subr.bf16.mxu0 %v2502
  %3764 = vmatpush2.bf16.msra.mxu0 %v2501
  %3765 = vmatprep.subr.bf16.mxu0 %v2494
  %3766 = vmatpush2.bf16.msra.mxu0 %v2493
  %3767 = vmatprep.subr.bf16.mxu0 %v2486
  %3768 = vmatpush2.bf16.msra.mxu0 %v2485
  %3769 = vmatprep.subr.bf16.mxu0 %v2478
  %3770 = vmatpush2.bf16.msra.mxu0 %v2477
  %3771 = vmatprep.subr.bf16.mxu0 %v2470
  %3772 = vmatpush2.bf16.msra.mxu0 %v2469
  %3773 = vmatprep.mubr.bf16.mxu0 %v596
  %3774 = vmatmul.mubr.bf16.gmra.mxu0 %v595
  %v3775 = vpop.f32.mrf.mxu0
  %v3776 = vadd.f32 %v3735, %v3775
  %v3777 = vpop.f32.mrf.mxu0
  %v3778 = vadd.f32 %v3737, %v3777
  %v3779 = vpop.f32.mrf.mxu0
  %v3780 = vpop.f32.mrf.mxu0
  %3781 = vdwg.mxu0
  %3782 = vmatprep.subr.bf16.mxu0 %v2590
  %3783 = vmatpush1.bf16.msra.mxu0 %v2589
  %3784 = vmatprep.subr.bf16.mxu0 %v2582
  %3785 = vmatpush1.bf16.msra.mxu0 %v2581
  %3786 = vmatprep.subr.bf16.mxu0 %v2574
  %3787 = vmatpush1.bf16.msra.mxu0 %v2573
  %3788 = vmatprep.subr.bf16.mxu0 %v2566
  %3789 = vmatpush1.bf16.msra.mxu0 %v2565
  %3790 = vmatprep.subr.bf16.mxu0 %v2558
  %3791 = vmatpush1.bf16.msra.mxu0 %v2557
  %3792 = vmatprep.subr.bf16.mxu0 %v2550
  %3793 = vmatpush1.bf16.msra.mxu0 %v2549
  %3794 = vmatprep.subr.bf16.mxu0 %v2542
  %3795 = vmatpush1.bf16.msra.mxu0 %v2541
  %3796 = vmatprep.subr.bf16.mxu0 %v2534
  %3797 = vmatpush1.bf16.msra.mxu0 %v2533
  %3798 = vmatprep.subr.bf16.mxu0 %v2654
  %3799 = vmatpush2.bf16.msra.mxu0 %v2653
  %3800 = vmatprep.subr.bf16.mxu0 %v2646
  %3801 = vmatpush2.bf16.msra.mxu0 %v2645
  %3802 = vmatprep.subr.bf16.mxu0 %v2638
  %3803 = vmatpush2.bf16.msra.mxu0 %v2637
  %3804 = vmatprep.subr.bf16.mxu0 %v2630
  %3805 = vmatpush2.bf16.msra.mxu0 %v2629
  %3806 = vmatprep.subr.bf16.mxu0 %v2622
  %3807 = vmatpush2.bf16.msra.mxu0 %v2621
  %3808 = vmatprep.subr.bf16.mxu0 %v2614
  %3809 = vmatpush2.bf16.msra.mxu0 %v2613
  %3810 = vmatprep.subr.bf16.mxu0 %v2606
  %3811 = vmatpush2.bf16.msra.mxu0 %v2605
  %3812 = vmatprep.subr.bf16.mxu0 %v2598
  %3813 = vmatpush2.bf16.msra.mxu0 %v2597
  %3814 = vmatprep.mubr.bf16.mxu0 %v598
  %3815 = vmatmul.mubr.bf16.gmra.mxu0 %v597
  %v3816 = vpop.f32.mrf.mxu0
  %v3817 = vadd.f32 %v3776, %v3816
  %v3818 = vpop.f32.mrf.mxu0
  %v3819 = vadd.f32 %v3778, %v3818
  %v3820 = vpop.f32.mrf.mxu0
  %v3821 = vpop.f32.mrf.mxu0
  %3822 = vdwg.mxu0
  %v3823 = vmax.f32 %v3325, 0.0
  %v3824 = vmax.f32 %v3327, 0.0
  %v3825 = vmax.f32 %v3489, 0.0
  %v3826 = vmax.f32 %v3491, 0.0
  %v3827 = vmax.f32 %v3653, 0.0
  %v3828 = vmax.f32 %v3655, 0.0
  %v3829 = vmax.f32 %v3817, 0.0
  %v3830 = vmax.f32 %v3819, 0.0
  %v3831 = vpack.c.bf16 %v3823, %v3823
  %v3832 = vpack.c.bf16 %v3824, %v3824
  %v3833 = vpack.c.bf16 %v3825, %v3825
  %v3834 = vpack.c.bf16 %v3826, %v3826
  %v3835 = vpack.c.bf16 %v3827, %v3827
  %v3836 = vpack.c.bf16 %v3828, %v3828
  %v3837 = vpack.c.bf16 %v3829, %v3829
  %v3838 = vpack.c.bf16 %v3830, %v3830
  %v3839 = vld [vmem:[%s3] sm:$0xf]
  %v3840 = vld [vmem:[%s3 + $0x4] sm:$0xf]
  %v3841 = vld [vmem:[%s3 + $0x8] sm:$0xf]
  %v3842 = vld [vmem:[%s3 + $0xc] sm:$0xf]
  %v3843 = vld [vmem:[%s3 + $0x10] sm:$0xf]
  %v3844 = vld [vmem:[%s3 + $0x14] sm:$0xf]
  %v3845 = vld [vmem:[%s3 + $0x18] sm:$0xf]
  %v3846 = vld [vmem:[%s3 + $0x1c] sm:$0xf]
  %v3847 = vld [vmem:[%s3 + $0x20] sm:$0xf]
  %v3848 = vld [vmem:[%s3 + $0x24] sm:$0xf]
  %v3849 = vld [vmem:[%s3 + $0x28] sm:$0xf]
  %v3850 = vld [vmem:[%s3 + $0x2c] sm:$0xf]
  %v3851 = vld [vmem:[%s3 + $0x30] sm:$0xf]
  %v3852 = vld [vmem:[%s3 + $0x34] sm:$0xf]
  %v3853 = vld [vmem:[%s3 + $0x38] sm:$0xf]
  %v3854 = vld [vmem:[%s3 + $0x3c] sm:$0xf]
  %v3855 = vld [vmem:[%s3 + $0x40] sm:$0xf]
  %v3856 = vld [vmem:[%s3 + $0x44] sm:$0xf]
  %v3857 = vld [vmem:[%s3 + $0x48] sm:$0xf]
  %v3858 = vld [vmem:[%s3 + $0x4c] sm:$0xf]
  %v3859 = vld [vmem:[%s3 + $0x50] sm:$0xf]
  %v3860 = vld [vmem:[%s3 + $0x54] sm:$0xf]
  %v3861 = vld [vmem:[%s3 + $0x58] sm:$0xf]
  %v3862 = vld [vmem:[%s3 + $0x5c] sm:$0xf]
  %v3863 = vld [vmem:[%s3 + $0x60] sm:$0xf]
  %v3864 = vld [vmem:[%s3 + $0x64] sm:$0xf]
  %v3865 = vld [vmem:[%s3 + $0x68] sm:$0xf]
  %v3866 = vld [vmem:[%s3 + $0x6c] sm:$0xf]
  %v3867 = vld [vmem:[%s3 + $0x70] sm:$0xf]
  %v3868 = vld [vmem:[%s3 + $0x74] sm:$0xf]
  %v3869 = vld [vmem:[%s3 + $0x78] sm:$0xf]
  %v3870 = vld [vmem:[%s3 + $0x7c] sm:$0xf]
  %v3871 = vld [vmem:[%s3 + $0x80] sm:$0xf]
  %v3872 = vld [vmem:[%s3 + $0x84] sm:$0xf]
  %v3873 = vld [vmem:[%s3 + $0x88] sm:$0xf]
  %v3874 = vld [vmem:[%s3 + $0x8c] sm:$0xf]
  %v3875 = vld [vmem:[%s3 + $0x90] sm:$0xf]
  %v3876 = vld [vmem:[%s3 + $0x94] sm:$0xf]
  %v3877 = vld [vmem:[%s3 + $0x98] sm:$0xf]
  %v3878 = vld [vmem:[%s3 + $0x9c] sm:$0xf]
  %v3879 = vld [vmem:[%s3 + $0xa0] sm:$0xf]
  %v3880 = vld [vmem:[%s3 + $0xa4] sm:$0xf]
  %v3881 = vld [vmem:[%s3 + $0xa8] sm:$0xf]
  %v3882 = vld [vmem:[%s3 + $0xac] sm:$0xf]
  %v3883 = vld [vmem:[%s3 + $0xb0] sm:$0xf]
  %v3884 = vld [vmem:[%s3 + $0xb4] sm:$0xf]
  %v3885 = vld [vmem:[%s3 + $0xb8] sm:$0xf]
  %v3886 = vld [vmem:[%s3 + $0xbc] sm:$0xf]
  %v3887 = vld [vmem:[%s3 + $0xc0] sm:$0xf]
  %v3888 = vld [vmem:[%s3 + $0xc4] sm:$0xf]
  %v3889 = vld [vmem:[%s3 + $0xc8] sm:$0xf]
  %v3890 = vld [vmem:[%s3 + $0xcc] sm:$0xf]
  %v3891 = vld [vmem:[%s3 + $0xd0] sm:$0xf]
  %v3892 = vld [vmem:[%s3 + $0xd4] sm:$0xf]
  %v3893 = vld [vmem:[%s3 + $0xd8] sm:$0xf]
  %v3894 = vld [vmem:[%s3 + $0xdc] sm:$0xf]
  %v3895 = vld [vmem:[%s3 + $0xe0] sm:$0xf]
  %v3896 = vld [vmem:[%s3 + $0xe4] sm:$0xf]
  %v3897 = vld [vmem:[%s3 + $0xe8] sm:$0xf]
  %v3898 = vld [vmem:[%s3 + $0xec] sm:$0xf]
  %v3899 = vld [vmem:[%s3 + $0xf0] sm:$0xf]
  %v3900 = vld [vmem:[%s3 + $0xf4] sm:$0xf]
  %v3901 = vld [vmem:[%s3 + $0xf8] sm:$0xf]
  %v3902 = vld [vmem:[%s3 + $0xfc] sm:$0xf]
  %v3903 = vld [vmem:[%s3 + $0x100] sm:$0xf]
  %v3904 = vld [vmem:[%s3 + $0x104] sm:$0xf]
  %v3905 = vld [vmem:[%s3 + $0x108] sm:$0xf]
  %v3906 = vld [vmem:[%s3 + $0x10c] sm:$0xf]
  %v3907 = vld [vmem:[%s3 + $0x110] sm:$0xf]
  %v3908 = vld [vmem:[%s3 + $0x114] sm:$0xf]
  %v3909 = vld [vmem:[%s3 + $0x118] sm:$0xf]
  %v3910 = vld [vmem:[%s3 + $0x11c] sm:$0xf]
  %v3911 = vld [vmem:[%s3 + $0x120] sm:$0xf]
  %v3912 = vld [vmem:[%s3 + $0x124] sm:$0xf]
  %v3913 = vld [vmem:[%s3 + $0x128] sm:$0xf]
  %v3914 = vld [vmem:[%s3 + $0x12c] sm:$0xf]
  %v3915 = vld [vmem:[%s3 + $0x130] sm:$0xf]
  %v3916 = vld [vmem:[%s3 + $0x134] sm:$0xf]
  %v3917 = vld [vmem:[%s3 + $0x138] sm:$0xf]
  %v3918 = vld [vmem:[%s3 + $0x13c] sm:$0xf]
  %v3919 = vld [vmem:[%s3 + $0x140] sm:$0xf]
  %v3920 = vld [vmem:[%s3 + $0x144] sm:$0xf]
  %v3921 = vld [vmem:[%s3 + $0x148] sm:$0xf]
  %v3922 = vld [vmem:[%s3 + $0x14c] sm:$0xf]
  %v3923 = vld [vmem:[%s3 + $0x150] sm:$0xf]
  %v3924 = vld [vmem:[%s3 + $0x154] sm:$0xf]
  %v3925 = vld [vmem:[%s3 + $0x158] sm:$0xf]
  %v3926 = vld [vmem:[%s3 + $0x15c] sm:$0xf]
  %v3927 = vld [vmem:[%s3 + $0x160] sm:$0xf]
  %v3928 = vld [vmem:[%s3 + $0x164] sm:$0xf]
  %v3929 = vld [vmem:[%s3 + $0x168] sm:$0xf]
  %v3930 = vld [vmem:[%s3 + $0x16c] sm:$0xf]
  %v3931 = vld [vmem:[%s3 + $0x170] sm:$0xf]
  %v3932 = vld [vmem:[%s3 + $0x174] sm:$0xf]
  %v3933 = vld [vmem:[%s3 + $0x178] sm:$0xf]
  %v3934 = vld [vmem:[%s3 + $0x17c] sm:$0xf]
  %v3935 = vld [vmem:[%s3 + $0x180] sm:$0xf]
  %v3936 = vld [vmem:[%s3 + $0x184] sm:$0xf]
  %v3937 = vld [vmem:[%s3 + $0x188] sm:$0xf]
  %v3938 = vld [vmem:[%s3 + $0x18c] sm:$0xf]
  %v3939 = vld [vmem:[%s3 + $0x190] sm:$0xf]
  %v3940 = vld [vmem:[%s3 + $0x194] sm:$0xf]
  %v3941 = vld [vmem:[%s3 + $0x198] sm:$0xf]
  %v3942 = vld [vmem:[%s3 + $0x19c] sm:$0xf]
  %v3943 = vld [vmem:[%s3 + $0x1a0] sm:$0xf]
  %v3944 = vld [vmem:[%s3 + $0x1a4] sm:$0xf]
  %v3945 = vld [vmem:[%s3 + $0x1a8] sm:$0xf]
  %v3946 = vld [vmem:[%s3 + $0x1ac] sm:$0xf]
  %v3947 = vld [vmem:[%s3 + $0x1b0] sm:$0xf]
  %v3948 = vld [vmem:[%s3 + $0x1b4] sm:$0xf]
  %v3949 = vld [vmem:[%s3 + $0x1b8] sm:$0xf]
  %v3950 = vld [vmem:[%s3 + $0x1bc] sm:$0xf]
  %v3951 = vld [vmem:[%s3 + $0x1c0] sm:$0xf]
  %v3952 = vld [vmem:[%s3 + $0x1c4] sm:$0xf]
  %v3953 = vld [vmem:[%s3 + $0x1c8] sm:$0xf]
  %v3954 = vld [vmem:[%s3 + $0x1cc] sm:$0xf]
  %v3955 = vld [vmem:[%s3 + $0x1d0] sm:$0xf]
  %v3956 = vld [vmem:[%s3 + $0x1d4] sm:$0xf]
  %v3957 = vld [vmem:[%s3 + $0x1d8] sm:$0xf]
  %v3958 = vld [vmem:[%s3 + $0x1dc] sm:$0xf]
  %v3959 = vld [vmem:[%s3 + $0x1e0] sm:$0xf]
  %v3960 = vld [vmem:[%s3 + $0x1e4] sm:$0xf]
  %v3961 = vld [vmem:[%s3 + $0x1e8] sm:$0xf]
  %v3962 = vld [vmem:[%s3 + $0x1ec] sm:$0xf]
  %v3963 = vld [vmem:[%s3 + $0x1f0] sm:$0xf]
  %v3964 = vld [vmem:[%s3 + $0x1f4] sm:$0xf]
  %v3965 = vld [vmem:[%s3 + $0x1f8] sm:$0xf]
  %v3966 = vld [vmem:[%s3 + $0x1fc] sm:$0xf]
  %v3967 = vld [vmem:[%s4] sm:$0x1]
  %v3969 = vlaneseq
  %v3970 = vshrl.u32 %v3969, 7
  %v3971 = vsub.s32 0, %v3970
  %v3972 = vrot.slane %v3967, %v3971
  %v4102 = vunpack.c.l.b16 %v3839
  %v4103 = vunpack.c.l.b16 %v3840
  %v4104 = vunpack.c.l.b16 %v3841
  %v4105 = vunpack.c.l.b16 %v3842
  %v4106 = vunpack.c.l.b16 %v3843
  %v4107 = vunpack.c.l.b16 %v3844
  %v4108 = vunpack.c.l.b16 %v3845
  %v4109 = vunpack.c.l.b16 %v3846
  %v4110 = vunpack.c.l.b16 %v3847
  %v4111 = vunpack.c.l.b16 %v3848
  %v4112 = vunpack.c.l.b16 %v3849
  %v4113 = vunpack.c.l.b16 %v3850
  %v4114 = vunpack.c.l.b16 %v3851
  %v4115 = vunpack.c.l.b16 %v3852
  %v4116 = vunpack.c.l.b16 %v3853
  %v4117 = vunpack.c.l.b16 %v3854
  %v4118 = vunpack.c.l.b16 %v3855
  %v4119 = vunpack.c.l.b16 %v3856
  %v4120 = vunpack.c.l.b16 %v3857
  %v4121 = vunpack.c.l.b16 %v3858
  %v4122 = vunpack.c.l.b16 %v3859
  %v4123 = vunpack.c.l.b16 %v3860
  %v4124 = vunpack.c.l.b16 %v3861
  %v4125 = vunpack.c.l.b16 %v3862
  %v4126 = vunpack.c.l.b16 %v3863
  %v4127 = vunpack.c.l.b16 %v3864
  %v4128 = vunpack.c.l.b16 %v3865
  %v4129 = vunpack.c.l.b16 %v3866
  %v4130 = vunpack.c.l.b16 %v3867
  %v4131 = vunpack.c.l.b16 %v3868
  %v4132 = vunpack.c.l.b16 %v3869
  %v4133 = vunpack.c.l.b16 %v3870
  %v4134 = vunpack.c.l.b16 %v3871
  %v4135 = vunpack.c.l.b16 %v3872
  %v4136 = vunpack.c.l.b16 %v3873
  %v4137 = vunpack.c.l.b16 %v3874
  %v4138 = vunpack.c.l.b16 %v3875
  %v4139 = vunpack.c.l.b16 %v3876
  %v4140 = vunpack.c.l.b16 %v3877
  %v4141 = vunpack.c.l.b16 %v3878
  %v4142 = vunpack.c.l.b16 %v3879
  %v4143 = vunpack.c.l.b16 %v3880
  %v4144 = vunpack.c.l.b16 %v3881
  %v4145 = vunpack.c.l.b16 %v3882
  %v4146 = vunpack.c.l.b16 %v3883
  %v4147 = vunpack.c.l.b16 %v3884
  %v4148 = vunpack.c.l.b16 %v3885
  %v4149 = vunpack.c.l.b16 %v3886
  %v4150 = vunpack.c.l.b16 %v3887
  %v4151 = vunpack.c.l.b16 %v3888
  %v4152 = vunpack.c.l.b16 %v3889
  %v4153 = vunpack.c.l.b16 %v3890
  %v4154 = vunpack.c.l.b16 %v3891
  %v4155 = vunpack.c.l.b16 %v3892
  %v4156 = vunpack.c.l.b16 %v3893
  %v4157 = vunpack.c.l.b16 %v3894
  %v4158 = vunpack.c.l.b16 %v3895
  %v4159 = vunpack.c.l.b16 %v3896
  %v4160 = vunpack.c.l.b16 %v3897
  %v4161 = vunpack.c.l.b16 %v3898
  %v4162 = vunpack.c.l.b16 %v3899
  %v4163 = vunpack.c.l.b16 %v3900
  %v4164 = vunpack.c.l.b16 %v3901
  %v4165 = vunpack.c.l.b16 %v3902
  %v4166 = vunpack.c.l.b16 %v3903
  %v4167 = vunpack.c.l.b16 %v3904
  %v4168 = vunpack.c.l.b16 %v3905
  %v4169 = vunpack.c.l.b16 %v3906
  %v4170 = vunpack.c.l.b16 %v3907
  %v4171 = vunpack.c.l.b16 %v3908
  %v4172 = vunpack.c.l.b16 %v3909
  %v4173 = vunpack.c.l.b16 %v3910
  %v4174 = vunpack.c.l.b16 %v3911
  %v4175 = vunpack.c.l.b16 %v3912
  %v4176 = vunpack.c.l.b16 %v3913
  %v4177 = vunpack.c.l.b16 %v3914
  %v4178 = vunpack.c.l.b16 %v3915
  %v4179 = vunpack.c.l.b16 %v3916
  %v4180 = vunpack.c.l.b16 %v3917
  %v4181 = vunpack.c.l.b16 %v3918
  %v4182 = vunpack.c.l.b16 %v3919
  %v4183 = vunpack.c.l.b16 %v3920
  %v4184 = vunpack.c.l.b16 %v3921
  %v4185 = vunpack.c.l.b16 %v3922
  %v4186 = vunpack.c.l.b16 %v3923
  %v4187 = vunpack.c.l.b16 %v3924
  %v4188 = vunpack.c.l.b16 %v3925
  %v4189 = vunpack.c.l.b16 %v3926
  %v4190 = vunpack.c.l.b16 %v3927
  %v4191 = vunpack.c.l.b16 %v3928
  %v4192 = vunpack.c.l.b16 %v3929
  %v4193 = vunpack.c.l.b16 %v3930
  %v4194 = vunpack.c.l.b16 %v3931
  %v4195 = vunpack.c.l.b16 %v3932
  %v4196 = vunpack.c.l.b16 %v3933
  %v4197 = vunpack.c.l.b16 %v3934
  %v4198 = vunpack.c.l.b16 %v3935
  %v4199 = vunpack.c.l.b16 %v3936
  %v4200 = vunpack.c.l.b16 %v3937
  %v4201 = vunpack.c.l.b16 %v3938
  %v4202 = vunpack.c.l.b16 %v3939
  %v4203 = vunpack.c.l.b16 %v3940
  %v4204 = vunpack.c.l.b16 %v3941
  %v4205 = vunpack.c.l.b16 %v3942
  %v4206 = vunpack.c.l.b16 %v3943
  %v4207 = vunpack.c.l.b16 %v3944
  %v4208 = vunpack.c.l.b16 %v3945
  %v4209 = vunpack.c.l.b16 %v3946
  %v4210 = vunpack.c.l.b16 %v3947
  %v4211 = vunpack.c.l.b16 %v3948
  %v4212 = vunpack.c.l.b16 %v3949
  %v4213 = vunpack.c.l.b16 %v3950
  %v4214 = vunpack.c.l.b16 %v3951
  %v4215 = vunpack.c.l.b16 %v3952
  %v4216 = vunpack.c.l.b16 %v3953
  %v4217 = vunpack.c.l.b16 %v3954
  %v4218 = vunpack.c.l.b16 %v3955
  %v4219 = vunpack.c.l.b16 %v3956
  %v4220 = vunpack.c.l.b16 %v3957
  %v4221 = vunpack.c.l.b16 %v3958
  %v4222 = vunpack.c.l.b16 %v3959
  %v4223 = vunpack.c.l.b16 %v3960
  %v4224 = vunpack.c.l.b16 %v3961
  %v4225 = vunpack.c.l.b16 %v3962
  %v4226 = vunpack.c.l.b16 %v3963
  %v4227 = vunpack.c.l.b16 %v3964
  %v4228 = vunpack.c.l.b16 %v3965
  %v4229 = vunpack.c.l.b16 %v3966
  %v4230 = vpack.c.b16 %v4103, %v4102
  %v4231 = vpack.c.b16 %v4105, %v4104
  %v4232 = vpack.c.b16 %v4107, %v4106
  %v4233 = vpack.c.b16 %v4109, %v4108
  %v4234 = vpack.c.b16 %v4111, %v4110
  %v4235 = vpack.c.b16 %v4113, %v4112
  %v4236 = vpack.c.b16 %v4115, %v4114
  %v4237 = vpack.c.b16 %v4117, %v4116
  %v4238 = vpack.c.b16 %v4119, %v4118
  %v4239 = vpack.c.b16 %v4121, %v4120
  %v4240 = vpack.c.b16 %v4123, %v4122
  %v4241 = vpack.c.b16 %v4125, %v4124
  %v4242 = vpack.c.b16 %v4127, %v4126
  %v4243 = vpack.c.b16 %v4129, %v4128
  %v4244 = vpack.c.b16 %v4131, %v4130
  %v4245 = vpack.c.b16 %v4133, %v4132
  %v4246 = vpack.c.b16 %v4135, %v4134
  %v4247 = vpack.c.b16 %v4137, %v4136
  %v4248 = vpack.c.b16 %v4139, %v4138
  %v4249 = vpack.c.b16 %v4141, %v4140
  %v4250 = vpack.c.b16 %v4143, %v4142
  %v4251 = vpack.c.b16 %v4145, %v4144
  %v4252 = vpack.c.b16 %v4147, %v4146
  %v4253 = vpack.c.b16 %v4149, %v4148
  %v4254 = vpack.c.b16 %v4151, %v4150
  %v4255 = vpack.c.b16 %v4153, %v4152
  %v4256 = vpack.c.b16 %v4155, %v4154
  %v4257 = vpack.c.b16 %v4157, %v4156
  %v4258 = vpack.c.b16 %v4159, %v4158
  %v4259 = vpack.c.b16 %v4161, %v4160
  %v4260 = vpack.c.b16 %v4163, %v4162
  %v4261 = vpack.c.b16 %v4165, %v4164
  %v4262 = vpack.c.b16 %v4167, %v4166
  %v4263 = vpack.c.b16 %v4169, %v4168
  %v4264 = vpack.c.b16 %v4171, %v4170
  %v4265 = vpack.c.b16 %v4173, %v4172
  %v4266 = vpack.c.b16 %v4175, %v4174
  %v4267 = vpack.c.b16 %v4177, %v4176
  %v4268 = vpack.c.b16 %v4179, %v4178
  %v4269 = vpack.c.b16 %v4181, %v4180
  %v4270 = vpack.c.b16 %v4183, %v4182
  %v4271 = vpack.c.b16 %v4185, %v4184
  %v4272 = vpack.c.b16 %v4187, %v4186
  %v4273 = vpack.c.b16 %v4189, %v4188
  %v4274 = vpack.c.b16 %v4191, %v4190
  %v4275 = vpack.c.b16 %v4193, %v4192
  %v4276 = vpack.c.b16 %v4195, %v4194
  %v4277 = vpack.c.b16 %v4197, %v4196
  %v4278 = vpack.c.b16 %v4199, %v4198
  %v4279 = vpack.c.b16 %v4201, %v4200
  %v4280 = vpack.c.b16 %v4203, %v4202
  %v4281 = vpack.c.b16 %v4205, %v4204
  %v4282 = vpack.c.b16 %v4207, %v4206
  %v4283 = vpack.c.b16 %v4209, %v4208
  %v4284 = vpack.c.b16 %v4211, %v4210
  %v4285 = vpack.c.b16 %v4213, %v4212
  %v4286 = vpack.c.b16 %v4215, %v4214
  %v4287 = vpack.c.b16 %v4217, %v4216
  %v4288 = vpack.c.b16 %v4219, %v4218
  %v4289 = vpack.c.b16 %v4221, %v4220
  %v4290 = vpack.c.b16 %v4223, %v4222
  %v4291 = vpack.c.b16 %v4225, %v4224
  %v4292 = vpack.c.b16 %v4227, %v4226
  %v4293 = vpack.c.b16 %v4229, %v4228
  %4358 = vmatprep.subr.bf16.mxu0 0
  %4359 = vmatpush1.bf16.msra.mxu0 %v4237
  %4360 = vmatprep.subr.bf16.mxu0 0
  %4361 = vmatpush1.bf16.msra.mxu0 %v4236
  %4362 = vmatprep.subr.bf16.mxu0 0
  %4363 = vmatpush1.bf16.msra.mxu0 %v4235
  %4364 = vmatprep.subr.bf16.mxu0 0
  %4365 = vmatpush1.bf16.msra.mxu0 %v4234
  %4366 = vmatprep.subr.bf16.mxu0 0
  %4367 = vmatpush1.bf16.msra.mxu0 %v4233
  %4368 = vmatprep.subr.bf16.mxu0 0
  %4369 = vmatpush1.bf16.msra.mxu0 %v4232
  %4370 = vmatprep.subr.bf16.mxu0 0
  %4371 = vmatpush1.bf16.msra.mxu0 %v4231
  %4372 = vmatprep.subr.bf16.mxu0 0
  %4373 = vmatpush1.bf16.msra.mxu0 %v4230
  %4374 = vmatprep.subr.bf16.mxu0 0
  %4375 = vmatpush2.bf16.msra.mxu0 %v4245
  %4376 = vmatprep.subr.bf16.mxu0 0
  %4377 = vmatpush2.bf16.msra.mxu0 %v4244
  %4378 = vmatprep.subr.bf16.mxu0 0
  %4379 = vmatpush2.bf16.msra.mxu0 %v4243
  %4380 = vmatprep.subr.bf16.mxu0 0
  %4381 = vmatpush2.bf16.msra.mxu0 %v4242
  %4382 = vmatprep.subr.bf16.mxu0 0
  %4383 = vmatpush2.bf16.msra.mxu0 %v4241
  %4384 = vmatprep.subr.bf16.mxu0 0
  %4385 = vmatpush2.bf16.msra.mxu0 %v4240
  %4386 = vmatprep.subr.bf16.mxu0 0
  %4387 = vmatpush2.bf16.msra.mxu0 %v4239
  %4388 = vmatprep.subr.bf16.mxu0 0
  %4389 = vmatpush2.bf16.msra.mxu0 %v4238
  %4390 = vmatprep.mubr.bf16.mxu0 %v3832
  %4391 = vmatmul.mubr.bf16.gmra.mxu0 %v3831
  %v4392 = vpop.f32.mrf.mxu0
  %v4393 = vadd.f32 %v3972, %v4392
  %v4394 = vpop.f32.mrf.mxu0
  %v4395 = vpop.f32.mrf.mxu0
  %v4396 = vpop.f32.mrf.mxu0
  %4397 = vdwg.mxu0
  %4398 = vmatprep.subr.bf16.mxu0 0
  %4399 = vmatpush1.bf16.msra.mxu0 %v4253
  %4400 = vmatprep.subr.bf16.mxu0 0
  %4401 = vmatpush1.bf16.msra.mxu0 %v4252
  %4402 = vmatprep.subr.bf16.mxu0 0
  %4403 = vmatpush1.bf16.msra.mxu0 %v4251
  %4404 = vmatprep.subr.bf16.mxu0 0
  %4405 = vmatpush1.bf16.msra.mxu0 %v4250
  %4406 = vmatprep.subr.bf16.mxu0 0
  %4407 = vmatpush1.bf16.msra.mxu0 %v4249
  %4408 = vmatprep.subr.bf16.mxu0 0
  %4409 = vmatpush1.bf16.msra.mxu0 %v4248
  %4410 = vmatprep.subr.bf16.mxu0 0
  %4411 = vmatpush1.bf16.msra.mxu0 %v4247
  %4412 = vmatprep.subr.bf16.mxu0 0
  %4413 = vmatpush1.bf16.msra.mxu0 %v4246
  %4414 = vmatprep.subr.bf16.mxu0 0
  %4415 = vmatpush2.bf16.msra.mxu0 %v4261
  %4416 = vmatprep.subr.bf16.mxu0 0
  %4417 = vmatpush2.bf16.msra.mxu0 %v4260
  %4418 = vmatprep.subr.bf16.mxu0 0
  %4419 = vmatpush2.bf16.msra.mxu0 %v4259
  %4420 = vmatprep.subr.bf16.mxu0 0
  %4421 = vmatpush2.bf16.msra.mxu0 %v4258
  %4422 = vmatprep.subr.bf16.mxu0 0
  %4423 = vmatpush2.bf16.msra.mxu0 %v4257
  %4424 = vmatprep.subr.bf16.mxu0 0
  %4425 = vmatpush2.bf16.msra.mxu0 %v4256
  %4426 = vmatprep.subr.bf16.mxu0 0
  %4427 = vmatpush2.bf16.msra.mxu0 %v4255
  %4428 = vmatprep.subr.bf16.mxu0 0
  %4429 = vmatpush2.bf16.msra.mxu0 %v4254
  %4430 = vmatprep.mubr.bf16.mxu0 %v3834
  %4431 = vmatmul.mubr.bf16.gmra.mxu0 %v3833
  %v4432 = vpop.f32.mrf.mxu0
  %v4433 = vadd.f32 %v4393, %v4432
  %v4434 = vpop.f32.mrf.mxu0
  %v4435 = vpop.f32.mrf.mxu0
  %v4436 = vpop.f32.mrf.mxu0
  %4437 = vdwg.mxu0
  %4438 = vmatprep.subr.bf16.mxu0 0
  %4439 = vmatpush1.bf16.msra.mxu0 %v4269
  %4440 = vmatprep.subr.bf16.mxu0 0
  %4441 = vmatpush1.bf16.msra.mxu0 %v4268
  %4442 = vmatprep.subr.bf16.mxu0 0
  %4443 = vmatpush1.bf16.msra.mxu0 %v4267
  %4444 = vmatprep.subr.bf16.mxu0 0
  %4445 = vmatpush1.bf16.msra.mxu0 %v4266
  %4446 = vmatprep.subr.bf16.mxu0 0
  %4447 = vmatpush1.bf16.msra.mxu0 %v4265
  %4448 = vmatprep.subr.bf16.mxu0 0
  %4449 = vmatpush1.bf16.msra.mxu0 %v4264
  %4450 = vmatprep.subr.bf16.mxu0 0
  %4451 = vmatpush1.bf16.msra.mxu0 %v4263
  %4452 = vmatprep.subr.bf16.mxu0 0
  %4453 = vmatpush1.bf16.msra.mxu0 %v4262
  %4454 = vmatprep.subr.bf16.mxu0 0
  %4455 = vmatpush2.bf16.msra.mxu0 %v4277
  %4456 = vmatprep.subr.bf16.mxu0 0
  %4457 = vmatpush2.bf16.msra.mxu0 %v4276
  %4458 = vmatprep.subr.bf16.mxu0 0
  %4459 = vmatpush2.bf16.msra.mxu0 %v4275
  %4460 = vmatprep.subr.bf16.mxu0 0
  %4461 = vmatpush2.bf16.msra.mxu0 %v4274
  %4462 = vmatprep.subr.bf16.mxu0 0
  %4463 = vmatpush2.bf16.msra.mxu0 %v4273
  %4464 = vmatprep.subr.bf16.mxu0 0
  %4465 = vmatpush2.bf16.msra.mxu0 %v4272
  %4466 = vmatprep.subr.bf16.mxu0 0
  %4467 = vmatpush2.bf16.msra.mxu0 %v4271
  %4468 = vmatprep.subr.bf16.mxu0 0
  %4469 = vmatpush2.bf16.msra.mxu0 %v4270
  %4470 = vmatprep.mubr.bf16.mxu0 %v3836
  %4471 = vmatmul.mubr.bf16.gmra.mxu0 %v3835
  %v4472 = vpop.f32.mrf.mxu0
  %v4473 = vadd.f32 %v4433, %v4472
  %v4474 = vpop.f32.mrf.mxu0
  %v4475 = vpop.f32.mrf.mxu0
  %v4476 = vpop.f32.mrf.mxu0
  %4477 = vdwg.mxu0
  %4478 = vmatprep.subr.bf16.mxu0 0
  %4479 = vmatpush1.bf16.msra.mxu0 %v4285
  %4480 = vmatprep.subr.bf16.mxu0 0
  %4481 = vmatpush1.bf16.msra.mxu0 %v4284
  %4482 = vmatprep.subr.bf16.mxu0 0
  %4483 = vmatpush1.bf16.msra.mxu0 %v4283
  %4484 = vmatprep.subr.bf16.mxu0 0
  %4485 = vmatpush1.bf16.msra.mxu0 %v4282
  %4486 = vmatprep.subr.bf16.mxu0 0
  %4487 = vmatpush1.bf16.msra.mxu0 %v4281
  %4488 = vmatprep.subr.bf16.mxu0 0
  %4489 = vmatpush1.bf16.msra.mxu0 %v4280
  %4490 = vmatprep.subr.bf16.mxu0 0
  %4491 = vmatpush1.bf16.msra.mxu0 %v4279
  %4492 = vmatprep.subr.bf16.mxu0 0
  %4493 = vmatpush1.bf16.msra.mxu0 %v4278
  %4494 = vmatprep.subr.bf16.mxu0 0
  %4495 = vmatpush2.bf16.msra.mxu0 %v4293
  %4496 = vmatprep.subr.bf16.mxu0 0
  %4497 = vmatpush2.bf16.msra.mxu0 %v4292
  %4498 = vmatprep.subr.bf16.mxu0 0
  %4499 = vmatpush2.bf16.msra.mxu0 %v4291
  %4500 = vmatprep.subr.bf16.mxu0 0
  %4501 = vmatpush2.bf16.msra.mxu0 %v4290
  %4502 = vmatprep.subr.bf16.mxu0 0
  %4503 = vmatpush2.bf16.msra.mxu0 %v4289
  %4504 = vmatprep.subr.bf16.mxu0 0
  %4505 = vmatpush2.bf16.msra.mxu0 %v4288
  %4506 = vmatprep.subr.bf16.mxu0 0
  %4507 = vmatpush2.bf16.msra.mxu0 %v4287
  %4508 = vmatprep.subr.bf16.mxu0 0
  %4509 = vmatpush2.bf16.msra.mxu0 %v4286
  %4510 = vmatprep.mubr.bf16.mxu0 %v3838
  %4511 = vmatmul.mubr.bf16.gmra.mxu0 %v3837
  %v4512 = vpop.f32.mrf.mxu0
  %v4513 = vadd.f32 %v4473, %v4512
  %v4514 = vpop.f32.mrf.mxu0
  %v4515 = vpop.f32.mrf.mxu0
  %v4516 = vpop.f32.mrf.mxu0
  %4517 = vdwg.mxu0
  %4518 = vmax.xlane.f32.xlu0 %v4513
  %v4519 = vpop.xlane.xlu0 %4518
  %v4520 = vsub.f32 %v4513, %v4519
  %v4521 = vmul.f32 %v4520, 1.442695
  %v4522 = vpow.pop %v4521
  %4523 = vadd.xlane.f32.xlu0 %v4522
  %v4524 = vpop.xlane.xlu0 %4523
  %v4525 = vrcp.pop %v4524
  %v4526 = vmul.f32 %v4522, %v4525
  %4527 = vst [vmem:[%s5] sm:$0xff] %v4526
  // Predicated region
  $region22: #{alphabet_with_scallop_forward.5} parent=0 // pred_check
    _
  $region23: #{alphabet_with_scallop_forward.5} parent=0 // pred_check_branch
    %4529 = sbr.rel (0) target = $region25
  $region24: #{alphabet_with_scallop_forward.5} parent=0 // pred_region
    _
  $region25: #{alphabet_with_scallop_forward.5} parent=0 // pred_fallthru
    _
  // Predicated region
  $region26: #{alphabet_with_scallop_forward.5} parent=0 // pred_check
    _
  $region27: #{alphabet_with_scallop_forward.5} parent=0 // pred_check_branch
    %4531 = sbr.rel (0) target = $region29
  $region28: #{alphabet_with_scallop_forward.5} parent=0 // pred_region
    _
  $region29: #{alphabet_with_scallop_forward.5} parent=0 // pred_fallthru
    _

</llo_original>
